<compile_context>
chip_gen: v7x
topology: tpu7x:2x2x1
jax: 0.10.0
libtpu: 0.0.40
codegen_flags: <defaults>
</compile_context>

<pallas_src>
import functools

import numpy as np
import jax
import jax.numpy as jnp
from jax.experimental import pallas as pl
from jax.experimental.pallas import tpu as pltpu

LEAK = 0.2                      # assumed config.LRELU_SLOPE
G_LAST = "tanh"                 # assumed config.G_LAST
BN_EPS = 1e-5
VMEM_LIMIT = 16 * 1024 * 1024   # honest limit; real footprint < 3 MiB


def _round_up(x, m):
    return ((x + m - 1) // m) * m


# ----------------------------- Pallas kernels ------------------------------
def _convt_act_kernel(cols_ref, w_ref, b_ref, o_ref, *, act):
    # Phase-decomposed ConvTranspose as one MXU matmul + bias + activation.
    # bf16 operands -> MXU, f32 accumulation; epilogue stays f32 (VPU/EUP).
    y = jnp.dot(cols_ref[...], w_ref[...], preferred_element_type=jnp.float32)
    y = y + b_ref[...]
    if act == "lrelu":
        y = jnp.where(y > 0, y, LEAK * y)
    elif act == "tanh":
        y = jnp.tanh(y)
    elif act == "sigmoid":
        y = jax.nn.sigmoid(y)
    o_ref[...] = y.astype(o_ref.dtype)


def _convt_bn_lrelu_kernel(cols_ref, w_ref, b_ref, mask_ref, psum_ref,
                           g_ref, bt_ref, o_ref, *, count):
    # ConvTranspose matmul + bias + fused BatchNorm (batch stats) + LeakyReLU.
    #   mask_ref : (Mp, 4C) 0/1 - elements that survive the pixel shuffle
    #              (excludes M-padding rows and per-phase border rows).
    #   psum_ref : (4C, 4C) 0/1 with psum[i, j] = (i % C == j % C); matmul with
    #              it sums the 4 phase blocks of each channel and broadcasts
    #              the per-channel value back to all 4 blocks in one shot.
    y = jnp.dot(cols_ref[...], w_ref[...], preferred_element_type=jnp.float32)
    y = y + b_ref[...]
    mask = mask_ref[...]
    psum = psum_ref[...]
    inv = 1.0 / count
    # Two-pass batch statistics (biased variance, PyTorch training default).
    my = mask * y
    s4 = jnp.sum(jnp.dot(my, psum, preferred_element_type=jnp.float32),
                 axis=0, keepdims=True)                       # per-channel sum
    mean = s4 * inv
    d = y - mean
    mdd = mask * d * d
    v4 = jnp.sum(jnp.dot(mdd, psum, preferred_element_type=jnp.float32),
                 axis=0, keepdims=True)
    var = v4 * inv
    yn = d * jax.lax.rsqrt(var + BN_EPS) * g_ref[...] + bt_ref[...]
    o_ref[...] = jnp.where(yn > 0, yn, LEAK * yn).astype(o_ref.dtype)


# --------------------------- host-side constants ----------------------------
def _survivor_mask(n, h, w, c_out, mp, nc):
    """(mp, nc) f32 0/1: element (r, j) of the pre-shuffle matmul output is kept
    by the pixel shuffle iff row r's (p, q) lies inside column-j's phase window."""
    hw1 = (h + 1) * (w + 1)
    m = n * hw1
    r = np.arange(mp)[:, None]
    j = np.arange(nc)[None, :]
    p = (r % hw1) // (w + 1)
    q = r % (w + 1)
    k = j // c_out
    dy, dx = k // 2, k % 2
    keep = (r < m) & (p >= dy) & (p < dy + h) & (q >= dx) & (q < dx + w)
    return jnp.asarray(keep.astype(np.float32))


def _phase_sum_matrix(c_out):
    nc = 4 * c_out
    i = np.arange(nc)[:, None]
    j = np.arange(nc)[None, :]
    return jnp.asarray(((i % c_out) == (j % c_out)).astype(np.float32))


# --------------------------- pallas_call wrapper ----------------------------
def _convt_layer(cols, layer, n, h, w):
    """One generator layer as a single whole-array-block pallas_call."""
    m, _ = cols.shape
    mp = _round_up(m, 16)                       # bf16 sublane tile; minimal pad
    if mp != m:
        cols = jnp.pad(cols, ((0, mp - m), (0, 0)))
    wmat, bias = layer["wmat"], layer["bias"]
    nc = wmat.shape[1]
    cp = pltpu.CompilerParams(vmem_limit_bytes=VMEM_LIMIT)
    if layer["bn"]:
        c = layer["c_out"]
        mask = _survivor_mask(n, h, w, c, mp, nc)
        out = pl.pallas_call(
            functools.partial(_convt_bn_lrelu_kernel, count=float(n * 4 * h * w)),
            out_shape=jax.ShapeDtypeStruct((mp, nc), layer["out_dtype"]),
            compiler_params=cp,
        )(cols, wmat, bias, mask, layer["psum"], layer["gamma4"], layer["beta4"])
    else:
        out = pl.pallas_call(
            functools.partial(_convt_act_kernel, act=layer["act"]),
            out_shape=jax.ShapeDtypeStruct((mp, nc), layer["out_dtype"]),
            compiler_params=cp,
        )(cols, wmat, bias)
    return out[:m, :4 * layer["c_out"]]         # drop row / lane padding


# ------------------------------- glue (JAX) --------------------------------
def _phase_patches(x):
    """2x2 patches of the zero-padded NHWC input.

    cols[(n, p, q), (a*2+b)*C + ci] = xpad[n, p+a, q+b, ci],  p in [0,H], q in [0,W].
    """
    n, h, w, c = x.shape
    xp = jnp.pad(x, ((0, 0), (1, 1), (1, 1), (0, 0)))
    taps = [xp[:, a:a + h + 1, b:b + w + 1, :] for a in range(2) for b in range(2)]
    cols = jnp.concatenate(taps, axis=-1)                  # (N, H+1, W+1, 4*C)
    return cols.reshape(n * (h + 1) * (w + 1), 4 * c), h, w


def _assemble(y, n, h, w, c_out):
    """Pixel-shuffle the 4 phase outputs: out[n, 2i+dy, 2j+dx, :] = Y[n, i+dy, j+dx, dy, dx, :]."""
    yr = y.reshape(n, h + 1, w + 1, 2, 2, c_out)
    rows = []
    for dy in range(2):
        cols_ = [yr[:, dy:dy + h, dx:dx + w, dy, dx, :] for dx in range(2)]
        rows.append(jnp.stack(cols_, axis=3))              # (N, H, W, 2dx, C)
    p = jnp.stack(rows, axis=3)                            # (N, H, W, 2dy, 2dx, C)
    p = jnp.transpose(p, (0, 1, 3, 2, 4, 5))               # (N, H, 2dy, W, 2dx, C)
    return p.reshape(n, 2 * h, 2 * w, c_out)


def _build_phase_weight(w):
    """(C_in, C_out, 4, 4) ConvTranspose2d weight -> (4*C_in, 4*C_out) phase-matmul weight.

    Column block (dy*2+dx) holds the 2x2 sub-kernel for output phase (dy, dx):
    W_mat[(a*2+b)*C_in + ci, (dy*2+dx)*C_out + co] = w[ci, co, 3-dy-2a, 3-dx-2b].
    """
    c_in, c_out = w.shape[0], w.shape[1]
    blocks = []
    for dy in range(2):
        for dx in range(2):
            sub = jnp.stack(
                [jnp.stack([w[:, :, 3 - dy - 2 * a, 3 - dx - 2 * b]
                            for b in range(2)], axis=-1)
                 for a in range(2)], axis=-2)              # (C_in, C_out, 2(a), 2(b))
            sub = jnp.transpose(sub, (2, 3, 0, 1)).reshape(4 * c_in, c_out)
            blocks.append(sub)
    return jnp.concatenate(blocks, axis=1)                 # (4*C_in, 4*C_out)


def init_generator_params(key, z_size):
    base, k = 32, 4
    c_in_list = [z_size, base * 8, base * 4, base * 2, base]
    c_out_list = [base * 8, base * 4, base * 2, base, 3]
    has_bn = [False, True, True, True, False]
    acts = ["lrelu", "none", "none", "none", G_LAST]
    layers = []
    for li in range(5):
        key, kw, kb, kg = jax.random.split(key, 4)
        c_in, c_out = c_in_list[li], c_out_list[li]
        w = 0.02 * jax.random.normal(kw, (c_in, c_out, k, k), jnp.float32)
        b = 0.02 * jax.random.normal(kb, (c_out,), jnp.float32)
        # Hoisted weight re-layout + lane padding (out width -> multiple of 128).
        wmat = _build_phase_weight(w)
        nc = wmat.shape[1]
        nc_pad = max(_round_up(nc, 128), 128)
        wmat = jnp.pad(wmat, ((0, 0), (0, nc_pad - nc)))
        bias = jnp.pad(jnp.tile(b, 4), (0, nc_pad - nc)).reshape(1, nc_pad)
        layer = dict(wmat=wmat.astype(jnp.bfloat16), bias=bias, c_out=c_out,
                     act=acts[li], bn=has_bn[li],
                     out_dtype=jnp.float32 if li == 4 else jnp.bfloat16,
                     w_ref=w, b_ref=b)
        if has_bn[li]:
            gamma = 1.0 + 0.02 * jax.random.normal(kg, (c_out,), jnp.float32)
            beta = jnp.zeros((c_out,), jnp.float32)
            layer["gamma"] = gamma.reshape(1, c_out)               # reference
            layer["beta"] = beta.reshape(1, c_out)
            layer["gamma4"] = jnp.tile(gamma, 4).reshape(1, 4 * c_out)
            layer["beta4"] = jnp.tile(beta, 4).reshape(1, 4 * c_out)
            layer["psum"] = _phase_sum_matrix(c_out)
        layers.append(layer)
    return dict(z_size=z_size, layers=layers)


def generator_forward(z, params):
    n = z.shape[0]
    x = z.reshape(n, params["z_size"], 1, 1)                 # z.view(-1, z_size, 1, 1)
    x = jnp.transpose(x, (0, 2, 3, 1)).astype(jnp.bfloat16)  # NCHW -> NHWC, bf16 MXU operand
    for layer in params["layers"]:
        cols, h, w = _phase_patches(x)
        y = _convt_layer(cols, layer, n, h, w)
        x = _assemble(y, n, h, w, layer["c_out"])
    return jnp.transpose(x.astype(jnp.float32), (0, 3, 1, 2))  # NHWC -> NCHW


# --------------------------- pure-JAX reference -----------------------------
def _ref_conv_transpose(x_nchw, w, b):
    wf = jnp.flip(jnp.transpose(w, (1, 0, 2, 3)), axis=(2, 3))   # (OC, IC, kH, kW), flipped
    y = jax.lax.conv_general_dilated(
        x_nchw, wf, window_strides=(1, 1), padding=((2, 2), (2, 2)),
        lhs_dilation=(2, 2), dimension_numbers=("NCHW", "OIHW", "NCHW"),
        precision=jax.lax.Precision.HIGHEST)
    return y + b.reshape(1, -1, 1, 1)


def reference_forward(z, params):
    x = z.reshape(z.shape[0], params["z_size"], 1, 1)
    for layer in params["layers"]:
        x = _ref_conv_transpose(x, layer["w_ref"], layer["b_ref"])
        if layer["bn"]:
            mean = jnp.mean(x, axis=(0, 2, 3), keepdims=True)
            var = jnp.mean(jnp.square(x - mean), axis=(0, 2, 3), keepdims=True)
            x = (x - mean) * jax.lax.rsqrt(var + BN_EPS)
            x = x * layer["gamma"].reshape(1, -1, 1, 1) + layer["beta"].reshape(1, -1, 1, 1)
            x = jnp.where(x > 0, x, LEAK * x)
        elif layer["act"] == "lrelu":
            x = jnp.where(x > 0, x, LEAK * x)
    return jnp.tanh(x) if G_LAST == "tanh" else jax.nn.sigmoid(x)


# ---------------------------------- main ------------------------------------
if __name__ == "__main__":
    # Small shapes consistent with the module: batch=2, z_size=64.
    # Architecture: 1x1 -> 2x2(256) -> 4x4(128) -> 8x8(64) -> 16x16(32) -> 32x32(3), tanh.
    batch, z_size = 2, 64
    key = jax.random.PRNGKey(0)
    key, kz, kp = jax.random.split(key, 3)
    z = jax.random.normal(kz, (batch, z_size), dtype=jnp.float32)
    params = init_generator_params(kp, z_size)

    fwd = jax.jit(functools.partial(generator_forward, params=params))
    out = jax.block_until_ready(fwd(z))

    assert out.shape == (batch, 3, 32, 32), out.shape
    assert bool(jnp.all(jnp.isfinite(out)))
    assert bool(jnp.all(jnp.abs(out) <= 1.0))              # tanh output range

    ref = reference_forward(z, params)
    max_err = float(jnp.max(jnp.abs(out - ref)))
    assert max_err < 5e-2, f"max abs error vs reference: {max_err}"

    print("KERNEL_OK")
</pallas_src>

<mosaic_0001>
module attributes {stable_mosaic.version = 11 : i64} {
  func.func @_convt_act_kernel(%arg0: memref<16x256xbf16, #tpu.memory_space<vmem>>, %arg1: memref<256x1024xbf16, #tpu.memory_space<vmem>>, %arg2: memref<1x1024xf32, #tpu.memory_space<vmem>>, %arg3: memref<16x1024xbf16, #tpu.memory_space<vmem>>) attributes {dimension_semantics = [], scalar_prefetch = 0 : i64, scratch_operands = 0 : i64, tpu.core_type = #tpu.core_type<tc>} {
    %c0 = arith.constant 0 : index
    %c0_0 = arith.constant 0 : index
    %0 = vector.load %arg0[%c0, %c0_0] : memref<16x256xbf16, #tpu.memory_space<vmem>>, vector<16x256xbf16>
    %c0_1 = arith.constant 0 : index
    %c0_2 = arith.constant 0 : index
    %1 = vector.load %arg1[%c0_1, %c0_2] : memref<256x1024xbf16, #tpu.memory_space<vmem>>, vector<256x1024xbf16>
    %cst = arith.constant dense<0.000000e+00> : vector<16x1024xf32>
    %2 = tpu.matmul %0, %1, %cst {dimension_numbers = #tpu.dot_dimension_numbers<[1], [0], [0], [1], [0, 0, 1, 1], [], []>} : vector<16x256xbf16>, vector<256x1024xbf16>, vector<16x1024xf32> -> vector<16x1024xf32>
    %c0_3 = arith.constant 0 : index
    %c0_4 = arith.constant 0 : index
    %3 = vector.load %arg2[%c0_3, %c0_4] : memref<1x1024xf32, #tpu.memory_space<vmem>>, vector<1x1024xf32>
    %4 = vector.broadcast %3 : vector<1x1024xf32> to vector<16x1024xf32>
    %5 = arith.addf %2, %4 : vector<16x1024xf32>
    %cst_5 = arith.constant 0.000000e+00 : f32
    %6 = vector.broadcast %cst_5 : f32 to vector<16x1024xf32>
    %7 = arith.cmpf ogt, %5, %6 : vector<16x1024xf32>
    %cst_6 = arith.constant 2.000000e-01 : f32
    %8 = vector.broadcast %cst_6 : f32 to vector<16x1024xf32>
    %9 = arith.mulf %8, %5 : vector<16x1024xf32>
    %10 = arith.select %7, %5, %9 : vector<16x1024xi1>, vector<16x1024xf32>
    %11 = arith.truncf %10 : vector<16x1024xf32> to vector<16x1024xbf16>
    %c0_7 = arith.constant 0 : index
    %c0_8 = arith.constant 0 : index
    %12 = vector.load %arg3[%c0_7, %c0_8] : memref<16x1024xbf16, #tpu.memory_space<vmem>>, vector<16x1024xbf16>
    tpu.vector_store %arg3[%c0_7, %c0_8], %11 {strides = array<i32>} : memref<16x1024xbf16, #tpu.memory_space<vmem>>, vector<16x1024xbf16>,
    return
  }
}

module attributes {stable_mosaic.version = 11 : i64} {
  func.func @_convt_bn_lrelu_kernel(%arg0: memref<32x1024xbf16, #tpu.memory_space<vmem>>, %arg1: memref<1024x512xbf16, #tpu.memory_space<vmem>>, %arg2: memref<1x512xf32, #tpu.memory_space<vmem>>, %arg3: memref<32x512xf32, #tpu.memory_space<vmem>>, %arg4: memref<512x512xf32, #tpu.memory_space<vmem>>, %arg5: memref<1x512xf32, #tpu.memory_space<vmem>>, %arg6: memref<1x512xf32, #tpu.memory_space<vmem>>, %arg7: memref<32x512xbf16, #tpu.memory_space<vmem>>) attributes {dimension_semantics = [], scalar_prefetch = 0 : i64, scratch_operands = 0 : i64, tpu.core_type = #tpu.core_type<tc>} {
    %c0 = arith.constant 0 : index
    %c0_0 = arith.constant 0 : index
    %0 = vector.load %arg0[%c0, %c0_0] : memref<32x1024xbf16, #tpu.memory_space<vmem>>, vector<32x1024xbf16>
    %c0_1 = arith.constant 0 : index
    %c0_2 = arith.constant 0 : index
    %1 = vector.load %arg1[%c0_1, %c0_2] : memref<1024x512xbf16, #tpu.memory_space<vmem>>, vector<1024x512xbf16>
    %cst = arith.constant dense<0.000000e+00> : vector<32x512xf32>
    %2 = tpu.matmul %0, %1, %cst {dimension_numbers = #tpu.dot_dimension_numbers<[1], [0], [0], [1], [0, 0, 1, 1], [], []>} : vector<32x1024xbf16>, vector<1024x512xbf16>, vector<32x512xf32> -> vector<32x512xf32>
    %c0_3 = arith.constant 0 : index
    %c0_4 = arith.constant 0 : index
    %3 = vector.load %arg2[%c0_3, %c0_4] : memref<1x512xf32, #tpu.memory_space<vmem>>, vector<1x512xf32>
    %4 = vector.broadcast %3 : vector<1x512xf32> to vector<32x512xf32>
    %5 = arith.addf %2, %4 : vector<32x512xf32>
    %c0_5 = arith.constant 0 : index
    %c0_6 = arith.constant 0 : index
    %6 = vector.load %arg3[%c0_5, %c0_6] : memref<32x512xf32, #tpu.memory_space<vmem>>, vector<32x512xf32>
    %c0_7 = arith.constant 0 : index
    %c0_8 = arith.constant 0 : index
    %7 = vector.load %arg4[%c0_7, %c0_8] : memref<512x512xf32, #tpu.memory_space<vmem>>, vector<512x512xf32>
    %8 = arith.mulf %6, %5 : vector<32x512xf32>
    %cst_9 = arith.constant dense<0.000000e+00> : vector<32x512xf32>
    %9 = tpu.matmul %8, %7, %cst_9 {dimension_numbers = #tpu.dot_dimension_numbers<[1], [0], [0], [1], [0, 0, 1, 1], [], []>} : vector<32x512xf32>, vector<512x512xf32>, vector<32x512xf32> -> vector<32x512xf32>
    %cst_10 = arith.constant dense<0.000000e+00> : vector<512xf32>
    %10 = vector.multi_reduction <add>, %9, %cst_10 [0] : vector<32x512xf32> to vector<512xf32>
    %11 = vector.shape_cast %10 : vector<512xf32> to vector<1x512xf32>
    %cst_11 = arith.constant 3.125000e-02 : f32
    %12 = vector.broadcast %cst_11 : f32 to vector<1x512xf32>
    %13 = arith.mulf %11, %12 : vector<1x512xf32>
    %14 = vector.broadcast %13 : vector<1x512xf32> to vector<32x512xf32>
    %15 = arith.subf %5, %14 : vector<32x512xf32>
    %16 = arith.mulf %6, %15 : vector<32x512xf32>
    %17 = arith.mulf %16, %15 : vector<32x512xf32>
    %cst_12 = arith.constant dense<0.000000e+00> : vector<32x512xf32>
    %18 = tpu.matmul %17, %7, %cst_12 {dimension_numbers = #tpu.dot_dimension_numbers<[1], [0], [0], [1], [0, 0, 1, 1], [], []>} : vector<32x512xf32>, vector<512x512xf32>, vector<32x512xf32> -> vector<32x512xf32>
    %cst_13 = arith.constant dense<0.000000e+00> : vector<512xf32>
    %19 = vector.multi_reduction <add>, %18, %cst_13 [0] : vector<32x512xf32> to vector<512xf32>
    %20 = vector.shape_cast %19 : vector<512xf32> to vector<1x512xf32>
    %cst_14 = arith.constant 3.125000e-02 : f32
    %21 = vector.broadcast %cst_14 : f32 to vector<1x512xf32>
    %22 = arith.mulf %20, %21 : vector<1x512xf32>
    %cst_15 = arith.constant 9.99999974E-6 : f32
    %23 = vector.broadcast %cst_15 : f32 to vector<1x512xf32>
    %24 = arith.addf %22, %23 : vector<1x512xf32>
    %25 = math.rsqrt %24 : vector<1x512xf32>
    %26 = vector.broadcast %25 : vector<1x512xf32> to vector<32x512xf32>
    %27 = arith.mulf %15, %26 : vector<32x512xf32>
    %c0_16 = arith.constant 0 : index
    %c0_17 = arith.constant 0 : index
    %28 = vector.load %arg5[%c0_16, %c0_17] : memref<1x512xf32, #tpu.memory_space<vmem>>, vector<1x512xf32>
    %29 = vector.broadcast %28 : vector<1x512xf32> to vector<32x512xf32>
    %30 = arith.mulf %27, %29 : vector<32x512xf32>
    %c0_18 = arith.constant 0 : index
    %c0_19 = arith.constant 0 : index
    %31 = vector.load %arg6[%c0_18, %c0_19] : memref<1x512xf32, #tpu.memory_space<vmem>>, vector<1x512xf32>
    %32 = vector.broadcast %31 : vector<1x512xf32> to vector<32x512xf32>
    %33 = arith.addf %30, %32 : vector<32x512xf32>
    %cst_20 = arith.constant 0.000000e+00 : f32
    %34 = vector.broadcast %cst_20 : f32 to vector<32x512xf32>
    %35 = arith.cmpf ogt, %33, %34 : vector<32x512xf32>
    %cst_21 = arith.constant 2.000000e-01 : f32
    %36 = vector.broadcast %cst_21 : f32 to vector<32x512xf32>
    %37 = arith.mulf %36, %33 : vector<32x512xf32>
    %38 = arith.select %35, %33, %37 : vector<32x512xi1>, vector<32x512xf32>
    %39 = arith.truncf %38 : vector<32x512xf32> to vector<32x512xbf16>
    %c0_22 = arith.constant 0 : index
    %c0_23 = arith.constant 0 : index
    %40 = vector.load %arg7[%c0_22, %c0_23] : memref<32x512xbf16, #tpu.memory_space<vmem>>, vector<32x512xbf16>
    tpu.vector_store %arg7[%c0_22, %c0_23], %39 {strides = array<i32>} : memref<32x512xbf16, #tpu.memory_space<vmem>>, vector<32x512xbf16>,
    return
  }
}

module attributes {stable_mosaic.version = 11 : i64} {
  func.func @_convt_bn_lrelu_kernel(%arg0: memref<64x512xbf16, #tpu.memory_space<vmem>>, %arg1: memref<512x256xbf16, #tpu.memory_space<vmem>>, %arg2: memref<1x256xf32, #tpu.memory_space<vmem>>, %arg3: memref<64x256xf32, #tpu.memory_space<vmem>>, %arg4: memref<256x256xf32, #tpu.memory_space<vmem>>, %arg5: memref<1x256xf32, #tpu.memory_space<vmem>>, %arg6: memref<1x256xf32, #tpu.memory_space<vmem>>, %arg7: memref<64x256xbf16, #tpu.memory_space<vmem>>) attributes {dimension_semantics = [], scalar_prefetch = 0 : i64, scratch_operands = 0 : i64, tpu.core_type = #tpu.core_type<tc>} {
    %c0 = arith.constant 0 : index
    %c0_0 = arith.constant 0 : index
    %0 = vector.load %arg0[%c0, %c0_0] : memref<64x512xbf16, #tpu.memory_space<vmem>>, vector<64x512xbf16>
    %c0_1 = arith.constant 0 : index
    %c0_2 = arith.constant 0 : index
    %1 = vector.load %arg1[%c0_1, %c0_2] : memref<512x256xbf16, #tpu.memory_space<vmem>>, vector<512x256xbf16>
    %cst = arith.constant dense<0.000000e+00> : vector<64x256xf32>
    %2 = tpu.matmul %0, %1, %cst {dimension_numbers = #tpu.dot_dimension_numbers<[1], [0], [0], [1], [0, 0, 1, 1], [], []>} : vector<64x512xbf16>, vector<512x256xbf16>, vector<64x256xf32> -> vector<64x256xf32>
    %c0_3 = arith.constant 0 : index
    %c0_4 = arith.constant 0 : index
    %3 = vector.load %arg2[%c0_3, %c0_4] : memref<1x256xf32, #tpu.memory_space<vmem>>, vector<1x256xf32>
    %4 = vector.broadcast %3 : vector<1x256xf32> to vector<64x256xf32>
    %5 = arith.addf %2, %4 : vector<64x256xf32>
    %c0_5 = arith.constant 0 : index
    %c0_6 = arith.constant 0 : index
    %6 = vector.load %arg3[%c0_5, %c0_6] : memref<64x256xf32, #tpu.memory_space<vmem>>, vector<64x256xf32>
    %c0_7 = arith.constant 0 : index
    %c0_8 = arith.constant 0 : index
    %7 = vector.load %arg4[%c0_7, %c0_8] : memref<256x256xf32, #tpu.memory_space<vmem>>, vector<256x256xf32>
    %8 = arith.mulf %6, %5 : vector<64x256xf32>
    %cst_9 = arith.constant dense<0.000000e+00> : vector<64x256xf32>
    %9 = tpu.matmul %8, %7, %cst_9 {dimension_numbers = #tpu.dot_dimension_numbers<[1], [0], [0], [1], [0, 0, 1, 1], [], []>} : vector<64x256xf32>, vector<256x256xf32>, vector<64x256xf32> -> vector<64x256xf32>
    %cst_10 = arith.constant dense<0.000000e+00> : vector<256xf32>
    %10 = vector.multi_reduction <add>, %9, %cst_10 [0] : vector<64x256xf32> to vector<256xf32>
    %11 = vector.shape_cast %10 : vector<256xf32> to vector<1x256xf32>
    %cst_11 = arith.constant 7.812500e-03 : f32
    %12 = vector.broadcast %cst_11 : f32 to vector<1x256xf32>
    %13 = arith.mulf %11, %12 : vector<1x256xf32>
    %14 = vector.broadcast %13 : vector<1x256xf32> to vector<64x256xf32>
    %15 = arith.subf %5, %14 : vector<64x256xf32>
    %16 = arith.mulf %6, %15 : vector<64x256xf32>
    %17 = arith.mulf %16, %15 : vector<64x256xf32>
    %cst_12 = arith.constant dense<0.000000e+00> : vector<64x256xf32>
    %18 = tpu.matmul %17, %7, %cst_12 {dimension_numbers = #tpu.dot_dimension_numbers<[1], [0], [0], [1], [0, 0, 1, 1], [], []>} : vector<64x256xf32>, vector<256x256xf32>, vector<64x256xf32> -> vector<64x256xf32>
    %cst_13 = arith.constant dense<0.000000e+00> : vector<256xf32>
    %19 = vector.multi_reduction <add>, %18, %cst_13 [0] : vector<64x256xf32> to vector<256xf32>
    %20 = vector.shape_cast %19 : vector<256xf32> to vector<1x256xf32>
    %cst_14 = arith.constant 7.812500e-03 : f32
    %21 = vector.broadcast %cst_14 : f32 to vector<1x256xf32>
    %22 = arith.mulf %20, %21 : vector<1x256xf32>
    %cst_15 = arith.constant 9.99999974E-6 : f32
    %23 = vector.broadcast %cst_15 : f32 to vector<1x256xf32>
    %24 = arith.addf %22, %23 : vector<1x256xf32>
    %25 = math.rsqrt %24 : vector<1x256xf32>
    %26 = vector.broadcast %25 : vector<1x256xf32> to vector<64x256xf32>
    %27 = arith.mulf %15, %26 : vector<64x256xf32>
    %c0_16 = arith.constant 0 : index
    %c0_17 = arith.constant 0 : index
    %28 = vector.load %arg5[%c0_16, %c0_17] : memref<1x256xf32, #tpu.memory_space<vmem>>, vector<1x256xf32>
    %29 = vector.broadcast %28 : vector<1x256xf32> to vector<64x256xf32>
    %30 = arith.mulf %27, %29 : vector<64x256xf32>
    %c0_18 = arith.constant 0 : index
    %c0_19 = arith.constant 0 : index
    %31 = vector.load %arg6[%c0_18, %c0_19] : memref<1x256xf32, #tpu.memory_space<vmem>>, vector<1x256xf32>
    %32 = vector.broadcast %31 : vector<1x256xf32> to vector<64x256xf32>
    %33 = arith.addf %30, %32 : vector<64x256xf32>
    %cst_20 = arith.constant 0.000000e+00 : f32
    %34 = vector.broadcast %cst_20 : f32 to vector<64x256xf32>
    %35 = arith.cmpf ogt, %33, %34 : vector<64x256xf32>
    %cst_21 = arith.constant 2.000000e-01 : f32
    %36 = vector.broadcast %cst_21 : f32 to vector<64x256xf32>
    %37 = arith.mulf %36, %33 : vector<64x256xf32>
    %38 = arith.select %35, %33, %37 : vector<64x256xi1>, vector<64x256xf32>
    %39 = arith.truncf %38 : vector<64x256xf32> to vector<64x256xbf16>
    %c0_22 = arith.constant 0 : index
    %c0_23 = arith.constant 0 : index
    %40 = vector.load %arg7[%c0_22, %c0_23] : memref<64x256xbf16, #tpu.memory_space<vmem>>, vector<64x256xbf16>
    tpu.vector_store %arg7[%c0_22, %c0_23], %39 {strides = array<i32>} : memref<64x256xbf16, #tpu.memory_space<vmem>>, vector<64x256xbf16>,
    return
  }
}

module attributes {stable_mosaic.version = 11 : i64} {
  func.func @_convt_bn_lrelu_kernel(%arg0: memref<176x256xbf16, #tpu.memory_space<vmem>>, %arg1: memref<256x128xbf16, #tpu.memory_space<vmem>>, %arg2: memref<1x128xf32, #tpu.memory_space<vmem>>, %arg3: memref<176x128xf32, #tpu.memory_space<vmem>>, %arg4: memref<128x128xf32, #tpu.memory_space<vmem>>, %arg5: memref<1x128xf32, #tpu.memory_space<vmem>>, %arg6: memref<1x128xf32, #tpu.memory_space<vmem>>, %arg7: memref<176x128xbf16, #tpu.memory_space<vmem>>) attributes {dimension_semantics = [], scalar_prefetch = 0 : i64, scratch_operands = 0 : i64, tpu.core_type = #tpu.core_type<tc>} {
    %c0 = arith.constant 0 : index
    %c0_0 = arith.constant 0 : index
    %0 = vector.load %arg0[%c0, %c0_0] : memref<176x256xbf16, #tpu.memory_space<vmem>>, vector<176x256xbf16>
    %c0_1 = arith.constant 0 : index
    %c0_2 = arith.constant 0 : index
    %1 = vector.load %arg1[%c0_1, %c0_2] : memref<256x128xbf16, #tpu.memory_space<vmem>>, vector<256x128xbf16>
    %cst = arith.constant dense<0.000000e+00> : vector<176x128xf32>
    %2 = tpu.matmul %0, %1, %cst {dimension_numbers = #tpu.dot_dimension_numbers<[1], [0], [0], [1], [0, 0, 1, 1], [], []>} : vector<176x256xbf16>, vector<256x128xbf16>, vector<176x128xf32> -> vector<176x128xf32>
    %c0_3 = arith.constant 0 : index
    %c0_4 = arith.constant 0 : index
    %3 = vector.load %arg2[%c0_3, %c0_4] : memref<1x128xf32, #tpu.memory_space<vmem>>, vector<1x128xf32>
    %4 = vector.broadcast %3 : vector<1x128xf32> to vector<176x128xf32>
    %5 = arith.addf %2, %4 : vector<176x128xf32>
    %c0_5 = arith.constant 0 : index
    %c0_6 = arith.constant 0 : index
    %6 = vector.load %arg3[%c0_5, %c0_6] : memref<176x128xf32, #tpu.memory_space<vmem>>, vector<176x128xf32>
    %c0_7 = arith.constant 0 : index
    %c0_8 = arith.constant 0 : index
    %7 = vector.load %arg4[%c0_7, %c0_8] : memref<128x128xf32, #tpu.memory_space<vmem>>, vector<128x128xf32>
    %8 = arith.mulf %6, %5 : vector<176x128xf32>
    %cst_9 = arith.constant dense<0.000000e+00> : vector<176x128xf32>
    %9 = tpu.matmul %8, %7, %cst_9 {dimension_numbers = #tpu.dot_dimension_numbers<[1], [0], [0], [1], [0, 0, 1, 1], [], []>} : vector<176x128xf32>, vector<128x128xf32>, vector<176x128xf32> -> vector<176x128xf32>
    %cst_10 = arith.constant dense<0.000000e+00> : vector<128xf32>
    %10 = vector.multi_reduction <add>, %9, %cst_10 [0] : vector<176x128xf32> to vector<128xf32>
    %11 = vector.shape_cast %10 : vector<128xf32> to vector<1x128xf32>
    %cst_11 = arith.constant 0.001953125 : f32
    %12 = vector.broadcast %cst_11 : f32 to vector<1x128xf32>
    %13 = arith.mulf %11, %12 : vector<1x128xf32>
    %14 = vector.broadcast %13 : vector<1x128xf32> to vector<176x128xf32>
    %15 = arith.subf %5, %14 : vector<176x128xf32>
    %16 = arith.mulf %6, %15 : vector<176x128xf32>
    %17 = arith.mulf %16, %15 : vector<176x128xf32>
    %cst_12 = arith.constant dense<0.000000e+00> : vector<176x128xf32>
    %18 = tpu.matmul %17, %7, %cst_12 {dimension_numbers = #tpu.dot_dimension_numbers<[1], [0], [0], [1], [0, 0, 1, 1], [], []>} : vector<176x128xf32>, vector<128x128xf32>, vector<176x128xf32> -> vector<176x128xf32>
    %cst_13 = arith.constant dense<0.000000e+00> : vector<128xf32>
    %19 = vector.multi_reduction <add>, %18, %cst_13 [0] : vector<176x128xf32> to vector<128xf32>
    %20 = vector.shape_cast %19 : vector<128xf32> to vector<1x128xf32>
    %cst_14 = arith.constant 0.001953125 : f32
    %21 = vector.broadcast %cst_14 : f32 to vector<1x128xf32>
    %22 = arith.mulf %20, %21 : vector<1x128xf32>
    %cst_15 = arith.constant 9.99999974E-6 : f32
    %23 = vector.broadcast %cst_15 : f32 to vector<1x128xf32>
    %24 = arith.addf %22, %23 : vector<1x128xf32>
    %25 = math.rsqrt %24 : vector<1x128xf32>
    %26 = vector.broadcast %25 : vector<1x128xf32> to vector<176x128xf32>
    %27 = arith.mulf %15, %26 : vector<176x128xf32>
    %c0_16 = arith.constant 0 : index
    %c0_17 = arith.constant 0 : index
    %28 = vector.load %arg5[%c0_16, %c0_17] : memref<1x128xf32, #tpu.memory_space<vmem>>, vector<1x128xf32>
    %29 = vector.broadcast %28 : vector<1x128xf32> to vector<176x128xf32>
    %30 = arith.mulf %27, %29 : vector<176x128xf32>
    %c0_18 = arith.constant 0 : index
    %c0_19 = arith.constant 0 : index
    %31 = vector.load %arg6[%c0_18, %c0_19] : memref<1x128xf32, #tpu.memory_space<vmem>>, vector<1x128xf32>
    %32 = vector.broadcast %31 : vector<1x128xf32> to vector<176x128xf32>
    %33 = arith.addf %30, %32 : vector<176x128xf32>
    %cst_20 = arith.constant 0.000000e+00 : f32
    %34 = vector.broadcast %cst_20 : f32 to vector<176x128xf32>
    %35 = arith.cmpf ogt, %33, %34 : vector<176x128xf32>
    %cst_21 = arith.constant 2.000000e-01 : f32
    %36 = vector.broadcast %cst_21 : f32 to vector<176x128xf32>
    %37 = arith.mulf %36, %33 : vector<176x128xf32>
    %38 = arith.select %35, %33, %37 : vector<176x128xi1>, vector<176x128xf32>
    %39 = arith.truncf %38 : vector<176x128xf32> to vector<176x128xbf16>
    %c0_22 = arith.constant 0 : index
    %c0_23 = arith.constant 0 : index
    %40 = vector.load %arg7[%c0_22, %c0_23] : memref<176x128xbf16, #tpu.memory_space<vmem>>, vector<176x128xbf16>
    tpu.vector_store %arg7[%c0_22, %c0_23], %39 {strides = array<i32>} : memref<176x128xbf16, #tpu.memory_space<vmem>>, vector<176x128xbf16>,
    return
  }
}

module attributes {stable_mosaic.version = 11 : i64} {
  func.func @_convt_act_kernel(%arg0: memref<592x128xbf16, #tpu.memory_space<vmem>>, %arg1: memref<128x128xbf16, #tpu.memory_space<vmem>>, %arg2: memref<1x128xf32, #tpu.memory_space<vmem>>, %arg3: memref<592x128xf32, #tpu.memory_space<vmem>>) attributes {dimension_semantics = [], scalar_prefetch = 0 : i64, scratch_operands = 0 : i64, tpu.core_type = #tpu.core_type<tc>} {
    %c0 = arith.constant 0 : index
    %c0_0 = arith.constant 0 : index
    %0 = vector.load %arg0[%c0, %c0_0] : memref<592x128xbf16, #tpu.memory_space<vmem>>, vector<592x128xbf16>
    %c0_1 = arith.constant 0 : index
    %c0_2 = arith.constant 0 : index
    %1 = vector.load %arg1[%c0_1, %c0_2] : memref<128x128xbf16, #tpu.memory_space<vmem>>, vector<128x128xbf16>
    %cst = arith.constant dense<0.000000e+00> : vector<592x128xf32>
    %2 = tpu.matmul %0, %1, %cst {dimension_numbers = #tpu.dot_dimension_numbers<[1], [0], [0], [1], [0, 0, 1, 1], [], []>} : vector<592x128xbf16>, vector<128x128xbf16>, vector<592x128xf32> -> vector<592x128xf32>
    %c0_3 = arith.constant 0 : index
    %c0_4 = arith.constant 0 : index
    %3 = vector.load %arg2[%c0_3, %c0_4] : memref<1x128xf32, #tpu.memory_space<vmem>>, vector<1x128xf32>
    %4 = vector.broadcast %3 : vector<1x128xf32> to vector<592x128xf32>
    %5 = arith.addf %2, %4 : vector<592x128xf32>
    %6 = math.tanh %5 : vector<592x128xf32>
    %c0_5 = arith.constant 0 : index
    %c0_6 = arith.constant 0 : index
    %7 = vector.load %arg3[%c0_5, %c0_6] : memref<592x128xf32, #tpu.memory_space<vmem>>, vector<592x128xf32>
    tpu.vector_store %arg3[%c0_5, %c0_6], %6 {strides = array<i32>} : memref<592x128xf32, #tpu.memory_space<vmem>>, vector<592x128xf32>,
    return
  }
}

</mosaic_0001>

<llo_original>
// kernel: generator_forward.5
$region0: #{generator_forward.5}
  #allocation0 [shape = 'u32[]', space=smem, size = 0x4, offset = 0x4, fixed_abs, tag = 'smem constant byte address 0x4 - core index']
  #allocation1 [shape = 'u32[144,128]{1,0:T(1,128)}', space=vmem, size = 0x12000, scoped, tag = 'internal scratch']
  %s0 = inlined_call_operand.vmem [shape: bf16[16,256], index: 0, kind: input, shape index: {}]
  %s1 = inlined_call_operand.vmem [shape: bf16[256,1024], index: 1, kind: input, shape index: {}]
  %s2 = inlined_call_operand.vmem [shape: f32[1,1024], index: 2, kind: input, shape index: {}]
  %s3 = inlined_call_operand.vmem [shape: bf16[16,1024], index: 3, kind: output, shape index: {}]
  %s4 = sld [smem:[#allocation0]]
  $region22: #{generator_forward.5} parent=0
    _
  %s6 = ssub.s32 1, %s4
  %s7 = scalar_select 0, %s6, %s4
  // Predicated region
  $region2: #{generator_forward.5} parent=0 // pred_check
    _
  $region3: #{generator_forward.5} parent=0 // pred_check_branch
    %9 = sbr.rel (0) target = $region5
  $region4: #{generator_forward.5} parent=0 // pred_region
    _
  $region5: #{generator_forward.5} parent=0 // pred_fallthru
    _
  // Predicated region
  $region6: #{generator_forward.5} parent=0 // pred_check
    _
  $region7: #{generator_forward.5} parent=0 // pred_check_branch
    %11 = sbr.rel (0) target = $region9
  $region8: #{generator_forward.5} parent=0 // pred_region
    _
  $region9: #{generator_forward.5} parent=0 // pred_fallthru
    _
  // Predicated region
  $region10: #{generator_forward.5} parent=0 // pred_check
    _
  $region11: #{generator_forward.5} parent=0 // pred_check_branch
    %13 = sbr.rel (0) target = $region13
  $region12: #{generator_forward.5} parent=0 // pred_region
    _
  $region13: #{generator_forward.5} parent=0 // pred_fallthru
    _
  %v14 = vld [vmem:[%s0] sm:$0xff]
  %v15 = vld [vmem:[%s0 + $0x8] sm:$0xff]
  %v16 = vld [vmem:[%s1] sm:$0xff]
  %v17 = vld [vmem:[%s1 + $0x8] sm:$0xff]
  %v18 = vld [vmem:[%s1 + $0x10] sm:$0xff]
  %v19 = vld [vmem:[%s1 + $0x18] sm:$0xff]
  %v20 = vld [vmem:[%s1 + $0x20] sm:$0xff]
  %v21 = vld [vmem:[%s1 + $0x28] sm:$0xff]
  %v22 = vld [vmem:[%s1 + $0x30] sm:$0xff]
  %v23 = vld [vmem:[%s1 + $0x38] sm:$0xff]
  %v24 = vld [vmem:[%s1 + $0x40] sm:$0xff]
  %v25 = vld [vmem:[%s1 + $0x48] sm:$0xff]
  %v26 = vld [vmem:[%s1 + $0x50] sm:$0xff]
  %v27 = vld [vmem:[%s1 + $0x58] sm:$0xff]
  %v28 = vld [vmem:[%s1 + $0x60] sm:$0xff]
  %v29 = vld [vmem:[%s1 + $0x68] sm:$0xff]
  %v30 = vld [vmem:[%s1 + $0x70] sm:$0xff]
  %v31 = vld [vmem:[%s1 + $0x78] sm:$0xff]
  %v32 = vld [vmem:[%s1 + $0x80] sm:$0xff]
  %v33 = vld [vmem:[%s1 + $0x88] sm:$0xff]
  %v34 = vld [vmem:[%s1 + $0x90] sm:$0xff]
  %v35 = vld [vmem:[%s1 + $0x98] sm:$0xff]
  %v36 = vld [vmem:[%s1 + $0xa0] sm:$0xff]
  %v37 = vld [vmem:[%s1 + $0xa8] sm:$0xff]
  %v38 = vld [vmem:[%s1 + $0xb0] sm:$0xff]
  %v39 = vld [vmem:[%s1 + $0xb8] sm:$0xff]
  %v40 = vld [vmem:[%s1 + $0xc0] sm:$0xff]
  %v41 = vld [vmem:[%s1 + $0xc8] sm:$0xff]
  %v42 = vld [vmem:[%s1 + $0xd0] sm:$0xff]
  %v43 = vld [vmem:[%s1 + $0xd8] sm:$0xff]
  %v44 = vld [vmem:[%s1 + $0xe0] sm:$0xff]
  %v45 = vld [vmem:[%s1 + $0xe8] sm:$0xff]
  %v46 = vld [vmem:[%s1 + $0xf0] sm:$0xff]
  %v47 = vld [vmem:[%s1 + $0xf8] sm:$0xff]
  %v48 = vld [vmem:[%s1 + $0x100] sm:$0xff]
  %v49 = vld [vmem:[%s1 + $0x108] sm:$0xff]
  %v50 = vld [vmem:[%s1 + $0x110] sm:$0xff]
  %v51 = vld [vmem:[%s1 + $0x118] sm:$0xff]
  %v52 = vld [vmem:[%s1 + $0x120] sm:$0xff]
  %v53 = vld [vmem:[%s1 + $0x128] sm:$0xff]
  %v54 = vld [vmem:[%s1 + $0x130] sm:$0xff]
  %v55 = vld [vmem:[%s1 + $0x138] sm:$0xff]
  %v56 = vld [vmem:[%s1 + $0x140] sm:$0xff]
  %v57 = vld [vmem:[%s1 + $0x148] sm:$0xff]
  %v58 = vld [vmem:[%s1 + $0x150] sm:$0xff]
  %v59 = vld [vmem:[%s1 + $0x158] sm:$0xff]
  %v60 = vld [vmem:[%s1 + $0x160] sm:$0xff]
  %v61 = vld [vmem:[%s1 + $0x168] sm:$0xff]
  %v62 = vld [vmem:[%s1 + $0x170] sm:$0xff]
  %v63 = vld [vmem:[%s1 + $0x178] sm:$0xff]
  %v64 = vld [vmem:[%s1 + $0x180] sm:$0xff]
  %v65 = vld [vmem:[%s1 + $0x188] sm:$0xff]
  %v66 = vld [vmem:[%s1 + $0x190] sm:$0xff]
  %v67 = vld [vmem:[%s1 + $0x198] sm:$0xff]
  %v68 = vld [vmem:[%s1 + $0x1a0] sm:$0xff]
  %v69 = vld [vmem:[%s1 + $0x1a8] sm:$0xff]
  %v70 = vld [vmem:[%s1 + $0x1b0] sm:$0xff]
  %v71 = vld [vmem:[%s1 + $0x1b8] sm:$0xff]
  %v72 = vld [vmem:[%s1 + $0x1c0] sm:$0xff]
  %v73 = vld [vmem:[%s1 + $0x1c8] sm:$0xff]
  %v74 = vld [vmem:[%s1 + $0x1d0] sm:$0xff]
  %v75 = vld [vmem:[%s1 + $0x1d8] sm:$0xff]
  %v76 = vld [vmem:[%s1 + $0x1e0] sm:$0xff]
  %v77 = vld [vmem:[%s1 + $0x1e8] sm:$0xff]
  %v78 = vld [vmem:[%s1 + $0x1f0] sm:$0xff]
  %v79 = vld [vmem:[%s1 + $0x1f8] sm:$0xff]
  %v80 = vld [vmem:[%s1 + $0x200] sm:$0xff]
  %v81 = vld [vmem:[%s1 + $0x208] sm:$0xff]
  %v82 = vld [vmem:[%s1 + $0x210] sm:$0xff]
  %v83 = vld [vmem:[%s1 + $0x218] sm:$0xff]
  %v84 = vld [vmem:[%s1 + $0x220] sm:$0xff]
  %v85 = vld [vmem:[%s1 + $0x228] sm:$0xff]
  %v86 = vld [vmem:[%s1 + $0x230] sm:$0xff]
  %v87 = vld [vmem:[%s1 + $0x238] sm:$0xff]
  %v88 = vld [vmem:[%s1 + $0x240] sm:$0xff]
  %v89 = vld [vmem:[%s1 + $0x248] sm:$0xff]
  %v90 = vld [vmem:[%s1 + $0x250] sm:$0xff]
  %v91 = vld [vmem:[%s1 + $0x258] sm:$0xff]
  %v92 = vld [vmem:[%s1 + $0x260] sm:$0xff]
  %v93 = vld [vmem:[%s1 + $0x268] sm:$0xff]
  %v94 = vld [vmem:[%s1 + $0x270] sm:$0xff]
  %v95 = vld [vmem:[%s1 + $0x278] sm:$0xff]
  %v96 = vld [vmem:[%s1 + $0x280] sm:$0xff]
  %v97 = vld [vmem:[%s1 + $0x288] sm:$0xff]
  %v98 = vld [vmem:[%s1 + $0x290] sm:$0xff]
  %v99 = vld [vmem:[%s1 + $0x298] sm:$0xff]
  %v100 = vld [vmem:[%s1 + $0x2a0] sm:$0xff]
  %v101 = vld [vmem:[%s1 + $0x2a8] sm:$0xff]
  %v102 = vld [vmem:[%s1 + $0x2b0] sm:$0xff]
  %v103 = vld [vmem:[%s1 + $0x2b8] sm:$0xff]
  %v104 = vld [vmem:[%s1 + $0x2c0] sm:$0xff]
  %v105 = vld [vmem:[%s1 + $0x2c8] sm:$0xff]
  %v106 = vld [vmem:[%s1 + $0x2d0] sm:$0xff]
  %v107 = vld [vmem:[%s1 + $0x2d8] sm:$0xff]
  %v108 = vld [vmem:[%s1 + $0x2e0] sm:$0xff]
  %v109 = vld [vmem:[%s1 + $0x2e8] sm:$0xff]
  %v110 = vld [vmem:[%s1 + $0x2f0] sm:$0xff]
  %v111 = vld [vmem:[%s1 + $0x2f8] sm:$0xff]
  %v112 = vld [vmem:[%s1 + $0x300] sm:$0xff]
  %v113 = vld [vmem:[%s1 + $0x308] sm:$0xff]
  %v114 = vld [vmem:[%s1 + $0x310] sm:$0xff]
  %v115 = vld [vmem:[%s1 + $0x318] sm:$0xff]
  %v116 = vld [vmem:[%s1 + $0x320] sm:$0xff]
  %v117 = vld [vmem:[%s1 + $0x328] sm:$0xff]
  %v118 = vld [vmem:[%s1 + $0x330] sm:$0xff]
  %v119 = vld [vmem:[%s1 + $0x338] sm:$0xff]
  %v120 = vld [vmem:[%s1 + $0x340] sm:$0xff]
  %v121 = vld [vmem:[%s1 + $0x348] sm:$0xff]
  %v122 = vld [vmem:[%s1 + $0x350] sm:$0xff]
  %v123 = vld [vmem:[%s1 + $0x358] sm:$0xff]
  %v124 = vld [vmem:[%s1 + $0x360] sm:$0xff]
  %v125 = vld [vmem:[%s1 + $0x368] sm:$0xff]
  %v126 = vld [vmem:[%s1 + $0x370] sm:$0xff]
  %v127 = vld [vmem:[%s1 + $0x378] sm:$0xff]
  %v128 = vld [vmem:[%s1 + $0x380] sm:$0xff]
  %v129 = vld [vmem:[%s1 + $0x388] sm:$0xff]
  %v130 = vld [vmem:[%s1 + $0x390] sm:$0xff]
  %v131 = vld [vmem:[%s1 + $0x398] sm:$0xff]
  %v132 = vld [vmem:[%s1 + $0x3a0] sm:$0xff]
  %v133 = vld [vmem:[%s1 + $0x3a8] sm:$0xff]
  %v134 = vld [vmem:[%s1 + $0x3b0] sm:$0xff]
  %v135 = vld [vmem:[%s1 + $0x3b8] sm:$0xff]
  %v136 = vld [vmem:[%s1 + $0x3c0] sm:$0xff]
  %v137 = vld [vmem:[%s1 + $0x3c8] sm:$0xff]
  %v138 = vld [vmem:[%s1 + $0x3d0] sm:$0xff]
  %v139 = vld [vmem:[%s1 + $0x3d8] sm:$0xff]
  %v140 = vld [vmem:[%s1 + $0x3e0] sm:$0xff]
  %v141 = vld [vmem:[%s1 + $0x3e8] sm:$0xff]
  %v142 = vld [vmem:[%s1 + $0x3f0] sm:$0xff]
  %v143 = vld [vmem:[%s1 + $0x3f8] sm:$0xff]
  %v144 = vld [vmem:[%s2] sm:$0xff]
  %v146 = vlaneseq
  %v147 = vshrl.u32 %v146, 7
  %v148 = vsub.s32 0, %v147
  %v149 = vrot.slane %v144, %v148
  %v150 = vlaneseq
  %v151 = vshrl.u32 %v150, 7
  %v152 = vsub.s32 1, %v151
  %v153 = vrot.slane %v144, %v152
  %v154 = vlaneseq
  %v155 = vshrl.u32 %v154, 7
  %v156 = vsub.s32 2, %v155
  %v157 = vrot.slane %v144, %v156
  %v158 = vlaneseq
  %v159 = vshrl.u32 %v158, 7
  %v160 = vsub.s32 3, %v159
  %v161 = vrot.slane %v144, %v160
  %v162 = vlaneseq
  %v163 = vshrl.u32 %v162, 7
  %v164 = vsub.s32 4, %v163
  %v165 = vrot.slane %v144, %v164
  %v166 = vlaneseq
  %v167 = vshrl.u32 %v166, 7
  %v168 = vsub.s32 5, %v167
  %v169 = vrot.slane %v144, %v168
  %v170 = vlaneseq
  %v171 = vshrl.u32 %v170, 7
  %v172 = vsub.s32 6, %v171
  %v173 = vrot.slane %v144, %v172
  %v174 = vlaneseq
  %v175 = vshrl.u32 %v174, 7
  %v176 = vsub.s32 7, %v175
  %v177 = vrot.slane %v144, %v176
  %v188 = vunpack.c.l.b16 %v14
  %v189 = vunpack.c.h.b16 %v14
  %v190 = vunpack.c.l.b16 %v15
  %v191 = vunpack.c.h.b16 %v15
  %v192 = vpack.c.b16 %v190, %v188
  %v193 = vpack.c.b16 %v191, %v189
  %v324 = vunpack.c.l.b16 %v16
  %v325 = vunpack.c.h.b16 %v16
  %v326 = vunpack.c.l.b16 %v17
  %v327 = vunpack.c.h.b16 %v17
  %v328 = vunpack.c.l.b16 %v18
  %v329 = vunpack.c.h.b16 %v18
  %v330 = vunpack.c.l.b16 %v19
  %v331 = vunpack.c.h.b16 %v19
  %v332 = vunpack.c.l.b16 %v20
  %v333 = vunpack.c.h.b16 %v20
  %v334 = vunpack.c.l.b16 %v21
  %v335 = vunpack.c.h.b16 %v21
  %v336 = vunpack.c.l.b16 %v22
  %v337 = vunpack.c.h.b16 %v22
  %v338 = vunpack.c.l.b16 %v23
  %v339 = vunpack.c.h.b16 %v23
  %v340 = vunpack.c.l.b16 %v24
  %v341 = vunpack.c.h.b16 %v24
  %v342 = vunpack.c.l.b16 %v25
  %v343 = vunpack.c.h.b16 %v25
  %v344 = vunpack.c.l.b16 %v26
  %v345 = vunpack.c.h.b16 %v26
  %v346 = vunpack.c.l.b16 %v27
  %v347 = vunpack.c.h.b16 %v27
  %v348 = vunpack.c.l.b16 %v28
  %v349 = vunpack.c.h.b16 %v28
  %v350 = vunpack.c.l.b16 %v29
  %v351 = vunpack.c.h.b16 %v29
  %v352 = vunpack.c.l.b16 %v30
  %v353 = vunpack.c.h.b16 %v30
  %v354 = vunpack.c.l.b16 %v31
  %v355 = vunpack.c.h.b16 %v31
  %v356 = vunpack.c.l.b16 %v32
  %v357 = vunpack.c.h.b16 %v32
  %v358 = vunpack.c.l.b16 %v33
  %v359 = vunpack.c.h.b16 %v33
  %v360 = vunpack.c.l.b16 %v34
  %v361 = vunpack.c.h.b16 %v34
  %v362 = vunpack.c.l.b16 %v35
  %v363 = vunpack.c.h.b16 %v35
  %v364 = vunpack.c.l.b16 %v36
  %v365 = vunpack.c.h.b16 %v36
  %v366 = vunpack.c.l.b16 %v37
  %v367 = vunpack.c.h.b16 %v37
  %v368 = vunpack.c.l.b16 %v38
  %v369 = vunpack.c.h.b16 %v38
  %v370 = vunpack.c.l.b16 %v39
  %v371 = vunpack.c.h.b16 %v39
  %v372 = vunpack.c.l.b16 %v40
  %v373 = vunpack.c.h.b16 %v40
  %v374 = vunpack.c.l.b16 %v41
  %v375 = vunpack.c.h.b16 %v41
  %v376 = vunpack.c.l.b16 %v42
  %v377 = vunpack.c.h.b16 %v42
  %v378 = vunpack.c.l.b16 %v43
  %v379 = vunpack.c.h.b16 %v43
  %v380 = vunpack.c.l.b16 %v44
  %v381 = vunpack.c.h.b16 %v44
  %v382 = vunpack.c.l.b16 %v45
  %v383 = vunpack.c.h.b16 %v45
  %v384 = vunpack.c.l.b16 %v46
  %v385 = vunpack.c.h.b16 %v46
  %v386 = vunpack.c.l.b16 %v47
  %v387 = vunpack.c.h.b16 %v47
  %v388 = vunpack.c.l.b16 %v48
  %v389 = vunpack.c.h.b16 %v48
  %v390 = vunpack.c.l.b16 %v49
  %v391 = vunpack.c.h.b16 %v49
  %v392 = vunpack.c.l.b16 %v50
  %v393 = vunpack.c.h.b16 %v50
  %v394 = vunpack.c.l.b16 %v51
  %v395 = vunpack.c.h.b16 %v51
  %v396 = vunpack.c.l.b16 %v52
  %v397 = vunpack.c.h.b16 %v52
  %v398 = vunpack.c.l.b16 %v53
  %v399 = vunpack.c.h.b16 %v53
  %v400 = vunpack.c.l.b16 %v54
  %v401 = vunpack.c.h.b16 %v54
  %v402 = vunpack.c.l.b16 %v55
  %v403 = vunpack.c.h.b16 %v55
  %v404 = vunpack.c.l.b16 %v56
  %v405 = vunpack.c.h.b16 %v56
  %v406 = vunpack.c.l.b16 %v57
  %v407 = vunpack.c.h.b16 %v57
  %v408 = vunpack.c.l.b16 %v58
  %v409 = vunpack.c.h.b16 %v58
  %v410 = vunpack.c.l.b16 %v59
  %v411 = vunpack.c.h.b16 %v59
  %v412 = vunpack.c.l.b16 %v60
  %v413 = vunpack.c.h.b16 %v60
  %v414 = vunpack.c.l.b16 %v61
  %v415 = vunpack.c.h.b16 %v61
  %v416 = vunpack.c.l.b16 %v62
  %v417 = vunpack.c.h.b16 %v62
  %v418 = vunpack.c.l.b16 %v63
  %v419 = vunpack.c.h.b16 %v63
  %v420 = vunpack.c.l.b16 %v64
  %v421 = vunpack.c.h.b16 %v64
  %v422 = vunpack.c.l.b16 %v65
  %v423 = vunpack.c.h.b16 %v65
  %v424 = vunpack.c.l.b16 %v66
  %v425 = vunpack.c.h.b16 %v66
  %v426 = vunpack.c.l.b16 %v67
  %v427 = vunpack.c.h.b16 %v67
  %v428 = vunpack.c.l.b16 %v68
  %v429 = vunpack.c.h.b16 %v68
  %v430 = vunpack.c.l.b16 %v69
  %v431 = vunpack.c.h.b16 %v69
  %v432 = vunpack.c.l.b16 %v70
  %v433 = vunpack.c.h.b16 %v70
  %v434 = vunpack.c.l.b16 %v71
  %v435 = vunpack.c.h.b16 %v71
  %v436 = vunpack.c.l.b16 %v72
  %v437 = vunpack.c.h.b16 %v72
  %v438 = vunpack.c.l.b16 %v73
  %v439 = vunpack.c.h.b16 %v73
  %v440 = vunpack.c.l.b16 %v74
  %v441 = vunpack.c.h.b16 %v74
  %v442 = vunpack.c.l.b16 %v75
  %v443 = vunpack.c.h.b16 %v75
  %v444 = vunpack.c.l.b16 %v76
  %v445 = vunpack.c.h.b16 %v76
  %v446 = vunpack.c.l.b16 %v77
  %v447 = vunpack.c.h.b16 %v77
  %v448 = vunpack.c.l.b16 %v78
  %v449 = vunpack.c.h.b16 %v78
  %v450 = vunpack.c.l.b16 %v79
  %v451 = vunpack.c.h.b16 %v79
  %v452 = vunpack.c.l.b16 %v80
  %v453 = vunpack.c.h.b16 %v80
  %v454 = vunpack.c.l.b16 %v81
  %v455 = vunpack.c.h.b16 %v81
  %v456 = vunpack.c.l.b16 %v82
  %v457 = vunpack.c.h.b16 %v82
  %v458 = vunpack.c.l.b16 %v83
  %v459 = vunpack.c.h.b16 %v83
  %v460 = vunpack.c.l.b16 %v84
  %v461 = vunpack.c.h.b16 %v84
  %v462 = vunpack.c.l.b16 %v85
  %v463 = vunpack.c.h.b16 %v85
  %v464 = vunpack.c.l.b16 %v86
  %v465 = vunpack.c.h.b16 %v86
  %v466 = vunpack.c.l.b16 %v87
  %v467 = vunpack.c.h.b16 %v87
  %v468 = vunpack.c.l.b16 %v88
  %v469 = vunpack.c.h.b16 %v88
  %v470 = vunpack.c.l.b16 %v89
  %v471 = vunpack.c.h.b16 %v89
  %v472 = vunpack.c.l.b16 %v90
  %v473 = vunpack.c.h.b16 %v90
  %v474 = vunpack.c.l.b16 %v91
  %v475 = vunpack.c.h.b16 %v91
  %v476 = vunpack.c.l.b16 %v92
  %v477 = vunpack.c.h.b16 %v92
  %v478 = vunpack.c.l.b16 %v93
  %v479 = vunpack.c.h.b16 %v93
  %v480 = vunpack.c.l.b16 %v94
  %v481 = vunpack.c.h.b16 %v94
  %v482 = vunpack.c.l.b16 %v95
  %v483 = vunpack.c.h.b16 %v95
  %v484 = vunpack.c.l.b16 %v96
  %v485 = vunpack.c.h.b16 %v96
  %v486 = vunpack.c.l.b16 %v97
  %v487 = vunpack.c.h.b16 %v97
  %v488 = vunpack.c.l.b16 %v98
  %v489 = vunpack.c.h.b16 %v98
  %v490 = vunpack.c.l.b16 %v99
  %v491 = vunpack.c.h.b16 %v99
  %v492 = vunpack.c.l.b16 %v100
  %v493 = vunpack.c.h.b16 %v100
  %v494 = vunpack.c.l.b16 %v101
  %v495 = vunpack.c.h.b16 %v101
  %v496 = vunpack.c.l.b16 %v102
  %v497 = vunpack.c.h.b16 %v102
  %v498 = vunpack.c.l.b16 %v103
  %v499 = vunpack.c.h.b16 %v103
  %v500 = vunpack.c.l.b16 %v104
  %v501 = vunpack.c.h.b16 %v104
  %v502 = vunpack.c.l.b16 %v105
  %v503 = vunpack.c.h.b16 %v105
  %v504 = vunpack.c.l.b16 %v106
  %v505 = vunpack.c.h.b16 %v106
  %v506 = vunpack.c.l.b16 %v107
  %v507 = vunpack.c.h.b16 %v107
  %v508 = vunpack.c.l.b16 %v108
  %v509 = vunpack.c.h.b16 %v108
  %v510 = vunpack.c.l.b16 %v109
  %v511 = vunpack.c.h.b16 %v109
  %v512 = vunpack.c.l.b16 %v110
  %v513 = vunpack.c.h.b16 %v110
  %v514 = vunpack.c.l.b16 %v111
  %v515 = vunpack.c.h.b16 %v111
  %v516 = vunpack.c.l.b16 %v112
  %v517 = vunpack.c.h.b16 %v112
  %v518 = vunpack.c.l.b16 %v113
  %v519 = vunpack.c.h.b16 %v113
  %v520 = vunpack.c.l.b16 %v114
  %v521 = vunpack.c.h.b16 %v114
  %v522 = vunpack.c.l.b16 %v115
  %v523 = vunpack.c.h.b16 %v115
  %v524 = vunpack.c.l.b16 %v116
  %v525 = vunpack.c.h.b16 %v116
  %v526 = vunpack.c.l.b16 %v117
  %v527 = vunpack.c.h.b16 %v117
  %v528 = vunpack.c.l.b16 %v118
  %v529 = vunpack.c.h.b16 %v118
  %v530 = vunpack.c.l.b16 %v119
  %v531 = vunpack.c.h.b16 %v119
  %v532 = vunpack.c.l.b16 %v120
  %v533 = vunpack.c.h.b16 %v120
  %v534 = vunpack.c.l.b16 %v121
  %v535 = vunpack.c.h.b16 %v121
  %v536 = vunpack.c.l.b16 %v122
  %v537 = vunpack.c.h.b16 %v122
  %v538 = vunpack.c.l.b16 %v123
  %v539 = vunpack.c.h.b16 %v123
  %v540 = vunpack.c.l.b16 %v124
  %v541 = vunpack.c.h.b16 %v124
  %v542 = vunpack.c.l.b16 %v125
  %v543 = vunpack.c.h.b16 %v125
  %v544 = vunpack.c.l.b16 %v126
  %v545 = vunpack.c.h.b16 %v126
  %v546 = vunpack.c.l.b16 %v127
  %v547 = vunpack.c.h.b16 %v127
  %v548 = vunpack.c.l.b16 %v128
  %v549 = vunpack.c.h.b16 %v128
  %v550 = vunpack.c.l.b16 %v129
  %v551 = vunpack.c.h.b16 %v129
  %v552 = vunpack.c.l.b16 %v130
  %v553 = vunpack.c.h.b16 %v130
  %v554 = vunpack.c.l.b16 %v131
  %v555 = vunpack.c.h.b16 %v131
  %v556 = vunpack.c.l.b16 %v132
  %v557 = vunpack.c.h.b16 %v132
  %v558 = vunpack.c.l.b16 %v133
  %v559 = vunpack.c.h.b16 %v133
  %v560 = vunpack.c.l.b16 %v134
  %v561 = vunpack.c.h.b16 %v134
  %v562 = vunpack.c.l.b16 %v135
  %v563 = vunpack.c.h.b16 %v135
  %v564 = vunpack.c.l.b16 %v136
  %v565 = vunpack.c.h.b16 %v136
  %v566 = vunpack.c.l.b16 %v137
  %v567 = vunpack.c.h.b16 %v137
  %v568 = vunpack.c.l.b16 %v138
  %v569 = vunpack.c.h.b16 %v138
  %v570 = vunpack.c.l.b16 %v139
  %v571 = vunpack.c.h.b16 %v139
  %v572 = vunpack.c.l.b16 %v140
  %v573 = vunpack.c.h.b16 %v140
  %v574 = vunpack.c.l.b16 %v141
  %v575 = vunpack.c.h.b16 %v141
  %v576 = vunpack.c.l.b16 %v142
  %v577 = vunpack.c.h.b16 %v142
  %v578 = vunpack.c.l.b16 %v143
  %v579 = vunpack.c.h.b16 %v143
  %v580 = vpack.c.b16 %v332, %v324
  %v581 = vpack.c.b16 %v333, %v325
  %v582 = vpack.c.b16 %v334, %v326
  %v583 = vpack.c.b16 %v335, %v327
  %v584 = vpack.c.b16 %v336, %v328
  %v585 = vpack.c.b16 %v337, %v329
  %v586 = vpack.c.b16 %v338, %v330
  %v587 = vpack.c.b16 %v339, %v331
  %v588 = vpack.c.b16 %v348, %v340
  %v589 = vpack.c.b16 %v349, %v341
  %v590 = vpack.c.b16 %v350, %v342
  %v591 = vpack.c.b16 %v351, %v343
  %v592 = vpack.c.b16 %v352, %v344
  %v593 = vpack.c.b16 %v353, %v345
  %v594 = vpack.c.b16 %v354, %v346
  %v595 = vpack.c.b16 %v355, %v347
  %v596 = vpack.c.b16 %v364, %v356
  %v597 = vpack.c.b16 %v365, %v357
  %v598 = vpack.c.b16 %v366, %v358
  %v599 = vpack.c.b16 %v367, %v359
  %v600 = vpack.c.b16 %v368, %v360
  %v601 = vpack.c.b16 %v369, %v361
  %v602 = vpack.c.b16 %v370, %v362
  %v603 = vpack.c.b16 %v371, %v363
  %v604 = vpack.c.b16 %v380, %v372
  %v605 = vpack.c.b16 %v381, %v373
  %v606 = vpack.c.b16 %v382, %v374
  %v607 = vpack.c.b16 %v383, %v375
  %v608 = vpack.c.b16 %v384, %v376
  %v609 = vpack.c.b16 %v385, %v377
  %v610 = vpack.c.b16 %v386, %v378
  %v611 = vpack.c.b16 %v387, %v379
  %v612 = vpack.c.b16 %v396, %v388
  %v613 = vpack.c.b16 %v397, %v389
  %v614 = vpack.c.b16 %v398, %v390
  %v615 = vpack.c.b16 %v399, %v391
  %v616 = vpack.c.b16 %v400, %v392
  %v617 = vpack.c.b16 %v401, %v393
  %v618 = vpack.c.b16 %v402, %v394
  %v619 = vpack.c.b16 %v403, %v395
  %v620 = vpack.c.b16 %v412, %v404
  %v621 = vpack.c.b16 %v413, %v405
  %v622 = vpack.c.b16 %v414, %v406
  %v623 = vpack.c.b16 %v415, %v407
  %v624 = vpack.c.b16 %v416, %v408
  %v625 = vpack.c.b16 %v417, %v409
  %v626 = vpack.c.b16 %v418, %v410
  %v627 = vpack.c.b16 %v419, %v411
  %v628 = vpack.c.b16 %v428, %v420
  %v629 = vpack.c.b16 %v429, %v421
  %v630 = vpack.c.b16 %v430, %v422
  %v631 = vpack.c.b16 %v431, %v423
  %v632 = vpack.c.b16 %v432, %v424
  %v633 = vpack.c.b16 %v433, %v425
  %v634 = vpack.c.b16 %v434, %v426
  %v635 = vpack.c.b16 %v435, %v427
  %v636 = vpack.c.b16 %v444, %v436
  %v637 = vpack.c.b16 %v445, %v437
  %v638 = vpack.c.b16 %v446, %v438
  %v639 = vpack.c.b16 %v447, %v439
  %v640 = vpack.c.b16 %v448, %v440
  %v641 = vpack.c.b16 %v449, %v441
  %v642 = vpack.c.b16 %v450, %v442
  %v643 = vpack.c.b16 %v451, %v443
  %v644 = vpack.c.b16 %v460, %v452
  %v645 = vpack.c.b16 %v461, %v453
  %v646 = vpack.c.b16 %v462, %v454
  %v647 = vpack.c.b16 %v463, %v455
  %v648 = vpack.c.b16 %v464, %v456
  %v649 = vpack.c.b16 %v465, %v457
  %v650 = vpack.c.b16 %v466, %v458
  %v651 = vpack.c.b16 %v467, %v459
  %v652 = vpack.c.b16 %v476, %v468
  %v653 = vpack.c.b16 %v477, %v469
  %v654 = vpack.c.b16 %v478, %v470
  %v655 = vpack.c.b16 %v479, %v471
  %v656 = vpack.c.b16 %v480, %v472
  %v657 = vpack.c.b16 %v481, %v473
  %v658 = vpack.c.b16 %v482, %v474
  %v659 = vpack.c.b16 %v483, %v475
  %v660 = vpack.c.b16 %v492, %v484
  %v661 = vpack.c.b16 %v493, %v485
  %v662 = vpack.c.b16 %v494, %v486
  %v663 = vpack.c.b16 %v495, %v487
  %v664 = vpack.c.b16 %v496, %v488
  %v665 = vpack.c.b16 %v497, %v489
  %v666 = vpack.c.b16 %v498, %v490
  %v667 = vpack.c.b16 %v499, %v491
  %v668 = vpack.c.b16 %v508, %v500
  %v669 = vpack.c.b16 %v509, %v501
  %v670 = vpack.c.b16 %v510, %v502
  %v671 = vpack.c.b16 %v511, %v503
  %v672 = vpack.c.b16 %v512, %v504
  %v673 = vpack.c.b16 %v513, %v505
  %v674 = vpack.c.b16 %v514, %v506
  %v675 = vpack.c.b16 %v515, %v507
  %v676 = vpack.c.b16 %v524, %v516
  %v677 = vpack.c.b16 %v525, %v517
  %v678 = vpack.c.b16 %v526, %v518
  %v679 = vpack.c.b16 %v527, %v519
  %v680 = vpack.c.b16 %v528, %v520
  %v681 = vpack.c.b16 %v529, %v521
  %v682 = vpack.c.b16 %v530, %v522
  %v683 = vpack.c.b16 %v531, %v523
  %v684 = vpack.c.b16 %v540, %v532
  %v685 = vpack.c.b16 %v541, %v533
  %v686 = vpack.c.b16 %v542, %v534
  %v687 = vpack.c.b16 %v543, %v535
  %v688 = vpack.c.b16 %v544, %v536
  %v689 = vpack.c.b16 %v545, %v537
  %v690 = vpack.c.b16 %v546, %v538
  %v691 = vpack.c.b16 %v547, %v539
  %v692 = vpack.c.b16 %v556, %v548
  %v693 = vpack.c.b16 %v557, %v549
  %v694 = vpack.c.b16 %v558, %v550
  %v695 = vpack.c.b16 %v559, %v551
  %v696 = vpack.c.b16 %v560, %v552
  %v697 = vpack.c.b16 %v561, %v553
  %v698 = vpack.c.b16 %v562, %v554
  %v699 = vpack.c.b16 %v563, %v555
  %v700 = vpack.c.b16 %v572, %v564
  %v701 = vpack.c.b16 %v573, %v565
  %v702 = vpack.c.b16 %v574, %v566
  %v703 = vpack.c.b16 %v575, %v567
  %v704 = vpack.c.b16 %v576, %v568
  %v705 = vpack.c.b16 %v577, %v569
  %v706 = vpack.c.b16 %v578, %v570
  %v707 = vpack.c.b16 %v579, %v571
  %836 = vmatprep.subr.bf16.mxu0 %v581
  %837 = vmatpush1.bf16.msra.mxu0 %v580
  %838 = vmatprep.subr.bf16.mxu0 %v589
  %839 = vmatpush1.bf16.msra.mxu0 %v588
  %840 = vmatprep.subr.bf16.mxu0 %v597
  %841 = vmatpush1.bf16.msra.mxu0 %v596
  %842 = vmatprep.subr.bf16.mxu0 %v605
  %843 = vmatpush1.bf16.msra.mxu0 %v604
  %844 = vmatprep.subr.bf16.mxu0 %v613
  %845 = vmatpush1.bf16.msra.mxu0 %v612
  %846 = vmatprep.subr.bf16.mxu0 %v621
  %847 = vmatpush1.bf16.msra.mxu0 %v620
  %848 = vmatprep.subr.bf16.mxu0 %v629
  %849 = vmatpush1.bf16.msra.mxu0 %v628
  %850 = vmatprep.subr.bf16.mxu0 %v637
  %851 = vmatpush1.bf16.msra.mxu0 %v636
  %852 = vmatprep.subr.bf16.mxu0 %v645
  %853 = vmatpush1.bf16.msra.mxu0 %v644
  %854 = vmatprep.subr.bf16.mxu0 %v653
  %855 = vmatpush1.bf16.msra.mxu0 %v652
  %856 = vmatprep.subr.bf16.mxu0 %v661
  %857 = vmatpush1.bf16.msra.mxu0 %v660
  %858 = vmatprep.subr.bf16.mxu0 %v669
  %859 = vmatpush1.bf16.msra.mxu0 %v668
  %860 = vmatprep.subr.bf16.mxu0 %v677
  %861 = vmatpush1.bf16.msra.mxu0 %v676
  %862 = vmatprep.subr.bf16.mxu0 %v685
  %863 = vmatpush1.bf16.msra.mxu0 %v684
  %864 = vmatprep.subr.bf16.mxu0 %v693
  %865 = vmatpush1.bf16.msra.mxu0 %v692
  %866 = vmatprep.subr.bf16.mxu0 %v701
  %867 = vmatpush1.bf16.msra.mxu0 %v700
  %868 = vmatprep.mubr.bf16.mxu0 %v193
  %869 = vmatmul.mubr.bf16.gmra.mrb[0].mxu0 %v192
  %v870 = vpop.f32.mrb[0].mxu0
  %v871 = vadd.f32 %v149, %v870
  %v872 = vpop.f32.mrb[0].mxu0
  %v873 = vadd.f32 %v153, %v872
  %v874 = vpop.f32.mrb[0].mxu0
  %v875 = vadd.f32 %v149, %v874
  %v876 = vpop.f32.mrb[0].mxu0
  %v877 = vadd.f32 %v153, %v876
  %878 = vdwg.mxu0
  %879 = vmatprep.subr.bf16.mxu0 %v583
  %880 = vmatpush1.bf16.msra.mxu0 %v582
  %881 = vmatprep.subr.bf16.mxu0 %v591
  %882 = vmatpush1.bf16.msra.mxu0 %v590
  %883 = vmatprep.subr.bf16.mxu0 %v599
  %884 = vmatpush1.bf16.msra.mxu0 %v598
  %885 = vmatprep.subr.bf16.mxu0 %v607
  %886 = vmatpush1.bf16.msra.mxu0 %v606
  %887 = vmatprep.subr.bf16.mxu0 %v615
  %888 = vmatpush1.bf16.msra.mxu0 %v614
  %889 = vmatprep.subr.bf16.mxu0 %v623
  %890 = vmatpush1.bf16.msra.mxu0 %v622
  %891 = vmatprep.subr.bf16.mxu0 %v631
  %892 = vmatpush1.bf16.msra.mxu0 %v630
  %893 = vmatprep.subr.bf16.mxu0 %v639
  %894 = vmatpush1.bf16.msra.mxu0 %v638
  %895 = vmatprep.subr.bf16.mxu0 %v647
  %896 = vmatpush1.bf16.msra.mxu0 %v646
  %897 = vmatprep.subr.bf16.mxu0 %v655
  %898 = vmatpush1.bf16.msra.mxu0 %v654
  %899 = vmatprep.subr.bf16.mxu0 %v663
  %900 = vmatpush1.bf16.msra.mxu0 %v662
  %901 = vmatprep.subr.bf16.mxu0 %v671
  %902 = vmatpush1.bf16.msra.mxu0 %v670
  %903 = vmatprep.subr.bf16.mxu0 %v679
  %904 = vmatpush1.bf16.msra.mxu0 %v678
  %905 = vmatprep.subr.bf16.mxu0 %v687
  %906 = vmatpush1.bf16.msra.mxu0 %v686
  %907 = vmatprep.subr.bf16.mxu0 %v695
  %908 = vmatpush1.bf16.msra.mxu0 %v694
  %909 = vmatprep.subr.bf16.mxu0 %v703
  %910 = vmatpush1.bf16.msra.mxu0 %v702
  %911 = vmatprep.mubr.bf16.mxu0 %v193
  %912 = vmatmul.mubr.bf16.gmra.mrb[0].mxu0 %v192
  %v913 = vpop.f32.mrb[0].mxu0
  %v914 = vadd.f32 %v157, %v913
  %v915 = vpop.f32.mrb[0].mxu0
  %v916 = vadd.f32 %v161, %v915
  %v917 = vpop.f32.mrb[0].mxu0
  %v918 = vadd.f32 %v157, %v917
  %v919 = vpop.f32.mrb[0].mxu0
  %v920 = vadd.f32 %v161, %v919
  %921 = vdwg.mxu0
  %922 = vmatprep.subr.bf16.mxu0 %v585
  %923 = vmatpush1.bf16.msra.mxu0 %v584
  %924 = vmatprep.subr.bf16.mxu0 %v593
  %925 = vmatpush1.bf16.msra.mxu0 %v592
  %926 = vmatprep.subr.bf16.mxu0 %v601
  %927 = vmatpush1.bf16.msra.mxu0 %v600
  %928 = vmatprep.subr.bf16.mxu0 %v609
  %929 = vmatpush1.bf16.msra.mxu0 %v608
  %930 = vmatprep.subr.bf16.mxu0 %v617
  %931 = vmatpush1.bf16.msra.mxu0 %v616
  %932 = vmatprep.subr.bf16.mxu0 %v625
  %933 = vmatpush1.bf16.msra.mxu0 %v624
  %934 = vmatprep.subr.bf16.mxu0 %v633
  %935 = vmatpush1.bf16.msra.mxu0 %v632
  %936 = vmatprep.subr.bf16.mxu0 %v641
  %937 = vmatpush1.bf16.msra.mxu0 %v640
  %938 = vmatprep.subr.bf16.mxu0 %v649
  %939 = vmatpush1.bf16.msra.mxu0 %v648
  %940 = vmatprep.subr.bf16.mxu0 %v657
  %941 = vmatpush1.bf16.msra.mxu0 %v656
  %942 = vmatprep.subr.bf16.mxu0 %v665
  %943 = vmatpush1.bf16.msra.mxu0 %v664
  %944 = vmatprep.subr.bf16.mxu0 %v673
  %945 = vmatpush1.bf16.msra.mxu0 %v672
  %946 = vmatprep.subr.bf16.mxu0 %v681
  %947 = vmatpush1.bf16.msra.mxu0 %v680
  %948 = vmatprep.subr.bf16.mxu0 %v689
  %949 = vmatpush1.bf16.msra.mxu0 %v688
  %950 = vmatprep.subr.bf16.mxu0 %v697
  %951 = vmatpush1.bf16.msra.mxu0 %v696
  %952 = vmatprep.subr.bf16.mxu0 %v705
  %953 = vmatpush1.bf16.msra.mxu0 %v704
  %954 = vmatprep.mubr.bf16.mxu0 %v193
  %955 = vmatmul.mubr.bf16.gmra.mrb[0].mxu0 %v192
  %v956 = vpop.f32.mrb[0].mxu0
  %v957 = vadd.f32 %v165, %v956
  %v958 = vpop.f32.mrb[0].mxu0
  %v959 = vadd.f32 %v169, %v958
  %v960 = vpop.f32.mrb[0].mxu0
  %v961 = vadd.f32 %v165, %v960
  %v962 = vpop.f32.mrb[0].mxu0
  %v963 = vadd.f32 %v169, %v962
  %964 = vdwg.mxu0
  %965 = vmatprep.subr.bf16.mxu0 %v587
  %966 = vmatpush1.bf16.msra.mxu0 %v586
  %967 = vmatprep.subr.bf16.mxu0 %v595
  %968 = vmatpush1.bf16.msra.mxu0 %v594
  %969 = vmatprep.subr.bf16.mxu0 %v603
  %970 = vmatpush1.bf16.msra.mxu0 %v602
  %971 = vmatprep.subr.bf16.mxu0 %v611
  %972 = vmatpush1.bf16.msra.mxu0 %v610
  %973 = vmatprep.subr.bf16.mxu0 %v619
  %974 = vmatpush1.bf16.msra.mxu0 %v618
  %975 = vmatprep.subr.bf16.mxu0 %v627
  %976 = vmatpush1.bf16.msra.mxu0 %v626
  %977 = vmatprep.subr.bf16.mxu0 %v635
  %978 = vmatpush1.bf16.msra.mxu0 %v634
  %979 = vmatprep.subr.bf16.mxu0 %v643
  %980 = vmatpush1.bf16.msra.mxu0 %v642
  %981 = vmatprep.subr.bf16.mxu0 %v651
  %982 = vmatpush1.bf16.msra.mxu0 %v650
  %983 = vmatprep.subr.bf16.mxu0 %v659
  %984 = vmatpush1.bf16.msra.mxu0 %v658
  %985 = vmatprep.subr.bf16.mxu0 %v667
  %986 = vmatpush1.bf16.msra.mxu0 %v666
  %987 = vmatprep.subr.bf16.mxu0 %v675
  %988 = vmatpush1.bf16.msra.mxu0 %v674
  %989 = vmatprep.subr.bf16.mxu0 %v683
  %990 = vmatpush1.bf16.msra.mxu0 %v682
  %991 = vmatprep.subr.bf16.mxu0 %v691
  %992 = vmatpush1.bf16.msra.mxu0 %v690
  %993 = vmatprep.subr.bf16.mxu0 %v699
  %994 = vmatpush1.bf16.msra.mxu0 %v698
  %995 = vmatprep.subr.bf16.mxu0 %v707
  %996 = vmatpush1.bf16.msra.mxu0 %v706
  %997 = vmatprep.mubr.bf16.mxu0 %v193
  %998 = vmatmul.mubr.bf16.gmra.mrb[0].mxu0 %v192
  %v999 = vpop.f32.mrb[0].mxu0
  %v1000 = vadd.f32 %v173, %v999
  %v1001 = vpop.f32.mrb[0].mxu0
  %v1002 = vadd.f32 %v177, %v1001
  %v1003 = vpop.f32.mrb[0].mxu0
  %v1004 = vadd.f32 %v173, %v1003
  %v1005 = vpop.f32.mrb[0].mxu0
  %v1006 = vadd.f32 %v177, %v1005
  %1007 = vdwg.mxu0
  %vm1008 = vcmp.gt.f32.partialorder %v871, 0.0
  %vm1009 = vcmp.gt.f32.partialorder %v873, 0.0
  %vm1010 = vcmp.gt.f32.partialorder %v914, 0.0
  %vm1011 = vcmp.gt.f32.partialorder %v916, 0.0
  %vm1012 = vcmp.gt.f32.partialorder %v957, 0.0
  %vm1013 = vcmp.gt.f32.partialorder %v959, 0.0
  %vm1014 = vcmp.gt.f32.partialorder %v1000, 0.0
  %vm1015 = vcmp.gt.f32.partialorder %v1002, 0.0
  %vm1016 = vcmp.gt.f32.partialorder %v875, 0.0
  %vm1017 = vcmp.gt.f32.partialorder %v877, 0.0
  %vm1018 = vcmp.gt.f32.partialorder %v918, 0.0
  %vm1019 = vcmp.gt.f32.partialorder %v920, 0.0
  %vm1020 = vcmp.gt.f32.partialorder %v961, 0.0
  %vm1021 = vcmp.gt.f32.partialorder %v963, 0.0
  %vm1022 = vcmp.gt.f32.partialorder %v1004, 0.0
  %vm1023 = vcmp.gt.f32.partialorder %v1006, 0.0
  %v1024 = vmul.f32 %v871, 0.2
  %v1025 = vmul.f32 %v873, 0.2
  %v1026 = vmul.f32 %v914, 0.2
  %v1027 = vmul.f32 %v916, 0.2
  %v1028 = vmul.f32 %v957, 0.2
  %v1029 = vmul.f32 %v959, 0.2
  %v1030 = vmul.f32 %v1000, 0.2
  %v1031 = vmul.f32 %v1002, 0.2
  %v1032 = vmul.f32 %v875, 0.2
  %v1033 = vmul.f32 %v877, 0.2
  %v1034 = vmul.f32 %v918, 0.2
  %v1035 = vmul.f32 %v920, 0.2
  %v1036 = vmul.f32 %v961, 0.2
  %v1037 = vmul.f32 %v963, 0.2
  %v1038 = vmul.f32 %v1004, 0.2
  %v1039 = vmul.f32 %v1006, 0.2
  %v1040 = vsel %vm1008, %v871, %v1024
  %v1041 = vsel %vm1009, %v873, %v1025
  %v1042 = vsel %vm1010, %v914, %v1026
  %v1043 = vsel %vm1011, %v916, %v1027
  %v1044 = vsel %vm1012, %v957, %v1028
  %v1045 = vsel %vm1013, %v959, %v1029
  %v1046 = vsel %vm1014, %v1000, %v1030
  %v1047 = vsel %vm1015, %v1002, %v1031
  %v1048 = vsel %vm1016, %v875, %v1032
  %v1049 = vsel %vm1017, %v877, %v1033
  %v1050 = vsel %vm1018, %v918, %v1034
  %v1051 = vsel %vm1019, %v920, %v1035
  %v1052 = vsel %vm1020, %v961, %v1036
  %v1053 = vsel %vm1021, %v963, %v1037
  %v1054 = vsel %vm1022, %v1004, %v1038
  %v1055 = vsel %vm1023, %v1006, %v1039
  %v1056 = vpack.c.bf16 %v1048, %v1040
  %v1057 = vpack.c.bf16 %v1049, %v1041
  %v1058 = vpack.c.bf16 %v1050, %v1042
  %v1059 = vpack.c.bf16 %v1051, %v1043
  %v1060 = vpack.c.bf16 %v1052, %v1044
  %v1061 = vpack.c.bf16 %v1053, %v1045
  %v1062 = vpack.c.bf16 %v1054, %v1046
  %v1063 = vpack.c.bf16 %v1055, %v1047
  %v1072 = vunpack.c.l.b16 %v1056
  %v1073 = vunpack.c.l.b16 %v1057
  %v1074 = vunpack.c.l.b16 %v1058
  %v1075 = vunpack.c.l.b16 %v1059
  %v1076 = vunpack.c.l.b16 %v1060
  %v1077 = vunpack.c.l.b16 %v1061
  %v1078 = vunpack.c.l.b16 %v1062
  %v1079 = vunpack.c.l.b16 %v1063
  %v1080 = vunpack.c.h.b16 %v1056
  %v1081 = vunpack.c.h.b16 %v1057
  %v1082 = vunpack.c.h.b16 %v1058
  %v1083 = vunpack.c.h.b16 %v1059
  %v1084 = vunpack.c.h.b16 %v1060
  %v1085 = vunpack.c.h.b16 %v1061
  %v1086 = vunpack.c.h.b16 %v1062
  %v1087 = vunpack.c.h.b16 %v1063
  %v1088 = vpack.c.b16 %v1073, %v1072
  %v1089 = vpack.c.b16 %v1075, %v1074
  %v1090 = vpack.c.b16 %v1077, %v1076
  %v1091 = vpack.c.b16 %v1079, %v1078
  %v1092 = vpack.c.b16 %v1081, %v1080
  %v1093 = vpack.c.b16 %v1083, %v1082
  %v1094 = vpack.c.b16 %v1085, %v1084
  %v1095 = vpack.c.b16 %v1087, %v1086
  %1104 = vst [vmem:[%s3] sm:$0xff] %v1088
  %1105 = vst [vmem:[%s3 + $0x8] sm:$0xff] %v1089
  %1106 = vst [vmem:[%s3 + $0x10] sm:$0xff] %v1090
  %1107 = vst [vmem:[%s3 + $0x18] sm:$0xff] %v1091
  %1108 = vst [vmem:[%s3 + $0x20] sm:$0xff] %v1092
  %1109 = vst [vmem:[%s3 + $0x28] sm:$0xff] %v1093
  %1110 = vst [vmem:[%s3 + $0x30] sm:$0xff] %v1094
  %1111 = vst [vmem:[%s3 + $0x38] sm:$0xff] %v1095
  // Predicated region
  $region14: #{generator_forward.5} parent=0 // pred_check
    _
  $region15: #{generator_forward.5} parent=0 // pred_check_branch
    %1113 = sbr.rel (0) target = $region17
  $region16: #{generator_forward.5} parent=0 // pred_region
    _
  $region17: #{generator_forward.5} parent=0 // pred_fallthru
    _
  // Predicated region
  $region18: #{generator_forward.5} parent=0 // pred_check
    _
  $region19: #{generator_forward.5} parent=0 // pred_check_branch
    %1115 = sbr.rel (0) target = $region21
  $region20: #{generator_forward.5} parent=0 // pred_region
    _
  $region21: #{generator_forward.5} parent=0 // pred_fallthru
    _

// kernel: generator_forward.7
$region0: #{generator_forward.7}
  #allocation0 [shape = 'u32[]', space=smem, size = 0x4, offset = 0x4, fixed_abs, tag = 'smem constant byte address 0x4 - core index']
  #allocation1 [shape = 'u32[144,128]{1,0:T(1,128)}', space=vmem, size = 0x12000, scoped, tag = 'internal scratch']
  %s0 = inlined_call_operand.vmem [shape: bf16[64,512], index: 0, kind: input, shape index: {}]
  %s1 = inlined_call_operand.vmem [shape: bf16[512,256], index: 1, kind: input, shape index: {}]
  %s2 = inlined_call_operand.vmem [shape: f32[1,256], index: 2, kind: input, shape index: {}]
  %s3 = inlined_call_operand.vmem [shape: f32[64,256], index: 3, kind: input, shape index: {}]
  %s4 = inlined_call_operand.vmem [shape: f32[256,256], index: 4, kind: input, shape index: {}]
  %s5 = inlined_call_operand.vmem [shape: f32[1,256], index: 5, kind: input, shape index: {}]
  %s6 = inlined_call_operand.vmem [shape: f32[1,256], index: 6, kind: input, shape index: {}]
  %s7 = inlined_call_operand.vmem [shape: bf16[64,256], index: 7, kind: output, shape index: {}]
  %s8 = sld [smem:[#allocation0]]
  $region38: #{generator_forward.7} parent=0
    _
  %s10 = ssub.s32 1, %s8
  %s11 = scalar_select 0, %s10, %s8
  // Predicated region
  $region2: #{generator_forward.7} parent=0 // pred_check
    _
  $region3: #{generator_forward.7} parent=0 // pred_check_branch
    %13 = sbr.rel (0) target = $region5
  $region4: #{generator_forward.7} parent=0 // pred_region
    _
  $region5: #{generator_forward.7} parent=0 // pred_fallthru
    _
  // Predicated region
  $region6: #{generator_forward.7} parent=0 // pred_check
    _
  $region7: #{generator_forward.7} parent=0 // pred_check_branch
    %15 = sbr.rel (0) target = $region9
  $region8: #{generator_forward.7} parent=0 // pred_region
    _
  $region9: #{generator_forward.7} parent=0 // pred_fallthru
    _
  // Predicated region
  $region10: #{generator_forward.7} parent=0 // pred_check
    _
  $region11: #{generator_forward.7} parent=0 // pred_check_branch
    %17 = sbr.rel (0) target = $region13
  $region12: #{generator_forward.7} parent=0 // pred_region
    _
  $region13: #{generator_forward.7} parent=0 // pred_fallthru
    _
  // Predicated region
  $region14: #{generator_forward.7} parent=0 // pred_check
    _
  $region15: #{generator_forward.7} parent=0 // pred_check_branch
    %19 = sbr.rel (0) target = $region17
  $region16: #{generator_forward.7} parent=0 // pred_region
    _
  $region17: #{generator_forward.7} parent=0 // pred_fallthru
    _
  // Predicated region
  $region18: #{generator_forward.7} parent=0 // pred_check
    _
  $region19: #{generator_forward.7} parent=0 // pred_check_branch
    %21 = sbr.rel (0) target = $region21
  $region20: #{generator_forward.7} parent=0 // pred_region
    _
  $region21: #{generator_forward.7} parent=0 // pred_fallthru
    _
  // Predicated region
  $region22: #{generator_forward.7} parent=0 // pred_check
    _
  $region23: #{generator_forward.7} parent=0 // pred_check_branch
    %23 = sbr.rel (0) target = $region25
  $region24: #{generator_forward.7} parent=0 // pred_region
    _
  $region25: #{generator_forward.7} parent=0 // pred_fallthru
    _
  // Predicated region
  $region26: #{generator_forward.7} parent=0 // pred_check
    _
  $region27: #{generator_forward.7} parent=0 // pred_check_branch
    %25 = sbr.rel (0) target = $region29
  $region28: #{generator_forward.7} parent=0 // pred_region
    _
  $region29: #{generator_forward.7} parent=0 // pred_fallthru
    _
  %v26 = vld [vmem:[%s0] sm:$0xff]
  %v27 = vld [vmem:[%s0 + $0x8] sm:$0xff]
  %v28 = vld [vmem:[%s0 + $0x10] sm:$0xff]
  %v29 = vld [vmem:[%s0 + $0x18] sm:$0xff]
  %v30 = vld [vmem:[%s0 + $0x20] sm:$0xff]
  %v31 = vld [vmem:[%s0 + $0x28] sm:$0xff]
  %v32 = vld [vmem:[%s0 + $0x30] sm:$0xff]
  %v33 = vld [vmem:[%s0 + $0x38] sm:$0xff]
  %v34 = vld [vmem:[%s0 + $0x40] sm:$0xff]
  %v35 = vld [vmem:[%s0 + $0x48] sm:$0xff]
  %v36 = vld [vmem:[%s0 + $0x50] sm:$0xff]
  %v37 = vld [vmem:[%s0 + $0x58] sm:$0xff]
  %v38 = vld [vmem:[%s0 + $0x60] sm:$0xff]
  %v39 = vld [vmem:[%s0 + $0x68] sm:$0xff]
  %v40 = vld [vmem:[%s0 + $0x70] sm:$0xff]
  %v41 = vld [vmem:[%s0 + $0x78] sm:$0xff]
  %v42 = vld [vmem:[%s1] sm:$0xff]
  %v43 = vld [vmem:[%s1 + $0x8] sm:$0xff]
  %v44 = vld [vmem:[%s1 + $0x10] sm:$0xff]
  %v45 = vld [vmem:[%s1 + $0x18] sm:$0xff]
  %v46 = vld [vmem:[%s1 + $0x20] sm:$0xff]
  %v47 = vld [vmem:[%s1 + $0x28] sm:$0xff]
  %v48 = vld [vmem:[%s1 + $0x30] sm:$0xff]
  %v49 = vld [vmem:[%s1 + $0x38] sm:$0xff]
  %v50 = vld [vmem:[%s1 + $0x40] sm:$0xff]
  %v51 = vld [vmem:[%s1 + $0x48] sm:$0xff]
  %v52 = vld [vmem:[%s1 + $0x50] sm:$0xff]
  %v53 = vld [vmem:[%s1 + $0x58] sm:$0xff]
  %v54 = vld [vmem:[%s1 + $0x60] sm:$0xff]
  %v55 = vld [vmem:[%s1 + $0x68] sm:$0xff]
  %v56 = vld [vmem:[%s1 + $0x70] sm:$0xff]
  %v57 = vld [vmem:[%s1 + $0x78] sm:$0xff]
  %v58 = vld [vmem:[%s1 + $0x80] sm:$0xff]
  %v59 = vld [vmem:[%s1 + $0x88] sm:$0xff]
  %v60 = vld [vmem:[%s1 + $0x90] sm:$0xff]
  %v61 = vld [vmem:[%s1 + $0x98] sm:$0xff]
  %v62 = vld [vmem:[%s1 + $0xa0] sm:$0xff]
  %v63 = vld [vmem:[%s1 + $0xa8] sm:$0xff]
  %v64 = vld [vmem:[%s1 + $0xb0] sm:$0xff]
  %v65 = vld [vmem:[%s1 + $0xb8] sm:$0xff]
  %v66 = vld [vmem:[%s1 + $0xc0] sm:$0xff]
  %v67 = vld [vmem:[%s1 + $0xc8] sm:$0xff]
  %v68 = vld [vmem:[%s1 + $0xd0] sm:$0xff]
  %v69 = vld [vmem:[%s1 + $0xd8] sm:$0xff]
  %v70 = vld [vmem:[%s1 + $0xe0] sm:$0xff]
  %v71 = vld [vmem:[%s1 + $0xe8] sm:$0xff]
  %v72 = vld [vmem:[%s1 + $0xf0] sm:$0xff]
  %v73 = vld [vmem:[%s1 + $0xf8] sm:$0xff]
  %v74 = vld [vmem:[%s1 + $0x100] sm:$0xff]
  %v75 = vld [vmem:[%s1 + $0x108] sm:$0xff]
  %v76 = vld [vmem:[%s1 + $0x110] sm:$0xff]
  %v77 = vld [vmem:[%s1 + $0x118] sm:$0xff]
  %v78 = vld [vmem:[%s1 + $0x120] sm:$0xff]
  %v79 = vld [vmem:[%s1 + $0x128] sm:$0xff]
  %v80 = vld [vmem:[%s1 + $0x130] sm:$0xff]
  %v81 = vld [vmem:[%s1 + $0x138] sm:$0xff]
  %v82 = vld [vmem:[%s1 + $0x140] sm:$0xff]
  %v83 = vld [vmem:[%s1 + $0x148] sm:$0xff]
  %v84 = vld [vmem:[%s1 + $0x150] sm:$0xff]
  %v85 = vld [vmem:[%s1 + $0x158] sm:$0xff]
  %v86 = vld [vmem:[%s1 + $0x160] sm:$0xff]
  %v87 = vld [vmem:[%s1 + $0x168] sm:$0xff]
  %v88 = vld [vmem:[%s1 + $0x170] sm:$0xff]
  %v89 = vld [vmem:[%s1 + $0x178] sm:$0xff]
  %v90 = vld [vmem:[%s1 + $0x180] sm:$0xff]
  %v91 = vld [vmem:[%s1 + $0x188] sm:$0xff]
  %v92 = vld [vmem:[%s1 + $0x190] sm:$0xff]
  %v93 = vld [vmem:[%s1 + $0x198] sm:$0xff]
  %v94 = vld [vmem:[%s1 + $0x1a0] sm:$0xff]
  %v95 = vld [vmem:[%s1 + $0x1a8] sm:$0xff]
  %v96 = vld [vmem:[%s1 + $0x1b0] sm:$0xff]
  %v97 = vld [vmem:[%s1 + $0x1b8] sm:$0xff]
  %v98 = vld [vmem:[%s1 + $0x1c0] sm:$0xff]
  %v99 = vld [vmem:[%s1 + $0x1c8] sm:$0xff]
  %v100 = vld [vmem:[%s1 + $0x1d0] sm:$0xff]
  %v101 = vld [vmem:[%s1 + $0x1d8] sm:$0xff]
  %v102 = vld [vmem:[%s1 + $0x1e0] sm:$0xff]
  %v103 = vld [vmem:[%s1 + $0x1e8] sm:$0xff]
  %v104 = vld [vmem:[%s1 + $0x1f0] sm:$0xff]
  %v105 = vld [vmem:[%s1 + $0x1f8] sm:$0xff]
  %v106 = vld [vmem:[%s2] sm:$0x3]
  %v108 = vlaneseq
  %v109 = vshrl.u32 %v108, 7
  %v110 = vsub.s32 0, %v109
  %v111 = vrot.slane %v106, %v110
  %v112 = vlaneseq
  %v113 = vshrl.u32 %v112, 7
  %v114 = vsub.s32 1, %v113
  %v115 = vrot.slane %v106, %v114
  %v134 = vunpack.c.l.b16 %v26
  %v135 = vunpack.c.h.b16 %v26
  %v136 = vunpack.c.l.b16 %v27
  %v137 = vunpack.c.h.b16 %v27
  %v138 = vunpack.c.l.b16 %v28
  %v139 = vunpack.c.h.b16 %v28
  %v140 = vunpack.c.l.b16 %v29
  %v141 = vunpack.c.h.b16 %v29
  %v142 = vunpack.c.l.b16 %v30
  %v143 = vunpack.c.h.b16 %v30
  %v144 = vunpack.c.l.b16 %v31
  %v145 = vunpack.c.h.b16 %v31
  %v146 = vunpack.c.l.b16 %v32
  %v147 = vunpack.c.h.b16 %v32
  %v148 = vunpack.c.l.b16 %v33
  %v149 = vunpack.c.h.b16 %v33
  %v150 = vunpack.c.l.b16 %v34
  %v151 = vunpack.c.h.b16 %v34
  %v152 = vunpack.c.l.b16 %v35
  %v153 = vunpack.c.h.b16 %v35
  %v154 = vunpack.c.l.b16 %v36
  %v155 = vunpack.c.h.b16 %v36
  %v156 = vunpack.c.l.b16 %v37
  %v157 = vunpack.c.h.b16 %v37
  %v158 = vunpack.c.l.b16 %v38
  %v159 = vunpack.c.h.b16 %v38
  %v160 = vunpack.c.l.b16 %v39
  %v161 = vunpack.c.h.b16 %v39
  %v162 = vunpack.c.l.b16 %v40
  %v163 = vunpack.c.h.b16 %v40
  %v164 = vunpack.c.l.b16 %v41
  %v165 = vunpack.c.h.b16 %v41
  %v166 = vpack.c.b16 %v138, %v134
  %v167 = vpack.c.b16 %v139, %v135
  %v168 = vpack.c.b16 %v140, %v136
  %v169 = vpack.c.b16 %v141, %v137
  %v170 = vpack.c.b16 %v146, %v142
  %v171 = vpack.c.b16 %v147, %v143
  %v172 = vpack.c.b16 %v148, %v144
  %v173 = vpack.c.b16 %v149, %v145
  %v174 = vpack.c.b16 %v154, %v150
  %v175 = vpack.c.b16 %v155, %v151
  %v176 = vpack.c.b16 %v156, %v152
  %v177 = vpack.c.b16 %v157, %v153
  %v178 = vpack.c.b16 %v162, %v158
  %v179 = vpack.c.b16 %v163, %v159
  %v180 = vpack.c.b16 %v164, %v160
  %v181 = vpack.c.b16 %v165, %v161
  %v262 = vunpack.c.l.b16 %v42
  %v263 = vunpack.c.h.b16 %v42
  %v264 = vunpack.c.l.b16 %v43
  %v265 = vunpack.c.h.b16 %v43
  %v266 = vunpack.c.l.b16 %v44
  %v267 = vunpack.c.h.b16 %v44
  %v268 = vunpack.c.l.b16 %v45
  %v269 = vunpack.c.h.b16 %v45
  %v270 = vunpack.c.l.b16 %v46
  %v271 = vunpack.c.h.b16 %v46
  %v272 = vunpack.c.l.b16 %v47
  %v273 = vunpack.c.h.b16 %v47
  %v274 = vunpack.c.l.b16 %v48
  %v275 = vunpack.c.h.b16 %v48
  %v276 = vunpack.c.l.b16 %v49
  %v277 = vunpack.c.h.b16 %v49
  %v278 = vunpack.c.l.b16 %v50
  %v279 = vunpack.c.h.b16 %v50
  %v280 = vunpack.c.l.b16 %v51
  %v281 = vunpack.c.h.b16 %v51
  %v282 = vunpack.c.l.b16 %v52
  %v283 = vunpack.c.h.b16 %v52
  %v284 = vunpack.c.l.b16 %v53
  %v285 = vunpack.c.h.b16 %v53
  %v286 = vunpack.c.l.b16 %v54
  %v287 = vunpack.c.h.b16 %v54
  %v288 = vunpack.c.l.b16 %v55
  %v289 = vunpack.c.h.b16 %v55
  %v290 = vunpack.c.l.b16 %v56
  %v291 = vunpack.c.h.b16 %v56
  %v292 = vunpack.c.l.b16 %v57
  %v293 = vunpack.c.h.b16 %v57
  %v294 = vunpack.c.l.b16 %v58
  %v295 = vunpack.c.h.b16 %v58
  %v296 = vunpack.c.l.b16 %v59
  %v297 = vunpack.c.h.b16 %v59
  %v298 = vunpack.c.l.b16 %v60
  %v299 = vunpack.c.h.b16 %v60
  %v300 = vunpack.c.l.b16 %v61
  %v301 = vunpack.c.h.b16 %v61
  %v302 = vunpack.c.l.b16 %v62
  %v303 = vunpack.c.h.b16 %v62
  %v304 = vunpack.c.l.b16 %v63
  %v305 = vunpack.c.h.b16 %v63
  %v306 = vunpack.c.l.b16 %v64
  %v307 = vunpack.c.h.b16 %v64
  %v308 = vunpack.c.l.b16 %v65
  %v309 = vunpack.c.h.b16 %v65
  %v310 = vunpack.c.l.b16 %v66
  %v311 = vunpack.c.h.b16 %v66
  %v312 = vunpack.c.l.b16 %v67
  %v313 = vunpack.c.h.b16 %v67
  %v314 = vunpack.c.l.b16 %v68
  %v315 = vunpack.c.h.b16 %v68
  %v316 = vunpack.c.l.b16 %v69
  %v317 = vunpack.c.h.b16 %v69
  %v318 = vunpack.c.l.b16 %v70
  %v319 = vunpack.c.h.b16 %v70
  %v320 = vunpack.c.l.b16 %v71
  %v321 = vunpack.c.h.b16 %v71
  %v322 = vunpack.c.l.b16 %v72
  %v323 = vunpack.c.h.b16 %v72
  %v324 = vunpack.c.l.b16 %v73
  %v325 = vunpack.c.h.b16 %v73
  %v326 = vunpack.c.l.b16 %v74
  %v327 = vunpack.c.h.b16 %v74
  %v328 = vunpack.c.l.b16 %v75
  %v329 = vunpack.c.h.b16 %v75
  %v330 = vunpack.c.l.b16 %v76
  %v331 = vunpack.c.h.b16 %v76
  %v332 = vunpack.c.l.b16 %v77
  %v333 = vunpack.c.h.b16 %v77
  %v334 = vunpack.c.l.b16 %v78
  %v335 = vunpack.c.h.b16 %v78
  %v336 = vunpack.c.l.b16 %v79
  %v337 = vunpack.c.h.b16 %v79
  %v338 = vunpack.c.l.b16 %v80
  %v339 = vunpack.c.h.b16 %v80
  %v340 = vunpack.c.l.b16 %v81
  %v341 = vunpack.c.h.b16 %v81
  %v342 = vunpack.c.l.b16 %v82
  %v343 = vunpack.c.h.b16 %v82
  %v344 = vunpack.c.l.b16 %v83
  %v345 = vunpack.c.h.b16 %v83
  %v346 = vunpack.c.l.b16 %v84
  %v347 = vunpack.c.h.b16 %v84
  %v348 = vunpack.c.l.b16 %v85
  %v349 = vunpack.c.h.b16 %v85
  %v350 = vunpack.c.l.b16 %v86
  %v351 = vunpack.c.h.b16 %v86
  %v352 = vunpack.c.l.b16 %v87
  %v353 = vunpack.c.h.b16 %v87
  %v354 = vunpack.c.l.b16 %v88
  %v355 = vunpack.c.h.b16 %v88
  %v356 = vunpack.c.l.b16 %v89
  %v357 = vunpack.c.h.b16 %v89
  %v358 = vunpack.c.l.b16 %v90
  %v359 = vunpack.c.h.b16 %v90
  %v360 = vunpack.c.l.b16 %v91
  %v361 = vunpack.c.h.b16 %v91
  %v362 = vunpack.c.l.b16 %v92
  %v363 = vunpack.c.h.b16 %v92
  %v364 = vunpack.c.l.b16 %v93
  %v365 = vunpack.c.h.b16 %v93
  %v366 = vunpack.c.l.b16 %v94
  %v367 = vunpack.c.h.b16 %v94
  %v368 = vunpack.c.l.b16 %v95
  %v369 = vunpack.c.h.b16 %v95
  %v370 = vunpack.c.l.b16 %v96
  %v371 = vunpack.c.h.b16 %v96
  %v372 = vunpack.c.l.b16 %v97
  %v373 = vunpack.c.h.b16 %v97
  %v374 = vunpack.c.l.b16 %v98
  %v375 = vunpack.c.h.b16 %v98
  %v376 = vunpack.c.l.b16 %v99
  %v377 = vunpack.c.h.b16 %v99
  %v378 = vunpack.c.l.b16 %v100
  %v379 = vunpack.c.h.b16 %v100
  %v380 = vunpack.c.l.b16 %v101
  %v381 = vunpack.c.h.b16 %v101
  %v382 = vunpack.c.l.b16 %v102
  %v383 = vunpack.c.h.b16 %v102
  %v384 = vunpack.c.l.b16 %v103
  %v385 = vunpack.c.h.b16 %v103
  %v386 = vunpack.c.l.b16 %v104
  %v387 = vunpack.c.h.b16 %v104
  %v388 = vunpack.c.l.b16 %v105
  %v389 = vunpack.c.h.b16 %v105
  %v390 = vpack.c.b16 %v264, %v262
  %v391 = vpack.c.b16 %v265, %v263
  %v392 = vpack.c.b16 %v268, %v266
  %v393 = vpack.c.b16 %v269, %v267
  %v394 = vpack.c.b16 %v272, %v270
  %v395 = vpack.c.b16 %v273, %v271
  %v396 = vpack.c.b16 %v276, %v274
  %v397 = vpack.c.b16 %v277, %v275
  %v398 = vpack.c.b16 %v280, %v278
  %v399 = vpack.c.b16 %v281, %v279
  %v400 = vpack.c.b16 %v284, %v282
  %v401 = vpack.c.b16 %v285, %v283
  %v402 = vpack.c.b16 %v288, %v286
  %v403 = vpack.c.b16 %v289, %v287
  %v404 = vpack.c.b16 %v292, %v290
  %v405 = vpack.c.b16 %v293, %v291
  %v406 = vpack.c.b16 %v296, %v294
  %v407 = vpack.c.b16 %v297, %v295
  %v408 = vpack.c.b16 %v300, %v298
  %v409 = vpack.c.b16 %v301, %v299
  %v410 = vpack.c.b16 %v304, %v302
  %v411 = vpack.c.b16 %v305, %v303
  %v412 = vpack.c.b16 %v308, %v306
  %v413 = vpack.c.b16 %v309, %v307
  %v414 = vpack.c.b16 %v312, %v310
  %v415 = vpack.c.b16 %v313, %v311
  %v416 = vpack.c.b16 %v316, %v314
  %v417 = vpack.c.b16 %v317, %v315
  %v418 = vpack.c.b16 %v320, %v318
  %v419 = vpack.c.b16 %v321, %v319
  %v420 = vpack.c.b16 %v324, %v322
  %v421 = vpack.c.b16 %v325, %v323
  %v422 = vpack.c.b16 %v328, %v326
  %v423 = vpack.c.b16 %v329, %v327
  %v424 = vpack.c.b16 %v332, %v330
  %v425 = vpack.c.b16 %v333, %v331
  %v426 = vpack.c.b16 %v336, %v334
  %v427 = vpack.c.b16 %v337, %v335
  %v428 = vpack.c.b16 %v340, %v338
  %v429 = vpack.c.b16 %v341, %v339
  %v430 = vpack.c.b16 %v344, %v342
  %v431 = vpack.c.b16 %v345, %v343
  %v432 = vpack.c.b16 %v348, %v346
  %v433 = vpack.c.b16 %v349, %v347
  %v434 = vpack.c.b16 %v352, %v350
  %v435 = vpack.c.b16 %v353, %v351
  %v436 = vpack.c.b16 %v356, %v354
  %v437 = vpack.c.b16 %v357, %v355
  %v438 = vpack.c.b16 %v360, %v358
  %v439 = vpack.c.b16 %v361, %v359
  %v440 = vpack.c.b16 %v364, %v362
  %v441 = vpack.c.b16 %v365, %v363
  %v442 = vpack.c.b16 %v368, %v366
  %v443 = vpack.c.b16 %v369, %v367
  %v444 = vpack.c.b16 %v372, %v370
  %v445 = vpack.c.b16 %v373, %v371
  %v446 = vpack.c.b16 %v376, %v374
  %v447 = vpack.c.b16 %v377, %v375
  %v448 = vpack.c.b16 %v380, %v378
  %v449 = vpack.c.b16 %v381, %v379
  %v450 = vpack.c.b16 %v384, %v382
  %v451 = vpack.c.b16 %v385, %v383
  %v452 = vpack.c.b16 %v388, %v386
  %v453 = vpack.c.b16 %v389, %v387
  %518 = vmatprep.subr.bf16.mxu0 %v391
  %519 = vmatpush1.bf16.msra.mxu0 %v390
  %520 = vmatprep.subr.bf16.mxu0 %v393
  %521 = vmatpush1.bf16.msra.mxu0 %v392
  %522 = vmatprep.subr.bf16.mxu0 %v395
  %523 = vmatpush1.bf16.msra.mxu0 %v394
  %524 = vmatprep.subr.bf16.mxu0 %v397
  %525 = vmatpush1.bf16.msra.mxu0 %v396
  %526 = vmatprep.subr.bf16.mxu0 %v399
  %527 = vmatpush1.bf16.msra.mxu0 %v398
  %528 = vmatprep.subr.bf16.mxu0 %v401
  %529 = vmatpush1.bf16.msra.mxu0 %v400
  %530 = vmatprep.subr.bf16.mxu0 %v403
  %531 = vmatpush1.bf16.msra.mxu0 %v402
  %532 = vmatprep.subr.bf16.mxu0 %v405
  %533 = vmatpush1.bf16.msra.mxu0 %v404
  %534 = vmatprep.subr.bf16.mxu0 %v407
  %535 = vmatpush1.bf16.msra.mxu0 %v406
  %536 = vmatprep.subr.bf16.mxu0 %v409
  %537 = vmatpush1.bf16.msra.mxu0 %v408
  %538 = vmatprep.subr.bf16.mxu0 %v411
  %539 = vmatpush1.bf16.msra.mxu0 %v410
  %540 = vmatprep.subr.bf16.mxu0 %v413
  %541 = vmatpush1.bf16.msra.mxu0 %v412
  %542 = vmatprep.subr.bf16.mxu0 %v415
  %543 = vmatpush1.bf16.msra.mxu0 %v414
  %544 = vmatprep.subr.bf16.mxu0 %v417
  %545 = vmatpush1.bf16.msra.mxu0 %v416
  %546 = vmatprep.subr.bf16.mxu0 %v419
  %547 = vmatpush1.bf16.msra.mxu0 %v418
  %548 = vmatprep.subr.bf16.mxu0 %v421
  %549 = vmatpush1.bf16.msra.mxu0 %v420
  %550 = vmatprep.mubr.bf16.mxu0 %v167
  %551 = vmatmul.mubr.bf16.gmra.mrb[0].mxu0 %v166
  %v552 = vpop.f32.mrb[0].mxu0
  %v553 = vadd.f32 %v111, %v552
  %v554 = vpop.f32.mrb[0].mxu0
  %v555 = vadd.f32 %v115, %v554
  %v556 = vpop.f32.mrb[0].mxu0
  %v557 = vadd.f32 %v111, %v556
  %v558 = vpop.f32.mrb[0].mxu0
  %v559 = vadd.f32 %v115, %v558
  %560 = vmatprep.mubr.bf16.mxu0 %v171
  %561 = vmatmul.mubr.bf16.gmra.mrb[0].mxu0 %v170
  %v562 = vpop.f32.mrb[0].mxu0
  %v563 = vadd.f32 %v111, %v562
  %v564 = vpop.f32.mrb[0].mxu0
  %v565 = vadd.f32 %v115, %v564
  %v566 = vpop.f32.mrb[0].mxu0
  %v567 = vadd.f32 %v111, %v566
  %v568 = vpop.f32.mrb[0].mxu0
  %v569 = vadd.f32 %v115, %v568
  %570 = vmatprep.mubr.bf16.mxu0 %v175
  %571 = vmatmul.mubr.bf16.gmra.mrb[0].mxu0 %v174
  %v572 = vpop.f32.mrb[0].mxu0
  %v573 = vadd.f32 %v111, %v572
  %v574 = vpop.f32.mrb[0].mxu0
  %v575 = vadd.f32 %v115, %v574
  %v576 = vpop.f32.mrb[0].mxu0
  %v577 = vadd.f32 %v111, %v576
  %v578 = vpop.f32.mrb[0].mxu0
  %v579 = vadd.f32 %v115, %v578
  %580 = vmatprep.mubr.bf16.mxu0 %v179
  %581 = vmatmul.mubr.bf16.gmra.mrb[0].mxu0 %v178
  %v582 = vpop.f32.mrb[0].mxu0
  %v583 = vadd.f32 %v111, %v582
  %v584 = vpop.f32.mrb[0].mxu0
  %v585 = vadd.f32 %v115, %v584
  %v586 = vpop.f32.mrb[0].mxu0
  %v587 = vadd.f32 %v111, %v586
  %v588 = vpop.f32.mrb[0].mxu0
  %v589 = vadd.f32 %v115, %v588
  %590 = vdwg.mxu0
  %591 = vmatprep.subr.bf16.mxu0 %v423
  %592 = vmatpush1.bf16.msra.mxu0 %v422
  %593 = vmatprep.subr.bf16.mxu0 %v425
  %594 = vmatpush1.bf16.msra.mxu0 %v424
  %595 = vmatprep.subr.bf16.mxu0 %v427
  %596 = vmatpush1.bf16.msra.mxu0 %v426
  %597 = vmatprep.subr.bf16.mxu0 %v429
  %598 = vmatpush1.bf16.msra.mxu0 %v428
  %599 = vmatprep.subr.bf16.mxu0 %v431
  %600 = vmatpush1.bf16.msra.mxu0 %v430
  %601 = vmatprep.subr.bf16.mxu0 %v433
  %602 = vmatpush1.bf16.msra.mxu0 %v432
  %603 = vmatprep.subr.bf16.mxu0 %v435
  %604 = vmatpush1.bf16.msra.mxu0 %v434
  %605 = vmatprep.subr.bf16.mxu0 %v437
  %606 = vmatpush1.bf16.msra.mxu0 %v436
  %607 = vmatprep.subr.bf16.mxu0 %v439
  %608 = vmatpush1.bf16.msra.mxu0 %v438
  %609 = vmatprep.subr.bf16.mxu0 %v441
  %610 = vmatpush1.bf16.msra.mxu0 %v440
  %611 = vmatprep.subr.bf16.mxu0 %v443
  %612 = vmatpush1.bf16.msra.mxu0 %v442
  %613 = vmatprep.subr.bf16.mxu0 %v445
  %614 = vmatpush1.bf16.msra.mxu0 %v444
  %615 = vmatprep.subr.bf16.mxu0 %v447
  %616 = vmatpush1.bf16.msra.mxu0 %v446
  %617 = vmatprep.subr.bf16.mxu0 %v449
  %618 = vmatpush1.bf16.msra.mxu0 %v448
  %619 = vmatprep.subr.bf16.mxu0 %v451
  %620 = vmatpush1.bf16.msra.mxu0 %v450
  %621 = vmatprep.subr.bf16.mxu0 %v453
  %622 = vmatpush1.bf16.msra.mxu0 %v452
  %623 = vmatprep.mubr.bf16.mxu0 %v169
  %624 = vmatmul.mubr.bf16.gmra.mrb[0].mxu0 %v168
  %v625 = vpop.f32.mrb[0].mxu0
  %v626 = vadd.f32 %v553, %v625
  %v627 = vpop.f32.mrb[0].mxu0
  %v628 = vadd.f32 %v555, %v627
  %v629 = vpop.f32.mrb[0].mxu0
  %v630 = vadd.f32 %v557, %v629
  %v631 = vpop.f32.mrb[0].mxu0
  %v632 = vadd.f32 %v559, %v631
  %633 = vmatprep.mubr.bf16.mxu0 %v173
  %634 = vmatmul.mubr.bf16.gmra.mrb[0].mxu0 %v172
  %v635 = vpop.f32.mrb[0].mxu0
  %v636 = vadd.f32 %v563, %v635
  %v637 = vpop.f32.mrb[0].mxu0
  %v638 = vadd.f32 %v565, %v637
  %v639 = vpop.f32.mrb[0].mxu0
  %v640 = vadd.f32 %v567, %v639
  %v641 = vpop.f32.mrb[0].mxu0
  %v642 = vadd.f32 %v569, %v641
  %643 = vmatprep.mubr.bf16.mxu0 %v177
  %644 = vmatmul.mubr.bf16.gmra.mrb[0].mxu0 %v176
  %v645 = vpop.f32.mrb[0].mxu0
  %v646 = vadd.f32 %v573, %v645
  %v647 = vpop.f32.mrb[0].mxu0
  %v648 = vadd.f32 %v575, %v647
  %v649 = vpop.f32.mrb[0].mxu0
  %v650 = vadd.f32 %v577, %v649
  %v651 = vpop.f32.mrb[0].mxu0
  %v652 = vadd.f32 %v579, %v651
  %653 = vmatprep.mubr.bf16.mxu0 %v181
  %654 = vmatmul.mubr.bf16.gmra.mrb[0].mxu0 %v180
  %v655 = vpop.f32.mrb[0].mxu0
  %v656 = vadd.f32 %v583, %v655
  %v657 = vpop.f32.mrb[0].mxu0
  %v658 = vadd.f32 %v585, %v657
  %v659 = vpop.f32.mrb[0].mxu0
  %v660 = vadd.f32 %v587, %v659
  %v661 = vpop.f32.mrb[0].mxu0
  %v662 = vadd.f32 %v589, %v661
  %663 = vdwg.mxu0
  %v664 = vld [vmem:[%s3] sm:$0xff]
  %v665 = vld [vmem:[%s3 + $0x8] sm:$0xff]
  %v666 = vld [vmem:[%s3 + $0x10] sm:$0xff]
  %v667 = vld [vmem:[%s3 + $0x18] sm:$0xff]
  %v668 = vld [vmem:[%s3 + $0x20] sm:$0xff]
  %v669 = vld [vmem:[%s3 + $0x28] sm:$0xff]
  %v670 = vld [vmem:[%s3 + $0x30] sm:$0xff]
  %v671 = vld [vmem:[%s3 + $0x38] sm:$0xff]
  %v672 = vld [vmem:[%s3 + $0x40] sm:$0xff]
  %v673 = vld [vmem:[%s3 + $0x48] sm:$0xff]
  %v674 = vld [vmem:[%s3 + $0x50] sm:$0xff]
  %v675 = vld [vmem:[%s3 + $0x58] sm:$0xff]
  %v676 = vld [vmem:[%s3 + $0x60] sm:$0xff]
  %v677 = vld [vmem:[%s3 + $0x68] sm:$0xff]
  %v678 = vld [vmem:[%s3 + $0x70] sm:$0xff]
  %v679 = vld [vmem:[%s3 + $0x78] sm:$0xff]
  %v680 = vld [vmem:[%s4] sm:$0xff]
  %v681 = vld [vmem:[%s4 + $0x8] sm:$0xff]
  %v682 = vld [vmem:[%s4 + $0x10] sm:$0xff]
  %v683 = vld [vmem:[%s4 + $0x18] sm:$0xff]
  %v684 = vld [vmem:[%s4 + $0x20] sm:$0xff]
  %v685 = vld [vmem:[%s4 + $0x28] sm:$0xff]
  %v686 = vld [vmem:[%s4 + $0x30] sm:$0xff]
  %v687 = vld [vmem:[%s4 + $0x38] sm:$0xff]
  %v688 = vld [vmem:[%s4 + $0x40] sm:$0xff]
  %v689 = vld [vmem:[%s4 + $0x48] sm:$0xff]
  %v690 = vld [vmem:[%s4 + $0x50] sm:$0xff]
  %v691 = vld [vmem:[%s4 + $0x58] sm:$0xff]
  %v692 = vld [vmem:[%s4 + $0x60] sm:$0xff]
  %v693 = vld [vmem:[%s4 + $0x68] sm:$0xff]
  %v694 = vld [vmem:[%s4 + $0x70] sm:$0xff]
  %v695 = vld [vmem:[%s4 + $0x78] sm:$0xff]
  %v696 = vld [vmem:[%s4 + $0x80] sm:$0xff]
  %v697 = vld [vmem:[%s4 + $0x88] sm:$0xff]
  %v698 = vld [vmem:[%s4 + $0x90] sm:$0xff]
  %v699 = vld [vmem:[%s4 + $0x98] sm:$0xff]
  %v700 = vld [vmem:[%s4 + $0xa0] sm:$0xff]
  %v701 = vld [vmem:[%s4 + $0xa8] sm:$0xff]
  %v702 = vld [vmem:[%s4 + $0xb0] sm:$0xff]
  %v703 = vld [vmem:[%s4 + $0xb8] sm:$0xff]
  %v704 = vld [vmem:[%s4 + $0xc0] sm:$0xff]
  %v705 = vld [vmem:[%s4 + $0xc8] sm:$0xff]
  %v706 = vld [vmem:[%s4 + $0xd0] sm:$0xff]
  %v707 = vld [vmem:[%s4 + $0xd8] sm:$0xff]
  %v708 = vld [vmem:[%s4 + $0xe0] sm:$0xff]
  %v709 = vld [vmem:[%s4 + $0xe8] sm:$0xff]
  %v710 = vld [vmem:[%s4 + $0xf0] sm:$0xff]
  %v711 = vld [vmem:[%s4 + $0xf8] sm:$0xff]
  %v712 = vld [vmem:[%s4 + $0x100] sm:$0xff]
  %v713 = vld [vmem:[%s4 + $0x108] sm:$0xff]
  %v714 = vld [vmem:[%s4 + $0x110] sm:$0xff]
  %v715 = vld [vmem:[%s4 + $0x118] sm:$0xff]
  %v716 = vld [vmem:[%s4 + $0x120] sm:$0xff]
  %v717 = vld [vmem:[%s4 + $0x128] sm:$0xff]
  %v718 = vld [vmem:[%s4 + $0x130] sm:$0xff]
  %v719 = vld [vmem:[%s4 + $0x138] sm:$0xff]
  %v720 = vld [vmem:[%s4 + $0x140] sm:$0xff]
  %v721 = vld [vmem:[%s4 + $0x148] sm:$0xff]
  %v722 = vld [vmem:[%s4 + $0x150] sm:$0xff]
  %v723 = vld [vmem:[%s4 + $0x158] sm:$0xff]
  %v724 = vld [vmem:[%s4 + $0x160] sm:$0xff]
  %v725 = vld [vmem:[%s4 + $0x168] sm:$0xff]
  %v726 = vld [vmem:[%s4 + $0x170] sm:$0xff]
  %v727 = vld [vmem:[%s4 + $0x178] sm:$0xff]
  %v728 = vld [vmem:[%s4 + $0x180] sm:$0xff]
  %v729 = vld [vmem:[%s4 + $0x188] sm:$0xff]
  %v730 = vld [vmem:[%s4 + $0x190] sm:$0xff]
  %v731 = vld [vmem:[%s4 + $0x198] sm:$0xff]
  %v732 = vld [vmem:[%s4 + $0x1a0] sm:$0xff]
  %v733 = vld [vmem:[%s4 + $0x1a8] sm:$0xff]
  %v734 = vld [vmem:[%s4 + $0x1b0] sm:$0xff]
  %v735 = vld [vmem:[%s4 + $0x1b8] sm:$0xff]
  %v736 = vld [vmem:[%s4 + $0x1c0] sm:$0xff]
  %v737 = vld [vmem:[%s4 + $0x1c8] sm:$0xff]
  %v738 = vld [vmem:[%s4 + $0x1d0] sm:$0xff]
  %v739 = vld [vmem:[%s4 + $0x1d8] sm:$0xff]
  %v740 = vld [vmem:[%s4 + $0x1e0] sm:$0xff]
  %v741 = vld [vmem:[%s4 + $0x1e8] sm:$0xff]
  %v742 = vld [vmem:[%s4 + $0x1f0] sm:$0xff]
  %v743 = vld [vmem:[%s4 + $0x1f8] sm:$0xff]
  %v744 = vmul.f32 %v664, %v626
  %v745 = vmul.f32 %v665, %v628
  %v746 = vmul.f32 %v666, %v630
  %v747 = vmul.f32 %v667, %v632
  %v748 = vmul.f32 %v668, %v636
  %v749 = vmul.f32 %v669, %v638
  %v750 = vmul.f32 %v670, %v640
  %v751 = vmul.f32 %v671, %v642
  %v752 = vmul.f32 %v672, %v646
  %v753 = vmul.f32 %v673, %v648
  %v754 = vmul.f32 %v674, %v650
  %v755 = vmul.f32 %v675, %v652
  %v756 = vmul.f32 %v676, %v656
  %v757 = vmul.f32 %v677, %v658
  %v758 = vmul.f32 %v678, %v660
  %v759 = vmul.f32 %v679, %v662
  %760 = vmatprep.subr.mxu0 %v681
  %761 = vmatpush1.msra.mxu0 %v680
  %762 = vmatprep.subr.mxu0 %v683
  %763 = vmatpush1.msra.mxu0 %v682
  %764 = vmatprep.subr.mxu0 %v685
  %765 = vmatpush1.msra.mxu0 %v684
  %766 = vmatprep.subr.mxu0 %v687
  %767 = vmatpush1.msra.mxu0 %v686
  %768 = vmatprep.subr.mxu0 %v689
  %769 = vmatpush1.msra.mxu0 %v688
  %770 = vmatprep.subr.mxu0 %v691
  %771 = vmatpush1.msra.mxu0 %v690
  %772 = vmatprep.subr.mxu0 %v693
  %773 = vmatpush1.msra.mxu0 %v692
  %774 = vmatprep.subr.mxu0 %v695
  %775 = vmatpush1.msra.mxu0 %v694
  %776 = vmatprep.subr.mxu0 %v697
  %777 = vmatpush1.msra.mxu0 %v696
  %778 = vmatprep.subr.mxu0 %v699
  %779 = vmatpush1.msra.mxu0 %v698
  %780 = vmatprep.subr.mxu0 %v701
  %781 = vmatpush1.msra.mxu0 %v700
  %782 = vmatprep.subr.mxu0 %v703
  %783 = vmatpush1.msra.mxu0 %v702
  %784 = vmatprep.subr.mxu0 %v705
  %785 = vmatpush1.msra.mxu0 %v704
  %786 = vmatprep.subr.mxu0 %v707
  %787 = vmatpush1.msra.mxu0 %v706
  %788 = vmatprep.subr.mxu0 %v709
  %789 = vmatpush1.msra.mxu0 %v708
  %790 = vmatprep.subr.mxu0 %v711
  %791 = vmatpush1.msra.mxu0 %v710
  %792 = vmatprep.subr.mxu0 %v713
  %793 = vmatpush1.msra.mxu0 %v712
  %794 = vmatprep.subr.mxu0 %v715
  %795 = vmatpush1.msra.mxu0 %v714
  %796 = vmatprep.subr.mxu0 %v717
  %797 = vmatpush1.msra.mxu0 %v716
  %798 = vmatprep.subr.mxu0 %v719
  %799 = vmatpush1.msra.mxu0 %v718
  %800 = vmatprep.subr.mxu0 %v721
  %801 = vmatpush1.msra.mxu0 %v720
  %802 = vmatprep.subr.mxu0 %v723
  %803 = vmatpush1.msra.mxu0 %v722
  %804 = vmatprep.subr.mxu0 %v725
  %805 = vmatpush1.msra.mxu0 %v724
  %806 = vmatprep.subr.mxu0 %v727
  %807 = vmatpush1.msra.mxu0 %v726
  %808 = vmatprep.subr.mxu0 %v729
  %809 = vmatpush1.msra.mxu0 %v728
  %810 = vmatprep.subr.mxu0 %v731
  %811 = vmatpush1.msra.mxu0 %v730
  %812 = vmatprep.subr.mxu0 %v733
  %813 = vmatpush1.msra.mxu0 %v732
  %814 = vmatprep.subr.mxu0 %v735
  %815 = vmatpush1.msra.mxu0 %v734
  %816 = vmatprep.subr.mxu0 %v737
  %817 = vmatpush1.msra.mxu0 %v736
  %818 = vmatprep.subr.mxu0 %v739
  %819 = vmatpush1.msra.mxu0 %v738
  %820 = vmatprep.subr.mxu0 %v741
  %821 = vmatpush1.msra.mxu0 %v740
  %822 = vmatprep.subr.mxu0 %v743
  %823 = vmatpush1.msra.mxu0 %v742
  %824 = vmatprep.mubr.f32.mxu0 %v745
  %825 = vmatmul.mubr.f32.gmra.mrb[0].mxu0 %v744
  %v826 = vpop.f32.mrb[0].mxu0
  %v827 = vadd.f32 0.0, %v826
  %v828 = vpop.f32.mrb[0].mxu0
  %v829 = vadd.f32 0.0, %v828
  %830 = vmatprep.mubr.f32.mxu0 %v747
  %831 = vmatmul.mubr.f32.gmra.mrb[0].mxu0 %v746
  %v832 = vpop.f32.mrb[0].mxu0
  %v833 = vadd.f32 0.0, %v832
  %v834 = vpop.f32.mrb[0].mxu0
  %v835 = vadd.f32 0.0, %v834
  %836 = vmatprep.mubr.f32.mxu0 %v749
  %837 = vmatmul.mubr.f32.gmra.mrb[0].mxu0 %v748
  %v838 = vpop.f32.mrb[0].mxu0
  %v839 = vadd.f32 0.0, %v838
  %v840 = vpop.f32.mrb[0].mxu0
  %v841 = vadd.f32 0.0, %v840
  %842 = vmatprep.mubr.f32.mxu0 %v751
  %843 = vmatmul.mubr.f32.gmra.mrb[0].mxu0 %v750
  %v844 = vpop.f32.mrb[0].mxu0
  %v845 = vadd.f32 0.0, %v844
  %v846 = vpop.f32.mrb[0].mxu0
  %v847 = vadd.f32 0.0, %v846
  %848 = vmatprep.mubr.f32.mxu0 %v753
  %849 = vmatmul.mubr.f32.gmra.mrb[0].mxu0 %v752
  %v850 = vpop.f32.mrb[0].mxu0
  %v851 = vadd.f32 0.0, %v850
  %v852 = vpop.f32.mrb[0].mxu0
  %v853 = vadd.f32 0.0, %v852
  %854 = vmatprep.mubr.f32.mxu0 %v755
  %855 = vmatmul.mubr.f32.gmra.mrb[0].mxu0 %v754
  %v856 = vpop.f32.mrb[0].mxu0
  %v857 = vadd.f32 0.0, %v856
  %v858 = vpop.f32.mrb[0].mxu0
  %v859 = vadd.f32 0.0, %v858
  %860 = vmatprep.mubr.f32.mxu0 %v757
  %861 = vmatmul.mubr.f32.gmra.mrb[0].mxu0 %v756
  %v862 = vpop.f32.mrb[0].mxu0
  %v863 = vadd.f32 0.0, %v862
  %v864 = vpop.f32.mrb[0].mxu0
  %v865 = vadd.f32 0.0, %v864
  %866 = vmatprep.mubr.f32.mxu0 %v759
  %867 = vmatmul.mubr.f32.gmra.mrb[0].mxu0 %v758
  %v868 = vpop.f32.mrb[0].mxu0
  %v869 = vadd.f32 0.0, %v868
  %v870 = vpop.f32.mrb[0].mxu0
  %v871 = vadd.f32 0.0, %v870
  %872 = vdwg.mxu0
  %v873 = vadd.f32 %v827, %v833
  %v874 = vadd.f32 %v873, %v839
  %v875 = vadd.f32 %v874, %v845
  %v876 = vadd.f32 %v875, %v851
  %v877 = vadd.f32 %v876, %v857
  %v878 = vadd.f32 %v877, %v863
  %v879 = vadd.f32 %v878, %v869
  %v880 = vrot.slane %v879, 4
  %v881 = vadd.f32 %v879, %v880
  %v882 = vrot.slane %v881, 2
  %v883 = vadd.f32 %v881, %v882
  %v884 = vrot.slane %v883, 1
  %v885 = vadd.f32 %v883, %v884
  %v886 = vadd.f32 %v829, %v835
  %v887 = vadd.f32 %v886, %v841
  %v888 = vadd.f32 %v887, %v847
  %v889 = vadd.f32 %v888, %v853
  %v890 = vadd.f32 %v889, %v859
  %v891 = vadd.f32 %v890, %v865
  %v892 = vadd.f32 %v891, %v871
  %v893 = vrot.slane %v892, 4
  %v894 = vadd.f32 %v892, %v893
  %v895 = vrot.slane %v894, 2
  %v896 = vadd.f32 %v894, %v895
  %v897 = vrot.slane %v896, 1
  %v898 = vadd.f32 %v896, %v897
  %v899 = vmul.f32 %v885, 0.0078125
  %v900 = vmul.f32 %v898, 0.0078125
  %v901 = vsub.f32 %v626, %v899
  %v902 = vsub.f32 %v628, %v900
  %v903 = vsub.f32 %v630, %v899
  %v904 = vsub.f32 %v632, %v900
  %v905 = vsub.f32 %v636, %v899
  %v906 = vsub.f32 %v638, %v900
  %v907 = vsub.f32 %v640, %v899
  %v908 = vsub.f32 %v642, %v900
  %v909 = vsub.f32 %v646, %v899
  %v910 = vsub.f32 %v648, %v900
  %v911 = vsub.f32 %v650, %v899
  %v912 = vsub.f32 %v652, %v900
  %v913 = vsub.f32 %v656, %v899
  %v914 = vsub.f32 %v658, %v900
  %v915 = vsub.f32 %v660, %v899
  %v916 = vsub.f32 %v662, %v900
  %v917 = vmul.f32 %v664, %v901
  %v918 = vmul.f32 %v665, %v902
  %v919 = vmul.f32 %v666, %v903
  %v920 = vmul.f32 %v667, %v904
  %v921 = vmul.f32 %v668, %v905
  %v922 = vmul.f32 %v669, %v906
  %v923 = vmul.f32 %v670, %v907
  %v924 = vmul.f32 %v671, %v908
  %v925 = vmul.f32 %v672, %v909
  %v926 = vmul.f32 %v673, %v910
  %v927 = vmul.f32 %v674, %v911
  %v928 = vmul.f32 %v675, %v912
  %v929 = vmul.f32 %v676, %v913
  %v930 = vmul.f32 %v677, %v914
  %v931 = vmul.f32 %v678, %v915
  %v932 = vmul.f32 %v679, %v916
  %v933 = vmul.f32 %v917, %v901
  %v934 = vmul.f32 %v918, %v902
  %v935 = vmul.f32 %v919, %v903
  %v936 = vmul.f32 %v920, %v904
  %v937 = vmul.f32 %v921, %v905
  %v938 = vmul.f32 %v922, %v906
  %v939 = vmul.f32 %v923, %v907
  %v940 = vmul.f32 %v924, %v908
  %v941 = vmul.f32 %v925, %v909
  %v942 = vmul.f32 %v926, %v910
  %v943 = vmul.f32 %v927, %v911
  %v944 = vmul.f32 %v928, %v912
  %v945 = vmul.f32 %v929, %v913
  %v946 = vmul.f32 %v930, %v914
  %v947 = vmul.f32 %v931, %v915
  %v948 = vmul.f32 %v932, %v916
  %949 = vmatprep.subr.mxu0 %v681
  %950 = vmatpush1.msra.mxu0 %v680
  %951 = vmatprep.subr.mxu0 %v683
  %952 = vmatpush1.msra.mxu0 %v682
  %953 = vmatprep.subr.mxu0 %v685
  %954 = vmatpush1.msra.mxu0 %v684
  %955 = vmatprep.subr.mxu0 %v687
  %956 = vmatpush1.msra.mxu0 %v686
  %957 = vmatprep.subr.mxu0 %v689
  %958 = vmatpush1.msra.mxu0 %v688
  %959 = vmatprep.subr.mxu0 %v691
  %960 = vmatpush1.msra.mxu0 %v690
  %961 = vmatprep.subr.mxu0 %v693
  %962 = vmatpush1.msra.mxu0 %v692
  %963 = vmatprep.subr.mxu0 %v695
  %964 = vmatpush1.msra.mxu0 %v694
  %965 = vmatprep.subr.mxu0 %v697
  %966 = vmatpush1.msra.mxu0 %v696
  %967 = vmatprep.subr.mxu0 %v699
  %968 = vmatpush1.msra.mxu0 %v698
  %969 = vmatprep.subr.mxu0 %v701
  %970 = vmatpush1.msra.mxu0 %v700
  %971 = vmatprep.subr.mxu0 %v703
  %972 = vmatpush1.msra.mxu0 %v702
  %973 = vmatprep.subr.mxu0 %v705
  %974 = vmatpush1.msra.mxu0 %v704
  %975 = vmatprep.subr.mxu0 %v707
  %976 = vmatpush1.msra.mxu0 %v706
  %977 = vmatprep.subr.mxu0 %v709
  %978 = vmatpush1.msra.mxu0 %v708
  %979 = vmatprep.subr.mxu0 %v711
  %980 = vmatpush1.msra.mxu0 %v710
  %981 = vmatprep.subr.mxu0 %v713
  %982 = vmatpush1.msra.mxu0 %v712
  %983 = vmatprep.subr.mxu0 %v715
  %984 = vmatpush1.msra.mxu0 %v714
  %985 = vmatprep.subr.mxu0 %v717
  %986 = vmatpush1.msra.mxu0 %v716
  %987 = vmatprep.subr.mxu0 %v719
  %988 = vmatpush1.msra.mxu0 %v718
  %989 = vmatprep.subr.mxu0 %v721
  %990 = vmatpush1.msra.mxu0 %v720
  %991 = vmatprep.subr.mxu0 %v723
  %992 = vmatpush1.msra.mxu0 %v722
  %993 = vmatprep.subr.mxu0 %v725
  %994 = vmatpush1.msra.mxu0 %v724
  %995 = vmatprep.subr.mxu0 %v727
  %996 = vmatpush1.msra.mxu0 %v726
  %997 = vmatprep.subr.mxu0 %v729
  %998 = vmatpush1.msra.mxu0 %v728
  %999 = vmatprep.subr.mxu0 %v731
  %1000 = vmatpush1.msra.mxu0 %v730
  %1001 = vmatprep.subr.mxu0 %v733
  %1002 = vmatpush1.msra.mxu0 %v732
  %1003 = vmatprep.subr.mxu0 %v735
  %1004 = vmatpush1.msra.mxu0 %v734
  %1005 = vmatprep.subr.mxu0 %v737
  %1006 = vmatpush1.msra.mxu0 %v736
  %1007 = vmatprep.subr.mxu0 %v739
  %1008 = vmatpush1.msra.mxu0 %v738
  %1009 = vmatprep.subr.mxu0 %v741
  %1010 = vmatpush1.msra.mxu0 %v740
  %1011 = vmatprep.subr.mxu0 %v743
  %1012 = vmatpush1.msra.mxu0 %v742
  %1013 = vmatprep.mubr.f32.mxu0 %v934
  %1014 = vmatmul.mubr.f32.gmra.mrb[0].mxu0 %v933
  %v1015 = vpop.f32.mrb[0].mxu0
  %v1016 = vadd.f32 0.0, %v1015
  %v1017 = vpop.f32.mrb[0].mxu0
  %v1018 = vadd.f32 0.0, %v1017
  %1019 = vmatprep.mubr.f32.mxu0 %v936
  %1020 = vmatmul.mubr.f32.gmra.mrb[0].mxu0 %v935
  %v1021 = vpop.f32.mrb[0].mxu0
  %v1022 = vadd.f32 0.0, %v1021
  %v1023 = vpop.f32.mrb[0].mxu0
  %v1024 = vadd.f32 0.0, %v1023
  %1025 = vmatprep.mubr.f32.mxu0 %v938
  %1026 = vmatmul.mubr.f32.gmra.mrb[0].mxu0 %v937
  %v1027 = vpop.f32.mrb[0].mxu0
  %v1028 = vadd.f32 0.0, %v1027
  %v1029 = vpop.f32.mrb[0].mxu0
  %v1030 = vadd.f32 0.0, %v1029
  %1031 = vmatprep.mubr.f32.mxu0 %v940
  %1032 = vmatmul.mubr.f32.gmra.mrb[0].mxu0 %v939
  %v1033 = vpop.f32.mrb[0].mxu0
  %v1034 = vadd.f32 0.0, %v1033
  %v1035 = vpop.f32.mrb[0].mxu0
  %v1036 = vadd.f32 0.0, %v1035
  %1037 = vmatprep.mubr.f32.mxu0 %v942
  %1038 = vmatmul.mubr.f32.gmra.mrb[0].mxu0 %v941
  %v1039 = vpop.f32.mrb[0].mxu0
  %v1040 = vadd.f32 0.0, %v1039
  %v1041 = vpop.f32.mrb[0].mxu0
  %v1042 = vadd.f32 0.0, %v1041
  %1043 = vmatprep.mubr.f32.mxu0 %v944
  %1044 = vmatmul.mubr.f32.gmra.mrb[0].mxu0 %v943
  %v1045 = vpop.f32.mrb[0].mxu0
  %v1046 = vadd.f32 0.0, %v1045
  %v1047 = vpop.f32.mrb[0].mxu0
  %v1048 = vadd.f32 0.0, %v1047
  %1049 = vmatprep.mubr.f32.mxu0 %v946
  %1050 = vmatmul.mubr.f32.gmra.mrb[0].mxu0 %v945
  %v1051 = vpop.f32.mrb[0].mxu0
  %v1052 = vadd.f32 0.0, %v1051
  %v1053 = vpop.f32.mrb[0].mxu0
  %v1054 = vadd.f32 0.0, %v1053
  %1055 = vmatprep.mubr.f32.mxu0 %v948
  %1056 = vmatmul.mubr.f32.gmra.mrb[0].mxu0 %v947
  %v1057 = vpop.f32.mrb[0].mxu0
  %v1058 = vadd.f32 0.0, %v1057
  %v1059 = vpop.f32.mrb[0].mxu0
  %v1060 = vadd.f32 0.0, %v1059
  %1061 = vdwg.mxu0
  %v1062 = vadd.f32 %v1016, %v1022
  %v1063 = vadd.f32 %v1062, %v1028
  %v1064 = vadd.f32 %v1063, %v1034
  %v1065 = vadd.f32 %v1064, %v1040
  %v1066 = vadd.f32 %v1065, %v1046
  %v1067 = vadd.f32 %v1066, %v1052
  %v1068 = vadd.f32 %v1067, %v1058
  %v1069 = vrot.slane %v1068, 4
  %v1070 = vadd.f32 %v1068, %v1069
  %v1071 = vrot.slane %v1070, 2
  %v1072 = vadd.f32 %v1070, %v1071
  %v1073 = vrot.slane %v1072, 1
  %v1074 = vadd.f32 %v1072, %v1073
  %v1075 = vadd.f32 %v1018, %v1024
  %v1076 = vadd.f32 %v1075, %v1030
  %v1077 = vadd.f32 %v1076, %v1036
  %v1078 = vadd.f32 %v1077, %v1042
  %v1079 = vadd.f32 %v1078, %v1048
  %v1080 = vadd.f32 %v1079, %v1054
  %v1081 = vadd.f32 %v1080, %v1060
  %v1082 = vrot.slane %v1081, 4
  %v1083 = vadd.f32 %v1081, %v1082
  %v1084 = vrot.slane %v1083, 2
  %v1085 = vadd.f32 %v1083, %v1084
  %v1086 = vrot.slane %v1085, 1
  %v1087 = vadd.f32 %v1085, %v1086
  %v1088 = vmul.f32 %v1074, 0.0078125
  %v1089 = vmul.f32 %v1087, 0.0078125
  %v1090 = vadd.f32 %v1088, 1e-05
  %v1091 = vadd.f32 %v1089, 1e-05
  %v1092 = vrsqrt.pop %v1090
  %v1093 = vrsqrt.pop %v1091
  %v1094 = vmul.f32 %v901, %v1092
  %v1095 = vmul.f32 %v902, %v1093
  %v1096 = vmul.f32 %v903, %v1092
  %v1097 = vmul.f32 %v904, %v1093
  %v1098 = vmul.f32 %v905, %v1092
  %v1099 = vmul.f32 %v906, %v1093
  %v1100 = vmul.f32 %v907, %v1092
  %v1101 = vmul.f32 %v908, %v1093
  %v1102 = vmul.f32 %v909, %v1092
  %v1103 = vmul.f32 %v910, %v1093
  %v1104 = vmul.f32 %v911, %v1092
  %v1105 = vmul.f32 %v912, %v1093
  %v1106 = vmul.f32 %v913, %v1092
  %v1107 = vmul.f32 %v914, %v1093
  %v1108 = vmul.f32 %v915, %v1092
  %v1109 = vmul.f32 %v916, %v1093
  %v1110 = vld [vmem:[%s5] sm:$0x3]
  %v1112 = vlaneseq
  %v1113 = vshrl.u32 %v1112, 7
  %v1114 = vsub.s32 0, %v1113
  %v1115 = vrot.slane %v1110, %v1114
  %v1116 = vlaneseq
  %v1117 = vshrl.u32 %v1116, 7
  %v1118 = vsub.s32 1, %v1117
  %v1119 = vrot.slane %v1110, %v1118
  %v1122 = vmul.f32 %v1094, %v1115
  %v1123 = vmul.f32 %v1095, %v1119
  %v1124 = vmul.f32 %v1096, %v1115
  %v1125 = vmul.f32 %v1097, %v1119
  %v1126 = vmul.f32 %v1098, %v1115
  %v1127 = vmul.f32 %v1099, %v1119
  %v1128 = vmul.f32 %v1100, %v1115
  %v1129 = vmul.f32 %v1101, %v1119
  %v1130 = vmul.f32 %v1102, %v1115
  %v1131 = vmul.f32 %v1103, %v1119
  %v1132 = vmul.f32 %v1104, %v1115
  %v1133 = vmul.f32 %v1105, %v1119
  %v1134 = vmul.f32 %v1106, %v1115
  %v1135 = vmul.f32 %v1107, %v1119
  %v1136 = vmul.f32 %v1108, %v1115
  %v1137 = vmul.f32 %v1109, %v1119
  %v1138 = vld [vmem:[%s6] sm:$0x3]
  %v1140 = vlaneseq
  %v1141 = vshrl.u32 %v1140, 7
  %v1142 = vsub.s32 0, %v1141
  %v1143 = vrot.slane %v1138, %v1142
  %v1144 = vlaneseq
  %v1145 = vshrl.u32 %v1144, 7
  %v1146 = vsub.s32 1, %v1145
  %v1147 = vrot.slane %v1138, %v1146
  %v1150 = vadd.f32 %v1122, %v1143
  %v1151 = vadd.f32 %v1123, %v1147
  %v1152 = vadd.f32 %v1124, %v1143
  %v1153 = vadd.f32 %v1125, %v1147
  %v1154 = vadd.f32 %v1126, %v1143
  %v1155 = vadd.f32 %v1127, %v1147
  %v1156 = vadd.f32 %v1128, %v1143
  %v1157 = vadd.f32 %v1129, %v1147
  %v1158 = vadd.f32 %v1130, %v1143
  %v1159 = vadd.f32 %v1131, %v1147
  %v1160 = vadd.f32 %v1132, %v1143
  %v1161 = vadd.f32 %v1133, %v1147
  %v1162 = vadd.f32 %v1134, %v1143
  %v1163 = vadd.f32 %v1135, %v1147
  %v1164 = vadd.f32 %v1136, %v1143
  %v1165 = vadd.f32 %v1137, %v1147
  %vm1166 = vcmp.gt.f32.partialorder %v1150, 0.0
  %vm1167 = vcmp.gt.f32.partialorder %v1151, 0.0
  %vm1168 = vcmp.gt.f32.partialorder %v1152, 0.0
  %vm1169 = vcmp.gt.f32.partialorder %v1153, 0.0
  %vm1170 = vcmp.gt.f32.partialorder %v1154, 0.0
  %vm1171 = vcmp.gt.f32.partialorder %v1155, 0.0
  %vm1172 = vcmp.gt.f32.partialorder %v1156, 0.0
  %vm1173 = vcmp.gt.f32.partialorder %v1157, 0.0
  %vm1174 = vcmp.gt.f32.partialorder %v1158, 0.0
  %vm1175 = vcmp.gt.f32.partialorder %v1159, 0.0
  %vm1176 = vcmp.gt.f32.partialorder %v1160, 0.0
  %vm1177 = vcmp.gt.f32.partialorder %v1161, 0.0
  %vm1178 = vcmp.gt.f32.partialorder %v1162, 0.0
  %vm1179 = vcmp.gt.f32.partialorder %v1163, 0.0
  %vm1180 = vcmp.gt.f32.partialorder %v1164, 0.0
  %vm1181 = vcmp.gt.f32.partialorder %v1165, 0.0
  %v1182 = vmul.f32 %v1150, 0.2
  %v1183 = vmul.f32 %v1151, 0.2
  %v1184 = vmul.f32 %v1152, 0.2
  %v1185 = vmul.f32 %v1153, 0.2
  %v1186 = vmul.f32 %v1154, 0.2
  %v1187 = vmul.f32 %v1155, 0.2
  %v1188 = vmul.f32 %v1156, 0.2
  %v1189 = vmul.f32 %v1157, 0.2
  %v1190 = vmul.f32 %v1158, 0.2
  %v1191 = vmul.f32 %v1159, 0.2
  %v1192 = vmul.f32 %v1160, 0.2
  %v1193 = vmul.f32 %v1161, 0.2
  %v1194 = vmul.f32 %v1162, 0.2
  %v1195 = vmul.f32 %v1163, 0.2
  %v1196 = vmul.f32 %v1164, 0.2
  %v1197 = vmul.f32 %v1165, 0.2
  %v1198 = vsel %vm1166, %v1150, %v1182
  %v1199 = vsel %vm1167, %v1151, %v1183
  %v1200 = vsel %vm1168, %v1152, %v1184
  %v1201 = vsel %vm1169, %v1153, %v1185
  %v1202 = vsel %vm1170, %v1154, %v1186
  %v1203 = vsel %vm1171, %v1155, %v1187
  %v1204 = vsel %vm1172, %v1156, %v1188
  %v1205 = vsel %vm1173, %v1157, %v1189
  %v1206 = vsel %vm1174, %v1158, %v1190
  %v1207 = vsel %vm1175, %v1159, %v1191
  %v1208 = vsel %vm1176, %v1160, %v1192
  %v1209 = vsel %vm1177, %v1161, %v1193
  %v1210 = vsel %vm1178, %v1162, %v1194
  %v1211 = vsel %vm1179, %v1163, %v1195
  %v1212 = vsel %vm1180, %v1164, %v1196
  %v1213 = vsel %vm1181, %v1165, %v1197
  %v1214 = vpack.c.bf16 %v1200, %v1198
  %v1215 = vpack.c.bf16 %v1201, %v1199
  %v1216 = vpack.c.bf16 %v1204, %v1202
  %v1217 = vpack.c.bf16 %v1205, %v1203
  %v1218 = vpack.c.bf16 %v1208, %v1206
  %v1219 = vpack.c.bf16 %v1209, %v1207
  %v1220 = vpack.c.bf16 %v1212, %v1210
  %v1221 = vpack.c.bf16 %v1213, %v1211
  %v1230 = vunpack.c.l.b16 %v1214
  %v1231 = vunpack.c.l.b16 %v1215
  %v1232 = vunpack.c.h.b16 %v1214
  %v1233 = vunpack.c.h.b16 %v1215
  %v1234 = vunpack.c.l.b16 %v1216
  %v1235 = vunpack.c.l.b16 %v1217
  %v1236 = vunpack.c.h.b16 %v1216
  %v1237 = vunpack.c.h.b16 %v1217
  %v1238 = vunpack.c.l.b16 %v1218
  %v1239 = vunpack.c.l.b16 %v1219
  %v1240 = vunpack.c.h.b16 %v1218
  %v1241 = vunpack.c.h.b16 %v1219
  %v1242 = vunpack.c.l.b16 %v1220
  %v1243 = vunpack.c.l.b16 %v1221
  %v1244 = vunpack.c.h.b16 %v1220
  %v1245 = vunpack.c.h.b16 %v1221
  %v1246 = vpack.c.b16 %v1231, %v1230
  %v1247 = vpack.c.b16 %v1233, %v1232
  %v1248 = vpack.c.b16 %v1235, %v1234
  %v1249 = vpack.c.b16 %v1237, %v1236
  %v1250 = vpack.c.b16 %v1239, %v1238
  %v1251 = vpack.c.b16 %v1241, %v1240
  %v1252 = vpack.c.b16 %v1243, %v1242
  %v1253 = vpack.c.b16 %v1245, %v1244
  %1262 = vst [vmem:[%s7] sm:$0xff] %v1246
  %1263 = vst [vmem:[%s7 + $0x8] sm:$0xff] %v1247
  %1264 = vst [vmem:[%s7 + $0x10] sm:$0xff] %v1248
  %1265 = vst [vmem:[%s7 + $0x18] sm:$0xff] %v1249
  %1266 = vst [vmem:[%s7 + $0x20] sm:$0xff] %v1250
  %1267 = vst [vmem:[%s7 + $0x28] sm:$0xff] %v1251
  %1268 = vst [vmem:[%s7 + $0x30] sm:$0xff] %v1252
  %1269 = vst [vmem:[%s7 + $0x38] sm:$0xff] %v1253
  // Predicated region
  $region30: #{generator_forward.7} parent=0 // pred_check
    _
  $region31: #{generator_forward.7} parent=0 // pred_check_branch
    %1271 = sbr.rel (0) target = $region33
  $region32: #{generator_forward.7} parent=0 // pred_region
    _
  $region33: #{generator_forward.7} parent=0 // pred_fallthru
    _
  // Predicated region
  $region34: #{generator_forward.7} parent=0 // pred_check
    _
  $region35: #{generator_forward.7} parent=0 // pred_check_branch
    %1273 = sbr.rel (0) target = $region37
  $region36: #{generator_forward.7} parent=0 // pred_region
    _
  $region37: #{generator_forward.7} parent=0 // pred_fallthru
    _

// kernel: generator_forward.6
$region0: #{generator_forward.6}
  #allocation0 [shape = 'u32[]', space=smem, size = 0x4, offset = 0x4, fixed_abs, tag = 'smem constant byte address 0x4 - core index']
  #allocation1 [shape = 'u32[144,128]{1,0:T(1,128)}', space=vmem, size = 0x12000, scoped, tag = 'internal scratch']
  %s0 = inlined_call_operand.vmem [shape: bf16[32,1024], index: 0, kind: input, shape index: {}]
  %s1 = inlined_call_operand.vmem [shape: bf16[1024,512], index: 1, kind: input, shape index: {}]
  %s2 = inlined_call_operand.vmem [shape: f32[1,512], index: 2, kind: input, shape index: {}]
  %s3 = inlined_call_operand.vmem [shape: f32[32,512], index: 3, kind: input, shape index: {}]
  %s4 = inlined_call_operand.vmem [shape: f32[512,512], index: 4, kind: input, shape index: {}]
  %s5 = inlined_call_operand.vmem [shape: f32[1,512], index: 5, kind: input, shape index: {}]
  %s6 = inlined_call_operand.vmem [shape: f32[1,512], index: 6, kind: input, shape index: {}]
  %s7 = inlined_call_operand.vmem [shape: bf16[32,512], index: 7, kind: output, shape index: {}]
  %s8 = sld [smem:[#allocation0]]
  $region38: #{generator_forward.6} parent=0
    _
  %s10 = ssub.s32 1, %s8
  %s11 = scalar_select 0, %s10, %s8
  // Predicated region
  $region2: #{generator_forward.6} parent=0 // pred_check
    _
  $region3: #{generator_forward.6} parent=0 // pred_check_branch
    %13 = sbr.rel (0) target = $region5
  $region4: #{generator_forward.6} parent=0 // pred_region
    _
  $region5: #{generator_forward.6} parent=0 // pred_fallthru
    _
  // Predicated region
  $region6: #{generator_forward.6} parent=0 // pred_check
    _
  $region7: #{generator_forward.6} parent=0 // pred_check_branch
    %15 = sbr.rel (0) target = $region9
  $region8: #{generator_forward.6} parent=0 // pred_region
    _
  $region9: #{generator_forward.6} parent=0 // pred_fallthru
    _
  // Predicated region
  $region10: #{generator_forward.6} parent=0 // pred_check
    _
  $region11: #{generator_forward.6} parent=0 // pred_check_branch
    %17 = sbr.rel (0) target = $region13
  $region12: #{generator_forward.6} parent=0 // pred_region
    _
  $region13: #{generator_forward.6} parent=0 // pred_fallthru
    _
  // Predicated region
  $region14: #{generator_forward.6} parent=0 // pred_check
    _
  $region15: #{generator_forward.6} parent=0 // pred_check_branch
    %19 = sbr.rel (0) target = $region17
  $region16: #{generator_forward.6} parent=0 // pred_region
    _
  $region17: #{generator_forward.6} parent=0 // pred_fallthru
    _
  // Predicated region
  $region18: #{generator_forward.6} parent=0 // pred_check
    _
  $region19: #{generator_forward.6} parent=0 // pred_check_branch
    %21 = sbr.rel (0) target = $region21
  $region20: #{generator_forward.6} parent=0 // pred_region
    _
  $region21: #{generator_forward.6} parent=0 // pred_fallthru
    _
  // Predicated region
  $region22: #{generator_forward.6} parent=0 // pred_check
    _
  $region23: #{generator_forward.6} parent=0 // pred_check_branch
    %23 = sbr.rel (0) target = $region25
  $region24: #{generator_forward.6} parent=0 // pred_region
    _
  $region25: #{generator_forward.6} parent=0 // pred_fallthru
    _
  // Predicated region
  $region26: #{generator_forward.6} parent=0 // pred_check
    _
  $region27: #{generator_forward.6} parent=0 // pred_check_branch
    %25 = sbr.rel (0) target = $region29
  $region28: #{generator_forward.6} parent=0 // pred_region
    _
  $region29: #{generator_forward.6} parent=0 // pred_fallthru
    _
  %v26 = vld [vmem:[%s0] sm:$0xff]
  %v27 = vld [vmem:[%s0 + $0x8] sm:$0xff]
  %v28 = vld [vmem:[%s0 + $0x10] sm:$0xff]
  %v29 = vld [vmem:[%s0 + $0x18] sm:$0xff]
  %v30 = vld [vmem:[%s0 + $0x20] sm:$0xff]
  %v31 = vld [vmem:[%s0 + $0x28] sm:$0xff]
  %v32 = vld [vmem:[%s0 + $0x30] sm:$0xff]
  %v33 = vld [vmem:[%s0 + $0x38] sm:$0xff]
  %v34 = vld [vmem:[%s0 + $0x40] sm:$0xff]
  %v35 = vld [vmem:[%s0 + $0x48] sm:$0xff]
  %v36 = vld [vmem:[%s0 + $0x50] sm:$0xff]
  %v37 = vld [vmem:[%s0 + $0x58] sm:$0xff]
  %v38 = vld [vmem:[%s0 + $0x60] sm:$0xff]
  %v39 = vld [vmem:[%s0 + $0x68] sm:$0xff]
  %v40 = vld [vmem:[%s0 + $0x70] sm:$0xff]
  %v41 = vld [vmem:[%s0 + $0x78] sm:$0xff]
  %v42 = vld [vmem:[%s1] sm:$0xff]
  %v43 = vld [vmem:[%s1 + $0x8] sm:$0xff]
  %v44 = vld [vmem:[%s1 + $0x10] sm:$0xff]
  %v45 = vld [vmem:[%s1 + $0x18] sm:$0xff]
  %v46 = vld [vmem:[%s1 + $0x20] sm:$0xff]
  %v47 = vld [vmem:[%s1 + $0x28] sm:$0xff]
  %v48 = vld [vmem:[%s1 + $0x30] sm:$0xff]
  %v49 = vld [vmem:[%s1 + $0x38] sm:$0xff]
  %v50 = vld [vmem:[%s1 + $0x40] sm:$0xff]
  %v51 = vld [vmem:[%s1 + $0x48] sm:$0xff]
  %v52 = vld [vmem:[%s1 + $0x50] sm:$0xff]
  %v53 = vld [vmem:[%s1 + $0x58] sm:$0xff]
  %v54 = vld [vmem:[%s1 + $0x60] sm:$0xff]
  %v55 = vld [vmem:[%s1 + $0x68] sm:$0xff]
  %v56 = vld [vmem:[%s1 + $0x70] sm:$0xff]
  %v57 = vld [vmem:[%s1 + $0x78] sm:$0xff]
  %v58 = vld [vmem:[%s1 + $0x80] sm:$0xff]
  %v59 = vld [vmem:[%s1 + $0x88] sm:$0xff]
  %v60 = vld [vmem:[%s1 + $0x90] sm:$0xff]
  %v61 = vld [vmem:[%s1 + $0x98] sm:$0xff]
  %v62 = vld [vmem:[%s1 + $0xa0] sm:$0xff]
  %v63 = vld [vmem:[%s1 + $0xa8] sm:$0xff]
  %v64 = vld [vmem:[%s1 + $0xb0] sm:$0xff]
  %v65 = vld [vmem:[%s1 + $0xb8] sm:$0xff]
  %v66 = vld [vmem:[%s1 + $0xc0] sm:$0xff]
  %v67 = vld [vmem:[%s1 + $0xc8] sm:$0xff]
  %v68 = vld [vmem:[%s1 + $0xd0] sm:$0xff]
  %v69 = vld [vmem:[%s1 + $0xd8] sm:$0xff]
  %v70 = vld [vmem:[%s1 + $0xe0] sm:$0xff]
  %v71 = vld [vmem:[%s1 + $0xe8] sm:$0xff]
  %v72 = vld [vmem:[%s1 + $0xf0] sm:$0xff]
  %v73 = vld [vmem:[%s1 + $0xf8] sm:$0xff]
  %v74 = vld [vmem:[%s1 + $0x100] sm:$0xff]
  %v75 = vld [vmem:[%s1 + $0x108] sm:$0xff]
  %v76 = vld [vmem:[%s1 + $0x110] sm:$0xff]
  %v77 = vld [vmem:[%s1 + $0x118] sm:$0xff]
  %v78 = vld [vmem:[%s1 + $0x120] sm:$0xff]
  %v79 = vld [vmem:[%s1 + $0x128] sm:$0xff]
  %v80 = vld [vmem:[%s1 + $0x130] sm:$0xff]
  %v81 = vld [vmem:[%s1 + $0x138] sm:$0xff]
  %v82 = vld [vmem:[%s1 + $0x140] sm:$0xff]
  %v83 = vld [vmem:[%s1 + $0x148] sm:$0xff]
  %v84 = vld [vmem:[%s1 + $0x150] sm:$0xff]
  %v85 = vld [vmem:[%s1 + $0x158] sm:$0xff]
  %v86 = vld [vmem:[%s1 + $0x160] sm:$0xff]
  %v87 = vld [vmem:[%s1 + $0x168] sm:$0xff]
  %v88 = vld [vmem:[%s1 + $0x170] sm:$0xff]
  %v89 = vld [vmem:[%s1 + $0x178] sm:$0xff]
  %v90 = vld [vmem:[%s1 + $0x180] sm:$0xff]
  %v91 = vld [vmem:[%s1 + $0x188] sm:$0xff]
  %v92 = vld [vmem:[%s1 + $0x190] sm:$0xff]
  %v93 = vld [vmem:[%s1 + $0x198] sm:$0xff]
  %v94 = vld [vmem:[%s1 + $0x1a0] sm:$0xff]
  %v95 = vld [vmem:[%s1 + $0x1a8] sm:$0xff]
  %v96 = vld [vmem:[%s1 + $0x1b0] sm:$0xff]
  %v97 = vld [vmem:[%s1 + $0x1b8] sm:$0xff]
  %v98 = vld [vmem:[%s1 + $0x1c0] sm:$0xff]
  %v99 = vld [vmem:[%s1 + $0x1c8] sm:$0xff]
  %v100 = vld [vmem:[%s1 + $0x1d0] sm:$0xff]
  %v101 = vld [vmem:[%s1 + $0x1d8] sm:$0xff]
  %v102 = vld [vmem:[%s1 + $0x1e0] sm:$0xff]
  %v103 = vld [vmem:[%s1 + $0x1e8] sm:$0xff]
  %v104 = vld [vmem:[%s1 + $0x1f0] sm:$0xff]
  %v105 = vld [vmem:[%s1 + $0x1f8] sm:$0xff]
  %v106 = vld [vmem:[%s1 + $0x200] sm:$0xff]
  %v107 = vld [vmem:[%s1 + $0x208] sm:$0xff]
  %v108 = vld [vmem:[%s1 + $0x210] sm:$0xff]
  %v109 = vld [vmem:[%s1 + $0x218] sm:$0xff]
  %v110 = vld [vmem:[%s1 + $0x220] sm:$0xff]
  %v111 = vld [vmem:[%s1 + $0x228] sm:$0xff]
  %v112 = vld [vmem:[%s1 + $0x230] sm:$0xff]
  %v113 = vld [vmem:[%s1 + $0x238] sm:$0xff]
  %v114 = vld [vmem:[%s1 + $0x240] sm:$0xff]
  %v115 = vld [vmem:[%s1 + $0x248] sm:$0xff]
  %v116 = vld [vmem:[%s1 + $0x250] sm:$0xff]
  %v117 = vld [vmem:[%s1 + $0x258] sm:$0xff]
  %v118 = vld [vmem:[%s1 + $0x260] sm:$0xff]
  %v119 = vld [vmem:[%s1 + $0x268] sm:$0xff]
  %v120 = vld [vmem:[%s1 + $0x270] sm:$0xff]
  %v121 = vld [vmem:[%s1 + $0x278] sm:$0xff]
  %v122 = vld [vmem:[%s1 + $0x280] sm:$0xff]
  %v123 = vld [vmem:[%s1 + $0x288] sm:$0xff]
  %v124 = vld [vmem:[%s1 + $0x290] sm:$0xff]
  %v125 = vld [vmem:[%s1 + $0x298] sm:$0xff]
  %v126 = vld [vmem:[%s1 + $0x2a0] sm:$0xff]
  %v127 = vld [vmem:[%s1 + $0x2a8] sm:$0xff]
  %v128 = vld [vmem:[%s1 + $0x2b0] sm:$0xff]
  %v129 = vld [vmem:[%s1 + $0x2b8] sm:$0xff]
  %v130 = vld [vmem:[%s1 + $0x2c0] sm:$0xff]
  %v131 = vld [vmem:[%s1 + $0x2c8] sm:$0xff]
  %v132 = vld [vmem:[%s1 + $0x2d0] sm:$0xff]
  %v133 = vld [vmem:[%s1 + $0x2d8] sm:$0xff]
  %v134 = vld [vmem:[%s1 + $0x2e0] sm:$0xff]
  %v135 = vld [vmem:[%s1 + $0x2e8] sm:$0xff]
  %v136 = vld [vmem:[%s1 + $0x2f0] sm:$0xff]
  %v137 = vld [vmem:[%s1 + $0x2f8] sm:$0xff]
  %v138 = vld [vmem:[%s1 + $0x300] sm:$0xff]
  %v139 = vld [vmem:[%s1 + $0x308] sm:$0xff]
  %v140 = vld [vmem:[%s1 + $0x310] sm:$0xff]
  %v141 = vld [vmem:[%s1 + $0x318] sm:$0xff]
  %v142 = vld [vmem:[%s1 + $0x320] sm:$0xff]
  %v143 = vld [vmem:[%s1 + $0x328] sm:$0xff]
  %v144 = vld [vmem:[%s1 + $0x330] sm:$0xff]
  %v145 = vld [vmem:[%s1 + $0x338] sm:$0xff]
  %v146 = vld [vmem:[%s1 + $0x340] sm:$0xff]
  %v147 = vld [vmem:[%s1 + $0x348] sm:$0xff]
  %v148 = vld [vmem:[%s1 + $0x350] sm:$0xff]
  %v149 = vld [vmem:[%s1 + $0x358] sm:$0xff]
  %v150 = vld [vmem:[%s1 + $0x360] sm:$0xff]
  %v151 = vld [vmem:[%s1 + $0x368] sm:$0xff]
  %v152 = vld [vmem:[%s1 + $0x370] sm:$0xff]
  %v153 = vld [vmem:[%s1 + $0x378] sm:$0xff]
  %v154 = vld [vmem:[%s1 + $0x380] sm:$0xff]
  %v155 = vld [vmem:[%s1 + $0x388] sm:$0xff]
  %v156 = vld [vmem:[%s1 + $0x390] sm:$0xff]
  %v157 = vld [vmem:[%s1 + $0x398] sm:$0xff]
  %v158 = vld [vmem:[%s1 + $0x3a0] sm:$0xff]
  %v159 = vld [vmem:[%s1 + $0x3a8] sm:$0xff]
  %v160 = vld [vmem:[%s1 + $0x3b0] sm:$0xff]
  %v161 = vld [vmem:[%s1 + $0x3b8] sm:$0xff]
  %v162 = vld [vmem:[%s1 + $0x3c0] sm:$0xff]
  %v163 = vld [vmem:[%s1 + $0x3c8] sm:$0xff]
  %v164 = vld [vmem:[%s1 + $0x3d0] sm:$0xff]
  %v165 = vld [vmem:[%s1 + $0x3d8] sm:$0xff]
  %v166 = vld [vmem:[%s1 + $0x3e0] sm:$0xff]
  %v167 = vld [vmem:[%s1 + $0x3e8] sm:$0xff]
  %v168 = vld [vmem:[%s1 + $0x3f0] sm:$0xff]
  %v169 = vld [vmem:[%s1 + $0x3f8] sm:$0xff]
  %v170 = vld [vmem:[%s1 + $0x400] sm:$0xff]
  %v171 = vld [vmem:[%s1 + $0x408] sm:$0xff]
  %v172 = vld [vmem:[%s1 + $0x410] sm:$0xff]
  %v173 = vld [vmem:[%s1 + $0x418] sm:$0xff]
  %v174 = vld [vmem:[%s1 + $0x420] sm:$0xff]
  %v175 = vld [vmem:[%s1 + $0x428] sm:$0xff]
  %v176 = vld [vmem:[%s1 + $0x430] sm:$0xff]
  %v177 = vld [vmem:[%s1 + $0x438] sm:$0xff]
  %v178 = vld [vmem:[%s1 + $0x440] sm:$0xff]
  %v179 = vld [vmem:[%s1 + $0x448] sm:$0xff]
  %v180 = vld [vmem:[%s1 + $0x450] sm:$0xff]
  %v181 = vld [vmem:[%s1 + $0x458] sm:$0xff]
  %v182 = vld [vmem:[%s1 + $0x460] sm:$0xff]
  %v183 = vld [vmem:[%s1 + $0x468] sm:$0xff]
  %v184 = vld [vmem:[%s1 + $0x470] sm:$0xff]
  %v185 = vld [vmem:[%s1 + $0x478] sm:$0xff]
  %v186 = vld [vmem:[%s1 + $0x480] sm:$0xff]
  %v187 = vld [vmem:[%s1 + $0x488] sm:$0xff]
  %v188 = vld [vmem:[%s1 + $0x490] sm:$0xff]
  %v189 = vld [vmem:[%s1 + $0x498] sm:$0xff]
  %v190 = vld [vmem:[%s1 + $0x4a0] sm:$0xff]
  %v191 = vld [vmem:[%s1 + $0x4a8] sm:$0xff]
  %v192 = vld [vmem:[%s1 + $0x4b0] sm:$0xff]
  %v193 = vld [vmem:[%s1 + $0x4b8] sm:$0xff]
  %v194 = vld [vmem:[%s1 + $0x4c0] sm:$0xff]
  %v195 = vld [vmem:[%s1 + $0x4c8] sm:$0xff]
  %v196 = vld [vmem:[%s1 + $0x4d0] sm:$0xff]
  %v197 = vld [vmem:[%s1 + $0x4d8] sm:$0xff]
  %v198 = vld [vmem:[%s1 + $0x4e0] sm:$0xff]
  %v199 = vld [vmem:[%s1 + $0x4e8] sm:$0xff]
  %v200 = vld [vmem:[%s1 + $0x4f0] sm:$0xff]
  %v201 = vld [vmem:[%s1 + $0x4f8] sm:$0xff]
  %v202 = vld [vmem:[%s1 + $0x500] sm:$0xff]
  %v203 = vld [vmem:[%s1 + $0x508] sm:$0xff]
  %v204 = vld [vmem:[%s1 + $0x510] sm:$0xff]
  %v205 = vld [vmem:[%s1 + $0x518] sm:$0xff]
  %v206 = vld [vmem:[%s1 + $0x520] sm:$0xff]
  %v207 = vld [vmem:[%s1 + $0x528] sm:$0xff]
  %v208 = vld [vmem:[%s1 + $0x530] sm:$0xff]
  %v209 = vld [vmem:[%s1 + $0x538] sm:$0xff]
  %v210 = vld [vmem:[%s1 + $0x540] sm:$0xff]
  %v211 = vld [vmem:[%s1 + $0x548] sm:$0xff]
  %v212 = vld [vmem:[%s1 + $0x550] sm:$0xff]
  %v213 = vld [vmem:[%s1 + $0x558] sm:$0xff]
  %v214 = vld [vmem:[%s1 + $0x560] sm:$0xff]
  %v215 = vld [vmem:[%s1 + $0x568] sm:$0xff]
  %v216 = vld [vmem:[%s1 + $0x570] sm:$0xff]
  %v217 = vld [vmem:[%s1 + $0x578] sm:$0xff]
  %v218 = vld [vmem:[%s1 + $0x580] sm:$0xff]
  %v219 = vld [vmem:[%s1 + $0x588] sm:$0xff]
  %v220 = vld [vmem:[%s1 + $0x590] sm:$0xff]
  %v221 = vld [vmem:[%s1 + $0x598] sm:$0xff]
  %v222 = vld [vmem:[%s1 + $0x5a0] sm:$0xff]
  %v223 = vld [vmem:[%s1 + $0x5a8] sm:$0xff]
  %v224 = vld [vmem:[%s1 + $0x5b0] sm:$0xff]
  %v225 = vld [vmem:[%s1 + $0x5b8] sm:$0xff]
  %v226 = vld [vmem:[%s1 + $0x5c0] sm:$0xff]
  %v227 = vld [vmem:[%s1 + $0x5c8] sm:$0xff]
  %v228 = vld [vmem:[%s1 + $0x5d0] sm:$0xff]
  %v229 = vld [vmem:[%s1 + $0x5d8] sm:$0xff]
  %v230 = vld [vmem:[%s1 + $0x5e0] sm:$0xff]
  %v231 = vld [vmem:[%s1 + $0x5e8] sm:$0xff]
  %v232 = vld [vmem:[%s1 + $0x5f0] sm:$0xff]
  %v233 = vld [vmem:[%s1 + $0x5f8] sm:$0xff]
  %v234 = vld [vmem:[%s1 + $0x600] sm:$0xff]
  %v235 = vld [vmem:[%s1 + $0x608] sm:$0xff]
  %v236 = vld [vmem:[%s1 + $0x610] sm:$0xff]
  %v237 = vld [vmem:[%s1 + $0x618] sm:$0xff]
  %v238 = vld [vmem:[%s1 + $0x620] sm:$0xff]
  %v239 = vld [vmem:[%s1 + $0x628] sm:$0xff]
  %v240 = vld [vmem:[%s1 + $0x630] sm:$0xff]
  %v241 = vld [vmem:[%s1 + $0x638] sm:$0xff]
  %v242 = vld [vmem:[%s1 + $0x640] sm:$0xff]
  %v243 = vld [vmem:[%s1 + $0x648] sm:$0xff]
  %v244 = vld [vmem:[%s1 + $0x650] sm:$0xff]
  %v245 = vld [vmem:[%s1 + $0x658] sm:$0xff]
  %v246 = vld [vmem:[%s1 + $0x660] sm:$0xff]
  %v247 = vld [vmem:[%s1 + $0x668] sm:$0xff]
  %v248 = vld [vmem:[%s1 + $0x670] sm:$0xff]
  %v249 = vld [vmem:[%s1 + $0x678] sm:$0xff]
  %v250 = vld [vmem:[%s1 + $0x680] sm:$0xff]
  %v251 = vld [vmem:[%s1 + $0x688] sm:$0xff]
  %v252 = vld [vmem:[%s1 + $0x690] sm:$0xff]
  %v253 = vld [vmem:[%s1 + $0x698] sm:$0xff]
  %v254 = vld [vmem:[%s1 + $0x6a0] sm:$0xff]
  %v255 = vld [vmem:[%s1 + $0x6a8] sm:$0xff]
  %v256 = vld [vmem:[%s1 + $0x6b0] sm:$0xff]
  %v257 = vld [vmem:[%s1 + $0x6b8] sm:$0xff]
  %v258 = vld [vmem:[%s1 + $0x6c0] sm:$0xff]
  %v259 = vld [vmem:[%s1 + $0x6c8] sm:$0xff]
  %v260 = vld [vmem:[%s1 + $0x6d0] sm:$0xff]
  %v261 = vld [vmem:[%s1 + $0x6d8] sm:$0xff]
  %v262 = vld [vmem:[%s1 + $0x6e0] sm:$0xff]
  %v263 = vld [vmem:[%s1 + $0x6e8] sm:$0xff]
  %v264 = vld [vmem:[%s1 + $0x6f0] sm:$0xff]
  %v265 = vld [vmem:[%s1 + $0x6f8] sm:$0xff]
  %v266 = vld [vmem:[%s1 + $0x700] sm:$0xff]
  %v267 = vld [vmem:[%s1 + $0x708] sm:$0xff]
  %v268 = vld [vmem:[%s1 + $0x710] sm:$0xff]
  %v269 = vld [vmem:[%s1 + $0x718] sm:$0xff]
  %v270 = vld [vmem:[%s1 + $0x720] sm:$0xff]
  %v271 = vld [vmem:[%s1 + $0x728] sm:$0xff]
  %v272 = vld [vmem:[%s1 + $0x730] sm:$0xff]
  %v273 = vld [vmem:[%s1 + $0x738] sm:$0xff]
  %v274 = vld [vmem:[%s1 + $0x740] sm:$0xff]
  %v275 = vld [vmem:[%s1 + $0x748] sm:$0xff]
  %v276 = vld [vmem:[%s1 + $0x750] sm:$0xff]
  %v277 = vld [vmem:[%s1 + $0x758] sm:$0xff]
  %v278 = vld [vmem:[%s1 + $0x760] sm:$0xff]
  %v279 = vld [vmem:[%s1 + $0x768] sm:$0xff]
  %v280 = vld [vmem:[%s1 + $0x770] sm:$0xff]
  %v281 = vld [vmem:[%s1 + $0x778] sm:$0xff]
  %v282 = vld [vmem:[%s1 + $0x780] sm:$0xff]
  %v283 = vld [vmem:[%s1 + $0x788] sm:$0xff]
  %v284 = vld [vmem:[%s1 + $0x790] sm:$0xff]
  %v285 = vld [vmem:[%s1 + $0x798] sm:$0xff]
  %v286 = vld [vmem:[%s1 + $0x7a0] sm:$0xff]
  %v287 = vld [vmem:[%s1 + $0x7a8] sm:$0xff]
  %v288 = vld [vmem:[%s1 + $0x7b0] sm:$0xff]
  %v289 = vld [vmem:[%s1 + $0x7b8] sm:$0xff]
  %v290 = vld [vmem:[%s1 + $0x7c0] sm:$0xff]
  %v291 = vld [vmem:[%s1 + $0x7c8] sm:$0xff]
  %v292 = vld [vmem:[%s1 + $0x7d0] sm:$0xff]
  %v293 = vld [vmem:[%s1 + $0x7d8] sm:$0xff]
  %v294 = vld [vmem:[%s1 + $0x7e0] sm:$0xff]
  %v295 = vld [vmem:[%s1 + $0x7e8] sm:$0xff]
  %v296 = vld [vmem:[%s1 + $0x7f0] sm:$0xff]
  %v297 = vld [vmem:[%s1 + $0x7f8] sm:$0xff]
  %v298 = vld [vmem:[%s2] sm:$0xf]
  %v300 = vlaneseq
  %v301 = vshrl.u32 %v300, 7
  %v302 = vsub.s32 0, %v301
  %v303 = vrot.slane %v298, %v302
  %v304 = vlaneseq
  %v305 = vshrl.u32 %v304, 7
  %v306 = vsub.s32 1, %v305
  %v307 = vrot.slane %v298, %v306
  %v308 = vlaneseq
  %v309 = vshrl.u32 %v308, 7
  %v310 = vsub.s32 2, %v309
  %v311 = vrot.slane %v298, %v310
  %v312 = vlaneseq
  %v313 = vshrl.u32 %v312, 7
  %v314 = vsub.s32 3, %v313
  %v315 = vrot.slane %v298, %v314
  %v336 = vunpack.c.l.b16 %v26
  %v337 = vunpack.c.h.b16 %v26
  %v338 = vunpack.c.l.b16 %v27
  %v339 = vunpack.c.h.b16 %v27
  %v340 = vunpack.c.l.b16 %v28
  %v341 = vunpack.c.h.b16 %v28
  %v342 = vunpack.c.l.b16 %v29
  %v343 = vunpack.c.h.b16 %v29
  %v344 = vunpack.c.l.b16 %v30
  %v345 = vunpack.c.h.b16 %v30
  %v346 = vunpack.c.l.b16 %v31
  %v347 = vunpack.c.h.b16 %v31
  %v348 = vunpack.c.l.b16 %v32
  %v349 = vunpack.c.h.b16 %v32
  %v350 = vunpack.c.l.b16 %v33
  %v351 = vunpack.c.h.b16 %v33
  %v352 = vunpack.c.l.b16 %v34
  %v353 = vunpack.c.h.b16 %v34
  %v354 = vunpack.c.l.b16 %v35
  %v355 = vunpack.c.h.b16 %v35
  %v356 = vunpack.c.l.b16 %v36
  %v357 = vunpack.c.h.b16 %v36
  %v358 = vunpack.c.l.b16 %v37
  %v359 = vunpack.c.h.b16 %v37
  %v360 = vunpack.c.l.b16 %v38
  %v361 = vunpack.c.h.b16 %v38
  %v362 = vunpack.c.l.b16 %v39
  %v363 = vunpack.c.h.b16 %v39
  %v364 = vunpack.c.l.b16 %v40
  %v365 = vunpack.c.h.b16 %v40
  %v366 = vunpack.c.l.b16 %v41
  %v367 = vunpack.c.h.b16 %v41
  %v368 = vpack.c.b16 %v344, %v336
  %v369 = vpack.c.b16 %v345, %v337
  %v370 = vpack.c.b16 %v346, %v338
  %v371 = vpack.c.b16 %v347, %v339
  %v372 = vpack.c.b16 %v348, %v340
  %v373 = vpack.c.b16 %v349, %v341
  %v374 = vpack.c.b16 %v350, %v342
  %v375 = vpack.c.b16 %v351, %v343
  %v376 = vpack.c.b16 %v360, %v352
  %v377 = vpack.c.b16 %v361, %v353
  %v378 = vpack.c.b16 %v362, %v354
  %v379 = vpack.c.b16 %v363, %v355
  %v380 = vpack.c.b16 %v364, %v356
  %v381 = vpack.c.b16 %v365, %v357
  %v382 = vpack.c.b16 %v366, %v358
  %v383 = vpack.c.b16 %v367, %v359
  %v656 = vunpack.c.l.b16 %v42
  %v657 = vunpack.c.h.b16 %v42
  %v658 = vunpack.c.l.b16 %v43
  %v659 = vunpack.c.h.b16 %v43
  %v660 = vunpack.c.l.b16 %v44
  %v661 = vunpack.c.h.b16 %v44
  %v662 = vunpack.c.l.b16 %v45
  %v663 = vunpack.c.h.b16 %v45
  %v664 = vunpack.c.l.b16 %v46
  %v665 = vunpack.c.h.b16 %v46
  %v666 = vunpack.c.l.b16 %v47
  %v667 = vunpack.c.h.b16 %v47
  %v668 = vunpack.c.l.b16 %v48
  %v669 = vunpack.c.h.b16 %v48
  %v670 = vunpack.c.l.b16 %v49
  %v671 = vunpack.c.h.b16 %v49
  %v672 = vunpack.c.l.b16 %v50
  %v673 = vunpack.c.h.b16 %v50
  %v674 = vunpack.c.l.b16 %v51
  %v675 = vunpack.c.h.b16 %v51
  %v676 = vunpack.c.l.b16 %v52
  %v677 = vunpack.c.h.b16 %v52
  %v678 = vunpack.c.l.b16 %v53
  %v679 = vunpack.c.h.b16 %v53
  %v680 = vunpack.c.l.b16 %v54
  %v681 = vunpack.c.h.b16 %v54
  %v682 = vunpack.c.l.b16 %v55
  %v683 = vunpack.c.h.b16 %v55
  %v684 = vunpack.c.l.b16 %v56
  %v685 = vunpack.c.h.b16 %v56
  %v686 = vunpack.c.l.b16 %v57
  %v687 = vunpack.c.h.b16 %v57
  %v688 = vunpack.c.l.b16 %v58
  %v689 = vunpack.c.h.b16 %v58
  %v690 = vunpack.c.l.b16 %v59
  %v691 = vunpack.c.h.b16 %v59
  %v692 = vunpack.c.l.b16 %v60
  %v693 = vunpack.c.h.b16 %v60
  %v694 = vunpack.c.l.b16 %v61
  %v695 = vunpack.c.h.b16 %v61
  %v696 = vunpack.c.l.b16 %v62
  %v697 = vunpack.c.h.b16 %v62
  %v698 = vunpack.c.l.b16 %v63
  %v699 = vunpack.c.h.b16 %v63
  %v700 = vunpack.c.l.b16 %v64
  %v701 = vunpack.c.h.b16 %v64
  %v702 = vunpack.c.l.b16 %v65
  %v703 = vunpack.c.h.b16 %v65
  %v704 = vunpack.c.l.b16 %v66
  %v705 = vunpack.c.h.b16 %v66
  %v706 = vunpack.c.l.b16 %v67
  %v707 = vunpack.c.h.b16 %v67
  %v708 = vunpack.c.l.b16 %v68
  %v709 = vunpack.c.h.b16 %v68
  %v710 = vunpack.c.l.b16 %v69
  %v711 = vunpack.c.h.b16 %v69
  %v712 = vunpack.c.l.b16 %v70
  %v713 = vunpack.c.h.b16 %v70
  %v714 = vunpack.c.l.b16 %v71
  %v715 = vunpack.c.h.b16 %v71
  %v716 = vunpack.c.l.b16 %v72
  %v717 = vunpack.c.h.b16 %v72
  %v718 = vunpack.c.l.b16 %v73
  %v719 = vunpack.c.h.b16 %v73
  %v720 = vunpack.c.l.b16 %v74
  %v721 = vunpack.c.h.b16 %v74
  %v722 = vunpack.c.l.b16 %v75
  %v723 = vunpack.c.h.b16 %v75
  %v724 = vunpack.c.l.b16 %v76
  %v725 = vunpack.c.h.b16 %v76
  %v726 = vunpack.c.l.b16 %v77
  %v727 = vunpack.c.h.b16 %v77
  %v728 = vunpack.c.l.b16 %v78
  %v729 = vunpack.c.h.b16 %v78
  %v730 = vunpack.c.l.b16 %v79
  %v731 = vunpack.c.h.b16 %v79
  %v732 = vunpack.c.l.b16 %v80
  %v733 = vunpack.c.h.b16 %v80
  %v734 = vunpack.c.l.b16 %v81
  %v735 = vunpack.c.h.b16 %v81
  %v736 = vunpack.c.l.b16 %v82
  %v737 = vunpack.c.h.b16 %v82
  %v738 = vunpack.c.l.b16 %v83
  %v739 = vunpack.c.h.b16 %v83
  %v740 = vunpack.c.l.b16 %v84
  %v741 = vunpack.c.h.b16 %v84
  %v742 = vunpack.c.l.b16 %v85
  %v743 = vunpack.c.h.b16 %v85
  %v744 = vunpack.c.l.b16 %v86
  %v745 = vunpack.c.h.b16 %v86
  %v746 = vunpack.c.l.b16 %v87
  %v747 = vunpack.c.h.b16 %v87
  %v748 = vunpack.c.l.b16 %v88
  %v749 = vunpack.c.h.b16 %v88
  %v750 = vunpack.c.l.b16 %v89
  %v751 = vunpack.c.h.b16 %v89
  %v752 = vunpack.c.l.b16 %v90
  %v753 = vunpack.c.h.b16 %v90
  %v754 = vunpack.c.l.b16 %v91
  %v755 = vunpack.c.h.b16 %v91
  %v756 = vunpack.c.l.b16 %v92
  %v757 = vunpack.c.h.b16 %v92
  %v758 = vunpack.c.l.b16 %v93
  %v759 = vunpack.c.h.b16 %v93
  %v760 = vunpack.c.l.b16 %v94
  %v761 = vunpack.c.h.b16 %v94
  %v762 = vunpack.c.l.b16 %v95
  %v763 = vunpack.c.h.b16 %v95
  %v764 = vunpack.c.l.b16 %v96
  %v765 = vunpack.c.h.b16 %v96
  %v766 = vunpack.c.l.b16 %v97
  %v767 = vunpack.c.h.b16 %v97
  %v768 = vunpack.c.l.b16 %v98
  %v769 = vunpack.c.h.b16 %v98
  %v770 = vunpack.c.l.b16 %v99
  %v771 = vunpack.c.h.b16 %v99
  %v772 = vunpack.c.l.b16 %v100
  %v773 = vunpack.c.h.b16 %v100
  %v774 = vunpack.c.l.b16 %v101
  %v775 = vunpack.c.h.b16 %v101
  %v776 = vunpack.c.l.b16 %v102
  %v777 = vunpack.c.h.b16 %v102
  %v778 = vunpack.c.l.b16 %v103
  %v779 = vunpack.c.h.b16 %v103
  %v780 = vunpack.c.l.b16 %v104
  %v781 = vunpack.c.h.b16 %v104
  %v782 = vunpack.c.l.b16 %v105
  %v783 = vunpack.c.h.b16 %v105
  %v784 = vunpack.c.l.b16 %v106
  %v785 = vunpack.c.h.b16 %v106
  %v786 = vunpack.c.l.b16 %v107
  %v787 = vunpack.c.h.b16 %v107
  %v788 = vunpack.c.l.b16 %v108
  %v789 = vunpack.c.h.b16 %v108
  %v790 = vunpack.c.l.b16 %v109
  %v791 = vunpack.c.h.b16 %v109
  %v792 = vunpack.c.l.b16 %v110
  %v793 = vunpack.c.h.b16 %v110
  %v794 = vunpack.c.l.b16 %v111
  %v795 = vunpack.c.h.b16 %v111
  %v796 = vunpack.c.l.b16 %v112
  %v797 = vunpack.c.h.b16 %v112
  %v798 = vunpack.c.l.b16 %v113
  %v799 = vunpack.c.h.b16 %v113
  %v800 = vunpack.c.l.b16 %v114
  %v801 = vunpack.c.h.b16 %v114
  %v802 = vunpack.c.l.b16 %v115
  %v803 = vunpack.c.h.b16 %v115
  %v804 = vunpack.c.l.b16 %v116
  %v805 = vunpack.c.h.b16 %v116
  %v806 = vunpack.c.l.b16 %v117
  %v807 = vunpack.c.h.b16 %v117
  %v808 = vunpack.c.l.b16 %v118
  %v809 = vunpack.c.h.b16 %v118
  %v810 = vunpack.c.l.b16 %v119
  %v811 = vunpack.c.h.b16 %v119
  %v812 = vunpack.c.l.b16 %v120
  %v813 = vunpack.c.h.b16 %v120
  %v814 = vunpack.c.l.b16 %v121
  %v815 = vunpack.c.h.b16 %v121
  %v816 = vunpack.c.l.b16 %v122
  %v817 = vunpack.c.h.b16 %v122
  %v818 = vunpack.c.l.b16 %v123
  %v819 = vunpack.c.h.b16 %v123
  %v820 = vunpack.c.l.b16 %v124
  %v821 = vunpack.c.h.b16 %v124
  %v822 = vunpack.c.l.b16 %v125
  %v823 = vunpack.c.h.b16 %v125
  %v824 = vunpack.c.l.b16 %v126
  %v825 = vunpack.c.h.b16 %v126
  %v826 = vunpack.c.l.b16 %v127
  %v827 = vunpack.c.h.b16 %v127
  %v828 = vunpack.c.l.b16 %v128
  %v829 = vunpack.c.h.b16 %v128
  %v830 = vunpack.c.l.b16 %v129
  %v831 = vunpack.c.h.b16 %v129
  %v832 = vunpack.c.l.b16 %v130
  %v833 = vunpack.c.h.b16 %v130
  %v834 = vunpack.c.l.b16 %v131
  %v835 = vunpack.c.h.b16 %v131
  %v836 = vunpack.c.l.b16 %v132
  %v837 = vunpack.c.h.b16 %v132
  %v838 = vunpack.c.l.b16 %v133
  %v839 = vunpack.c.h.b16 %v133
  %v840 = vunpack.c.l.b16 %v134
  %v841 = vunpack.c.h.b16 %v134
  %v842 = vunpack.c.l.b16 %v135
  %v843 = vunpack.c.h.b16 %v135
  %v844 = vunpack.c.l.b16 %v136
  %v845 = vunpack.c.h.b16 %v136
  %v846 = vunpack.c.l.b16 %v137
  %v847 = vunpack.c.h.b16 %v137
  %v848 = vunpack.c.l.b16 %v138
  %v849 = vunpack.c.h.b16 %v138
  %v850 = vunpack.c.l.b16 %v139
  %v851 = vunpack.c.h.b16 %v139
  %v852 = vunpack.c.l.b16 %v140
  %v853 = vunpack.c.h.b16 %v140
  %v854 = vunpack.c.l.b16 %v141
  %v855 = vunpack.c.h.b16 %v141
  %v856 = vunpack.c.l.b16 %v142
  %v857 = vunpack.c.h.b16 %v142
  %v858 = vunpack.c.l.b16 %v143
  %v859 = vunpack.c.h.b16 %v143
  %v860 = vunpack.c.l.b16 %v144
  %v861 = vunpack.c.h.b16 %v144
  %v862 = vunpack.c.l.b16 %v145
  %v863 = vunpack.c.h.b16 %v145
  %v864 = vunpack.c.l.b16 %v146
  %v865 = vunpack.c.h.b16 %v146
  %v866 = vunpack.c.l.b16 %v147
  %v867 = vunpack.c.h.b16 %v147
  %v868 = vunpack.c.l.b16 %v148
  %v869 = vunpack.c.h.b16 %v148
  %v870 = vunpack.c.l.b16 %v149
  %v871 = vunpack.c.h.b16 %v149
  %v872 = vunpack.c.l.b16 %v150
  %v873 = vunpack.c.h.b16 %v150
  %v874 = vunpack.c.l.b16 %v151
  %v875 = vunpack.c.h.b16 %v151
  %v876 = vunpack.c.l.b16 %v152
  %v877 = vunpack.c.h.b16 %v152
  %v878 = vunpack.c.l.b16 %v153
  %v879 = vunpack.c.h.b16 %v153
  %v880 = vunpack.c.l.b16 %v154
  %v881 = vunpack.c.h.b16 %v154
  %v882 = vunpack.c.l.b16 %v155
  %v883 = vunpack.c.h.b16 %v155
  %v884 = vunpack.c.l.b16 %v156
  %v885 = vunpack.c.h.b16 %v156
  %v886 = vunpack.c.l.b16 %v157
  %v887 = vunpack.c.h.b16 %v157
  %v888 = vunpack.c.l.b16 %v158
  %v889 = vunpack.c.h.b16 %v158
  %v890 = vunpack.c.l.b16 %v159
  %v891 = vunpack.c.h.b16 %v159
  %v892 = vunpack.c.l.b16 %v160
  %v893 = vunpack.c.h.b16 %v160
  %v894 = vunpack.c.l.b16 %v161
  %v895 = vunpack.c.h.b16 %v161
  %v896 = vunpack.c.l.b16 %v162
  %v897 = vunpack.c.h.b16 %v162
  %v898 = vunpack.c.l.b16 %v163
  %v899 = vunpack.c.h.b16 %v163
  %v900 = vunpack.c.l.b16 %v164
  %v901 = vunpack.c.h.b16 %v164
  %v902 = vunpack.c.l.b16 %v165
  %v903 = vunpack.c.h.b16 %v165
  %v904 = vunpack.c.l.b16 %v166
  %v905 = vunpack.c.h.b16 %v166
  %v906 = vunpack.c.l.b16 %v167
  %v907 = vunpack.c.h.b16 %v167
  %v908 = vunpack.c.l.b16 %v168
  %v909 = vunpack.c.h.b16 %v168
  %v910 = vunpack.c.l.b16 %v169
  %v911 = vunpack.c.h.b16 %v169
  %v912 = vunpack.c.l.b16 %v170
  %v913 = vunpack.c.h.b16 %v170
  %v914 = vunpack.c.l.b16 %v171
  %v915 = vunpack.c.h.b16 %v171
  %v916 = vunpack.c.l.b16 %v172
  %v917 = vunpack.c.h.b16 %v172
  %v918 = vunpack.c.l.b16 %v173
  %v919 = vunpack.c.h.b16 %v173
  %v920 = vunpack.c.l.b16 %v174
  %v921 = vunpack.c.h.b16 %v174
  %v922 = vunpack.c.l.b16 %v175
  %v923 = vunpack.c.h.b16 %v175
  %v924 = vunpack.c.l.b16 %v176
  %v925 = vunpack.c.h.b16 %v176
  %v926 = vunpack.c.l.b16 %v177
  %v927 = vunpack.c.h.b16 %v177
  %v928 = vunpack.c.l.b16 %v178
  %v929 = vunpack.c.h.b16 %v178
  %v930 = vunpack.c.l.b16 %v179
  %v931 = vunpack.c.h.b16 %v179
  %v932 = vunpack.c.l.b16 %v180
  %v933 = vunpack.c.h.b16 %v180
  %v934 = vunpack.c.l.b16 %v181
  %v935 = vunpack.c.h.b16 %v181
  %v936 = vunpack.c.l.b16 %v182
  %v937 = vunpack.c.h.b16 %v182
  %v938 = vunpack.c.l.b16 %v183
  %v939 = vunpack.c.h.b16 %v183
  %v940 = vunpack.c.l.b16 %v184
  %v941 = vunpack.c.h.b16 %v184
  %v942 = vunpack.c.l.b16 %v185
  %v943 = vunpack.c.h.b16 %v185
  %v944 = vunpack.c.l.b16 %v186
  %v945 = vunpack.c.h.b16 %v186
  %v946 = vunpack.c.l.b16 %v187
  %v947 = vunpack.c.h.b16 %v187
  %v948 = vunpack.c.l.b16 %v188
  %v949 = vunpack.c.h.b16 %v188
  %v950 = vunpack.c.l.b16 %v189
  %v951 = vunpack.c.h.b16 %v189
  %v952 = vunpack.c.l.b16 %v190
  %v953 = vunpack.c.h.b16 %v190
  %v954 = vunpack.c.l.b16 %v191
  %v955 = vunpack.c.h.b16 %v191
  %v956 = vunpack.c.l.b16 %v192
  %v957 = vunpack.c.h.b16 %v192
  %v958 = vunpack.c.l.b16 %v193
  %v959 = vunpack.c.h.b16 %v193
  %v960 = vunpack.c.l.b16 %v194
  %v961 = vunpack.c.h.b16 %v194
  %v962 = vunpack.c.l.b16 %v195
  %v963 = vunpack.c.h.b16 %v195
  %v964 = vunpack.c.l.b16 %v196
  %v965 = vunpack.c.h.b16 %v196
  %v966 = vunpack.c.l.b16 %v197
  %v967 = vunpack.c.h.b16 %v197
  %v968 = vunpack.c.l.b16 %v198
  %v969 = vunpack.c.h.b16 %v198
  %v970 = vunpack.c.l.b16 %v199
  %v971 = vunpack.c.h.b16 %v199
  %v972 = vunpack.c.l.b16 %v200
  %v973 = vunpack.c.h.b16 %v200
  %v974 = vunpack.c.l.b16 %v201
  %v975 = vunpack.c.h.b16 %v201
  %v976 = vunpack.c.l.b16 %v202
  %v977 = vunpack.c.h.b16 %v202
  %v978 = vunpack.c.l.b16 %v203
  %v979 = vunpack.c.h.b16 %v203
  %v980 = vunpack.c.l.b16 %v204
  %v981 = vunpack.c.h.b16 %v204
  %v982 = vunpack.c.l.b16 %v205
  %v983 = vunpack.c.h.b16 %v205
  %v984 = vunpack.c.l.b16 %v206
  %v985 = vunpack.c.h.b16 %v206
  %v986 = vunpack.c.l.b16 %v207
  %v987 = vunpack.c.h.b16 %v207
  %v988 = vunpack.c.l.b16 %v208
  %v989 = vunpack.c.h.b16 %v208
  %v990 = vunpack.c.l.b16 %v209
  %v991 = vunpack.c.h.b16 %v209
  %v992 = vunpack.c.l.b16 %v210
  %v993 = vunpack.c.h.b16 %v210
  %v994 = vunpack.c.l.b16 %v211
  %v995 = vunpack.c.h.b16 %v211
  %v996 = vunpack.c.l.b16 %v212
  %v997 = vunpack.c.h.b16 %v212
  %v998 = vunpack.c.l.b16 %v213
  %v999 = vunpack.c.h.b16 %v213
  %v1000 = vunpack.c.l.b16 %v214
  %v1001 = vunpack.c.h.b16 %v214
  %v1002 = vunpack.c.l.b16 %v215
  %v1003 = vunpack.c.h.b16 %v215
  %v1004 = vunpack.c.l.b16 %v216
  %v1005 = vunpack.c.h.b16 %v216
  %v1006 = vunpack.c.l.b16 %v217
  %v1007 = vunpack.c.h.b16 %v217
  %v1008 = vunpack.c.l.b16 %v218
  %v1009 = vunpack.c.h.b16 %v218
  %v1010 = vunpack.c.l.b16 %v219
  %v1011 = vunpack.c.h.b16 %v219
  %v1012 = vunpack.c.l.b16 %v220
  %v1013 = vunpack.c.h.b16 %v220
  %v1014 = vunpack.c.l.b16 %v221
  %v1015 = vunpack.c.h.b16 %v221
  %v1016 = vunpack.c.l.b16 %v222
  %v1017 = vunpack.c.h.b16 %v222
  %v1018 = vunpack.c.l.b16 %v223
  %v1019 = vunpack.c.h.b16 %v223
  %v1020 = vunpack.c.l.b16 %v224
  %v1021 = vunpack.c.h.b16 %v224
  %v1022 = vunpack.c.l.b16 %v225
  %v1023 = vunpack.c.h.b16 %v225
  %v1024 = vunpack.c.l.b16 %v226
  %v1025 = vunpack.c.h.b16 %v226
  %v1026 = vunpack.c.l.b16 %v227
  %v1027 = vunpack.c.h.b16 %v227
  %v1028 = vunpack.c.l.b16 %v228
  %v1029 = vunpack.c.h.b16 %v228
  %v1030 = vunpack.c.l.b16 %v229
  %v1031 = vunpack.c.h.b16 %v229
  %v1032 = vunpack.c.l.b16 %v230
  %v1033 = vunpack.c.h.b16 %v230
  %v1034 = vunpack.c.l.b16 %v231
  %v1035 = vunpack.c.h.b16 %v231
  %v1036 = vunpack.c.l.b16 %v232
  %v1037 = vunpack.c.h.b16 %v232
  %v1038 = vunpack.c.l.b16 %v233
  %v1039 = vunpack.c.h.b16 %v233
  %v1040 = vunpack.c.l.b16 %v234
  %v1041 = vunpack.c.h.b16 %v234
  %v1042 = vunpack.c.l.b16 %v235
  %v1043 = vunpack.c.h.b16 %v235
  %v1044 = vunpack.c.l.b16 %v236
  %v1045 = vunpack.c.h.b16 %v236
  %v1046 = vunpack.c.l.b16 %v237
  %v1047 = vunpack.c.h.b16 %v237
  %v1048 = vunpack.c.l.b16 %v238
  %v1049 = vunpack.c.h.b16 %v238
  %v1050 = vunpack.c.l.b16 %v239
  %v1051 = vunpack.c.h.b16 %v239
  %v1052 = vunpack.c.l.b16 %v240
  %v1053 = vunpack.c.h.b16 %v240
  %v1054 = vunpack.c.l.b16 %v241
  %v1055 = vunpack.c.h.b16 %v241
  %v1056 = vunpack.c.l.b16 %v242
  %v1057 = vunpack.c.h.b16 %v242
  %v1058 = vunpack.c.l.b16 %v243
  %v1059 = vunpack.c.h.b16 %v243
  %v1060 = vunpack.c.l.b16 %v244
  %v1061 = vunpack.c.h.b16 %v244
  %v1062 = vunpack.c.l.b16 %v245
  %v1063 = vunpack.c.h.b16 %v245
  %v1064 = vunpack.c.l.b16 %v246
  %v1065 = vunpack.c.h.b16 %v246
  %v1066 = vunpack.c.l.b16 %v247
  %v1067 = vunpack.c.h.b16 %v247
  %v1068 = vunpack.c.l.b16 %v248
  %v1069 = vunpack.c.h.b16 %v248
  %v1070 = vunpack.c.l.b16 %v249
  %v1071 = vunpack.c.h.b16 %v249
  %v1072 = vunpack.c.l.b16 %v250
  %v1073 = vunpack.c.h.b16 %v250
  %v1074 = vunpack.c.l.b16 %v251
  %v1075 = vunpack.c.h.b16 %v251
  %v1076 = vunpack.c.l.b16 %v252
  %v1077 = vunpack.c.h.b16 %v252
  %v1078 = vunpack.c.l.b16 %v253
  %v1079 = vunpack.c.h.b16 %v253
  %v1080 = vunpack.c.l.b16 %v254
  %v1081 = vunpack.c.h.b16 %v254
  %v1082 = vunpack.c.l.b16 %v255
  %v1083 = vunpack.c.h.b16 %v255
  %v1084 = vunpack.c.l.b16 %v256
  %v1085 = vunpack.c.h.b16 %v256
  %v1086 = vunpack.c.l.b16 %v257
  %v1087 = vunpack.c.h.b16 %v257
  %v1088 = vunpack.c.l.b16 %v258
  %v1089 = vunpack.c.h.b16 %v258
  %v1090 = vunpack.c.l.b16 %v259
  %v1091 = vunpack.c.h.b16 %v259
  %v1092 = vunpack.c.l.b16 %v260
  %v1093 = vunpack.c.h.b16 %v260
  %v1094 = vunpack.c.l.b16 %v261
  %v1095 = vunpack.c.h.b16 %v261
  %v1096 = vunpack.c.l.b16 %v262
  %v1097 = vunpack.c.h.b16 %v262
  %v1098 = vunpack.c.l.b16 %v263
  %v1099 = vunpack.c.h.b16 %v263
  %v1100 = vunpack.c.l.b16 %v264
  %v1101 = vunpack.c.h.b16 %v264
  %v1102 = vunpack.c.l.b16 %v265
  %v1103 = vunpack.c.h.b16 %v265
  %v1104 = vunpack.c.l.b16 %v266
  %v1105 = vunpack.c.h.b16 %v266
  %v1106 = vunpack.c.l.b16 %v267
  %v1107 = vunpack.c.h.b16 %v267
  %v1108 = vunpack.c.l.b16 %v268
  %v1109 = vunpack.c.h.b16 %v268
  %v1110 = vunpack.c.l.b16 %v269
  %v1111 = vunpack.c.h.b16 %v269
  %v1112 = vunpack.c.l.b16 %v270
  %v1113 = vunpack.c.h.b16 %v270
  %v1114 = vunpack.c.l.b16 %v271
  %v1115 = vunpack.c.h.b16 %v271
  %v1116 = vunpack.c.l.b16 %v272
  %v1117 = vunpack.c.h.b16 %v272
  %v1118 = vunpack.c.l.b16 %v273
  %v1119 = vunpack.c.h.b16 %v273
  %v1120 = vunpack.c.l.b16 %v274
  %v1121 = vunpack.c.h.b16 %v274
  %v1122 = vunpack.c.l.b16 %v275
  %v1123 = vunpack.c.h.b16 %v275
  %v1124 = vunpack.c.l.b16 %v276
  %v1125 = vunpack.c.h.b16 %v276
  %v1126 = vunpack.c.l.b16 %v277
  %v1127 = vunpack.c.h.b16 %v277
  %v1128 = vunpack.c.l.b16 %v278
  %v1129 = vunpack.c.h.b16 %v278
  %v1130 = vunpack.c.l.b16 %v279
  %v1131 = vunpack.c.h.b16 %v279
  %v1132 = vunpack.c.l.b16 %v280
  %v1133 = vunpack.c.h.b16 %v280
  %v1134 = vunpack.c.l.b16 %v281
  %v1135 = vunpack.c.h.b16 %v281
  %v1136 = vunpack.c.l.b16 %v282
  %v1137 = vunpack.c.h.b16 %v282
  %v1138 = vunpack.c.l.b16 %v283
  %v1139 = vunpack.c.h.b16 %v283
  %v1140 = vunpack.c.l.b16 %v284
  %v1141 = vunpack.c.h.b16 %v284
  %v1142 = vunpack.c.l.b16 %v285
  %v1143 = vunpack.c.h.b16 %v285
  %v1144 = vunpack.c.l.b16 %v286
  %v1145 = vunpack.c.h.b16 %v286
  %v1146 = vunpack.c.l.b16 %v287
  %v1147 = vunpack.c.h.b16 %v287
  %v1148 = vunpack.c.l.b16 %v288
  %v1149 = vunpack.c.h.b16 %v288
  %v1150 = vunpack.c.l.b16 %v289
  %v1151 = vunpack.c.h.b16 %v289
  %v1152 = vunpack.c.l.b16 %v290
  %v1153 = vunpack.c.h.b16 %v290
  %v1154 = vunpack.c.l.b16 %v291
  %v1155 = vunpack.c.h.b16 %v291
  %v1156 = vunpack.c.l.b16 %v292
  %v1157 = vunpack.c.h.b16 %v292
  %v1158 = vunpack.c.l.b16 %v293
  %v1159 = vunpack.c.h.b16 %v293
  %v1160 = vunpack.c.l.b16 %v294
  %v1161 = vunpack.c.h.b16 %v294
  %v1162 = vunpack.c.l.b16 %v295
  %v1163 = vunpack.c.h.b16 %v295
  %v1164 = vunpack.c.l.b16 %v296
  %v1165 = vunpack.c.h.b16 %v296
  %v1166 = vunpack.c.l.b16 %v297
  %v1167 = vunpack.c.h.b16 %v297
  %v1168 = vpack.c.b16 %v660, %v656
  %v1169 = vpack.c.b16 %v661, %v657
  %v1170 = vpack.c.b16 %v662, %v658
  %v1171 = vpack.c.b16 %v663, %v659
  %v1172 = vpack.c.b16 %v668, %v664
  %v1173 = vpack.c.b16 %v669, %v665
  %v1174 = vpack.c.b16 %v670, %v666
  %v1175 = vpack.c.b16 %v671, %v667
  %v1176 = vpack.c.b16 %v676, %v672
  %v1177 = vpack.c.b16 %v677, %v673
  %v1178 = vpack.c.b16 %v678, %v674
  %v1179 = vpack.c.b16 %v679, %v675
  %v1180 = vpack.c.b16 %v684, %v680
  %v1181 = vpack.c.b16 %v685, %v681
  %v1182 = vpack.c.b16 %v686, %v682
  %v1183 = vpack.c.b16 %v687, %v683
  %v1184 = vpack.c.b16 %v692, %v688
  %v1185 = vpack.c.b16 %v693, %v689
  %v1186 = vpack.c.b16 %v694, %v690
  %v1187 = vpack.c.b16 %v695, %v691
  %v1188 = vpack.c.b16 %v700, %v696
  %v1189 = vpack.c.b16 %v701, %v697
  %v1190 = vpack.c.b16 %v702, %v698
  %v1191 = vpack.c.b16 %v703, %v699
  %v1192 = vpack.c.b16 %v708, %v704
  %v1193 = vpack.c.b16 %v709, %v705
  %v1194 = vpack.c.b16 %v710, %v706
  %v1195 = vpack.c.b16 %v711, %v707
  %v1196 = vpack.c.b16 %v716, %v712
  %v1197 = vpack.c.b16 %v717, %v713
  %v1198 = vpack.c.b16 %v718, %v714
  %v1199 = vpack.c.b16 %v719, %v715
  %v1200 = vpack.c.b16 %v724, %v720
  %v1201 = vpack.c.b16 %v725, %v721
  %v1202 = vpack.c.b16 %v726, %v722
  %v1203 = vpack.c.b16 %v727, %v723
  %v1204 = vpack.c.b16 %v732, %v728
  %v1205 = vpack.c.b16 %v733, %v729
  %v1206 = vpack.c.b16 %v734, %v730
  %v1207 = vpack.c.b16 %v735, %v731
  %v1208 = vpack.c.b16 %v740, %v736
  %v1209 = vpack.c.b16 %v741, %v737
  %v1210 = vpack.c.b16 %v742, %v738
  %v1211 = vpack.c.b16 %v743, %v739
  %v1212 = vpack.c.b16 %v748, %v744
  %v1213 = vpack.c.b16 %v749, %v745
  %v1214 = vpack.c.b16 %v750, %v746
  %v1215 = vpack.c.b16 %v751, %v747
  %v1216 = vpack.c.b16 %v756, %v752
  %v1217 = vpack.c.b16 %v757, %v753
  %v1218 = vpack.c.b16 %v758, %v754
  %v1219 = vpack.c.b16 %v759, %v755
  %v1220 = vpack.c.b16 %v764, %v760
  %v1221 = vpack.c.b16 %v765, %v761
  %v1222 = vpack.c.b16 %v766, %v762
  %v1223 = vpack.c.b16 %v767, %v763
  %v1224 = vpack.c.b16 %v772, %v768
  %v1225 = vpack.c.b16 %v773, %v769
  %v1226 = vpack.c.b16 %v774, %v770
  %v1227 = vpack.c.b16 %v775, %v771
  %v1228 = vpack.c.b16 %v780, %v776
  %v1229 = vpack.c.b16 %v781, %v777
  %v1230 = vpack.c.b16 %v782, %v778
  %v1231 = vpack.c.b16 %v783, %v779
  %v1232 = vpack.c.b16 %v788, %v784
  %v1233 = vpack.c.b16 %v789, %v785
  %v1234 = vpack.c.b16 %v790, %v786
  %v1235 = vpack.c.b16 %v791, %v787
  %v1236 = vpack.c.b16 %v796, %v792
  %v1237 = vpack.c.b16 %v797, %v793
  %v1238 = vpack.c.b16 %v798, %v794
  %v1239 = vpack.c.b16 %v799, %v795
  %v1240 = vpack.c.b16 %v804, %v800
  %v1241 = vpack.c.b16 %v805, %v801
  %v1242 = vpack.c.b16 %v806, %v802
  %v1243 = vpack.c.b16 %v807, %v803
  %v1244 = vpack.c.b16 %v812, %v808
  %v1245 = vpack.c.b16 %v813, %v809
  %v1246 = vpack.c.b16 %v814, %v810
  %v1247 = vpack.c.b16 %v815, %v811
  %v1248 = vpack.c.b16 %v820, %v816
  %v1249 = vpack.c.b16 %v821, %v817
  %v1250 = vpack.c.b16 %v822, %v818
  %v1251 = vpack.c.b16 %v823, %v819
  %v1252 = vpack.c.b16 %v828, %v824
  %v1253 = vpack.c.b16 %v829, %v825
  %v1254 = vpack.c.b16 %v830, %v826
  %v1255 = vpack.c.b16 %v831, %v827
  %v1256 = vpack.c.b16 %v836, %v832
  %v1257 = vpack.c.b16 %v837, %v833
  %v1258 = vpack.c.b16 %v838, %v834
  %v1259 = vpack.c.b16 %v839, %v835
  %v1260 = vpack.c.b16 %v844, %v840
  %v1261 = vpack.c.b16 %v845, %v841
  %v1262 = vpack.c.b16 %v846, %v842
  %v1263 = vpack.c.b16 %v847, %v843
  %v1264 = vpack.c.b16 %v852, %v848
  %v1265 = vpack.c.b16 %v853, %v849
  %v1266 = vpack.c.b16 %v854, %v850
  %v1267 = vpack.c.b16 %v855, %v851
  %v1268 = vpack.c.b16 %v860, %v856
  %v1269 = vpack.c.b16 %v861, %v857
  %v1270 = vpack.c.b16 %v862, %v858
  %v1271 = vpack.c.b16 %v863, %v859
  %v1272 = vpack.c.b16 %v868, %v864
  %v1273 = vpack.c.b16 %v869, %v865
  %v1274 = vpack.c.b16 %v870, %v866
  %v1275 = vpack.c.b16 %v871, %v867
  %v1276 = vpack.c.b16 %v876, %v872
  %v1277 = vpack.c.b16 %v877, %v873
  %v1278 = vpack.c.b16 %v878, %v874
  %v1279 = vpack.c.b16 %v879, %v875
  %v1280 = vpack.c.b16 %v884, %v880
  %v1281 = vpack.c.b16 %v885, %v881
  %v1282 = vpack.c.b16 %v886, %v882
  %v1283 = vpack.c.b16 %v887, %v883
  %v1284 = vpack.c.b16 %v892, %v888
  %v1285 = vpack.c.b16 %v893, %v889
  %v1286 = vpack.c.b16 %v894, %v890
  %v1287 = vpack.c.b16 %v895, %v891
  %v1288 = vpack.c.b16 %v900, %v896
  %v1289 = vpack.c.b16 %v901, %v897
  %v1290 = vpack.c.b16 %v902, %v898
  %v1291 = vpack.c.b16 %v903, %v899
  %v1292 = vpack.c.b16 %v908, %v904
  %v1293 = vpack.c.b16 %v909, %v905
  %v1294 = vpack.c.b16 %v910, %v906
  %v1295 = vpack.c.b16 %v911, %v907
  %v1296 = vpack.c.b16 %v916, %v912
  %v1297 = vpack.c.b16 %v917, %v913
  %v1298 = vpack.c.b16 %v918, %v914
  %v1299 = vpack.c.b16 %v919, %v915
  %v1300 = vpack.c.b16 %v924, %v920
  %v1301 = vpack.c.b16 %v925, %v921
  %v1302 = vpack.c.b16 %v926, %v922
  %v1303 = vpack.c.b16 %v927, %v923
  %v1304 = vpack.c.b16 %v932, %v928
  %v1305 = vpack.c.b16 %v933, %v929
  %v1306 = vpack.c.b16 %v934, %v930
  %v1307 = vpack.c.b16 %v935, %v931
  %v1308 = vpack.c.b16 %v940, %v936
  %v1309 = vpack.c.b16 %v941, %v937
  %v1310 = vpack.c.b16 %v942, %v938
  %v1311 = vpack.c.b16 %v943, %v939
  %v1312 = vpack.c.b16 %v948, %v944
  %v1313 = vpack.c.b16 %v949, %v945
  %v1314 = vpack.c.b16 %v950, %v946
  %v1315 = vpack.c.b16 %v951, %v947
  %v1316 = vpack.c.b16 %v956, %v952
  %v1317 = vpack.c.b16 %v957, %v953
  %v1318 = vpack.c.b16 %v958, %v954
  %v1319 = vpack.c.b16 %v959, %v955
  %v1320 = vpack.c.b16 %v964, %v960
  %v1321 = vpack.c.b16 %v965, %v961
  %v1322 = vpack.c.b16 %v966, %v962
  %v1323 = vpack.c.b16 %v967, %v963
  %v1324 = vpack.c.b16 %v972, %v968
  %v1325 = vpack.c.b16 %v973, %v969
  %v1326 = vpack.c.b16 %v974, %v970
  %v1327 = vpack.c.b16 %v975, %v971
  %v1328 = vpack.c.b16 %v980, %v976
  %v1329 = vpack.c.b16 %v981, %v977
  %v1330 = vpack.c.b16 %v982, %v978
  %v1331 = vpack.c.b16 %v983, %v979
  %v1332 = vpack.c.b16 %v988, %v984
  %v1333 = vpack.c.b16 %v989, %v985
  %v1334 = vpack.c.b16 %v990, %v986
  %v1335 = vpack.c.b16 %v991, %v987
  %v1336 = vpack.c.b16 %v996, %v992
  %v1337 = vpack.c.b16 %v997, %v993
  %v1338 = vpack.c.b16 %v998, %v994
  %v1339 = vpack.c.b16 %v999, %v995
  %v1340 = vpack.c.b16 %v1004, %v1000
  %v1341 = vpack.c.b16 %v1005, %v1001
  %v1342 = vpack.c.b16 %v1006, %v1002
  %v1343 = vpack.c.b16 %v1007, %v1003
  %v1344 = vpack.c.b16 %v1012, %v1008
  %v1345 = vpack.c.b16 %v1013, %v1009
  %v1346 = vpack.c.b16 %v1014, %v1010
  %v1347 = vpack.c.b16 %v1015, %v1011
  %v1348 = vpack.c.b16 %v1020, %v1016
  %v1349 = vpack.c.b16 %v1021, %v1017
  %v1350 = vpack.c.b16 %v1022, %v1018
  %v1351 = vpack.c.b16 %v1023, %v1019
  %v1352 = vpack.c.b16 %v1028, %v1024
  %v1353 = vpack.c.b16 %v1029, %v1025
  %v1354 = vpack.c.b16 %v1030, %v1026
  %v1355 = vpack.c.b16 %v1031, %v1027
  %v1356 = vpack.c.b16 %v1036, %v1032
  %v1357 = vpack.c.b16 %v1037, %v1033
  %v1358 = vpack.c.b16 %v1038, %v1034
  %v1359 = vpack.c.b16 %v1039, %v1035
  %v1360 = vpack.c.b16 %v1044, %v1040
  %v1361 = vpack.c.b16 %v1045, %v1041
  %v1362 = vpack.c.b16 %v1046, %v1042
  %v1363 = vpack.c.b16 %v1047, %v1043
  %v1364 = vpack.c.b16 %v1052, %v1048
  %v1365 = vpack.c.b16 %v1053, %v1049
  %v1366 = vpack.c.b16 %v1054, %v1050
  %v1367 = vpack.c.b16 %v1055, %v1051
  %v1368 = vpack.c.b16 %v1060, %v1056
  %v1369 = vpack.c.b16 %v1061, %v1057
  %v1370 = vpack.c.b16 %v1062, %v1058
  %v1371 = vpack.c.b16 %v1063, %v1059
  %v1372 = vpack.c.b16 %v1068, %v1064
  %v1373 = vpack.c.b16 %v1069, %v1065
  %v1374 = vpack.c.b16 %v1070, %v1066
  %v1375 = vpack.c.b16 %v1071, %v1067
  %v1376 = vpack.c.b16 %v1076, %v1072
  %v1377 = vpack.c.b16 %v1077, %v1073
  %v1378 = vpack.c.b16 %v1078, %v1074
  %v1379 = vpack.c.b16 %v1079, %v1075
  %v1380 = vpack.c.b16 %v1084, %v1080
  %v1381 = vpack.c.b16 %v1085, %v1081
  %v1382 = vpack.c.b16 %v1086, %v1082
  %v1383 = vpack.c.b16 %v1087, %v1083
  %v1384 = vpack.c.b16 %v1092, %v1088
  %v1385 = vpack.c.b16 %v1093, %v1089
  %v1386 = vpack.c.b16 %v1094, %v1090
  %v1387 = vpack.c.b16 %v1095, %v1091
  %v1388 = vpack.c.b16 %v1100, %v1096
  %v1389 = vpack.c.b16 %v1101, %v1097
  %v1390 = vpack.c.b16 %v1102, %v1098
  %v1391 = vpack.c.b16 %v1103, %v1099
  %v1392 = vpack.c.b16 %v1108, %v1104
  %v1393 = vpack.c.b16 %v1109, %v1105
  %v1394 = vpack.c.b16 %v1110, %v1106
  %v1395 = vpack.c.b16 %v1111, %v1107
  %v1396 = vpack.c.b16 %v1116, %v1112
  %v1397 = vpack.c.b16 %v1117, %v1113
  %v1398 = vpack.c.b16 %v1118, %v1114
  %v1399 = vpack.c.b16 %v1119, %v1115
  %v1400 = vpack.c.b16 %v1124, %v1120
  %v1401 = vpack.c.b16 %v1125, %v1121
  %v1402 = vpack.c.b16 %v1126, %v1122
  %v1403 = vpack.c.b16 %v1127, %v1123
  %v1404 = vpack.c.b16 %v1132, %v1128
  %v1405 = vpack.c.b16 %v1133, %v1129
  %v1406 = vpack.c.b16 %v1134, %v1130
  %v1407 = vpack.c.b16 %v1135, %v1131
  %v1408 = vpack.c.b16 %v1140, %v1136
  %v1409 = vpack.c.b16 %v1141, %v1137
  %v1410 = vpack.c.b16 %v1142, %v1138
  %v1411 = vpack.c.b16 %v1143, %v1139
  %v1412 = vpack.c.b16 %v1148, %v1144
  %v1413 = vpack.c.b16 %v1149, %v1145
  %v1414 = vpack.c.b16 %v1150, %v1146
  %v1415 = vpack.c.b16 %v1151, %v1147
  %v1416 = vpack.c.b16 %v1156, %v1152
  %v1417 = vpack.c.b16 %v1157, %v1153
  %v1418 = vpack.c.b16 %v1158, %v1154
  %v1419 = vpack.c.b16 %v1159, %v1155
  %v1420 = vpack.c.b16 %v1164, %v1160
  %v1421 = vpack.c.b16 %v1165, %v1161
  %v1422 = vpack.c.b16 %v1166, %v1162
  %v1423 = vpack.c.b16 %v1167, %v1163
  %1680 = vmatprep.subr.bf16.mxu0 %v1169
  %1681 = vmatpush1.bf16.msra.mxu0 %v1168
  %1682 = vmatprep.subr.bf16.mxu0 %v1173
  %1683 = vmatpush1.bf16.msra.mxu0 %v1172
  %1684 = vmatprep.subr.bf16.mxu0 %v1177
  %1685 = vmatpush1.bf16.msra.mxu0 %v1176
  %1686 = vmatprep.subr.bf16.mxu0 %v1181
  %1687 = vmatpush1.bf16.msra.mxu0 %v1180
  %1688 = vmatprep.subr.bf16.mxu0 %v1185
  %1689 = vmatpush1.bf16.msra.mxu0 %v1184
  %1690 = vmatprep.subr.bf16.mxu0 %v1189
  %1691 = vmatpush1.bf16.msra.mxu0 %v1188
  %1692 = vmatprep.subr.bf16.mxu0 %v1193
  %1693 = vmatpush1.bf16.msra.mxu0 %v1192
  %1694 = vmatprep.subr.bf16.mxu0 %v1197
  %1695 = vmatpush1.bf16.msra.mxu0 %v1196
  %1696 = vmatprep.subr.bf16.mxu0 %v1201
  %1697 = vmatpush1.bf16.msra.mxu0 %v1200
  %1698 = vmatprep.subr.bf16.mxu0 %v1205
  %1699 = vmatpush1.bf16.msra.mxu0 %v1204
  %1700 = vmatprep.subr.bf16.mxu0 %v1209
  %1701 = vmatpush1.bf16.msra.mxu0 %v1208
  %1702 = vmatprep.subr.bf16.mxu0 %v1213
  %1703 = vmatpush1.bf16.msra.mxu0 %v1212
  %1704 = vmatprep.subr.bf16.mxu0 %v1217
  %1705 = vmatpush1.bf16.msra.mxu0 %v1216
  %1706 = vmatprep.subr.bf16.mxu0 %v1221
  %1707 = vmatpush1.bf16.msra.mxu0 %v1220
  %1708 = vmatprep.subr.bf16.mxu0 %v1225
  %1709 = vmatpush1.bf16.msra.mxu0 %v1224
  %1710 = vmatprep.subr.bf16.mxu0 %v1229
  %1711 = vmatpush1.bf16.msra.mxu0 %v1228
  %1712 = vmatprep.mubr.bf16.mxu0 %v369
  %1713 = vmatmul.mubr.bf16.gmra.mrb[0].mxu0 %v368
  %v1714 = vpop.f32.mrb[0].mxu0
  %v1715 = vadd.f32 %v303, %v1714
  %v1716 = vpop.f32.mrb[0].mxu0
  %v1717 = vadd.f32 %v307, %v1716
  %v1718 = vpop.f32.mrb[0].mxu0
  %v1719 = vadd.f32 %v303, %v1718
  %v1720 = vpop.f32.mrb[0].mxu0
  %v1721 = vadd.f32 %v307, %v1720
  %1722 = vmatprep.mubr.bf16.mxu0 %v377
  %1723 = vmatmul.mubr.bf16.gmra.mrb[0].mxu0 %v376
  %v1724 = vpop.f32.mrb[0].mxu0
  %v1725 = vadd.f32 %v303, %v1724
  %v1726 = vpop.f32.mrb[0].mxu0
  %v1727 = vadd.f32 %v307, %v1726
  %v1728 = vpop.f32.mrb[0].mxu0
  %v1729 = vadd.f32 %v303, %v1728
  %v1730 = vpop.f32.mrb[0].mxu0
  %v1731 = vadd.f32 %v307, %v1730
  %1732 = vdwg.mxu0
  %1733 = vmatprep.subr.bf16.mxu0 %v1233
  %1734 = vmatpush1.bf16.msra.mxu0 %v1232
  %1735 = vmatprep.subr.bf16.mxu0 %v1237
  %1736 = vmatpush1.bf16.msra.mxu0 %v1236
  %1737 = vmatprep.subr.bf16.mxu0 %v1241
  %1738 = vmatpush1.bf16.msra.mxu0 %v1240
  %1739 = vmatprep.subr.bf16.mxu0 %v1245
  %1740 = vmatpush1.bf16.msra.mxu0 %v1244
  %1741 = vmatprep.subr.bf16.mxu0 %v1249
  %1742 = vmatpush1.bf16.msra.mxu0 %v1248
  %1743 = vmatprep.subr.bf16.mxu0 %v1253
  %1744 = vmatpush1.bf16.msra.mxu0 %v1252
  %1745 = vmatprep.subr.bf16.mxu0 %v1257
  %1746 = vmatpush1.bf16.msra.mxu0 %v1256
  %1747 = vmatprep.subr.bf16.mxu0 %v1261
  %1748 = vmatpush1.bf16.msra.mxu0 %v1260
  %1749 = vmatprep.subr.bf16.mxu0 %v1265
  %1750 = vmatpush1.bf16.msra.mxu0 %v1264
  %1751 = vmatprep.subr.bf16.mxu0 %v1269
  %1752 = vmatpush1.bf16.msra.mxu0 %v1268
  %1753 = vmatprep.subr.bf16.mxu0 %v1273
  %1754 = vmatpush1.bf16.msra.mxu0 %v1272
  %1755 = vmatprep.subr.bf16.mxu0 %v1277
  %1756 = vmatpush1.bf16.msra.mxu0 %v1276
  %1757 = vmatprep.subr.bf16.mxu0 %v1281
  %1758 = vmatpush1.bf16.msra.mxu0 %v1280
  %1759 = vmatprep.subr.bf16.mxu0 %v1285
  %1760 = vmatpush1.bf16.msra.mxu0 %v1284
  %1761 = vmatprep.subr.bf16.mxu0 %v1289
  %1762 = vmatpush1.bf16.msra.mxu0 %v1288
  %1763 = vmatprep.subr.bf16.mxu0 %v1293
  %1764 = vmatpush1.bf16.msra.mxu0 %v1292
  %1765 = vmatprep.mubr.bf16.mxu0 %v371
  %1766 = vmatmul.mubr.bf16.gmra.mrb[0].mxu0 %v370
  %v1767 = vpop.f32.mrb[0].mxu0
  %v1768 = vadd.f32 %v1715, %v1767
  %v1769 = vpop.f32.mrb[0].mxu0
  %v1770 = vadd.f32 %v1717, %v1769
  %v1771 = vpop.f32.mrb[0].mxu0
  %v1772 = vadd.f32 %v1719, %v1771
  %v1773 = vpop.f32.mrb[0].mxu0
  %v1774 = vadd.f32 %v1721, %v1773
  %1775 = vmatprep.mubr.bf16.mxu0 %v379
  %1776 = vmatmul.mubr.bf16.gmra.mrb[0].mxu0 %v378
  %v1777 = vpop.f32.mrb[0].mxu0
  %v1778 = vadd.f32 %v1725, %v1777
  %v1779 = vpop.f32.mrb[0].mxu0
  %v1780 = vadd.f32 %v1727, %v1779
  %v1781 = vpop.f32.mrb[0].mxu0
  %v1782 = vadd.f32 %v1729, %v1781
  %v1783 = vpop.f32.mrb[0].mxu0
  %v1784 = vadd.f32 %v1731, %v1783
  %1785 = vdwg.mxu0
  %1786 = vmatprep.subr.bf16.mxu0 %v1297
  %1787 = vmatpush1.bf16.msra.mxu0 %v1296
  %1788 = vmatprep.subr.bf16.mxu0 %v1301
  %1789 = vmatpush1.bf16.msra.mxu0 %v1300
  %1790 = vmatprep.subr.bf16.mxu0 %v1305
  %1791 = vmatpush1.bf16.msra.mxu0 %v1304
  %1792 = vmatprep.subr.bf16.mxu0 %v1309
  %1793 = vmatpush1.bf16.msra.mxu0 %v1308
  %1794 = vmatprep.subr.bf16.mxu0 %v1313
  %1795 = vmatpush1.bf16.msra.mxu0 %v1312
  %1796 = vmatprep.subr.bf16.mxu0 %v1317
  %1797 = vmatpush1.bf16.msra.mxu0 %v1316
  %1798 = vmatprep.subr.bf16.mxu0 %v1321
  %1799 = vmatpush1.bf16.msra.mxu0 %v1320
  %1800 = vmatprep.subr.bf16.mxu0 %v1325
  %1801 = vmatpush1.bf16.msra.mxu0 %v1324
  %1802 = vmatprep.subr.bf16.mxu0 %v1329
  %1803 = vmatpush1.bf16.msra.mxu0 %v1328
  %1804 = vmatprep.subr.bf16.mxu0 %v1333
  %1805 = vmatpush1.bf16.msra.mxu0 %v1332
  %1806 = vmatprep.subr.bf16.mxu0 %v1337
  %1807 = vmatpush1.bf16.msra.mxu0 %v1336
  %1808 = vmatprep.subr.bf16.mxu0 %v1341
  %1809 = vmatpush1.bf16.msra.mxu0 %v1340
  %1810 = vmatprep.subr.bf16.mxu0 %v1345
  %1811 = vmatpush1.bf16.msra.mxu0 %v1344
  %1812 = vmatprep.subr.bf16.mxu0 %v1349
  %1813 = vmatpush1.bf16.msra.mxu0 %v1348
  %1814 = vmatprep.subr.bf16.mxu0 %v1353
  %1815 = vmatpush1.bf16.msra.mxu0 %v1352
  %1816 = vmatprep.subr.bf16.mxu0 %v1357
  %1817 = vmatpush1.bf16.msra.mxu0 %v1356
  %1818 = vmatprep.mubr.bf16.mxu0 %v373
  %1819 = vmatmul.mubr.bf16.gmra.mrb[0].mxu0 %v372
  %v1820 = vpop.f32.mrb[0].mxu0
  %v1821 = vadd.f32 %v1768, %v1820
  %v1822 = vpop.f32.mrb[0].mxu0
  %v1823 = vadd.f32 %v1770, %v1822
  %v1824 = vpop.f32.mrb[0].mxu0
  %v1825 = vadd.f32 %v1772, %v1824
  %v1826 = vpop.f32.mrb[0].mxu0
  %v1827 = vadd.f32 %v1774, %v1826
  %1828 = vmatprep.mubr.bf16.mxu0 %v381
  %1829 = vmatmul.mubr.bf16.gmra.mrb[0].mxu0 %v380
  %v1830 = vpop.f32.mrb[0].mxu0
  %v1831 = vadd.f32 %v1778, %v1830
  %v1832 = vpop.f32.mrb[0].mxu0
  %v1833 = vadd.f32 %v1780, %v1832
  %v1834 = vpop.f32.mrb[0].mxu0
  %v1835 = vadd.f32 %v1782, %v1834
  %v1836 = vpop.f32.mrb[0].mxu0
  %v1837 = vadd.f32 %v1784, %v1836
  %1838 = vdwg.mxu0
  %1839 = vmatprep.subr.bf16.mxu0 %v1361
  %1840 = vmatpush1.bf16.msra.mxu0 %v1360
  %1841 = vmatprep.subr.bf16.mxu0 %v1365
  %1842 = vmatpush1.bf16.msra.mxu0 %v1364
  %1843 = vmatprep.subr.bf16.mxu0 %v1369
  %1844 = vmatpush1.bf16.msra.mxu0 %v1368
  %1845 = vmatprep.subr.bf16.mxu0 %v1373
  %1846 = vmatpush1.bf16.msra.mxu0 %v1372
  %1847 = vmatprep.subr.bf16.mxu0 %v1377
  %1848 = vmatpush1.bf16.msra.mxu0 %v1376
  %1849 = vmatprep.subr.bf16.mxu0 %v1381
  %1850 = vmatpush1.bf16.msra.mxu0 %v1380
  %1851 = vmatprep.subr.bf16.mxu0 %v1385
  %1852 = vmatpush1.bf16.msra.mxu0 %v1384
  %1853 = vmatprep.subr.bf16.mxu0 %v1389
  %1854 = vmatpush1.bf16.msra.mxu0 %v1388
  %1855 = vmatprep.subr.bf16.mxu0 %v1393
  %1856 = vmatpush1.bf16.msra.mxu0 %v1392
  %1857 = vmatprep.subr.bf16.mxu0 %v1397
  %1858 = vmatpush1.bf16.msra.mxu0 %v1396
  %1859 = vmatprep.subr.bf16.mxu0 %v1401
  %1860 = vmatpush1.bf16.msra.mxu0 %v1400
  %1861 = vmatprep.subr.bf16.mxu0 %v1405
  %1862 = vmatpush1.bf16.msra.mxu0 %v1404
  %1863 = vmatprep.subr.bf16.mxu0 %v1409
  %1864 = vmatpush1.bf16.msra.mxu0 %v1408
  %1865 = vmatprep.subr.bf16.mxu0 %v1413
  %1866 = vmatpush1.bf16.msra.mxu0 %v1412
  %1867 = vmatprep.subr.bf16.mxu0 %v1417
  %1868 = vmatpush1.bf16.msra.mxu0 %v1416
  %1869 = vmatprep.subr.bf16.mxu0 %v1421
  %1870 = vmatpush1.bf16.msra.mxu0 %v1420
  %1871 = vmatprep.mubr.bf16.mxu0 %v375
  %1872 = vmatmul.mubr.bf16.gmra.mrb[0].mxu0 %v374
  %v1873 = vpop.f32.mrb[0].mxu0
  %v1874 = vadd.f32 %v1821, %v1873
  %v1875 = vpop.f32.mrb[0].mxu0
  %v1876 = vadd.f32 %v1823, %v1875
  %v1877 = vpop.f32.mrb[0].mxu0
  %v1878 = vadd.f32 %v1825, %v1877
  %v1879 = vpop.f32.mrb[0].mxu0
  %v1880 = vadd.f32 %v1827, %v1879
  %1881 = vmatprep.mubr.bf16.mxu0 %v383
  %1882 = vmatmul.mubr.bf16.gmra.mrb[0].mxu0 %v382
  %v1883 = vpop.f32.mrb[0].mxu0
  %v1884 = vadd.f32 %v1831, %v1883
  %v1885 = vpop.f32.mrb[0].mxu0
  %v1886 = vadd.f32 %v1833, %v1885
  %v1887 = vpop.f32.mrb[0].mxu0
  %v1888 = vadd.f32 %v1835, %v1887
  %v1889 = vpop.f32.mrb[0].mxu0
  %v1890 = vadd.f32 %v1837, %v1889
  %1891 = vdwg.mxu0
  %1892 = vmatprep.subr.bf16.mxu0 %v1171
  %1893 = vmatpush1.bf16.msra.mxu0 %v1170
  %1894 = vmatprep.subr.bf16.mxu0 %v1175
  %1895 = vmatpush1.bf16.msra.mxu0 %v1174
  %1896 = vmatprep.subr.bf16.mxu0 %v1179
  %1897 = vmatpush1.bf16.msra.mxu0 %v1178
  %1898 = vmatprep.subr.bf16.mxu0 %v1183
  %1899 = vmatpush1.bf16.msra.mxu0 %v1182
  %1900 = vmatprep.subr.bf16.mxu0 %v1187
  %1901 = vmatpush1.bf16.msra.mxu0 %v1186
  %1902 = vmatprep.subr.bf16.mxu0 %v1191
  %1903 = vmatpush1.bf16.msra.mxu0 %v1190
  %1904 = vmatprep.subr.bf16.mxu0 %v1195
  %1905 = vmatpush1.bf16.msra.mxu0 %v1194
  %1906 = vmatprep.subr.bf16.mxu0 %v1199
  %1907 = vmatpush1.bf16.msra.mxu0 %v1198
  %1908 = vmatprep.subr.bf16.mxu0 %v1203
  %1909 = vmatpush1.bf16.msra.mxu0 %v1202
  %1910 = vmatprep.subr.bf16.mxu0 %v1207
  %1911 = vmatpush1.bf16.msra.mxu0 %v1206
  %1912 = vmatprep.subr.bf16.mxu0 %v1211
  %1913 = vmatpush1.bf16.msra.mxu0 %v1210
  %1914 = vmatprep.subr.bf16.mxu0 %v1215
  %1915 = vmatpush1.bf16.msra.mxu0 %v1214
  %1916 = vmatprep.subr.bf16.mxu0 %v1219
  %1917 = vmatpush1.bf16.msra.mxu0 %v1218
  %1918 = vmatprep.subr.bf16.mxu0 %v1223
  %1919 = vmatpush1.bf16.msra.mxu0 %v1222
  %1920 = vmatprep.subr.bf16.mxu0 %v1227
  %1921 = vmatpush1.bf16.msra.mxu0 %v1226
  %1922 = vmatprep.subr.bf16.mxu0 %v1231
  %1923 = vmatpush1.bf16.msra.mxu0 %v1230
  %1924 = vmatprep.mubr.bf16.mxu0 %v369
  %1925 = vmatmul.mubr.bf16.gmra.mrb[0].mxu0 %v368
  %v1926 = vpop.f32.mrb[0].mxu0
  %v1927 = vadd.f32 %v311, %v1926
  %v1928 = vpop.f32.mrb[0].mxu0
  %v1929 = vadd.f32 %v315, %v1928
  %v1930 = vpop.f32.mrb[0].mxu0
  %v1931 = vadd.f32 %v311, %v1930
  %v1932 = vpop.f32.mrb[0].mxu0
  %v1933 = vadd.f32 %v315, %v1932
  %1934 = vmatprep.mubr.bf16.mxu0 %v377
  %1935 = vmatmul.mubr.bf16.gmra.mrb[0].mxu0 %v376
  %v1936 = vpop.f32.mrb[0].mxu0
  %v1937 = vadd.f32 %v311, %v1936
  %v1938 = vpop.f32.mrb[0].mxu0
  %v1939 = vadd.f32 %v315, %v1938
  %v1940 = vpop.f32.mrb[0].mxu0
  %v1941 = vadd.f32 %v311, %v1940
  %v1942 = vpop.f32.mrb[0].mxu0
  %v1943 = vadd.f32 %v315, %v1942
  %1944 = vdwg.mxu0
  %1945 = vmatprep.subr.bf16.mxu0 %v1235
  %1946 = vmatpush1.bf16.msra.mxu0 %v1234
  %1947 = vmatprep.subr.bf16.mxu0 %v1239
  %1948 = vmatpush1.bf16.msra.mxu0 %v1238
  %1949 = vmatprep.subr.bf16.mxu0 %v1243
  %1950 = vmatpush1.bf16.msra.mxu0 %v1242
  %1951 = vmatprep.subr.bf16.mxu0 %v1247
  %1952 = vmatpush1.bf16.msra.mxu0 %v1246
  %1953 = vmatprep.subr.bf16.mxu0 %v1251
  %1954 = vmatpush1.bf16.msra.mxu0 %v1250
  %1955 = vmatprep.subr.bf16.mxu0 %v1255
  %1956 = vmatpush1.bf16.msra.mxu0 %v1254
  %1957 = vmatprep.subr.bf16.mxu0 %v1259
  %1958 = vmatpush1.bf16.msra.mxu0 %v1258
  %1959 = vmatprep.subr.bf16.mxu0 %v1263
  %1960 = vmatpush1.bf16.msra.mxu0 %v1262
  %1961 = vmatprep.subr.bf16.mxu0 %v1267
  %1962 = vmatpush1.bf16.msra.mxu0 %v1266
  %1963 = vmatprep.subr.bf16.mxu0 %v1271
  %1964 = vmatpush1.bf16.msra.mxu0 %v1270
  %1965 = vmatprep.subr.bf16.mxu0 %v1275
  %1966 = vmatpush1.bf16.msra.mxu0 %v1274
  %1967 = vmatprep.subr.bf16.mxu0 %v1279
  %1968 = vmatpush1.bf16.msra.mxu0 %v1278
  %1969 = vmatprep.subr.bf16.mxu0 %v1283
  %1970 = vmatpush1.bf16.msra.mxu0 %v1282
  %1971 = vmatprep.subr.bf16.mxu0 %v1287
  %1972 = vmatpush1.bf16.msra.mxu0 %v1286
  %1973 = vmatprep.subr.bf16.mxu0 %v1291
  %1974 = vmatpush1.bf16.msra.mxu0 %v1290
  %1975 = vmatprep.subr.bf16.mxu0 %v1295
  %1976 = vmatpush1.bf16.msra.mxu0 %v1294
  %1977 = vmatprep.mubr.bf16.mxu0 %v371
  %1978 = vmatmul.mubr.bf16.gmra.mrb[0].mxu0 %v370
  %v1979 = vpop.f32.mrb[0].mxu0
  %v1980 = vadd.f32 %v1927, %v1979
  %v1981 = vpop.f32.mrb[0].mxu0
  %v1982 = vadd.f32 %v1929, %v1981
  %v1983 = vpop.f32.mrb[0].mxu0
  %v1984 = vadd.f32 %v1931, %v1983
  %v1985 = vpop.f32.mrb[0].mxu0
  %v1986 = vadd.f32 %v1933, %v1985
  %1987 = vmatprep.mubr.bf16.mxu0 %v379
  %1988 = vmatmul.mubr.bf16.gmra.mrb[0].mxu0 %v378
  %v1989 = vpop.f32.mrb[0].mxu0
  %v1990 = vadd.f32 %v1937, %v1989
  %v1991 = vpop.f32.mrb[0].mxu0
  %v1992 = vadd.f32 %v1939, %v1991
  %v1993 = vpop.f32.mrb[0].mxu0
  %v1994 = vadd.f32 %v1941, %v1993
  %v1995 = vpop.f32.mrb[0].mxu0
  %v1996 = vadd.f32 %v1943, %v1995
  %1997 = vdwg.mxu0
  %1998 = vmatprep.subr.bf16.mxu0 %v1299
  %1999 = vmatpush1.bf16.msra.mxu0 %v1298
  %2000 = vmatprep.subr.bf16.mxu0 %v1303
  %2001 = vmatpush1.bf16.msra.mxu0 %v1302
  %2002 = vmatprep.subr.bf16.mxu0 %v1307
  %2003 = vmatpush1.bf16.msra.mxu0 %v1306
  %2004 = vmatprep.subr.bf16.mxu0 %v1311
  %2005 = vmatpush1.bf16.msra.mxu0 %v1310
  %2006 = vmatprep.subr.bf16.mxu0 %v1315
  %2007 = vmatpush1.bf16.msra.mxu0 %v1314
  %2008 = vmatprep.subr.bf16.mxu0 %v1319
  %2009 = vmatpush1.bf16.msra.mxu0 %v1318
  %2010 = vmatprep.subr.bf16.mxu0 %v1323
  %2011 = vmatpush1.bf16.msra.mxu0 %v1322
  %2012 = vmatprep.subr.bf16.mxu0 %v1327
  %2013 = vmatpush1.bf16.msra.mxu0 %v1326
  %2014 = vmatprep.subr.bf16.mxu0 %v1331
  %2015 = vmatpush1.bf16.msra.mxu0 %v1330
  %2016 = vmatprep.subr.bf16.mxu0 %v1335
  %2017 = vmatpush1.bf16.msra.mxu0 %v1334
  %2018 = vmatprep.subr.bf16.mxu0 %v1339
  %2019 = vmatpush1.bf16.msra.mxu0 %v1338
  %2020 = vmatprep.subr.bf16.mxu0 %v1343
  %2021 = vmatpush1.bf16.msra.mxu0 %v1342
  %2022 = vmatprep.subr.bf16.mxu0 %v1347
  %2023 = vmatpush1.bf16.msra.mxu0 %v1346
  %2024 = vmatprep.subr.bf16.mxu0 %v1351
  %2025 = vmatpush1.bf16.msra.mxu0 %v1350
  %2026 = vmatprep.subr.bf16.mxu0 %v1355
  %2027 = vmatpush1.bf16.msra.mxu0 %v1354
  %2028 = vmatprep.subr.bf16.mxu0 %v1359
  %2029 = vmatpush1.bf16.msra.mxu0 %v1358
  %2030 = vmatprep.mubr.bf16.mxu0 %v373
  %2031 = vmatmul.mubr.bf16.gmra.mrb[0].mxu0 %v372
  %v2032 = vpop.f32.mrb[0].mxu0
  %v2033 = vadd.f32 %v1980, %v2032
  %v2034 = vpop.f32.mrb[0].mxu0
  %v2035 = vadd.f32 %v1982, %v2034
  %v2036 = vpop.f32.mrb[0].mxu0
  %v2037 = vadd.f32 %v1984, %v2036
  %v2038 = vpop.f32.mrb[0].mxu0
  %v2039 = vadd.f32 %v1986, %v2038
  %2040 = vmatprep.mubr.bf16.mxu0 %v381
  %2041 = vmatmul.mubr.bf16.gmra.mrb[0].mxu0 %v380
  %v2042 = vpop.f32.mrb[0].mxu0
  %v2043 = vadd.f32 %v1990, %v2042
  %v2044 = vpop.f32.mrb[0].mxu0
  %v2045 = vadd.f32 %v1992, %v2044
  %v2046 = vpop.f32.mrb[0].mxu0
  %v2047 = vadd.f32 %v1994, %v2046
  %v2048 = vpop.f32.mrb[0].mxu0
  %v2049 = vadd.f32 %v1996, %v2048
  %2050 = vdwg.mxu0
  %2051 = vmatprep.subr.bf16.mxu0 %v1363
  %2052 = vmatpush1.bf16.msra.mxu0 %v1362
  %2053 = vmatprep.subr.bf16.mxu0 %v1367
  %2054 = vmatpush1.bf16.msra.mxu0 %v1366
  %2055 = vmatprep.subr.bf16.mxu0 %v1371
  %2056 = vmatpush1.bf16.msra.mxu0 %v1370
  %2057 = vmatprep.subr.bf16.mxu0 %v1375
  %2058 = vmatpush1.bf16.msra.mxu0 %v1374
  %2059 = vmatprep.subr.bf16.mxu0 %v1379
  %2060 = vmatpush1.bf16.msra.mxu0 %v1378
  %2061 = vmatprep.subr.bf16.mxu0 %v1383
  %2062 = vmatpush1.bf16.msra.mxu0 %v1382
  %2063 = vmatprep.subr.bf16.mxu0 %v1387
  %2064 = vmatpush1.bf16.msra.mxu0 %v1386
  %2065 = vmatprep.subr.bf16.mxu0 %v1391
  %2066 = vmatpush1.bf16.msra.mxu0 %v1390
  %2067 = vmatprep.subr.bf16.mxu0 %v1395
  %2068 = vmatpush1.bf16.msra.mxu0 %v1394
  %2069 = vmatprep.subr.bf16.mxu0 %v1399
  %2070 = vmatpush1.bf16.msra.mxu0 %v1398
  %2071 = vmatprep.subr.bf16.mxu0 %v1403
  %2072 = vmatpush1.bf16.msra.mxu0 %v1402
  %2073 = vmatprep.subr.bf16.mxu0 %v1407
  %2074 = vmatpush1.bf16.msra.mxu0 %v1406
  %2075 = vmatprep.subr.bf16.mxu0 %v1411
  %2076 = vmatpush1.bf16.msra.mxu0 %v1410
  %2077 = vmatprep.subr.bf16.mxu0 %v1415
  %2078 = vmatpush1.bf16.msra.mxu0 %v1414
  %2079 = vmatprep.subr.bf16.mxu0 %v1419
  %2080 = vmatpush1.bf16.msra.mxu0 %v1418
  %2081 = vmatprep.subr.bf16.mxu0 %v1423
  %2082 = vmatpush1.bf16.msra.mxu0 %v1422
  %2083 = vmatprep.mubr.bf16.mxu0 %v375
  %2084 = vmatmul.mubr.bf16.gmra.mrb[0].mxu0 %v374
  %v2085 = vpop.f32.mrb[0].mxu0
  %v2086 = vadd.f32 %v2033, %v2085
  %v2087 = vpop.f32.mrb[0].mxu0
  %v2088 = vadd.f32 %v2035, %v2087
  %v2089 = vpop.f32.mrb[0].mxu0
  %v2090 = vadd.f32 %v2037, %v2089
  %v2091 = vpop.f32.mrb[0].mxu0
  %v2092 = vadd.f32 %v2039, %v2091
  %2093 = vmatprep.mubr.bf16.mxu0 %v383
  %2094 = vmatmul.mubr.bf16.gmra.mrb[0].mxu0 %v382
  %v2095 = vpop.f32.mrb[0].mxu0
  %v2096 = vadd.f32 %v2043, %v2095
  %v2097 = vpop.f32.mrb[0].mxu0
  %v2098 = vadd.f32 %v2045, %v2097
  %v2099 = vpop.f32.mrb[0].mxu0
  %v2100 = vadd.f32 %v2047, %v2099
  %v2101 = vpop.f32.mrb[0].mxu0
  %v2102 = vadd.f32 %v2049, %v2101
  %2103 = vdwg.mxu0
  %v2104 = vld [vmem:[%s3] sm:$0xff]
  %v2105 = vld [vmem:[%s3 + $0x8] sm:$0xff]
  %v2106 = vld [vmem:[%s3 + $0x10] sm:$0xff]
  %v2107 = vld [vmem:[%s3 + $0x18] sm:$0xff]
  %v2108 = vld [vmem:[%s3 + $0x20] sm:$0xff]
  %v2109 = vld [vmem:[%s3 + $0x28] sm:$0xff]
  %v2110 = vld [vmem:[%s3 + $0x30] sm:$0xff]
  %v2111 = vld [vmem:[%s3 + $0x38] sm:$0xff]
  %v2112 = vld [vmem:[%s3 + $0x40] sm:$0xff]
  %v2113 = vld [vmem:[%s3 + $0x48] sm:$0xff]
  %v2114 = vld [vmem:[%s3 + $0x50] sm:$0xff]
  %v2115 = vld [vmem:[%s3 + $0x58] sm:$0xff]
  %v2116 = vld [vmem:[%s3 + $0x60] sm:$0xff]
  %v2117 = vld [vmem:[%s3 + $0x68] sm:$0xff]
  %v2118 = vld [vmem:[%s3 + $0x70] sm:$0xff]
  %v2119 = vld [vmem:[%s3 + $0x78] sm:$0xff]
  %v2120 = vld [vmem:[%s4] sm:$0xff]
  %v2121 = vld [vmem:[%s4 + $0x8] sm:$0xff]
  %v2122 = vld [vmem:[%s4 + $0x10] sm:$0xff]
  %v2123 = vld [vmem:[%s4 + $0x18] sm:$0xff]
  %v2124 = vld [vmem:[%s4 + $0x20] sm:$0xff]
  %v2125 = vld [vmem:[%s4 + $0x28] sm:$0xff]
  %v2126 = vld [vmem:[%s4 + $0x30] sm:$0xff]
  %v2127 = vld [vmem:[%s4 + $0x38] sm:$0xff]
  %v2128 = vld [vmem:[%s4 + $0x40] sm:$0xff]
  %v2129 = vld [vmem:[%s4 + $0x48] sm:$0xff]
  %v2130 = vld [vmem:[%s4 + $0x50] sm:$0xff]
  %v2131 = vld [vmem:[%s4 + $0x58] sm:$0xff]
  %v2132 = vld [vmem:[%s4 + $0x60] sm:$0xff]
  %v2133 = vld [vmem:[%s4 + $0x68] sm:$0xff]
  %v2134 = vld [vmem:[%s4 + $0x70] sm:$0xff]
  %v2135 = vld [vmem:[%s4 + $0x78] sm:$0xff]
  %v2136 = vld [vmem:[%s4 + $0x80] sm:$0xff]
  %v2137 = vld [vmem:[%s4 + $0x88] sm:$0xff]
  %v2138 = vld [vmem:[%s4 + $0x90] sm:$0xff]
  %v2139 = vld [vmem:[%s4 + $0x98] sm:$0xff]
  %v2140 = vld [vmem:[%s4 + $0xa0] sm:$0xff]
  %v2141 = vld [vmem:[%s4 + $0xa8] sm:$0xff]
  %v2142 = vld [vmem:[%s4 + $0xb0] sm:$0xff]
  %v2143 = vld [vmem:[%s4 + $0xb8] sm:$0xff]
  %v2144 = vld [vmem:[%s4 + $0xc0] sm:$0xff]
  %v2145 = vld [vmem:[%s4 + $0xc8] sm:$0xff]
  %v2146 = vld [vmem:[%s4 + $0xd0] sm:$0xff]
  %v2147 = vld [vmem:[%s4 + $0xd8] sm:$0xff]
  %v2148 = vld [vmem:[%s4 + $0xe0] sm:$0xff]
  %v2149 = vld [vmem:[%s4 + $0xe8] sm:$0xff]
  %v2150 = vld [vmem:[%s4 + $0xf0] sm:$0xff]
  %v2151 = vld [vmem:[%s4 + $0xf8] sm:$0xff]
  %v2152 = vld [vmem:[%s4 + $0x100] sm:$0xff]
  %v2153 = vld [vmem:[%s4 + $0x108] sm:$0xff]
  %v2154 = vld [vmem:[%s4 + $0x110] sm:$0xff]
  %v2155 = vld [vmem:[%s4 + $0x118] sm:$0xff]
  %v2156 = vld [vmem:[%s4 + $0x120] sm:$0xff]
  %v2157 = vld [vmem:[%s4 + $0x128] sm:$0xff]
  %v2158 = vld [vmem:[%s4 + $0x130] sm:$0xff]
  %v2159 = vld [vmem:[%s4 + $0x138] sm:$0xff]
  %v2160 = vld [vmem:[%s4 + $0x140] sm:$0xff]
  %v2161 = vld [vmem:[%s4 + $0x148] sm:$0xff]
  %v2162 = vld [vmem:[%s4 + $0x150] sm:$0xff]
  %v2163 = vld [vmem:[%s4 + $0x158] sm:$0xff]
  %v2164 = vld [vmem:[%s4 + $0x160] sm:$0xff]
  %v2165 = vld [vmem:[%s4 + $0x168] sm:$0xff]
  %v2166 = vld [vmem:[%s4 + $0x170] sm:$0xff]
  %v2167 = vld [vmem:[%s4 + $0x178] sm:$0xff]
  %v2168 = vld [vmem:[%s4 + $0x180] sm:$0xff]
  %v2169 = vld [vmem:[%s4 + $0x188] sm:$0xff]
  %v2170 = vld [vmem:[%s4 + $0x190] sm:$0xff]
  %v2171 = vld [vmem:[%s4 + $0x198] sm:$0xff]
  %v2172 = vld [vmem:[%s4 + $0x1a0] sm:$0xff]
  %v2173 = vld [vmem:[%s4 + $0x1a8] sm:$0xff]
  %v2174 = vld [vmem:[%s4 + $0x1b0] sm:$0xff]
  %v2175 = vld [vmem:[%s4 + $0x1b8] sm:$0xff]
  %v2176 = vld [vmem:[%s4 + $0x1c0] sm:$0xff]
  %v2177 = vld [vmem:[%s4 + $0x1c8] sm:$0xff]
  %v2178 = vld [vmem:[%s4 + $0x1d0] sm:$0xff]
  %v2179 = vld [vmem:[%s4 + $0x1d8] sm:$0xff]
  %v2180 = vld [vmem:[%s4 + $0x1e0] sm:$0xff]
  %v2181 = vld [vmem:[%s4 + $0x1e8] sm:$0xff]
  %v2182 = vld [vmem:[%s4 + $0x1f0] sm:$0xff]
  %v2183 = vld [vmem:[%s4 + $0x1f8] sm:$0xff]
  %v2184 = vld [vmem:[%s4 + $0x200] sm:$0xff]
  %v2185 = vld [vmem:[%s4 + $0x208] sm:$0xff]
  %v2186 = vld [vmem:[%s4 + $0x210] sm:$0xff]
  %v2187 = vld [vmem:[%s4 + $0x218] sm:$0xff]
  %v2188 = vld [vmem:[%s4 + $0x220] sm:$0xff]
  %v2189 = vld [vmem:[%s4 + $0x228] sm:$0xff]
  %v2190 = vld [vmem:[%s4 + $0x230] sm:$0xff]
  %v2191 = vld [vmem:[%s4 + $0x238] sm:$0xff]
  %v2192 = vld [vmem:[%s4 + $0x240] sm:$0xff]
  %v2193 = vld [vmem:[%s4 + $0x248] sm:$0xff]
  %v2194 = vld [vmem:[%s4 + $0x250] sm:$0xff]
  %v2195 = vld [vmem:[%s4 + $0x258] sm:$0xff]
  %v2196 = vld [vmem:[%s4 + $0x260] sm:$0xff]
  %v2197 = vld [vmem:[%s4 + $0x268] sm:$0xff]
  %v2198 = vld [vmem:[%s4 + $0x270] sm:$0xff]
  %v2199 = vld [vmem:[%s4 + $0x278] sm:$0xff]
  %v2200 = vld [vmem:[%s4 + $0x280] sm:$0xff]
  %v2201 = vld [vmem:[%s4 + $0x288] sm:$0xff]
  %v2202 = vld [vmem:[%s4 + $0x290] sm:$0xff]
  %v2203 = vld [vmem:[%s4 + $0x298] sm:$0xff]
  %v2204 = vld [vmem:[%s4 + $0x2a0] sm:$0xff]
  %v2205 = vld [vmem:[%s4 + $0x2a8] sm:$0xff]
  %v2206 = vld [vmem:[%s4 + $0x2b0] sm:$0xff]
  %v2207 = vld [vmem:[%s4 + $0x2b8] sm:$0xff]
  %v2208 = vld [vmem:[%s4 + $0x2c0] sm:$0xff]
  %v2209 = vld [vmem:[%s4 + $0x2c8] sm:$0xff]
  %v2210 = vld [vmem:[%s4 + $0x2d0] sm:$0xff]
  %v2211 = vld [vmem:[%s4 + $0x2d8] sm:$0xff]
  %v2212 = vld [vmem:[%s4 + $0x2e0] sm:$0xff]
  %v2213 = vld [vmem:[%s4 + $0x2e8] sm:$0xff]
  %v2214 = vld [vmem:[%s4 + $0x2f0] sm:$0xff]
  %v2215 = vld [vmem:[%s4 + $0x2f8] sm:$0xff]
  %v2216 = vld [vmem:[%s4 + $0x300] sm:$0xff]
  %v2217 = vld [vmem:[%s4 + $0x308] sm:$0xff]
  %v2218 = vld [vmem:[%s4 + $0x310] sm:$0xff]
  %v2219 = vld [vmem:[%s4 + $0x318] sm:$0xff]
  %v2220 = vld [vmem:[%s4 + $0x320] sm:$0xff]
  %v2221 = vld [vmem:[%s4 + $0x328] sm:$0xff]
  %v2222 = vld [vmem:[%s4 + $0x330] sm:$0xff]
  %v2223 = vld [vmem:[%s4 + $0x338] sm:$0xff]
  %v2224 = vld [vmem:[%s4 + $0x340] sm:$0xff]
  %v2225 = vld [vmem:[%s4 + $0x348] sm:$0xff]
  %v2226 = vld [vmem:[%s4 + $0x350] sm:$0xff]
  %v2227 = vld [vmem:[%s4 + $0x358] sm:$0xff]
  %v2228 = vld [vmem:[%s4 + $0x360] sm:$0xff]
  %v2229 = vld [vmem:[%s4 + $0x368] sm:$0xff]
  %v2230 = vld [vmem:[%s4 + $0x370] sm:$0xff]
  %v2231 = vld [vmem:[%s4 + $0x378] sm:$0xff]
  %v2232 = vld [vmem:[%s4 + $0x380] sm:$0xff]
  %v2233 = vld [vmem:[%s4 + $0x388] sm:$0xff]
  %v2234 = vld [vmem:[%s4 + $0x390] sm:$0xff]
  %v2235 = vld [vmem:[%s4 + $0x398] sm:$0xff]
  %v2236 = vld [vmem:[%s4 + $0x3a0] sm:$0xff]
  %v2237 = vld [vmem:[%s4 + $0x3a8] sm:$0xff]
  %v2238 = vld [vmem:[%s4 + $0x3b0] sm:$0xff]
  %v2239 = vld [vmem:[%s4 + $0x3b8] sm:$0xff]
  %v2240 = vld [vmem:[%s4 + $0x3c0] sm:$0xff]
  %v2241 = vld [vmem:[%s4 + $0x3c8] sm:$0xff]
  %v2242 = vld [vmem:[%s4 + $0x3d0] sm:$0xff]
  %v2243 = vld [vmem:[%s4 + $0x3d8] sm:$0xff]
  %v2244 = vld [vmem:[%s4 + $0x3e0] sm:$0xff]
  %v2245 = vld [vmem:[%s4 + $0x3e8] sm:$0xff]
  %v2246 = vld [vmem:[%s4 + $0x3f0] sm:$0xff]
  %v2247 = vld [vmem:[%s4 + $0x3f8] sm:$0xff]
  %v2248 = vld [vmem:[%s4 + $0x400] sm:$0xff]
  %v2249 = vld [vmem:[%s4 + $0x408] sm:$0xff]
  %v2250 = vld [vmem:[%s4 + $0x410] sm:$0xff]
  %v2251 = vld [vmem:[%s4 + $0x418] sm:$0xff]
  %v2252 = vld [vmem:[%s4 + $0x420] sm:$0xff]
  %v2253 = vld [vmem:[%s4 + $0x428] sm:$0xff]
  %v2254 = vld [vmem:[%s4 + $0x430] sm:$0xff]
  %v2255 = vld [vmem:[%s4 + $0x438] sm:$0xff]
  %v2256 = vld [vmem:[%s4 + $0x440] sm:$0xff]
  %v2257 = vld [vmem:[%s4 + $0x448] sm:$0xff]
  %v2258 = vld [vmem:[%s4 + $0x450] sm:$0xff]
  %v2259 = vld [vmem:[%s4 + $0x458] sm:$0xff]
  %v2260 = vld [vmem:[%s4 + $0x460] sm:$0xff]
  %v2261 = vld [vmem:[%s4 + $0x468] sm:$0xff]
  %v2262 = vld [vmem:[%s4 + $0x470] sm:$0xff]
  %v2263 = vld [vmem:[%s4 + $0x478] sm:$0xff]
  %v2264 = vld [vmem:[%s4 + $0x480] sm:$0xff]
  %v2265 = vld [vmem:[%s4 + $0x488] sm:$0xff]
  %v2266 = vld [vmem:[%s4 + $0x490] sm:$0xff]
  %v2267 = vld [vmem:[%s4 + $0x498] sm:$0xff]
  %v2268 = vld [vmem:[%s4 + $0x4a0] sm:$0xff]
  %v2269 = vld [vmem:[%s4 + $0x4a8] sm:$0xff]
  %v2270 = vld [vmem:[%s4 + $0x4b0] sm:$0xff]
  %v2271 = vld [vmem:[%s4 + $0x4b8] sm:$0xff]
  %v2272 = vld [vmem:[%s4 + $0x4c0] sm:$0xff]
  %v2273 = vld [vmem:[%s4 + $0x4c8] sm:$0xff]
  %v2274 = vld [vmem:[%s4 + $0x4d0] sm:$0xff]
  %v2275 = vld [vmem:[%s4 + $0x4d8] sm:$0xff]
  %v2276 = vld [vmem:[%s4 + $0x4e0] sm:$0xff]
  %v2277 = vld [vmem:[%s4 + $0x4e8] sm:$0xff]
  %v2278 = vld [vmem:[%s4 + $0x4f0] sm:$0xff]
  %v2279 = vld [vmem:[%s4 + $0x4f8] sm:$0xff]
  %v2280 = vld [vmem:[%s4 + $0x500] sm:$0xff]
  %v2281 = vld [vmem:[%s4 + $0x508] sm:$0xff]
  %v2282 = vld [vmem:[%s4 + $0x510] sm:$0xff]
  %v2283 = vld [vmem:[%s4 + $0x518] sm:$0xff]
  %v2284 = vld [vmem:[%s4 + $0x520] sm:$0xff]
  %v2285 = vld [vmem:[%s4 + $0x528] sm:$0xff]
  %v2286 = vld [vmem:[%s4 + $0x530] sm:$0xff]
  %v2287 = vld [vmem:[%s4 + $0x538] sm:$0xff]
  %v2288 = vld [vmem:[%s4 + $0x540] sm:$0xff]
  %v2289 = vld [vmem:[%s4 + $0x548] sm:$0xff]
  %v2290 = vld [vmem:[%s4 + $0x550] sm:$0xff]
  %v2291 = vld [vmem:[%s4 + $0x558] sm:$0xff]
  %v2292 = vld [vmem:[%s4 + $0x560] sm:$0xff]
  %v2293 = vld [vmem:[%s4 + $0x568] sm:$0xff]
  %v2294 = vld [vmem:[%s4 + $0x570] sm:$0xff]
  %v2295 = vld [vmem:[%s4 + $0x578] sm:$0xff]
  %v2296 = vld [vmem:[%s4 + $0x580] sm:$0xff]
  %v2297 = vld [vmem:[%s4 + $0x588] sm:$0xff]
  %v2298 = vld [vmem:[%s4 + $0x590] sm:$0xff]
  %v2299 = vld [vmem:[%s4 + $0x598] sm:$0xff]
  %v2300 = vld [vmem:[%s4 + $0x5a0] sm:$0xff]
  %v2301 = vld [vmem:[%s4 + $0x5a8] sm:$0xff]
  %v2302 = vld [vmem:[%s4 + $0x5b0] sm:$0xff]
  %v2303 = vld [vmem:[%s4 + $0x5b8] sm:$0xff]
  %v2304 = vld [vmem:[%s4 + $0x5c0] sm:$0xff]
  %v2305 = vld [vmem:[%s4 + $0x5c8] sm:$0xff]
  %v2306 = vld [vmem:[%s4 + $0x5d0] sm:$0xff]
  %v2307 = vld [vmem:[%s4 + $0x5d8] sm:$0xff]
  %v2308 = vld [vmem:[%s4 + $0x5e0] sm:$0xff]
  %v2309 = vld [vmem:[%s4 + $0x5e8] sm:$0xff]
  %v2310 = vld [vmem:[%s4 + $0x5f0] sm:$0xff]
  %v2311 = vld [vmem:[%s4 + $0x5f8] sm:$0xff]
  %v2312 = vld [vmem:[%s4 + $0x600] sm:$0xff]
  %v2313 = vld [vmem:[%s4 + $0x608] sm:$0xff]
  %v2314 = vld [vmem:[%s4 + $0x610] sm:$0xff]
  %v2315 = vld [vmem:[%s4 + $0x618] sm:$0xff]
  %v2316 = vld [vmem:[%s4 + $0x620] sm:$0xff]
  %v2317 = vld [vmem:[%s4 + $0x628] sm:$0xff]
  %v2318 = vld [vmem:[%s4 + $0x630] sm:$0xff]
  %v2319 = vld [vmem:[%s4 + $0x638] sm:$0xff]
  %v2320 = vld [vmem:[%s4 + $0x640] sm:$0xff]
  %v2321 = vld [vmem:[%s4 + $0x648] sm:$0xff]
  %v2322 = vld [vmem:[%s4 + $0x650] sm:$0xff]
  %v2323 = vld [vmem:[%s4 + $0x658] sm:$0xff]
  %v2324 = vld [vmem:[%s4 + $0x660] sm:$0xff]
  %v2325 = vld [vmem:[%s4 + $0x668] sm:$0xff]
  %v2326 = vld [vmem:[%s4 + $0x670] sm:$0xff]
  %v2327 = vld [vmem:[%s4 + $0x678] sm:$0xff]
  %v2328 = vld [vmem:[%s4 + $0x680] sm:$0xff]
  %v2329 = vld [vmem:[%s4 + $0x688] sm:$0xff]
  %v2330 = vld [vmem:[%s4 + $0x690] sm:$0xff]
  %v2331 = vld [vmem:[%s4 + $0x698] sm:$0xff]
  %v2332 = vld [vmem:[%s4 + $0x6a0] sm:$0xff]
  %v2333 = vld [vmem:[%s4 + $0x6a8] sm:$0xff]
  %v2334 = vld [vmem:[%s4 + $0x6b0] sm:$0xff]
  %v2335 = vld [vmem:[%s4 + $0x6b8] sm:$0xff]
  %v2336 = vld [vmem:[%s4 + $0x6c0] sm:$0xff]
  %v2337 = vld [vmem:[%s4 + $0x6c8] sm:$0xff]
  %v2338 = vld [vmem:[%s4 + $0x6d0] sm:$0xff]
  %v2339 = vld [vmem:[%s4 + $0x6d8] sm:$0xff]
  %v2340 = vld [vmem:[%s4 + $0x6e0] sm:$0xff]
  %v2341 = vld [vmem:[%s4 + $0x6e8] sm:$0xff]
  %v2342 = vld [vmem:[%s4 + $0x6f0] sm:$0xff]
  %v2343 = vld [vmem:[%s4 + $0x6f8] sm:$0xff]
  %v2344 = vld [vmem:[%s4 + $0x700] sm:$0xff]
  %v2345 = vld [vmem:[%s4 + $0x708] sm:$0xff]
  %v2346 = vld [vmem:[%s4 + $0x710] sm:$0xff]
  %v2347 = vld [vmem:[%s4 + $0x718] sm:$0xff]
  %v2348 = vld [vmem:[%s4 + $0x720] sm:$0xff]
  %v2349 = vld [vmem:[%s4 + $0x728] sm:$0xff]
  %v2350 = vld [vmem:[%s4 + $0x730] sm:$0xff]
  %v2351 = vld [vmem:[%s4 + $0x738] sm:$0xff]
  %v2352 = vld [vmem:[%s4 + $0x740] sm:$0xff]
  %v2353 = vld [vmem:[%s4 + $0x748] sm:$0xff]
  %v2354 = vld [vmem:[%s4 + $0x750] sm:$0xff]
  %v2355 = vld [vmem:[%s4 + $0x758] sm:$0xff]
  %v2356 = vld [vmem:[%s4 + $0x760] sm:$0xff]
  %v2357 = vld [vmem:[%s4 + $0x768] sm:$0xff]
  %v2358 = vld [vmem:[%s4 + $0x770] sm:$0xff]
  %v2359 = vld [vmem:[%s4 + $0x778] sm:$0xff]
  %v2360 = vld [vmem:[%s4 + $0x780] sm:$0xff]
  %v2361 = vld [vmem:[%s4 + $0x788] sm:$0xff]
  %v2362 = vld [vmem:[%s4 + $0x790] sm:$0xff]
  %v2363 = vld [vmem:[%s4 + $0x798] sm:$0xff]
  %v2364 = vld [vmem:[%s4 + $0x7a0] sm:$0xff]
  %v2365 = vld [vmem:[%s4 + $0x7a8] sm:$0xff]
  %v2366 = vld [vmem:[%s4 + $0x7b0] sm:$0xff]
  %v2367 = vld [vmem:[%s4 + $0x7b8] sm:$0xff]
  %v2368 = vld [vmem:[%s4 + $0x7c0] sm:$0xff]
  %v2369 = vld [vmem:[%s4 + $0x7c8] sm:$0xff]
  %v2370 = vld [vmem:[%s4 + $0x7d0] sm:$0xff]
  %v2371 = vld [vmem:[%s4 + $0x7d8] sm:$0xff]
  %v2372 = vld [vmem:[%s4 + $0x7e0] sm:$0xff]
  %v2373 = vld [vmem:[%s4 + $0x7e8] sm:$0xff]
  %v2374 = vld [vmem:[%s4 + $0x7f0] sm:$0xff]
  %v2375 = vld [vmem:[%s4 + $0x7f8] sm:$0xff]
  %v2376 = vmul.f32 %v2104, %v1874
  %v2377 = vmul.f32 %v2105, %v1876
  %v2378 = vmul.f32 %v2106, %v2086
  %v2379 = vmul.f32 %v2107, %v2088
  %v2380 = vmul.f32 %v2108, %v1878
  %v2381 = vmul.f32 %v2109, %v1880
  %v2382 = vmul.f32 %v2110, %v2090
  %v2383 = vmul.f32 %v2111, %v2092
  %v2384 = vmul.f32 %v2112, %v1884
  %v2385 = vmul.f32 %v2113, %v1886
  %v2386 = vmul.f32 %v2114, %v2096
  %v2387 = vmul.f32 %v2115, %v2098
  %v2388 = vmul.f32 %v2116, %v1888
  %v2389 = vmul.f32 %v2117, %v1890
  %v2390 = vmul.f32 %v2118, %v2100
  %v2391 = vmul.f32 %v2119, %v2102
  %2392 = vmatprep.subr.mxu0 %v2121
  %2393 = vmatpush1.msra.mxu0 %v2120
  %2394 = vmatprep.subr.mxu0 %v2125
  %2395 = vmatpush1.msra.mxu0 %v2124
  %2396 = vmatprep.subr.mxu0 %v2129
  %2397 = vmatpush1.msra.mxu0 %v2128
  %2398 = vmatprep.subr.mxu0 %v2133
  %2399 = vmatpush1.msra.mxu0 %v2132
  %2400 = vmatprep.subr.mxu0 %v2137
  %2401 = vmatpush1.msra.mxu0 %v2136
  %2402 = vmatprep.subr.mxu0 %v2141
  %2403 = vmatpush1.msra.mxu0 %v2140
  %2404 = vmatprep.subr.mxu0 %v2145
  %2405 = vmatpush1.msra.mxu0 %v2144
  %2406 = vmatprep.subr.mxu0 %v2149
  %2407 = vmatpush1.msra.mxu0 %v2148
  %2408 = vmatprep.subr.mxu0 %v2153
  %2409 = vmatpush1.msra.mxu0 %v2152
  %2410 = vmatprep.subr.mxu0 %v2157
  %2411 = vmatpush1.msra.mxu0 %v2156
  %2412 = vmatprep.subr.mxu0 %v2161
  %2413 = vmatpush1.msra.mxu0 %v2160
  %2414 = vmatprep.subr.mxu0 %v2165
  %2415 = vmatpush1.msra.mxu0 %v2164
  %2416 = vmatprep.subr.mxu0 %v2169
  %2417 = vmatpush1.msra.mxu0 %v2168
  %2418 = vmatprep.subr.mxu0 %v2173
  %2419 = vmatpush1.msra.mxu0 %v2172
  %2420 = vmatprep.subr.mxu0 %v2177
  %2421 = vmatpush1.msra.mxu0 %v2176
  %2422 = vmatprep.subr.mxu0 %v2181
  %2423 = vmatpush1.msra.mxu0 %v2180
  %2424 = vmatprep.subr.mxu0 %v2185
  %2425 = vmatpush1.msra.mxu0 %v2184
  %2426 = vmatprep.subr.mxu0 %v2189
  %2427 = vmatpush1.msra.mxu0 %v2188
  %2428 = vmatprep.subr.mxu0 %v2193
  %2429 = vmatpush1.msra.mxu0 %v2192
  %2430 = vmatprep.subr.mxu0 %v2197
  %2431 = vmatpush1.msra.mxu0 %v2196
  %2432 = vmatprep.subr.mxu0 %v2201
  %2433 = vmatpush1.msra.mxu0 %v2200
  %2434 = vmatprep.subr.mxu0 %v2205
  %2435 = vmatpush1.msra.mxu0 %v2204
  %2436 = vmatprep.subr.mxu0 %v2209
  %2437 = vmatpush1.msra.mxu0 %v2208
  %2438 = vmatprep.subr.mxu0 %v2213
  %2439 = vmatpush1.msra.mxu0 %v2212
  %2440 = vmatprep.subr.mxu0 %v2217
  %2441 = vmatpush1.msra.mxu0 %v2216
  %2442 = vmatprep.subr.mxu0 %v2221
  %2443 = vmatpush1.msra.mxu0 %v2220
  %2444 = vmatprep.subr.mxu0 %v2225
  %2445 = vmatpush1.msra.mxu0 %v2224
  %2446 = vmatprep.subr.mxu0 %v2229
  %2447 = vmatpush1.msra.mxu0 %v2228
  %2448 = vmatprep.subr.mxu0 %v2233
  %2449 = vmatpush1.msra.mxu0 %v2232
  %2450 = vmatprep.subr.mxu0 %v2237
  %2451 = vmatpush1.msra.mxu0 %v2236
  %2452 = vmatprep.subr.mxu0 %v2241
  %2453 = vmatpush1.msra.mxu0 %v2240
  %2454 = vmatprep.subr.mxu0 %v2245
  %2455 = vmatpush1.msra.mxu0 %v2244
  %2456 = vmatprep.mubr.f32.mxu0 %v2377
  %2457 = vmatmul.mubr.f32.gmra.mrb[0].mxu0 %v2376
  %v2458 = vpop.f32.mrb[0].mxu0
  %v2459 = vadd.f32 0.0, %v2458
  %v2460 = vpop.f32.mrb[0].mxu0
  %v2461 = vadd.f32 0.0, %v2460
  %2462 = vmatprep.mubr.f32.mxu0 %v2381
  %2463 = vmatmul.mubr.f32.gmra.mrb[0].mxu0 %v2380
  %v2464 = vpop.f32.mrb[0].mxu0
  %v2465 = vadd.f32 0.0, %v2464
  %v2466 = vpop.f32.mrb[0].mxu0
  %v2467 = vadd.f32 0.0, %v2466
  %2468 = vmatprep.mubr.f32.mxu0 %v2385
  %2469 = vmatmul.mubr.f32.gmra.mrb[0].mxu0 %v2384
  %v2470 = vpop.f32.mrb[0].mxu0
  %v2471 = vadd.f32 0.0, %v2470
  %v2472 = vpop.f32.mrb[0].mxu0
  %v2473 = vadd.f32 0.0, %v2472
  %2474 = vmatprep.mubr.f32.mxu0 %v2389
  %2475 = vmatmul.mubr.f32.gmra.mrb[0].mxu0 %v2388
  %v2476 = vpop.f32.mrb[0].mxu0
  %v2477 = vadd.f32 0.0, %v2476
  %v2478 = vpop.f32.mrb[0].mxu0
  %v2479 = vadd.f32 0.0, %v2478
  %2480 = vdwg.mxu0
  %2481 = vmatprep.subr.mxu0 %v2249
  %2482 = vmatpush1.msra.mxu0 %v2248
  %2483 = vmatprep.subr.mxu0 %v2253
  %2484 = vmatpush1.msra.mxu0 %v2252
  %2485 = vmatprep.subr.mxu0 %v2257
  %2486 = vmatpush1.msra.mxu0 %v2256
  %2487 = vmatprep.subr.mxu0 %v2261
  %2488 = vmatpush1.msra.mxu0 %v2260
  %2489 = vmatprep.subr.mxu0 %v2265
  %2490 = vmatpush1.msra.mxu0 %v2264
  %2491 = vmatprep.subr.mxu0 %v2269
  %2492 = vmatpush1.msra.mxu0 %v2268
  %2493 = vmatprep.subr.mxu0 %v2273
  %2494 = vmatpush1.msra.mxu0 %v2272
  %2495 = vmatprep.subr.mxu0 %v2277
  %2496 = vmatpush1.msra.mxu0 %v2276
  %2497 = vmatprep.subr.mxu0 %v2281
  %2498 = vmatpush1.msra.mxu0 %v2280
  %2499 = vmatprep.subr.mxu0 %v2285
  %2500 = vmatpush1.msra.mxu0 %v2284
  %2501 = vmatprep.subr.mxu0 %v2289
  %2502 = vmatpush1.msra.mxu0 %v2288
  %2503 = vmatprep.subr.mxu0 %v2293
  %2504 = vmatpush1.msra.mxu0 %v2292
  %2505 = vmatprep.subr.mxu0 %v2297
  %2506 = vmatpush1.msra.mxu0 %v2296
  %2507 = vmatprep.subr.mxu0 %v2301
  %2508 = vmatpush1.msra.mxu0 %v2300
  %2509 = vmatprep.subr.mxu0 %v2305
  %2510 = vmatpush1.msra.mxu0 %v2304
  %2511 = vmatprep.subr.mxu0 %v2309
  %2512 = vmatpush1.msra.mxu0 %v2308
  %2513 = vmatprep.subr.mxu0 %v2313
  %2514 = vmatpush1.msra.mxu0 %v2312
  %2515 = vmatprep.subr.mxu0 %v2317
  %2516 = vmatpush1.msra.mxu0 %v2316
  %2517 = vmatprep.subr.mxu0 %v2321
  %2518 = vmatpush1.msra.mxu0 %v2320
  %2519 = vmatprep.subr.mxu0 %v2325
  %2520 = vmatpush1.msra.mxu0 %v2324
  %2521 = vmatprep.subr.mxu0 %v2329
  %2522 = vmatpush1.msra.mxu0 %v2328
  %2523 = vmatprep.subr.mxu0 %v2333
  %2524 = vmatpush1.msra.mxu0 %v2332
  %2525 = vmatprep.subr.mxu0 %v2337
  %2526 = vmatpush1.msra.mxu0 %v2336
  %2527 = vmatprep.subr.mxu0 %v2341
  %2528 = vmatpush1.msra.mxu0 %v2340
  %2529 = vmatprep.subr.mxu0 %v2345
  %2530 = vmatpush1.msra.mxu0 %v2344
  %2531 = vmatprep.subr.mxu0 %v2349
  %2532 = vmatpush1.msra.mxu0 %v2348
  %2533 = vmatprep.subr.mxu0 %v2353
  %2534 = vmatpush1.msra.mxu0 %v2352
  %2535 = vmatprep.subr.mxu0 %v2357
  %2536 = vmatpush1.msra.mxu0 %v2356
  %2537 = vmatprep.subr.mxu0 %v2361
  %2538 = vmatpush1.msra.mxu0 %v2360
  %2539 = vmatprep.subr.mxu0 %v2365
  %2540 = vmatpush1.msra.mxu0 %v2364
  %2541 = vmatprep.subr.mxu0 %v2369
  %2542 = vmatpush1.msra.mxu0 %v2368
  %2543 = vmatprep.subr.mxu0 %v2373
  %2544 = vmatpush1.msra.mxu0 %v2372
  %2545 = vmatprep.mubr.f32.mxu0 %v2379
  %2546 = vmatmul.mubr.f32.gmra.mrb[0].mxu0 %v2378
  %v2547 = vpop.f32.mrb[0].mxu0
  %v2548 = vadd.f32 %v2459, %v2547
  %v2549 = vpop.f32.mrb[0].mxu0
  %v2550 = vadd.f32 %v2461, %v2549
  %2551 = vmatprep.mubr.f32.mxu0 %v2383
  %2552 = vmatmul.mubr.f32.gmra.mrb[0].mxu0 %v2382
  %v2553 = vpop.f32.mrb[0].mxu0
  %v2554 = vadd.f32 %v2465, %v2553
  %v2555 = vpop.f32.mrb[0].mxu0
  %v2556 = vadd.f32 %v2467, %v2555
  %2557 = vmatprep.mubr.f32.mxu0 %v2387
  %2558 = vmatmul.mubr.f32.gmra.mrb[0].mxu0 %v2386
  %v2559 = vpop.f32.mrb[0].mxu0
  %v2560 = vadd.f32 %v2471, %v2559
  %v2561 = vpop.f32.mrb[0].mxu0
  %v2562 = vadd.f32 %v2473, %v2561
  %2563 = vmatprep.mubr.f32.mxu0 %v2391
  %2564 = vmatmul.mubr.f32.gmra.mrb[0].mxu0 %v2390
  %v2565 = vpop.f32.mrb[0].mxu0
  %v2566 = vadd.f32 %v2477, %v2565
  %v2567 = vpop.f32.mrb[0].mxu0
  %v2568 = vadd.f32 %v2479, %v2567
  %2569 = vdwg.mxu0
  %2570 = vmatprep.subr.mxu0 %v2123
  %2571 = vmatpush1.msra.mxu0 %v2122
  %2572 = vmatprep.subr.mxu0 %v2127
  %2573 = vmatpush1.msra.mxu0 %v2126
  %2574 = vmatprep.subr.mxu0 %v2131
  %2575 = vmatpush1.msra.mxu0 %v2130
  %2576 = vmatprep.subr.mxu0 %v2135
  %2577 = vmatpush1.msra.mxu0 %v2134
  %2578 = vmatprep.subr.mxu0 %v2139
  %2579 = vmatpush1.msra.mxu0 %v2138
  %2580 = vmatprep.subr.mxu0 %v2143
  %2581 = vmatpush1.msra.mxu0 %v2142
  %2582 = vmatprep.subr.mxu0 %v2147
  %2583 = vmatpush1.msra.mxu0 %v2146
  %2584 = vmatprep.subr.mxu0 %v2151
  %2585 = vmatpush1.msra.mxu0 %v2150
  %2586 = vmatprep.subr.mxu0 %v2155
  %2587 = vmatpush1.msra.mxu0 %v2154
  %2588 = vmatprep.subr.mxu0 %v2159
  %2589 = vmatpush1.msra.mxu0 %v2158
  %2590 = vmatprep.subr.mxu0 %v2163
  %2591 = vmatpush1.msra.mxu0 %v2162
  %2592 = vmatprep.subr.mxu0 %v2167
  %2593 = vmatpush1.msra.mxu0 %v2166
  %2594 = vmatprep.subr.mxu0 %v2171
  %2595 = vmatpush1.msra.mxu0 %v2170
  %2596 = vmatprep.subr.mxu0 %v2175
  %2597 = vmatpush1.msra.mxu0 %v2174
  %2598 = vmatprep.subr.mxu0 %v2179
  %2599 = vmatpush1.msra.mxu0 %v2178
  %2600 = vmatprep.subr.mxu0 %v2183
  %2601 = vmatpush1.msra.mxu0 %v2182
  %2602 = vmatprep.subr.mxu0 %v2187
  %2603 = vmatpush1.msra.mxu0 %v2186
  %2604 = vmatprep.subr.mxu0 %v2191
  %2605 = vmatpush1.msra.mxu0 %v2190
  %2606 = vmatprep.subr.mxu0 %v2195
  %2607 = vmatpush1.msra.mxu0 %v2194
  %2608 = vmatprep.subr.mxu0 %v2199
  %2609 = vmatpush1.msra.mxu0 %v2198
  %2610 = vmatprep.subr.mxu0 %v2203
  %2611 = vmatpush1.msra.mxu0 %v2202
  %2612 = vmatprep.subr.mxu0 %v2207
  %2613 = vmatpush1.msra.mxu0 %v2206
  %2614 = vmatprep.subr.mxu0 %v2211
  %2615 = vmatpush1.msra.mxu0 %v2210
  %2616 = vmatprep.subr.mxu0 %v2215
  %2617 = vmatpush1.msra.mxu0 %v2214
  %2618 = vmatprep.subr.mxu0 %v2219
  %2619 = vmatpush1.msra.mxu0 %v2218
  %2620 = vmatprep.subr.mxu0 %v2223
  %2621 = vmatpush1.msra.mxu0 %v2222
  %2622 = vmatprep.subr.mxu0 %v2227
  %2623 = vmatpush1.msra.mxu0 %v2226
  %2624 = vmatprep.subr.mxu0 %v2231
  %2625 = vmatpush1.msra.mxu0 %v2230
  %2626 = vmatprep.subr.mxu0 %v2235
  %2627 = vmatpush1.msra.mxu0 %v2234
  %2628 = vmatprep.subr.mxu0 %v2239
  %2629 = vmatpush1.msra.mxu0 %v2238
  %2630 = vmatprep.subr.mxu0 %v2243
  %2631 = vmatpush1.msra.mxu0 %v2242
  %2632 = vmatprep.subr.mxu0 %v2247
  %2633 = vmatpush1.msra.mxu0 %v2246
  %2634 = vmatprep.mubr.f32.mxu0 %v2377
  %2635 = vmatmul.mubr.f32.gmra.mrb[0].mxu0 %v2376
  %v2636 = vpop.f32.mrb[0].mxu0
  %v2637 = vadd.f32 0.0, %v2636
  %v2638 = vpop.f32.mrb[0].mxu0
  %v2639 = vadd.f32 0.0, %v2638
  %2640 = vmatprep.mubr.f32.mxu0 %v2381
  %2641 = vmatmul.mubr.f32.gmra.mrb[0].mxu0 %v2380
  %v2642 = vpop.f32.mrb[0].mxu0
  %v2643 = vadd.f32 0.0, %v2642
  %v2644 = vpop.f32.mrb[0].mxu0
  %v2645 = vadd.f32 0.0, %v2644
  %2646 = vmatprep.mubr.f32.mxu0 %v2385
  %2647 = vmatmul.mubr.f32.gmra.mrb[0].mxu0 %v2384
  %v2648 = vpop.f32.mrb[0].mxu0
  %v2649 = vadd.f32 0.0, %v2648
  %v2650 = vpop.f32.mrb[0].mxu0
  %v2651 = vadd.f32 0.0, %v2650
  %2652 = vmatprep.mubr.f32.mxu0 %v2389
  %2653 = vmatmul.mubr.f32.gmra.mrb[0].mxu0 %v2388
  %v2654 = vpop.f32.mrb[0].mxu0
  %v2655 = vadd.f32 0.0, %v2654
  %v2656 = vpop.f32.mrb[0].mxu0
  %v2657 = vadd.f32 0.0, %v2656
  %2658 = vdwg.mxu0
  %2659 = vmatprep.subr.mxu0 %v2251
  %2660 = vmatpush1.msra.mxu0 %v2250
  %2661 = vmatprep.subr.mxu0 %v2255
  %2662 = vmatpush1.msra.mxu0 %v2254
  %2663 = vmatprep.subr.mxu0 %v2259
  %2664 = vmatpush1.msra.mxu0 %v2258
  %2665 = vmatprep.subr.mxu0 %v2263
  %2666 = vmatpush1.msra.mxu0 %v2262
  %2667 = vmatprep.subr.mxu0 %v2267
  %2668 = vmatpush1.msra.mxu0 %v2266
  %2669 = vmatprep.subr.mxu0 %v2271
  %2670 = vmatpush1.msra.mxu0 %v2270
  %2671 = vmatprep.subr.mxu0 %v2275
  %2672 = vmatpush1.msra.mxu0 %v2274
  %2673 = vmatprep.subr.mxu0 %v2279
  %2674 = vmatpush1.msra.mxu0 %v2278
  %2675 = vmatprep.subr.mxu0 %v2283
  %2676 = vmatpush1.msra.mxu0 %v2282
  %2677 = vmatprep.subr.mxu0 %v2287
  %2678 = vmatpush1.msra.mxu0 %v2286
  %2679 = vmatprep.subr.mxu0 %v2291
  %2680 = vmatpush1.msra.mxu0 %v2290
  %2681 = vmatprep.subr.mxu0 %v2295
  %2682 = vmatpush1.msra.mxu0 %v2294
  %2683 = vmatprep.subr.mxu0 %v2299
  %2684 = vmatpush1.msra.mxu0 %v2298
  %2685 = vmatprep.subr.mxu0 %v2303
  %2686 = vmatpush1.msra.mxu0 %v2302
  %2687 = vmatprep.subr.mxu0 %v2307
  %2688 = vmatpush1.msra.mxu0 %v2306
  %2689 = vmatprep.subr.mxu0 %v2311
  %2690 = vmatpush1.msra.mxu0 %v2310
  %2691 = vmatprep.subr.mxu0 %v2315
  %2692 = vmatpush1.msra.mxu0 %v2314
  %2693 = vmatprep.subr.mxu0 %v2319
  %2694 = vmatpush1.msra.mxu0 %v2318
  %2695 = vmatprep.subr.mxu0 %v2323
  %2696 = vmatpush1.msra.mxu0 %v2322
  %2697 = vmatprep.subr.mxu0 %v2327
  %2698 = vmatpush1.msra.mxu0 %v2326
  %2699 = vmatprep.subr.mxu0 %v2331
  %2700 = vmatpush1.msra.mxu0 %v2330
  %2701 = vmatprep.subr.mxu0 %v2335
  %2702 = vmatpush1.msra.mxu0 %v2334
  %2703 = vmatprep.subr.mxu0 %v2339
  %2704 = vmatpush1.msra.mxu0 %v2338
  %2705 = vmatprep.subr.mxu0 %v2343
  %2706 = vmatpush1.msra.mxu0 %v2342
  %2707 = vmatprep.subr.mxu0 %v2347
  %2708 = vmatpush1.msra.mxu0 %v2346
  %2709 = vmatprep.subr.mxu0 %v2351
  %2710 = vmatpush1.msra.mxu0 %v2350
  %2711 = vmatprep.subr.mxu0 %v2355
  %2712 = vmatpush1.msra.mxu0 %v2354
  %2713 = vmatprep.subr.mxu0 %v2359
  %2714 = vmatpush1.msra.mxu0 %v2358
  %2715 = vmatprep.subr.mxu0 %v2363
  %2716 = vmatpush1.msra.mxu0 %v2362
  %2717 = vmatprep.subr.mxu0 %v2367
  %2718 = vmatpush1.msra.mxu0 %v2366
  %2719 = vmatprep.subr.mxu0 %v2371
  %2720 = vmatpush1.msra.mxu0 %v2370
  %2721 = vmatprep.subr.mxu0 %v2375
  %2722 = vmatpush1.msra.mxu0 %v2374
  %2723 = vmatprep.mubr.f32.mxu0 %v2379
  %2724 = vmatmul.mubr.f32.gmra.mrb[0].mxu0 %v2378
  %v2725 = vpop.f32.mrb[0].mxu0
  %v2726 = vadd.f32 %v2637, %v2725
  %v2727 = vpop.f32.mrb[0].mxu0
  %v2728 = vadd.f32 %v2639, %v2727
  %2729 = vmatprep.mubr.f32.mxu0 %v2383
  %2730 = vmatmul.mubr.f32.gmra.mrb[0].mxu0 %v2382
  %v2731 = vpop.f32.mrb[0].mxu0
  %v2732 = vadd.f32 %v2643, %v2731
  %v2733 = vpop.f32.mrb[0].mxu0
  %v2734 = vadd.f32 %v2645, %v2733
  %2735 = vmatprep.mubr.f32.mxu0 %v2387
  %2736 = vmatmul.mubr.f32.gmra.mrb[0].mxu0 %v2386
  %v2737 = vpop.f32.mrb[0].mxu0
  %v2738 = vadd.f32 %v2649, %v2737
  %v2739 = vpop.f32.mrb[0].mxu0
  %v2740 = vadd.f32 %v2651, %v2739
  %2741 = vmatprep.mubr.f32.mxu0 %v2391
  %2742 = vmatmul.mubr.f32.gmra.mrb[0].mxu0 %v2390
  %v2743 = vpop.f32.mrb[0].mxu0
  %v2744 = vadd.f32 %v2655, %v2743
  %v2745 = vpop.f32.mrb[0].mxu0
  %v2746 = vadd.f32 %v2657, %v2745
  %2747 = vdwg.mxu0
  %v2748 = vadd.f32 %v2548, %v2554
  %v2749 = vadd.f32 %v2748, %v2560
  %v2750 = vadd.f32 %v2749, %v2566
  %v2751 = vrot.slane %v2750, 4
  %v2752 = vadd.f32 %v2750, %v2751
  %v2753 = vrot.slane %v2752, 2
  %v2754 = vadd.f32 %v2752, %v2753
  %v2755 = vrot.slane %v2754, 1
  %v2756 = vadd.f32 %v2754, %v2755
  %v2757 = vadd.f32 %v2550, %v2556
  %v2758 = vadd.f32 %v2757, %v2562
  %v2759 = vadd.f32 %v2758, %v2568
  %v2760 = vrot.slane %v2759, 4
  %v2761 = vadd.f32 %v2759, %v2760
  %v2762 = vrot.slane %v2761, 2
  %v2763 = vadd.f32 %v2761, %v2762
  %v2764 = vrot.slane %v2763, 1
  %v2765 = vadd.f32 %v2763, %v2764
  %v2766 = vadd.f32 %v2726, %v2732
  %v2767 = vadd.f32 %v2766, %v2738
  %v2768 = vadd.f32 %v2767, %v2744
  %v2769 = vrot.slane %v2768, 4
  %v2770 = vadd.f32 %v2768, %v2769
  %v2771 = vrot.slane %v2770, 2
  %v2772 = vadd.f32 %v2770, %v2771
  %v2773 = vrot.slane %v2772, 1
  %v2774 = vadd.f32 %v2772, %v2773
  %v2775 = vadd.f32 %v2728, %v2734
  %v2776 = vadd.f32 %v2775, %v2740
  %v2777 = vadd.f32 %v2776, %v2746
  %v2778 = vrot.slane %v2777, 4
  %v2779 = vadd.f32 %v2777, %v2778
  %v2780 = vrot.slane %v2779, 2
  %v2781 = vadd.f32 %v2779, %v2780
  %v2782 = vrot.slane %v2781, 1
  %v2783 = vadd.f32 %v2781, %v2782
  %v2784 = vmul.f32 %v2756, 0.03125
  %v2785 = vmul.f32 %v2765, 0.03125
  %v2786 = vmul.f32 %v2774, 0.03125
  %v2787 = vmul.f32 %v2783, 0.03125
  %v2788 = vsub.f32 %v1874, %v2784
  %v2789 = vsub.f32 %v1876, %v2785
  %v2790 = vsub.f32 %v2086, %v2786
  %v2791 = vsub.f32 %v2088, %v2787
  %v2792 = vsub.f32 %v1878, %v2784
  %v2793 = vsub.f32 %v1880, %v2785
  %v2794 = vsub.f32 %v2090, %v2786
  %v2795 = vsub.f32 %v2092, %v2787
  %v2796 = vsub.f32 %v1884, %v2784
  %v2797 = vsub.f32 %v1886, %v2785
  %v2798 = vsub.f32 %v2096, %v2786
  %v2799 = vsub.f32 %v2098, %v2787
  %v2800 = vsub.f32 %v1888, %v2784
  %v2801 = vsub.f32 %v1890, %v2785
  %v2802 = vsub.f32 %v2100, %v2786
  %v2803 = vsub.f32 %v2102, %v2787
  %v2804 = vmul.f32 %v2104, %v2788
  %v2805 = vmul.f32 %v2105, %v2789
  %v2806 = vmul.f32 %v2106, %v2790
  %v2807 = vmul.f32 %v2107, %v2791
  %v2808 = vmul.f32 %v2108, %v2792
  %v2809 = vmul.f32 %v2109, %v2793
  %v2810 = vmul.f32 %v2110, %v2794
  %v2811 = vmul.f32 %v2111, %v2795
  %v2812 = vmul.f32 %v2112, %v2796
  %v2813 = vmul.f32 %v2113, %v2797
  %v2814 = vmul.f32 %v2114, %v2798
  %v2815 = vmul.f32 %v2115, %v2799
  %v2816 = vmul.f32 %v2116, %v2800
  %v2817 = vmul.f32 %v2117, %v2801
  %v2818 = vmul.f32 %v2118, %v2802
  %v2819 = vmul.f32 %v2119, %v2803
  %v2820 = vmul.f32 %v2804, %v2788
  %v2821 = vmul.f32 %v2805, %v2789
  %v2822 = vmul.f32 %v2806, %v2790
  %v2823 = vmul.f32 %v2807, %v2791
  %v2824 = vmul.f32 %v2808, %v2792
  %v2825 = vmul.f32 %v2809, %v2793
  %v2826 = vmul.f32 %v2810, %v2794
  %v2827 = vmul.f32 %v2811, %v2795
  %v2828 = vmul.f32 %v2812, %v2796
  %v2829 = vmul.f32 %v2813, %v2797
  %v2830 = vmul.f32 %v2814, %v2798
  %v2831 = vmul.f32 %v2815, %v2799
  %v2832 = vmul.f32 %v2816, %v2800
  %v2833 = vmul.f32 %v2817, %v2801
  %v2834 = vmul.f32 %v2818, %v2802
  %v2835 = vmul.f32 %v2819, %v2803
  %2836 = vmatprep.subr.mxu0 %v2121
  %2837 = vmatpush1.msra.mxu0 %v2120
  %2838 = vmatprep.subr.mxu0 %v2125
  %2839 = vmatpush1.msra.mxu0 %v2124
  %2840 = vmatprep.subr.mxu0 %v2129
  %2841 = vmatpush1.msra.mxu0 %v2128
  %2842 = vmatprep.subr.mxu0 %v2133
  %2843 = vmatpush1.msra.mxu0 %v2132
  %2844 = vmatprep.subr.mxu0 %v2137
  %2845 = vmatpush1.msra.mxu0 %v2136
  %2846 = vmatprep.subr.mxu0 %v2141
  %2847 = vmatpush1.msra.mxu0 %v2140
  %2848 = vmatprep.subr.mxu0 %v2145
  %2849 = vmatpush1.msra.mxu0 %v2144
  %2850 = vmatprep.subr.mxu0 %v2149
  %2851 = vmatpush1.msra.mxu0 %v2148
  %2852 = vmatprep.subr.mxu0 %v2153
  %2853 = vmatpush1.msra.mxu0 %v2152
  %2854 = vmatprep.subr.mxu0 %v2157
  %2855 = vmatpush1.msra.mxu0 %v2156
  %2856 = vmatprep.subr.mxu0 %v2161
  %2857 = vmatpush1.msra.mxu0 %v2160
  %2858 = vmatprep.subr.mxu0 %v2165
  %2859 = vmatpush1.msra.mxu0 %v2164
  %2860 = vmatprep.subr.mxu0 %v2169
  %2861 = vmatpush1.msra.mxu0 %v2168
  %2862 = vmatprep.subr.mxu0 %v2173
  %2863 = vmatpush1.msra.mxu0 %v2172
  %2864 = vmatprep.subr.mxu0 %v2177
  %2865 = vmatpush1.msra.mxu0 %v2176
  %2866 = vmatprep.subr.mxu0 %v2181
  %2867 = vmatpush1.msra.mxu0 %v2180
  %2868 = vmatprep.subr.mxu0 %v2185
  %2869 = vmatpush1.msra.mxu0 %v2184
  %2870 = vmatprep.subr.mxu0 %v2189
  %2871 = vmatpush1.msra.mxu0 %v2188
  %2872 = vmatprep.subr.mxu0 %v2193
  %2873 = vmatpush1.msra.mxu0 %v2192
  %2874 = vmatprep.subr.mxu0 %v2197
  %2875 = vmatpush1.msra.mxu0 %v2196
  %2876 = vmatprep.subr.mxu0 %v2201
  %2877 = vmatpush1.msra.mxu0 %v2200
  %2878 = vmatprep.subr.mxu0 %v2205
  %2879 = vmatpush1.msra.mxu0 %v2204
  %2880 = vmatprep.subr.mxu0 %v2209
  %2881 = vmatpush1.msra.mxu0 %v2208
  %2882 = vmatprep.subr.mxu0 %v2213
  %2883 = vmatpush1.msra.mxu0 %v2212
  %2884 = vmatprep.subr.mxu0 %v2217
  %2885 = vmatpush1.msra.mxu0 %v2216
  %2886 = vmatprep.subr.mxu0 %v2221
  %2887 = vmatpush1.msra.mxu0 %v2220
  %2888 = vmatprep.subr.mxu0 %v2225
  %2889 = vmatpush1.msra.mxu0 %v2224
  %2890 = vmatprep.subr.mxu0 %v2229
  %2891 = vmatpush1.msra.mxu0 %v2228
  %2892 = vmatprep.subr.mxu0 %v2233
  %2893 = vmatpush1.msra.mxu0 %v2232
  %2894 = vmatprep.subr.mxu0 %v2237
  %2895 = vmatpush1.msra.mxu0 %v2236
  %2896 = vmatprep.subr.mxu0 %v2241
  %2897 = vmatpush1.msra.mxu0 %v2240
  %2898 = vmatprep.subr.mxu0 %v2245
  %2899 = vmatpush1.msra.mxu0 %v2244
  %2900 = vmatprep.mubr.f32.mxu0 %v2821
  %2901 = vmatmul.mubr.f32.gmra.mrb[0].mxu0 %v2820
  %v2902 = vpop.f32.mrb[0].mxu0
  %v2903 = vadd.f32 0.0, %v2902
  %v2904 = vpop.f32.mrb[0].mxu0
  %v2905 = vadd.f32 0.0, %v2904
  %2906 = vmatprep.mubr.f32.mxu0 %v2825
  %2907 = vmatmul.mubr.f32.gmra.mrb[0].mxu0 %v2824
  %v2908 = vpop.f32.mrb[0].mxu0
  %v2909 = vadd.f32 0.0, %v2908
  %v2910 = vpop.f32.mrb[0].mxu0
  %v2911 = vadd.f32 0.0, %v2910
  %2912 = vmatprep.mubr.f32.mxu0 %v2829
  %2913 = vmatmul.mubr.f32.gmra.mrb[0].mxu0 %v2828
  %v2914 = vpop.f32.mrb[0].mxu0
  %v2915 = vadd.f32 0.0, %v2914
  %v2916 = vpop.f32.mrb[0].mxu0
  %v2917 = vadd.f32 0.0, %v2916
  %2918 = vmatprep.mubr.f32.mxu0 %v2833
  %2919 = vmatmul.mubr.f32.gmra.mrb[0].mxu0 %v2832
  %v2920 = vpop.f32.mrb[0].mxu0
  %v2921 = vadd.f32 0.0, %v2920
  %v2922 = vpop.f32.mrb[0].mxu0
  %v2923 = vadd.f32 0.0, %v2922
  %2924 = vdwg.mxu0
  %2925 = vmatprep.subr.mxu0 %v2249
  %2926 = vmatpush1.msra.mxu0 %v2248
  %2927 = vmatprep.subr.mxu0 %v2253
  %2928 = vmatpush1.msra.mxu0 %v2252
  %2929 = vmatprep.subr.mxu0 %v2257
  %2930 = vmatpush1.msra.mxu0 %v2256
  %2931 = vmatprep.subr.mxu0 %v2261
  %2932 = vmatpush1.msra.mxu0 %v2260
  %2933 = vmatprep.subr.mxu0 %v2265
  %2934 = vmatpush1.msra.mxu0 %v2264
  %2935 = vmatprep.subr.mxu0 %v2269
  %2936 = vmatpush1.msra.mxu0 %v2268
  %2937 = vmatprep.subr.mxu0 %v2273
  %2938 = vmatpush1.msra.mxu0 %v2272
  %2939 = vmatprep.subr.mxu0 %v2277
  %2940 = vmatpush1.msra.mxu0 %v2276
  %2941 = vmatprep.subr.mxu0 %v2281
  %2942 = vmatpush1.msra.mxu0 %v2280
  %2943 = vmatprep.subr.mxu0 %v2285
  %2944 = vmatpush1.msra.mxu0 %v2284
  %2945 = vmatprep.subr.mxu0 %v2289
  %2946 = vmatpush1.msra.mxu0 %v2288
  %2947 = vmatprep.subr.mxu0 %v2293
  %2948 = vmatpush1.msra.mxu0 %v2292
  %2949 = vmatprep.subr.mxu0 %v2297
  %2950 = vmatpush1.msra.mxu0 %v2296
  %2951 = vmatprep.subr.mxu0 %v2301
  %2952 = vmatpush1.msra.mxu0 %v2300
  %2953 = vmatprep.subr.mxu0 %v2305
  %2954 = vmatpush1.msra.mxu0 %v2304
  %2955 = vmatprep.subr.mxu0 %v2309
  %2956 = vmatpush1.msra.mxu0 %v2308
  %2957 = vmatprep.subr.mxu0 %v2313
  %2958 = vmatpush1.msra.mxu0 %v2312
  %2959 = vmatprep.subr.mxu0 %v2317
  %2960 = vmatpush1.msra.mxu0 %v2316
  %2961 = vmatprep.subr.mxu0 %v2321
  %2962 = vmatpush1.msra.mxu0 %v2320
  %2963 = vmatprep.subr.mxu0 %v2325
  %2964 = vmatpush1.msra.mxu0 %v2324
  %2965 = vmatprep.subr.mxu0 %v2329
  %2966 = vmatpush1.msra.mxu0 %v2328
  %2967 = vmatprep.subr.mxu0 %v2333
  %2968 = vmatpush1.msra.mxu0 %v2332
  %2969 = vmatprep.subr.mxu0 %v2337
  %2970 = vmatpush1.msra.mxu0 %v2336
  %2971 = vmatprep.subr.mxu0 %v2341
  %2972 = vmatpush1.msra.mxu0 %v2340
  %2973 = vmatprep.subr.mxu0 %v2345
  %2974 = vmatpush1.msra.mxu0 %v2344
  %2975 = vmatprep.subr.mxu0 %v2349
  %2976 = vmatpush1.msra.mxu0 %v2348
  %2977 = vmatprep.subr.mxu0 %v2353
  %2978 = vmatpush1.msra.mxu0 %v2352
  %2979 = vmatprep.subr.mxu0 %v2357
  %2980 = vmatpush1.msra.mxu0 %v2356
  %2981 = vmatprep.subr.mxu0 %v2361
  %2982 = vmatpush1.msra.mxu0 %v2360
  %2983 = vmatprep.subr.mxu0 %v2365
  %2984 = vmatpush1.msra.mxu0 %v2364
  %2985 = vmatprep.subr.mxu0 %v2369
  %2986 = vmatpush1.msra.mxu0 %v2368
  %2987 = vmatprep.subr.mxu0 %v2373
  %2988 = vmatpush1.msra.mxu0 %v2372
  %2989 = vmatprep.mubr.f32.mxu0 %v2823
  %2990 = vmatmul.mubr.f32.gmra.mrb[0].mxu0 %v2822
  %v2991 = vpop.f32.mrb[0].mxu0
  %v2992 = vadd.f32 %v2903, %v2991
  %v2993 = vpop.f32.mrb[0].mxu0
  %v2994 = vadd.f32 %v2905, %v2993
  %2995 = vmatprep.mubr.f32.mxu0 %v2827
  %2996 = vmatmul.mubr.f32.gmra.mrb[0].mxu0 %v2826
  %v2997 = vpop.f32.mrb[0].mxu0
  %v2998 = vadd.f32 %v2909, %v2997
  %v2999 = vpop.f32.mrb[0].mxu0
  %v3000 = vadd.f32 %v2911, %v2999
  %3001 = vmatprep.mubr.f32.mxu0 %v2831
  %3002 = vmatmul.mubr.f32.gmra.mrb[0].mxu0 %v2830
  %v3003 = vpop.f32.mrb[0].mxu0
  %v3004 = vadd.f32 %v2915, %v3003
  %v3005 = vpop.f32.mrb[0].mxu0
  %v3006 = vadd.f32 %v2917, %v3005
  %3007 = vmatprep.mubr.f32.mxu0 %v2835
  %3008 = vmatmul.mubr.f32.gmra.mrb[0].mxu0 %v2834
  %v3009 = vpop.f32.mrb[0].mxu0
  %v3010 = vadd.f32 %v2921, %v3009
  %v3011 = vpop.f32.mrb[0].mxu0
  %v3012 = vadd.f32 %v2923, %v3011
  %3013 = vdwg.mxu0
  %3014 = vmatprep.subr.mxu0 %v2123
  %3015 = vmatpush1.msra.mxu0 %v2122
  %3016 = vmatprep.subr.mxu0 %v2127
  %3017 = vmatpush1.msra.mxu0 %v2126
  %3018 = vmatprep.subr.mxu0 %v2131
  %3019 = vmatpush1.msra.mxu0 %v2130
  %3020 = vmatprep.subr.mxu0 %v2135
  %3021 = vmatpush1.msra.mxu0 %v2134
  %3022 = vmatprep.subr.mxu0 %v2139
  %3023 = vmatpush1.msra.mxu0 %v2138
  %3024 = vmatprep.subr.mxu0 %v2143
  %3025 = vmatpush1.msra.mxu0 %v2142
  %3026 = vmatprep.subr.mxu0 %v2147
  %3027 = vmatpush1.msra.mxu0 %v2146
  %3028 = vmatprep.subr.mxu0 %v2151
  %3029 = vmatpush1.msra.mxu0 %v2150
  %3030 = vmatprep.subr.mxu0 %v2155
  %3031 = vmatpush1.msra.mxu0 %v2154
  %3032 = vmatprep.subr.mxu0 %v2159
  %3033 = vmatpush1.msra.mxu0 %v2158
  %3034 = vmatprep.subr.mxu0 %v2163
  %3035 = vmatpush1.msra.mxu0 %v2162
  %3036 = vmatprep.subr.mxu0 %v2167
  %3037 = vmatpush1.msra.mxu0 %v2166
  %3038 = vmatprep.subr.mxu0 %v2171
  %3039 = vmatpush1.msra.mxu0 %v2170
  %3040 = vmatprep.subr.mxu0 %v2175
  %3041 = vmatpush1.msra.mxu0 %v2174
  %3042 = vmatprep.subr.mxu0 %v2179
  %3043 = vmatpush1.msra.mxu0 %v2178
  %3044 = vmatprep.subr.mxu0 %v2183
  %3045 = vmatpush1.msra.mxu0 %v2182
  %3046 = vmatprep.subr.mxu0 %v2187
  %3047 = vmatpush1.msra.mxu0 %v2186
  %3048 = vmatprep.subr.mxu0 %v2191
  %3049 = vmatpush1.msra.mxu0 %v2190
  %3050 = vmatprep.subr.mxu0 %v2195
  %3051 = vmatpush1.msra.mxu0 %v2194
  %3052 = vmatprep.subr.mxu0 %v2199
  %3053 = vmatpush1.msra.mxu0 %v2198
  %3054 = vmatprep.subr.mxu0 %v2203
  %3055 = vmatpush1.msra.mxu0 %v2202
  %3056 = vmatprep.subr.mxu0 %v2207
  %3057 = vmatpush1.msra.mxu0 %v2206
  %3058 = vmatprep.subr.mxu0 %v2211
  %3059 = vmatpush1.msra.mxu0 %v2210
  %3060 = vmatprep.subr.mxu0 %v2215
  %3061 = vmatpush1.msra.mxu0 %v2214
  %3062 = vmatprep.subr.mxu0 %v2219
  %3063 = vmatpush1.msra.mxu0 %v2218
  %3064 = vmatprep.subr.mxu0 %v2223
  %3065 = vmatpush1.msra.mxu0 %v2222
  %3066 = vmatprep.subr.mxu0 %v2227
  %3067 = vmatpush1.msra.mxu0 %v2226
  %3068 = vmatprep.subr.mxu0 %v2231
  %3069 = vmatpush1.msra.mxu0 %v2230
  %3070 = vmatprep.subr.mxu0 %v2235
  %3071 = vmatpush1.msra.mxu0 %v2234
  %3072 = vmatprep.subr.mxu0 %v2239
  %3073 = vmatpush1.msra.mxu0 %v2238
  %3074 = vmatprep.subr.mxu0 %v2243
  %3075 = vmatpush1.msra.mxu0 %v2242
  %3076 = vmatprep.subr.mxu0 %v2247
  %3077 = vmatpush1.msra.mxu0 %v2246
  %3078 = vmatprep.mubr.f32.mxu0 %v2821
  %3079 = vmatmul.mubr.f32.gmra.mrb[0].mxu0 %v2820
  %v3080 = vpop.f32.mrb[0].mxu0
  %v3081 = vadd.f32 0.0, %v3080
  %v3082 = vpop.f32.mrb[0].mxu0
  %v3083 = vadd.f32 0.0, %v3082
  %3084 = vmatprep.mubr.f32.mxu0 %v2825
  %3085 = vmatmul.mubr.f32.gmra.mrb[0].mxu0 %v2824
  %v3086 = vpop.f32.mrb[0].mxu0
  %v3087 = vadd.f32 0.0, %v3086
  %v3088 = vpop.f32.mrb[0].mxu0
  %v3089 = vadd.f32 0.0, %v3088
  %3090 = vmatprep.mubr.f32.mxu0 %v2829
  %3091 = vmatmul.mubr.f32.gmra.mrb[0].mxu0 %v2828
  %v3092 = vpop.f32.mrb[0].mxu0
  %v3093 = vadd.f32 0.0, %v3092
  %v3094 = vpop.f32.mrb[0].mxu0
  %v3095 = vadd.f32 0.0, %v3094
  %3096 = vmatprep.mubr.f32.mxu0 %v2833
  %3097 = vmatmul.mubr.f32.gmra.mrb[0].mxu0 %v2832
  %v3098 = vpop.f32.mrb[0].mxu0
  %v3099 = vadd.f32 0.0, %v3098
  %v3100 = vpop.f32.mrb[0].mxu0
  %v3101 = vadd.f32 0.0, %v3100
  %3102 = vdwg.mxu0
  %3103 = vmatprep.subr.mxu0 %v2251
  %3104 = vmatpush1.msra.mxu0 %v2250
  %3105 = vmatprep.subr.mxu0 %v2255
  %3106 = vmatpush1.msra.mxu0 %v2254
  %3107 = vmatprep.subr.mxu0 %v2259
  %3108 = vmatpush1.msra.mxu0 %v2258
  %3109 = vmatprep.subr.mxu0 %v2263
  %3110 = vmatpush1.msra.mxu0 %v2262
  %3111 = vmatprep.subr.mxu0 %v2267
  %3112 = vmatpush1.msra.mxu0 %v2266
  %3113 = vmatprep.subr.mxu0 %v2271
  %3114 = vmatpush1.msra.mxu0 %v2270
  %3115 = vmatprep.subr.mxu0 %v2275
  %3116 = vmatpush1.msra.mxu0 %v2274
  %3117 = vmatprep.subr.mxu0 %v2279
  %3118 = vmatpush1.msra.mxu0 %v2278
  %3119 = vmatprep.subr.mxu0 %v2283
  %3120 = vmatpush1.msra.mxu0 %v2282
  %3121 = vmatprep.subr.mxu0 %v2287
  %3122 = vmatpush1.msra.mxu0 %v2286
  %3123 = vmatprep.subr.mxu0 %v2291
  %3124 = vmatpush1.msra.mxu0 %v2290
  %3125 = vmatprep.subr.mxu0 %v2295
  %3126 = vmatpush1.msra.mxu0 %v2294
  %3127 = vmatprep.subr.mxu0 %v2299
  %3128 = vmatpush1.msra.mxu0 %v2298
  %3129 = vmatprep.subr.mxu0 %v2303
  %3130 = vmatpush1.msra.mxu0 %v2302
  %3131 = vmatprep.subr.mxu0 %v2307
  %3132 = vmatpush1.msra.mxu0 %v2306
  %3133 = vmatprep.subr.mxu0 %v2311
  %3134 = vmatpush1.msra.mxu0 %v2310
  %3135 = vmatprep.subr.mxu0 %v2315
  %3136 = vmatpush1.msra.mxu0 %v2314
  %3137 = vmatprep.subr.mxu0 %v2319
  %3138 = vmatpush1.msra.mxu0 %v2318
  %3139 = vmatprep.subr.mxu0 %v2323
  %3140 = vmatpush1.msra.mxu0 %v2322
  %3141 = vmatprep.subr.mxu0 %v2327
  %3142 = vmatpush1.msra.mxu0 %v2326
  %3143 = vmatprep.subr.mxu0 %v2331
  %3144 = vmatpush1.msra.mxu0 %v2330
  %3145 = vmatprep.subr.mxu0 %v2335
  %3146 = vmatpush1.msra.mxu0 %v2334
  %3147 = vmatprep.subr.mxu0 %v2339
  %3148 = vmatpush1.msra.mxu0 %v2338
  %3149 = vmatprep.subr.mxu0 %v2343
  %3150 = vmatpush1.msra.mxu0 %v2342
  %3151 = vmatprep.subr.mxu0 %v2347
  %3152 = vmatpush1.msra.mxu0 %v2346
  %3153 = vmatprep.subr.mxu0 %v2351
  %3154 = vmatpush1.msra.mxu0 %v2350
  %3155 = vmatprep.subr.mxu0 %v2355
  %3156 = vmatpush1.msra.mxu0 %v2354
  %3157 = vmatprep.subr.mxu0 %v2359
  %3158 = vmatpush1.msra.mxu0 %v2358
  %3159 = vmatprep.subr.mxu0 %v2363
  %3160 = vmatpush1.msra.mxu0 %v2362
  %3161 = vmatprep.subr.mxu0 %v2367
  %3162 = vmatpush1.msra.mxu0 %v2366
  %3163 = vmatprep.subr.mxu0 %v2371
  %3164 = vmatpush1.msra.mxu0 %v2370
  %3165 = vmatprep.subr.mxu0 %v2375
  %3166 = vmatpush1.msra.mxu0 %v2374
  %3167 = vmatprep.mubr.f32.mxu0 %v2823
  %3168 = vmatmul.mubr.f32.gmra.mrb[0].mxu0 %v2822
  %v3169 = vpop.f32.mrb[0].mxu0
  %v3170 = vadd.f32 %v3081, %v3169
  %v3171 = vpop.f32.mrb[0].mxu0
  %v3172 = vadd.f32 %v3083, %v3171
  %3173 = vmatprep.mubr.f32.mxu0 %v2827
  %3174 = vmatmul.mubr.f32.gmra.mrb[0].mxu0 %v2826
  %v3175 = vpop.f32.mrb[0].mxu0
  %v3176 = vadd.f32 %v3087, %v3175
  %v3177 = vpop.f32.mrb[0].mxu0
  %v3178 = vadd.f32 %v3089, %v3177
  %3179 = vmatprep.mubr.f32.mxu0 %v2831
  %3180 = vmatmul.mubr.f32.gmra.mrb[0].mxu0 %v2830
  %v3181 = vpop.f32.mrb[0].mxu0
  %v3182 = vadd.f32 %v3093, %v3181
  %v3183 = vpop.f32.mrb[0].mxu0
  %v3184 = vadd.f32 %v3095, %v3183
  %3185 = vmatprep.mubr.f32.mxu0 %v2835
  %3186 = vmatmul.mubr.f32.gmra.mrb[0].mxu0 %v2834
  %v3187 = vpop.f32.mrb[0].mxu0
  %v3188 = vadd.f32 %v3099, %v3187
  %v3189 = vpop.f32.mrb[0].mxu0
  %v3190 = vadd.f32 %v3101, %v3189
  %3191 = vdwg.mxu0
  %v3192 = vadd.f32 %v2992, %v2998
  %v3193 = vadd.f32 %v3192, %v3004
  %v3194 = vadd.f32 %v3193, %v3010
  %v3195 = vrot.slane %v3194, 4
  %v3196 = vadd.f32 %v3194, %v3195
  %v3197 = vrot.slane %v3196, 2
  %v3198 = vadd.f32 %v3196, %v3197
  %v3199 = vrot.slane %v3198, 1
  %v3200 = vadd.f32 %v3198, %v3199
  %v3201 = vadd.f32 %v2994, %v3000
  %v3202 = vadd.f32 %v3201, %v3006
  %v3203 = vadd.f32 %v3202, %v3012
  %v3204 = vrot.slane %v3203, 4
  %v3205 = vadd.f32 %v3203, %v3204
  %v3206 = vrot.slane %v3205, 2
  %v3207 = vadd.f32 %v3205, %v3206
  %v3208 = vrot.slane %v3207, 1
  %v3209 = vadd.f32 %v3207, %v3208
  %v3210 = vadd.f32 %v3170, %v3176
  %v3211 = vadd.f32 %v3210, %v3182
  %v3212 = vadd.f32 %v3211, %v3188
  %v3213 = vrot.slane %v3212, 4
  %v3214 = vadd.f32 %v3212, %v3213
  %v3215 = vrot.slane %v3214, 2
  %v3216 = vadd.f32 %v3214, %v3215
  %v3217 = vrot.slane %v3216, 1
  %v3218 = vadd.f32 %v3216, %v3217
  %v3219 = vadd.f32 %v3172, %v3178
  %v3220 = vadd.f32 %v3219, %v3184
  %v3221 = vadd.f32 %v3220, %v3190
  %v3222 = vrot.slane %v3221, 4
  %v3223 = vadd.f32 %v3221, %v3222
  %v3224 = vrot.slane %v3223, 2
  %v3225 = vadd.f32 %v3223, %v3224
  %v3226 = vrot.slane %v3225, 1
  %v3227 = vadd.f32 %v3225, %v3226
  %v3228 = vmul.f32 %v3200, 0.03125
  %v3229 = vmul.f32 %v3209, 0.03125
  %v3230 = vmul.f32 %v3218, 0.03125
  %v3231 = vmul.f32 %v3227, 0.03125
  %v3232 = vadd.f32 %v3228, 1e-05
  %v3233 = vadd.f32 %v3229, 1e-05
  %v3234 = vadd.f32 %v3230, 1e-05
  %v3235 = vadd.f32 %v3231, 1e-05
  %v3236 = vrsqrt.pop %v3232
  %v3237 = vrsqrt.pop %v3233
  %v3238 = vrsqrt.pop %v3234
  %v3239 = vrsqrt.pop %v3235
  %v3240 = vmul.f32 %v2788, %v3236
  %v3241 = vmul.f32 %v2789, %v3237
  %v3242 = vmul.f32 %v2790, %v3238
  %v3243 = vmul.f32 %v2791, %v3239
  %v3244 = vmul.f32 %v2792, %v3236
  %v3245 = vmul.f32 %v2793, %v3237
  %v3246 = vmul.f32 %v2794, %v3238
  %v3247 = vmul.f32 %v2795, %v3239
  %v3248 = vmul.f32 %v2796, %v3236
  %v3249 = vmul.f32 %v2797, %v3237
  %v3250 = vmul.f32 %v2798, %v3238
  %v3251 = vmul.f32 %v2799, %v3239
  %v3252 = vmul.f32 %v2800, %v3236
  %v3253 = vmul.f32 %v2801, %v3237
  %v3254 = vmul.f32 %v2802, %v3238
  %v3255 = vmul.f32 %v2803, %v3239
  %v3256 = vld [vmem:[%s5] sm:$0xf]
  %v3258 = vlaneseq
  %v3259 = vshrl.u32 %v3258, 7
  %v3260 = vsub.s32 0, %v3259
  %v3261 = vrot.slane %v3256, %v3260
  %v3262 = vlaneseq
  %v3263 = vshrl.u32 %v3262, 7
  %v3264 = vsub.s32 1, %v3263
  %v3265 = vrot.slane %v3256, %v3264
  %v3266 = vlaneseq
  %v3267 = vshrl.u32 %v3266, 7
  %v3268 = vsub.s32 2, %v3267
  %v3269 = vrot.slane %v3256, %v3268
  %v3270 = vlaneseq
  %v3271 = vshrl.u32 %v3270, 7
  %v3272 = vsub.s32 3, %v3271
  %v3273 = vrot.slane %v3256, %v3272
  %v3278 = vmul.f32 %v3240, %v3261
  %v3279 = vmul.f32 %v3241, %v3265
  %v3280 = vmul.f32 %v3242, %v3269
  %v3281 = vmul.f32 %v3243, %v3273
  %v3282 = vmul.f32 %v3244, %v3261
  %v3283 = vmul.f32 %v3245, %v3265
  %v3284 = vmul.f32 %v3246, %v3269
  %v3285 = vmul.f32 %v3247, %v3273
  %v3286 = vmul.f32 %v3248, %v3261
  %v3287 = vmul.f32 %v3249, %v3265
  %v3288 = vmul.f32 %v3250, %v3269
  %v3289 = vmul.f32 %v3251, %v3273
  %v3290 = vmul.f32 %v3252, %v3261
  %v3291 = vmul.f32 %v3253, %v3265
  %v3292 = vmul.f32 %v3254, %v3269
  %v3293 = vmul.f32 %v3255, %v3273
  %v3294 = vld [vmem:[%s6] sm:$0xf]
  %v3296 = vlaneseq
  %v3297 = vshrl.u32 %v3296, 7
  %v3298 = vsub.s32 0, %v3297
  %v3299 = vrot.slane %v3294, %v3298
  %v3300 = vlaneseq
  %v3301 = vshrl.u32 %v3300, 7
  %v3302 = vsub.s32 1, %v3301
  %v3303 = vrot.slane %v3294, %v3302
  %v3304 = vlaneseq
  %v3305 = vshrl.u32 %v3304, 7
  %v3306 = vsub.s32 2, %v3305
  %v3307 = vrot.slane %v3294, %v3306
  %v3308 = vlaneseq
  %v3309 = vshrl.u32 %v3308, 7
  %v3310 = vsub.s32 3, %v3309
  %v3311 = vrot.slane %v3294, %v3310
  %v3316 = vadd.f32 %v3278, %v3299
  %v3317 = vadd.f32 %v3279, %v3303
  %v3318 = vadd.f32 %v3280, %v3307
  %v3319 = vadd.f32 %v3281, %v3311
  %v3320 = vadd.f32 %v3282, %v3299
  %v3321 = vadd.f32 %v3283, %v3303
  %v3322 = vadd.f32 %v3284, %v3307
  %v3323 = vadd.f32 %v3285, %v3311
  %v3324 = vadd.f32 %v3286, %v3299
  %v3325 = vadd.f32 %v3287, %v3303
  %v3326 = vadd.f32 %v3288, %v3307
  %v3327 = vadd.f32 %v3289, %v3311
  %v3328 = vadd.f32 %v3290, %v3299
  %v3329 = vadd.f32 %v3291, %v3303
  %v3330 = vadd.f32 %v3292, %v3307
  %v3331 = vadd.f32 %v3293, %v3311
  %vm3332 = vcmp.gt.f32.partialorder %v3316, 0.0
  %vm3333 = vcmp.gt.f32.partialorder %v3317, 0.0
  %vm3334 = vcmp.gt.f32.partialorder %v3318, 0.0
  %vm3335 = vcmp.gt.f32.partialorder %v3319, 0.0
  %vm3336 = vcmp.gt.f32.partialorder %v3320, 0.0
  %vm3337 = vcmp.gt.f32.partialorder %v3321, 0.0
  %vm3338 = vcmp.gt.f32.partialorder %v3322, 0.0
  %vm3339 = vcmp.gt.f32.partialorder %v3323, 0.0
  %vm3340 = vcmp.gt.f32.partialorder %v3324, 0.0
  %vm3341 = vcmp.gt.f32.partialorder %v3325, 0.0
  %vm3342 = vcmp.gt.f32.partialorder %v3326, 0.0
  %vm3343 = vcmp.gt.f32.partialorder %v3327, 0.0
  %vm3344 = vcmp.gt.f32.partialorder %v3328, 0.0
  %vm3345 = vcmp.gt.f32.partialorder %v3329, 0.0
  %vm3346 = vcmp.gt.f32.partialorder %v3330, 0.0
  %vm3347 = vcmp.gt.f32.partialorder %v3331, 0.0
  %v3348 = vmul.f32 %v3316, 0.2
  %v3349 = vmul.f32 %v3317, 0.2
  %v3350 = vmul.f32 %v3318, 0.2
  %v3351 = vmul.f32 %v3319, 0.2
  %v3352 = vmul.f32 %v3320, 0.2
  %v3353 = vmul.f32 %v3321, 0.2
  %v3354 = vmul.f32 %v3322, 0.2
  %v3355 = vmul.f32 %v3323, 0.2
  %v3356 = vmul.f32 %v3324, 0.2
  %v3357 = vmul.f32 %v3325, 0.2
  %v3358 = vmul.f32 %v3326, 0.2
  %v3359 = vmul.f32 %v3327, 0.2
  %v3360 = vmul.f32 %v3328, 0.2
  %v3361 = vmul.f32 %v3329, 0.2
  %v3362 = vmul.f32 %v3330, 0.2
  %v3363 = vmul.f32 %v3331, 0.2
  %v3364 = vsel %vm3332, %v3316, %v3348
  %v3365 = vsel %vm3333, %v3317, %v3349
  %v3366 = vsel %vm3334, %v3318, %v3350
  %v3367 = vsel %vm3335, %v3319, %v3351
  %v3368 = vsel %vm3336, %v3320, %v3352
  %v3369 = vsel %vm3337, %v3321, %v3353
  %v3370 = vsel %vm3338, %v3322, %v3354
  %v3371 = vsel %vm3339, %v3323, %v3355
  %v3372 = vsel %vm3340, %v3324, %v3356
  %v3373 = vsel %vm3341, %v3325, %v3357
  %v3374 = vsel %vm3342, %v3326, %v3358
  %v3375 = vsel %vm3343, %v3327, %v3359
  %v3376 = vsel %vm3344, %v3328, %v3360
  %v3377 = vsel %vm3345, %v3329, %v3361
  %v3378 = vsel %vm3346, %v3330, %v3362
  %v3379 = vsel %vm3347, %v3331, %v3363
  %v3380 = vpack.c.bf16 %v3368, %v3364
  %v3381 = vpack.c.bf16 %v3369, %v3365
  %v3382 = vpack.c.bf16 %v3370, %v3366
  %v3383 = vpack.c.bf16 %v3371, %v3367
  %v3384 = vpack.c.bf16 %v3376, %v3372
  %v3385 = vpack.c.bf16 %v3377, %v3373
  %v3386 = vpack.c.bf16 %v3378, %v3374
  %v3387 = vpack.c.bf16 %v3379, %v3375
  %v3396 = vunpack.c.l.b16 %v3380
  %v3397 = vunpack.c.l.b16 %v3381
  %v3398 = vunpack.c.l.b16 %v3382
  %v3399 = vunpack.c.l.b16 %v3383
  %v3400 = vunpack.c.h.b16 %v3380
  %v3401 = vunpack.c.h.b16 %v3381
  %v3402 = vunpack.c.h.b16 %v3382
  %v3403 = vunpack.c.h.b16 %v3383
  %v3404 = vunpack.c.l.b16 %v3384
  %v3405 = vunpack.c.l.b16 %v3385
  %v3406 = vunpack.c.l.b16 %v3386
  %v3407 = vunpack.c.l.b16 %v3387
  %v3408 = vunpack.c.h.b16 %v3384
  %v3409 = vunpack.c.h.b16 %v3385
  %v3410 = vunpack.c.h.b16 %v3386
  %v3411 = vunpack.c.h.b16 %v3387
  %v3412 = vpack.c.b16 %v3397, %v3396
  %v3413 = vpack.c.b16 %v3399, %v3398
  %v3414 = vpack.c.b16 %v3401, %v3400
  %v3415 = vpack.c.b16 %v3403, %v3402
  %v3416 = vpack.c.b16 %v3405, %v3404
  %v3417 = vpack.c.b16 %v3407, %v3406
  %v3418 = vpack.c.b16 %v3409, %v3408
  %v3419 = vpack.c.b16 %v3411, %v3410
  %3428 = vst [vmem:[%s7] sm:$0xff] %v3412
  %3429 = vst [vmem:[%s7 + $0x8] sm:$0xff] %v3413
  %3430 = vst [vmem:[%s7 + $0x10] sm:$0xff] %v3414
  %3431 = vst [vmem:[%s7 + $0x18] sm:$0xff] %v3415
  %3432 = vst [vmem:[%s7 + $0x20] sm:$0xff] %v3416
  %3433 = vst [vmem:[%s7 + $0x28] sm:$0xff] %v3417
  %3434 = vst [vmem:[%s7 + $0x30] sm:$0xff] %v3418
  %3435 = vst [vmem:[%s7 + $0x38] sm:$0xff] %v3419
  // Predicated region
  $region30: #{generator_forward.6} parent=0 // pred_check
    _
  $region31: #{generator_forward.6} parent=0 // pred_check_branch
    %3437 = sbr.rel (0) target = $region33
  $region32: #{generator_forward.6} parent=0 // pred_region
    _
  $region33: #{generator_forward.6} parent=0 // pred_fallthru
    _
  // Predicated region
  $region34: #{generator_forward.6} parent=0 // pred_check
    _
  $region35: #{generator_forward.6} parent=0 // pred_check_branch
    %3439 = sbr.rel (0) target = $region37
  $region36: #{generator_forward.6} parent=0 // pred_region
    _
  $region37: #{generator_forward.6} parent=0 // pred_fallthru
    _

// kernel: generator_forward.8
$region0: #{generator_forward.8}
  #allocation0 [shape = 'u32[]', space=smem, size = 0x4, offset = 0x4, fixed_abs, tag = 'smem constant byte address 0x4 - core index']
  #allocation1 [shape = 'u32[144,128]{1,0:T(1,128)}', space=vmem, size = 0x12000, scoped, tag = 'internal scratch']
  %s0 = inlined_call_operand.vmem [shape: bf16[176,256], index: 0, kind: input, shape index: {}]
  %s1 = inlined_call_operand.vmem [shape: bf16[256,128], index: 1, kind: input, shape index: {}]
  %s2 = inlined_call_operand.vmem [shape: f32[1,128], index: 2, kind: input, shape index: {}]
  %s3 = inlined_call_operand.vmem [shape: f32[176,128], index: 3, kind: input, shape index: {}]
  %s4 = inlined_call_operand.vmem [shape: f32[128,128], index: 4, kind: input, shape index: {}]
  %s5 = inlined_call_operand.vmem [shape: f32[1,128], index: 5, kind: input, shape index: {}]
  %s6 = inlined_call_operand.vmem [shape: f32[1,128], index: 6, kind: input, shape index: {}]
  %s7 = inlined_call_operand.vmem [shape: bf16[176,128], index: 7, kind: output, shape index: {}]
  %s8 = sld [smem:[#allocation0]]
  $region38: #{generator_forward.8} parent=0
    _
  %s10 = ssub.s32 1, %s8
  %s11 = scalar_select 0, %s10, %s8
  // Predicated region
  $region2: #{generator_forward.8} parent=0 // pred_check
    _
  $region3: #{generator_forward.8} parent=0 // pred_check_branch
    %13 = sbr.rel (0) target = $region5
  $region4: #{generator_forward.8} parent=0 // pred_region
    _
  $region5: #{generator_forward.8} parent=0 // pred_fallthru
    _
  // Predicated region
  $region6: #{generator_forward.8} parent=0 // pred_check
    _
  $region7: #{generator_forward.8} parent=0 // pred_check_branch
    %15 = sbr.rel (0) target = $region9
  $region8: #{generator_forward.8} parent=0 // pred_region
    _
  $region9: #{generator_forward.8} parent=0 // pred_fallthru
    _
  // Predicated region
  $region10: #{generator_forward.8} parent=0 // pred_check
    _
  $region11: #{generator_forward.8} parent=0 // pred_check_branch
    %17 = sbr.rel (0) target = $region13
  $region12: #{generator_forward.8} parent=0 // pred_region
    _
  $region13: #{generator_forward.8} parent=0 // pred_fallthru
    _
  // Predicated region
  $region14: #{generator_forward.8} parent=0 // pred_check
    _
  $region15: #{generator_forward.8} parent=0 // pred_check_branch
    %19 = sbr.rel (0) target = $region17
  $region16: #{generator_forward.8} parent=0 // pred_region
    _
  $region17: #{generator_forward.8} parent=0 // pred_fallthru
    _
  // Predicated region
  $region18: #{generator_forward.8} parent=0 // pred_check
    _
  $region19: #{generator_forward.8} parent=0 // pred_check_branch
    %21 = sbr.rel (0) target = $region21
  $region20: #{generator_forward.8} parent=0 // pred_region
    _
  $region21: #{generator_forward.8} parent=0 // pred_fallthru
    _
  // Predicated region
  $region22: #{generator_forward.8} parent=0 // pred_check
    _
  $region23: #{generator_forward.8} parent=0 // pred_check_branch
    %23 = sbr.rel (0) target = $region25
  $region24: #{generator_forward.8} parent=0 // pred_region
    _
  $region25: #{generator_forward.8} parent=0 // pred_fallthru
    _
  // Predicated region
  $region26: #{generator_forward.8} parent=0 // pred_check
    _
  $region27: #{generator_forward.8} parent=0 // pred_check_branch
    %25 = sbr.rel (0) target = $region29
  $region28: #{generator_forward.8} parent=0 // pred_region
    _
  $region29: #{generator_forward.8} parent=0 // pred_fallthru
    _
  %v27 = vld [vmem:[%s0] sm:$0xff]
  %v28 = vld [vmem:[%s0 + $0x8] sm:$0xff]
  %v29 = vld [vmem:[%s0 + $0x10] sm:$0xff]
  %v30 = vld [vmem:[%s0 + $0x18] sm:$0xff]
  %v31 = vld [vmem:[%s0 + $0x20] sm:$0xff]
  %v32 = vld [vmem:[%s0 + $0x28] sm:$0xff]
  %v33 = vld [vmem:[%s0 + $0x30] sm:$0xff]
  %v34 = vld [vmem:[%s0 + $0x38] sm:$0xff]
  %v35 = vld [vmem:[%s0 + $0x40] sm:$0xff]
  %v36 = vld [vmem:[%s0 + $0x48] sm:$0xff]
  %v37 = vld [vmem:[%s0 + $0x50] sm:$0xff]
  %v38 = vld [vmem:[%s0 + $0x58] sm:$0xff]
  %v39 = vld [vmem:[%s0 + $0x60] sm:$0xff]
  %v40 = vld [vmem:[%s0 + $0x68] sm:$0xff]
  %v41 = vld [vmem:[%s0 + $0x70] sm:$0xff]
  %v42 = vld [vmem:[%s0 + $0x78] sm:$0xff]
  %v43 = vld [vmem:[%s0 + $0x80] sm:$0xff]
  %v44 = vld [vmem:[%s0 + $0x88] sm:$0xff]
  %v45 = vld [vmem:[%s0 + $0x90] sm:$0xff]
  %v46 = vld [vmem:[%s0 + $0x98] sm:$0xff]
  %v47 = vld [vmem:[%s0 + $0xa0] sm:$0xff]
  %v48 = vld [vmem:[%s0 + $0xa8] sm:$0xff]
  %v49 = vld [vmem:[%s1] sm:$0xf]
  %v50 = vld [vmem:[%s1 + $0x4] sm:$0xf]
  %v51 = vld [vmem:[%s1 + $0x8] sm:$0xf]
  %v52 = vld [vmem:[%s1 + $0xc] sm:$0xf]
  %v53 = vld [vmem:[%s1 + $0x10] sm:$0xf]
  %v54 = vld [vmem:[%s1 + $0x14] sm:$0xf]
  %v55 = vld [vmem:[%s1 + $0x18] sm:$0xf]
  %v56 = vld [vmem:[%s1 + $0x1c] sm:$0xf]
  %v57 = vld [vmem:[%s1 + $0x20] sm:$0xf]
  %v58 = vld [vmem:[%s1 + $0x24] sm:$0xf]
  %v59 = vld [vmem:[%s1 + $0x28] sm:$0xf]
  %v60 = vld [vmem:[%s1 + $0x2c] sm:$0xf]
  %v61 = vld [vmem:[%s1 + $0x30] sm:$0xf]
  %v62 = vld [vmem:[%s1 + $0x34] sm:$0xf]
  %v63 = vld [vmem:[%s1 + $0x38] sm:$0xf]
  %v64 = vld [vmem:[%s1 + $0x3c] sm:$0xf]
  %v65 = vld [vmem:[%s1 + $0x40] sm:$0xf]
  %v66 = vld [vmem:[%s1 + $0x44] sm:$0xf]
  %v67 = vld [vmem:[%s1 + $0x48] sm:$0xf]
  %v68 = vld [vmem:[%s1 + $0x4c] sm:$0xf]
  %v69 = vld [vmem:[%s1 + $0x50] sm:$0xf]
  %v70 = vld [vmem:[%s1 + $0x54] sm:$0xf]
  %v71 = vld [vmem:[%s1 + $0x58] sm:$0xf]
  %v72 = vld [vmem:[%s1 + $0x5c] sm:$0xf]
  %v73 = vld [vmem:[%s1 + $0x60] sm:$0xf]
  %v74 = vld [vmem:[%s1 + $0x64] sm:$0xf]
  %v75 = vld [vmem:[%s1 + $0x68] sm:$0xf]
  %v76 = vld [vmem:[%s1 + $0x6c] sm:$0xf]
  %v77 = vld [vmem:[%s1 + $0x70] sm:$0xf]
  %v78 = vld [vmem:[%s1 + $0x74] sm:$0xf]
  %v79 = vld [vmem:[%s1 + $0x78] sm:$0xf]
  %v80 = vld [vmem:[%s1 + $0x7c] sm:$0xf]
  %v81 = vld [vmem:[%s2] sm:$0x1]
  %v83 = vlaneseq
  %v84 = vshrl.u32 %v83, 7
  %v85 = vsub.s32 0, %v84
  %v86 = vrot.slane %v81, %v85
  %v110 = vunpack.c.l.b16 %v27
  %v111 = vunpack.c.h.b16 %v27
  %v112 = vunpack.c.l.b16 %v28
  %v113 = vunpack.c.h.b16 %v28
  %v114 = vunpack.c.l.b16 %v29
  %v115 = vunpack.c.h.b16 %v29
  %v116 = vunpack.c.l.b16 %v30
  %v117 = vunpack.c.h.b16 %v30
  %v118 = vunpack.c.l.b16 %v31
  %v119 = vunpack.c.h.b16 %v31
  %v120 = vunpack.c.l.b16 %v32
  %v121 = vunpack.c.h.b16 %v32
  %v122 = vunpack.c.l.b16 %v33
  %v123 = vunpack.c.h.b16 %v33
  %v124 = vunpack.c.l.b16 %v34
  %v125 = vunpack.c.h.b16 %v34
  %v126 = vunpack.c.l.b16 %v35
  %v127 = vunpack.c.h.b16 %v35
  %v128 = vunpack.c.l.b16 %v36
  %v129 = vunpack.c.h.b16 %v36
  %v130 = vunpack.c.l.b16 %v37
  %v131 = vunpack.c.h.b16 %v37
  %v132 = vunpack.c.l.b16 %v38
  %v133 = vunpack.c.h.b16 %v38
  %v134 = vunpack.c.l.b16 %v39
  %v135 = vunpack.c.h.b16 %v39
  %v136 = vunpack.c.l.b16 %v40
  %v137 = vunpack.c.h.b16 %v40
  %v138 = vunpack.c.l.b16 %v41
  %v139 = vunpack.c.h.b16 %v41
  %v140 = vunpack.c.l.b16 %v42
  %v141 = vunpack.c.h.b16 %v42
  %v142 = vunpack.c.l.b16 %v43
  %v143 = vunpack.c.h.b16 %v43
  %v144 = vunpack.c.l.b16 %v44
  %v145 = vunpack.c.h.b16 %v44
  %v146 = vunpack.c.l.b16 %v45
  %v147 = vunpack.c.h.b16 %v45
  %v148 = vunpack.c.l.b16 %v46
  %v149 = vunpack.c.h.b16 %v46
  %v150 = vunpack.c.l.b16 %v47
  %v151 = vunpack.c.h.b16 %v47
  %v152 = vunpack.c.l.b16 %v48
  %v153 = vunpack.c.h.b16 %v48
  %v154 = vpack.c.b16 %v112, %v110
  %v155 = vpack.c.b16 %v113, %v111
  %v156 = vpack.c.b16 %v116, %v114
  %v157 = vpack.c.b16 %v117, %v115
  %v158 = vpack.c.b16 %v120, %v118
  %v159 = vpack.c.b16 %v121, %v119
  %v160 = vpack.c.b16 %v124, %v122
  %v161 = vpack.c.b16 %v125, %v123
  %v162 = vpack.c.b16 %v128, %v126
  %v163 = vpack.c.b16 %v129, %v127
  %v164 = vpack.c.b16 %v132, %v130
  %v165 = vpack.c.b16 %v133, %v131
  %v166 = vpack.c.b16 %v136, %v134
  %v167 = vpack.c.b16 %v137, %v135
  %v168 = vpack.c.b16 %v140, %v138
  %v169 = vpack.c.b16 %v141, %v139
  %v170 = vpack.c.b16 %v144, %v142
  %v171 = vpack.c.b16 %v145, %v143
  %v172 = vpack.c.b16 %v148, %v146
  %v173 = vpack.c.b16 %v149, %v147
  %v174 = vpack.c.b16 %v152, %v150
  %v175 = vpack.c.b16 %v153, %v151
  %v230 = vunpack.c.l.b16 %v49
  %v231 = vunpack.c.l.b16 %v50
  %v232 = vunpack.c.l.b16 %v51
  %v233 = vunpack.c.l.b16 %v52
  %v234 = vunpack.c.l.b16 %v53
  %v235 = vunpack.c.l.b16 %v54
  %v236 = vunpack.c.l.b16 %v55
  %v237 = vunpack.c.l.b16 %v56
  %v238 = vunpack.c.l.b16 %v57
  %v239 = vunpack.c.l.b16 %v58
  %v240 = vunpack.c.l.b16 %v59
  %v241 = vunpack.c.l.b16 %v60
  %v242 = vunpack.c.l.b16 %v61
  %v243 = vunpack.c.l.b16 %v62
  %v244 = vunpack.c.l.b16 %v63
  %v245 = vunpack.c.l.b16 %v64
  %v246 = vunpack.c.l.b16 %v65
  %v247 = vunpack.c.l.b16 %v66
  %v248 = vunpack.c.l.b16 %v67
  %v249 = vunpack.c.l.b16 %v68
  %v250 = vunpack.c.l.b16 %v69
  %v251 = vunpack.c.l.b16 %v70
  %v252 = vunpack.c.l.b16 %v71
  %v253 = vunpack.c.l.b16 %v72
  %v254 = vunpack.c.l.b16 %v73
  %v255 = vunpack.c.l.b16 %v74
  %v256 = vunpack.c.l.b16 %v75
  %v257 = vunpack.c.l.b16 %v76
  %v258 = vunpack.c.l.b16 %v77
  %v259 = vunpack.c.l.b16 %v78
  %v260 = vunpack.c.l.b16 %v79
  %v261 = vunpack.c.l.b16 %v80
  %v262 = vpack.c.b16 %v231, %v230
  %v263 = vpack.c.b16 %v233, %v232
  %v264 = vpack.c.b16 %v235, %v234
  %v265 = vpack.c.b16 %v237, %v236
  %v266 = vpack.c.b16 %v239, %v238
  %v267 = vpack.c.b16 %v241, %v240
  %v268 = vpack.c.b16 %v243, %v242
  %v269 = vpack.c.b16 %v245, %v244
  %v270 = vpack.c.b16 %v247, %v246
  %v271 = vpack.c.b16 %v249, %v248
  %v272 = vpack.c.b16 %v251, %v250
  %v273 = vpack.c.b16 %v253, %v252
  %v274 = vpack.c.b16 %v255, %v254
  %v275 = vpack.c.b16 %v257, %v256
  %v276 = vpack.c.b16 %v259, %v258
  %v277 = vpack.c.b16 %v261, %v260
  %294 = vmatprep.subr.bf16.mxu0 0
  %295 = vmatpush1.bf16.msra.mxu0 %v262
  %296 = vmatprep.subr.bf16.mxu0 0
  %297 = vmatpush1.bf16.msra.mxu0 %v263
  %298 = vmatprep.subr.bf16.mxu0 0
  %299 = vmatpush1.bf16.msra.mxu0 %v264
  %300 = vmatprep.subr.bf16.mxu0 0
  %301 = vmatpush1.bf16.msra.mxu0 %v265
  %302 = vmatprep.subr.bf16.mxu0 0
  %303 = vmatpush1.bf16.msra.mxu0 %v266
  %304 = vmatprep.subr.bf16.mxu0 0
  %305 = vmatpush1.bf16.msra.mxu0 %v267
  %306 = vmatprep.subr.bf16.mxu0 0
  %307 = vmatpush1.bf16.msra.mxu0 %v268
  %308 = vmatprep.subr.bf16.mxu0 0
  %309 = vmatpush1.bf16.msra.mxu0 %v269
  %310 = vmatprep.subr.bf16.mxu0 0
  %311 = vmatpush1.bf16.msra.mxu0 %v270
  %312 = vmatprep.subr.bf16.mxu0 0
  %313 = vmatpush1.bf16.msra.mxu0 %v271
  %314 = vmatprep.subr.bf16.mxu0 0
  %315 = vmatpush1.bf16.msra.mxu0 %v272
  %316 = vmatprep.subr.bf16.mxu0 0
  %317 = vmatpush1.bf16.msra.mxu0 %v273
  %318 = vmatprep.subr.bf16.mxu0 0
  %319 = vmatpush1.bf16.msra.mxu0 %v274
  %320 = vmatprep.subr.bf16.mxu0 0
  %321 = vmatpush1.bf16.msra.mxu0 %v275
  %322 = vmatprep.subr.bf16.mxu0 0
  %323 = vmatpush1.bf16.msra.mxu0 %v276
  %324 = vmatprep.subr.bf16.mxu0 0
  %325 = vmatpush1.bf16.msra.mxu0 %v277
  %326 = vmatprep.mubr.bf16.mxu0 %v155
  %327 = vmatmul.mubr.bf16.gmra.mrb[0].mxu0 %v154
  %v328 = vpop.f32.mrb[0].mxu0
  %v329 = vadd.f32 %v86, %v328
  %v330 = vpop.f32.mrb[0].mxu0
  %v331 = vpop.f32.mrb[0].mxu0
  %v332 = vadd.f32 %v86, %v331
  %v333 = vpop.f32.mrb[0].mxu0
  %334 = vmatprep.mubr.bf16.mxu0 %v157
  %335 = vmatmul.mubr.bf16.gmra.mrb[0].mxu0 %v156
  %v336 = vpop.f32.mrb[0].mxu0
  %v337 = vadd.f32 %v86, %v336
  %v338 = vpop.f32.mrb[0].mxu0
  %v339 = vpop.f32.mrb[0].mxu0
  %v340 = vadd.f32 %v86, %v339
  %v341 = vpop.f32.mrb[0].mxu0
  %342 = vmatprep.mubr.bf16.mxu0 %v159
  %343 = vmatmul.mubr.bf16.gmra.mrb[0].mxu0 %v158
  %v344 = vpop.f32.mrb[0].mxu0
  %v345 = vadd.f32 %v86, %v344
  %v346 = vpop.f32.mrb[0].mxu0
  %v347 = vpop.f32.mrb[0].mxu0
  %v348 = vadd.f32 %v86, %v347
  %v349 = vpop.f32.mrb[0].mxu0
  %350 = vmatprep.mubr.bf16.mxu0 %v161
  %351 = vmatmul.mubr.bf16.gmra.mrb[0].mxu0 %v160
  %v352 = vpop.f32.mrb[0].mxu0
  %v353 = vadd.f32 %v86, %v352
  %v354 = vpop.f32.mrb[0].mxu0
  %v355 = vpop.f32.mrb[0].mxu0
  %v356 = vadd.f32 %v86, %v355
  %v357 = vpop.f32.mrb[0].mxu0
  %358 = vmatprep.mubr.bf16.mxu0 %v163
  %359 = vmatmul.mubr.bf16.gmra.mrb[0].mxu0 %v162
  %v360 = vpop.f32.mrb[0].mxu0
  %v361 = vadd.f32 %v86, %v360
  %v362 = vpop.f32.mrb[0].mxu0
  %v363 = vpop.f32.mrb[0].mxu0
  %v364 = vadd.f32 %v86, %v363
  %v365 = vpop.f32.mrb[0].mxu0
  %366 = vmatprep.mubr.bf16.mxu0 %v165
  %367 = vmatmul.mubr.bf16.gmra.mrb[0].mxu0 %v164
  %v368 = vpop.f32.mrb[0].mxu0
  %v369 = vadd.f32 %v86, %v368
  %v370 = vpop.f32.mrb[0].mxu0
  %v371 = vpop.f32.mrb[0].mxu0
  %v372 = vadd.f32 %v86, %v371
  %v373 = vpop.f32.mrb[0].mxu0
  %374 = vmatprep.mubr.bf16.mxu0 %v167
  %375 = vmatmul.mubr.bf16.gmra.mrb[0].mxu0 %v166
  %v376 = vpop.f32.mrb[0].mxu0
  %v377 = vadd.f32 %v86, %v376
  %v378 = vpop.f32.mrb[0].mxu0
  %v379 = vpop.f32.mrb[0].mxu0
  %v380 = vadd.f32 %v86, %v379
  %v381 = vpop.f32.mrb[0].mxu0
  %382 = vmatprep.mubr.bf16.mxu0 %v169
  %383 = vmatmul.mubr.bf16.gmra.mrb[0].mxu0 %v168
  %v384 = vpop.f32.mrb[0].mxu0
  %v385 = vadd.f32 %v86, %v384
  %v386 = vpop.f32.mrb[0].mxu0
  %v387 = vpop.f32.mrb[0].mxu0
  %v388 = vadd.f32 %v86, %v387
  %v389 = vpop.f32.mrb[0].mxu0
  %390 = vmatprep.mubr.bf16.mxu0 %v171
  %391 = vmatmul.mubr.bf16.gmra.mrb[0].mxu0 %v170
  %v392 = vpop.f32.mrb[0].mxu0
  %v393 = vadd.f32 %v86, %v392
  %v394 = vpop.f32.mrb[0].mxu0
  %v395 = vpop.f32.mrb[0].mxu0
  %v396 = vadd.f32 %v86, %v395
  %v397 = vpop.f32.mrb[0].mxu0
  %398 = vmatprep.mubr.bf16.mxu0 %v173
  %399 = vmatmul.mubr.bf16.gmra.mrb[0].mxu0 %v172
  %v400 = vpop.f32.mrb[0].mxu0
  %v401 = vadd.f32 %v86, %v400
  %v402 = vpop.f32.mrb[0].mxu0
  %v403 = vpop.f32.mrb[0].mxu0
  %v404 = vadd.f32 %v86, %v403
  %v405 = vpop.f32.mrb[0].mxu0
  %406 = vmatprep.mubr.bf16.mxu0 %v175
  %407 = vmatmul.mubr.bf16.gmra.mrb[0].mxu0 %v174
  %v408 = vpop.f32.mrb[0].mxu0
  %v409 = vadd.f32 %v86, %v408
  %v410 = vpop.f32.mrb[0].mxu0
  %v411 = vpop.f32.mrb[0].mxu0
  %v412 = vadd.f32 %v86, %v411
  %v413 = vpop.f32.mrb[0].mxu0
  %414 = vdwg.mxu0
  %v415 = vld [vmem:[%s3] sm:$0xff]
  %v416 = vld [vmem:[%s3 + $0x8] sm:$0xff]
  %v417 = vld [vmem:[%s3 + $0x10] sm:$0xff]
  %v418 = vld [vmem:[%s3 + $0x18] sm:$0xff]
  %v419 = vld [vmem:[%s3 + $0x20] sm:$0xff]
  %v420 = vld [vmem:[%s3 + $0x28] sm:$0xff]
  %v421 = vld [vmem:[%s3 + $0x30] sm:$0xff]
  %v422 = vld [vmem:[%s3 + $0x38] sm:$0xff]
  %v423 = vld [vmem:[%s3 + $0x40] sm:$0xff]
  %v424 = vld [vmem:[%s3 + $0x48] sm:$0xff]
  %v425 = vld [vmem:[%s3 + $0x50] sm:$0xff]
  %v426 = vld [vmem:[%s3 + $0x58] sm:$0xff]
  %v427 = vld [vmem:[%s3 + $0x60] sm:$0xff]
  %v428 = vld [vmem:[%s3 + $0x68] sm:$0xff]
  %v429 = vld [vmem:[%s3 + $0x70] sm:$0xff]
  %v430 = vld [vmem:[%s3 + $0x78] sm:$0xff]
  %v431 = vld [vmem:[%s3 + $0x80] sm:$0xff]
  %v432 = vld [vmem:[%s3 + $0x88] sm:$0xff]
  %v433 = vld [vmem:[%s3 + $0x90] sm:$0xff]
  %v434 = vld [vmem:[%s3 + $0x98] sm:$0xff]
  %v435 = vld [vmem:[%s3 + $0xa0] sm:$0xff]
  %v436 = vld [vmem:[%s3 + $0xa8] sm:$0xff]
  %v437 = vld [vmem:[%s4] sm:$0xff]
  %v438 = vld [vmem:[%s4 + $0x8] sm:$0xff]
  %v439 = vld [vmem:[%s4 + $0x10] sm:$0xff]
  %v440 = vld [vmem:[%s4 + $0x18] sm:$0xff]
  %v441 = vld [vmem:[%s4 + $0x20] sm:$0xff]
  %v442 = vld [vmem:[%s4 + $0x28] sm:$0xff]
  %v443 = vld [vmem:[%s4 + $0x30] sm:$0xff]
  %v444 = vld [vmem:[%s4 + $0x38] sm:$0xff]
  %v445 = vld [vmem:[%s4 + $0x40] sm:$0xff]
  %v446 = vld [vmem:[%s4 + $0x48] sm:$0xff]
  %v447 = vld [vmem:[%s4 + $0x50] sm:$0xff]
  %v448 = vld [vmem:[%s4 + $0x58] sm:$0xff]
  %v449 = vld [vmem:[%s4 + $0x60] sm:$0xff]
  %v450 = vld [vmem:[%s4 + $0x68] sm:$0xff]
  %v451 = vld [vmem:[%s4 + $0x70] sm:$0xff]
  %v452 = vld [vmem:[%s4 + $0x78] sm:$0xff]
  %v453 = vmul.f32 %v415, %v329
  %v454 = vmul.f32 %v416, %v332
  %v455 = vmul.f32 %v417, %v337
  %v456 = vmul.f32 %v418, %v340
  %v457 = vmul.f32 %v419, %v345
  %v458 = vmul.f32 %v420, %v348
  %v459 = vmul.f32 %v421, %v353
  %v460 = vmul.f32 %v422, %v356
  %v461 = vmul.f32 %v423, %v361
  %v462 = vmul.f32 %v424, %v364
  %v463 = vmul.f32 %v425, %v369
  %v464 = vmul.f32 %v426, %v372
  %v465 = vmul.f32 %v427, %v377
  %v466 = vmul.f32 %v428, %v380
  %v467 = vmul.f32 %v429, %v385
  %v468 = vmul.f32 %v430, %v388
  %v469 = vmul.f32 %v431, %v393
  %v470 = vmul.f32 %v432, %v396
  %v471 = vmul.f32 %v433, %v401
  %v472 = vmul.f32 %v434, %v404
  %v473 = vmul.f32 %v435, %v409
  %v474 = vmul.f32 %v436, %v412
  %475 = vmatprep.subr.mxu0 0.0
  %476 = vmatpush1.msra.mxu0 %v437
  %477 = vmatprep.subr.mxu0 0.0
  %478 = vmatpush1.msra.mxu0 %v438
  %479 = vmatprep.subr.mxu0 0.0
  %480 = vmatpush1.msra.mxu0 %v439
  %481 = vmatprep.subr.mxu0 0.0
  %482 = vmatpush1.msra.mxu0 %v440
  %483 = vmatprep.subr.mxu0 0.0
  %484 = vmatpush1.msra.mxu0 %v441
  %485 = vmatprep.subr.mxu0 0.0
  %486 = vmatpush1.msra.mxu0 %v442
  %487 = vmatprep.subr.mxu0 0.0
  %488 = vmatpush1.msra.mxu0 %v443
  %489 = vmatprep.subr.mxu0 0.0
  %490 = vmatpush1.msra.mxu0 %v444
  %491 = vmatprep.subr.mxu0 0.0
  %492 = vmatpush1.msra.mxu0 %v445
  %493 = vmatprep.subr.mxu0 0.0
  %494 = vmatpush1.msra.mxu0 %v446
  %495 = vmatprep.subr.mxu0 0.0
  %496 = vmatpush1.msra.mxu0 %v447
  %497 = vmatprep.subr.mxu0 0.0
  %498 = vmatpush1.msra.mxu0 %v448
  %499 = vmatprep.subr.mxu0 0.0
  %500 = vmatpush1.msra.mxu0 %v449
  %501 = vmatprep.subr.mxu0 0.0
  %502 = vmatpush1.msra.mxu0 %v450
  %503 = vmatprep.subr.mxu0 0.0
  %504 = vmatpush1.msra.mxu0 %v451
  %505 = vmatprep.subr.mxu0 0.0
  %506 = vmatpush1.msra.mxu0 %v452
  %507 = vmatprep.subr.mxu0 0.0
  %508 = vmatpush1.msra.mxu0 0.0
  %509 = vmatprep.subr.mxu0 0.0
  %510 = vmatpush1.msra.mxu0 0.0
  %511 = vmatprep.subr.mxu0 0.0
  %512 = vmatpush1.msra.mxu0 0.0
  %513 = vmatprep.subr.mxu0 0.0
  %514 = vmatpush1.msra.mxu0 0.0
  %515 = vmatprep.subr.mxu0 0.0
  %516 = vmatpush1.msra.mxu0 0.0
  %517 = vmatprep.subr.mxu0 0.0
  %518 = vmatpush1.msra.mxu0 0.0
  %519 = vmatprep.subr.mxu0 0.0
  %520 = vmatpush1.msra.mxu0 0.0
  %521 = vmatprep.subr.mxu0 0.0
  %522 = vmatpush1.msra.mxu0 0.0
  %523 = vmatprep.subr.mxu0 0.0
  %524 = vmatpush1.msra.mxu0 0.0
  %525 = vmatprep.subr.mxu0 0.0
  %526 = vmatpush1.msra.mxu0 0.0
  %527 = vmatprep.subr.mxu0 0.0
  %528 = vmatpush1.msra.mxu0 0.0
  %529 = vmatprep.subr.mxu0 0.0
  %530 = vmatpush1.msra.mxu0 0.0
  %531 = vmatprep.subr.mxu0 0.0
  %532 = vmatpush1.msra.mxu0 0.0
  %533 = vmatprep.subr.mxu0 0.0
  %534 = vmatpush1.msra.mxu0 0.0
  %535 = vmatprep.subr.mxu0 0.0
  %536 = vmatpush1.msra.mxu0 0.0
  %537 = vmatprep.subr.mxu0 0.0
  %538 = vmatpush1.msra.mxu0 0.0
  %539 = vmatprep.mubr.f32.mxu0 0.0
  %540 = vmatmul.mubr.f32.gmra.mrb[0].mxu0 %v453
  %v541 = vpop.f32.mrb[0].mxu0
  %v542 = vadd.f32 0.0, %v541
  %v543 = vpop.f32.mrb[0].mxu0
  %544 = vmatprep.mubr.f32.mxu0 0.0
  %545 = vmatmul.mubr.f32.gmra.mrb[0].mxu0 %v454
  %v546 = vpop.f32.mrb[0].mxu0
  %v547 = vadd.f32 0.0, %v546
  %v548 = vpop.f32.mrb[0].mxu0
  %549 = vmatprep.mubr.f32.mxu0 0.0
  %550 = vmatmul.mubr.f32.gmra.mrb[0].mxu0 %v455
  %v551 = vpop.f32.mrb[0].mxu0
  %v552 = vadd.f32 0.0, %v551
  %v553 = vpop.f32.mrb[0].mxu0
  %554 = vmatprep.mubr.f32.mxu0 0.0
  %555 = vmatmul.mubr.f32.gmra.mrb[0].mxu0 %v456
  %v556 = vpop.f32.mrb[0].mxu0
  %v557 = vadd.f32 0.0, %v556
  %v558 = vpop.f32.mrb[0].mxu0
  %559 = vmatprep.mubr.f32.mxu0 0.0
  %560 = vmatmul.mubr.f32.gmra.mrb[0].mxu0 %v457
  %v561 = vpop.f32.mrb[0].mxu0
  %v562 = vadd.f32 0.0, %v561
  %v563 = vpop.f32.mrb[0].mxu0
  %564 = vmatprep.mubr.f32.mxu0 0.0
  %565 = vmatmul.mubr.f32.gmra.mrb[0].mxu0 %v458
  %v566 = vpop.f32.mrb[0].mxu0
  %v567 = vadd.f32 0.0, %v566
  %v568 = vpop.f32.mrb[0].mxu0
  %569 = vmatprep.mubr.f32.mxu0 0.0
  %570 = vmatmul.mubr.f32.gmra.mrb[0].mxu0 %v459
  %v571 = vpop.f32.mrb[0].mxu0
  %v572 = vadd.f32 0.0, %v571
  %v573 = vpop.f32.mrb[0].mxu0
  %574 = vmatprep.mubr.f32.mxu0 0.0
  %575 = vmatmul.mubr.f32.gmra.mrb[0].mxu0 %v460
  %v576 = vpop.f32.mrb[0].mxu0
  %v577 = vadd.f32 0.0, %v576
  %v578 = vpop.f32.mrb[0].mxu0
  %579 = vmatprep.mubr.f32.mxu0 0.0
  %580 = vmatmul.mubr.f32.gmra.mrb[0].mxu0 %v461
  %v581 = vpop.f32.mrb[0].mxu0
  %v582 = vadd.f32 0.0, %v581
  %v583 = vpop.f32.mrb[0].mxu0
  %584 = vmatprep.mubr.f32.mxu0 0.0
  %585 = vmatmul.mubr.f32.gmra.mrb[0].mxu0 %v462
  %v586 = vpop.f32.mrb[0].mxu0
  %v587 = vadd.f32 0.0, %v586
  %v588 = vpop.f32.mrb[0].mxu0
  %589 = vmatprep.mubr.f32.mxu0 0.0
  %590 = vmatmul.mubr.f32.gmra.mrb[0].mxu0 %v463
  %v591 = vpop.f32.mrb[0].mxu0
  %v592 = vadd.f32 0.0, %v591
  %v593 = vpop.f32.mrb[0].mxu0
  %594 = vmatprep.mubr.f32.mxu0 0.0
  %595 = vmatmul.mubr.f32.gmra.mrb[0].mxu0 %v464
  %v596 = vpop.f32.mrb[0].mxu0
  %v597 = vadd.f32 0.0, %v596
  %v598 = vpop.f32.mrb[0].mxu0
  %599 = vmatprep.mubr.f32.mxu0 0.0
  %600 = vmatmul.mubr.f32.gmra.mrb[0].mxu0 %v465
  %v601 = vpop.f32.mrb[0].mxu0
  %v602 = vadd.f32 0.0, %v601
  %v603 = vpop.f32.mrb[0].mxu0
  %604 = vmatprep.mubr.f32.mxu0 0.0
  %605 = vmatmul.mubr.f32.gmra.mrb[0].mxu0 %v466
  %v606 = vpop.f32.mrb[0].mxu0
  %v607 = vadd.f32 0.0, %v606
  %v608 = vpop.f32.mrb[0].mxu0
  %609 = vmatprep.mubr.f32.mxu0 0.0
  %610 = vmatmul.mubr.f32.gmra.mrb[0].mxu0 %v467
  %v611 = vpop.f32.mrb[0].mxu0
  %v612 = vadd.f32 0.0, %v611
  %v613 = vpop.f32.mrb[0].mxu0
  %614 = vmatprep.mubr.f32.mxu0 0.0
  %615 = vmatmul.mubr.f32.gmra.mrb[0].mxu0 %v468
  %v616 = vpop.f32.mrb[0].mxu0
  %v617 = vadd.f32 0.0, %v616
  %v618 = vpop.f32.mrb[0].mxu0
  %619 = vmatprep.mubr.f32.mxu0 0.0
  %620 = vmatmul.mubr.f32.gmra.mrb[0].mxu0 %v469
  %v621 = vpop.f32.mrb[0].mxu0
  %v622 = vadd.f32 0.0, %v621
  %v623 = vpop.f32.mrb[0].mxu0
  %624 = vmatprep.mubr.f32.mxu0 0.0
  %625 = vmatmul.mubr.f32.gmra.mrb[0].mxu0 %v470
  %v626 = vpop.f32.mrb[0].mxu0
  %v627 = vadd.f32 0.0, %v626
  %v628 = vpop.f32.mrb[0].mxu0
  %629 = vmatprep.mubr.f32.mxu0 0.0
  %630 = vmatmul.mubr.f32.gmra.mrb[0].mxu0 %v471
  %v631 = vpop.f32.mrb[0].mxu0
  %v632 = vadd.f32 0.0, %v631
  %v633 = vpop.f32.mrb[0].mxu0
  %634 = vmatprep.mubr.f32.mxu0 0.0
  %635 = vmatmul.mubr.f32.gmra.mrb[0].mxu0 %v472
  %v636 = vpop.f32.mrb[0].mxu0
  %v637 = vadd.f32 0.0, %v636
  %v638 = vpop.f32.mrb[0].mxu0
  %639 = vmatprep.mubr.f32.mxu0 0.0
  %640 = vmatmul.mubr.f32.gmra.mrb[0].mxu0 %v473
  %v641 = vpop.f32.mrb[0].mxu0
  %v642 = vadd.f32 0.0, %v641
  %v643 = vpop.f32.mrb[0].mxu0
  %644 = vmatprep.mubr.f32.mxu0 0.0
  %645 = vmatmul.mubr.f32.gmra.mrb[0].mxu0 %v474
  %v646 = vpop.f32.mrb[0].mxu0
  %v647 = vadd.f32 0.0, %v646
  %v648 = vpop.f32.mrb[0].mxu0
  %649 = vdwg.mxu0
  %v650 = vadd.f32 %v542, %v547
  %v651 = vadd.f32 %v650, %v552
  %v652 = vadd.f32 %v651, %v557
  %v653 = vadd.f32 %v652, %v562
  %v654 = vadd.f32 %v653, %v567
  %v655 = vadd.f32 %v654, %v572
  %v656 = vadd.f32 %v655, %v577
  %v657 = vadd.f32 %v656, %v582
  %v658 = vadd.f32 %v657, %v587
  %v659 = vadd.f32 %v658, %v592
  %v660 = vadd.f32 %v659, %v597
  %v661 = vadd.f32 %v660, %v602
  %v662 = vadd.f32 %v661, %v607
  %v663 = vadd.f32 %v662, %v612
  %v664 = vadd.f32 %v663, %v617
  %v665 = vadd.f32 %v664, %v622
  %v666 = vadd.f32 %v665, %v627
  %v667 = vadd.f32 %v666, %v632
  %v668 = vadd.f32 %v667, %v637
  %v669 = vadd.f32 %v668, %v642
  %v670 = vadd.f32 %v669, %v647
  %v671 = vrot.slane %v670, 4
  %v672 = vadd.f32 %v670, %v671
  %v673 = vrot.slane %v672, 2
  %v674 = vadd.f32 %v672, %v673
  %v675 = vrot.slane %v674, 1
  %v676 = vadd.f32 %v674, %v675
  %v677 = vmul.f32 %v676, 0.001953125
  %v678 = vsub.f32 %v329, %v677
  %v679 = vsub.f32 %v332, %v677
  %v680 = vsub.f32 %v337, %v677
  %v681 = vsub.f32 %v340, %v677
  %v682 = vsub.f32 %v345, %v677
  %v683 = vsub.f32 %v348, %v677
  %v684 = vsub.f32 %v353, %v677
  %v685 = vsub.f32 %v356, %v677
  %v686 = vsub.f32 %v361, %v677
  %v687 = vsub.f32 %v364, %v677
  %v688 = vsub.f32 %v369, %v677
  %v689 = vsub.f32 %v372, %v677
  %v690 = vsub.f32 %v377, %v677
  %v691 = vsub.f32 %v380, %v677
  %v692 = vsub.f32 %v385, %v677
  %v693 = vsub.f32 %v388, %v677
  %v694 = vsub.f32 %v393, %v677
  %v695 = vsub.f32 %v396, %v677
  %v696 = vsub.f32 %v401, %v677
  %v697 = vsub.f32 %v404, %v677
  %v698 = vsub.f32 %v409, %v677
  %v699 = vsub.f32 %v412, %v677
  %v700 = vmul.f32 %v415, %v678
  %v701 = vmul.f32 %v416, %v679
  %v702 = vmul.f32 %v417, %v680
  %v703 = vmul.f32 %v418, %v681
  %v704 = vmul.f32 %v419, %v682
  %v705 = vmul.f32 %v420, %v683
  %v706 = vmul.f32 %v421, %v684
  %v707 = vmul.f32 %v422, %v685
  %v708 = vmul.f32 %v423, %v686
  %v709 = vmul.f32 %v424, %v687
  %v710 = vmul.f32 %v425, %v688
  %v711 = vmul.f32 %v426, %v689
  %v712 = vmul.f32 %v427, %v690
  %v713 = vmul.f32 %v428, %v691
  %v714 = vmul.f32 %v429, %v692
  %v715 = vmul.f32 %v430, %v693
  %v716 = vmul.f32 %v431, %v694
  %v717 = vmul.f32 %v432, %v695
  %v718 = vmul.f32 %v433, %v696
  %v719 = vmul.f32 %v434, %v697
  %v720 = vmul.f32 %v435, %v698
  %v721 = vmul.f32 %v436, %v699
  %v722 = vmul.f32 %v700, %v678
  %v723 = vmul.f32 %v701, %v679
  %v724 = vmul.f32 %v702, %v680
  %v725 = vmul.f32 %v703, %v681
  %v726 = vmul.f32 %v704, %v682
  %v727 = vmul.f32 %v705, %v683
  %v728 = vmul.f32 %v706, %v684
  %v729 = vmul.f32 %v707, %v685
  %v730 = vmul.f32 %v708, %v686
  %v731 = vmul.f32 %v709, %v687
  %v732 = vmul.f32 %v710, %v688
  %v733 = vmul.f32 %v711, %v689
  %v734 = vmul.f32 %v712, %v690
  %v735 = vmul.f32 %v713, %v691
  %v736 = vmul.f32 %v714, %v692
  %v737 = vmul.f32 %v715, %v693
  %v738 = vmul.f32 %v716, %v694
  %v739 = vmul.f32 %v717, %v695
  %v740 = vmul.f32 %v718, %v696
  %v741 = vmul.f32 %v719, %v697
  %v742 = vmul.f32 %v720, %v698
  %v743 = vmul.f32 %v721, %v699
  %744 = vmatprep.subr.mxu0 0.0
  %745 = vmatpush1.msra.mxu0 %v437
  %746 = vmatprep.subr.mxu0 0.0
  %747 = vmatpush1.msra.mxu0 %v438
  %748 = vmatprep.subr.mxu0 0.0
  %749 = vmatpush1.msra.mxu0 %v439
  %750 = vmatprep.subr.mxu0 0.0
  %751 = vmatpush1.msra.mxu0 %v440
  %752 = vmatprep.subr.mxu0 0.0
  %753 = vmatpush1.msra.mxu0 %v441
  %754 = vmatprep.subr.mxu0 0.0
  %755 = vmatpush1.msra.mxu0 %v442
  %756 = vmatprep.subr.mxu0 0.0
  %757 = vmatpush1.msra.mxu0 %v443
  %758 = vmatprep.subr.mxu0 0.0
  %759 = vmatpush1.msra.mxu0 %v444
  %760 = vmatprep.subr.mxu0 0.0
  %761 = vmatpush1.msra.mxu0 %v445
  %762 = vmatprep.subr.mxu0 0.0
  %763 = vmatpush1.msra.mxu0 %v446
  %764 = vmatprep.subr.mxu0 0.0
  %765 = vmatpush1.msra.mxu0 %v447
  %766 = vmatprep.subr.mxu0 0.0
  %767 = vmatpush1.msra.mxu0 %v448
  %768 = vmatprep.subr.mxu0 0.0
  %769 = vmatpush1.msra.mxu0 %v449
  %770 = vmatprep.subr.mxu0 0.0
  %771 = vmatpush1.msra.mxu0 %v450
  %772 = vmatprep.subr.mxu0 0.0
  %773 = vmatpush1.msra.mxu0 %v451
  %774 = vmatprep.subr.mxu0 0.0
  %775 = vmatpush1.msra.mxu0 %v452
  %776 = vmatprep.subr.mxu0 0.0
  %777 = vmatpush1.msra.mxu0 0.0
  %778 = vmatprep.subr.mxu0 0.0
  %779 = vmatpush1.msra.mxu0 0.0
  %780 = vmatprep.subr.mxu0 0.0
  %781 = vmatpush1.msra.mxu0 0.0
  %782 = vmatprep.subr.mxu0 0.0
  %783 = vmatpush1.msra.mxu0 0.0
  %784 = vmatprep.subr.mxu0 0.0
  %785 = vmatpush1.msra.mxu0 0.0
  %786 = vmatprep.subr.mxu0 0.0
  %787 = vmatpush1.msra.mxu0 0.0
  %788 = vmatprep.subr.mxu0 0.0
  %789 = vmatpush1.msra.mxu0 0.0
  %790 = vmatprep.subr.mxu0 0.0
  %791 = vmatpush1.msra.mxu0 0.0
  %792 = vmatprep.subr.mxu0 0.0
  %793 = vmatpush1.msra.mxu0 0.0
  %794 = vmatprep.subr.mxu0 0.0
  %795 = vmatpush1.msra.mxu0 0.0
  %796 = vmatprep.subr.mxu0 0.0
  %797 = vmatpush1.msra.mxu0 0.0
  %798 = vmatprep.subr.mxu0 0.0
  %799 = vmatpush1.msra.mxu0 0.0
  %800 = vmatprep.subr.mxu0 0.0
  %801 = vmatpush1.msra.mxu0 0.0
  %802 = vmatprep.subr.mxu0 0.0
  %803 = vmatpush1.msra.mxu0 0.0
  %804 = vmatprep.subr.mxu0 0.0
  %805 = vmatpush1.msra.mxu0 0.0
  %806 = vmatprep.subr.mxu0 0.0
  %807 = vmatpush1.msra.mxu0 0.0
  %808 = vmatprep.mubr.f32.mxu0 0.0
  %809 = vmatmul.mubr.f32.gmra.mrb[0].mxu0 %v722
  %v810 = vpop.f32.mrb[0].mxu0
  %v811 = vadd.f32 0.0, %v810
  %v812 = vpop.f32.mrb[0].mxu0
  %813 = vmatprep.mubr.f32.mxu0 0.0
  %814 = vmatmul.mubr.f32.gmra.mrb[0].mxu0 %v723
  %v815 = vpop.f32.mrb[0].mxu0
  %v816 = vadd.f32 0.0, %v815
  %v817 = vpop.f32.mrb[0].mxu0
  %818 = vmatprep.mubr.f32.mxu0 0.0
  %819 = vmatmul.mubr.f32.gmra.mrb[0].mxu0 %v724
  %v820 = vpop.f32.mrb[0].mxu0
  %v821 = vadd.f32 0.0, %v820
  %v822 = vpop.f32.mrb[0].mxu0
  %823 = vmatprep.mubr.f32.mxu0 0.0
  %824 = vmatmul.mubr.f32.gmra.mrb[0].mxu0 %v725
  %v825 = vpop.f32.mrb[0].mxu0
  %v826 = vadd.f32 0.0, %v825
  %v827 = vpop.f32.mrb[0].mxu0
  %828 = vmatprep.mubr.f32.mxu0 0.0
  %829 = vmatmul.mubr.f32.gmra.mrb[0].mxu0 %v726
  %v830 = vpop.f32.mrb[0].mxu0
  %v831 = vadd.f32 0.0, %v830
  %v832 = vpop.f32.mrb[0].mxu0
  %833 = vmatprep.mubr.f32.mxu0 0.0
  %834 = vmatmul.mubr.f32.gmra.mrb[0].mxu0 %v727
  %v835 = vpop.f32.mrb[0].mxu0
  %v836 = vadd.f32 0.0, %v835
  %v837 = vpop.f32.mrb[0].mxu0
  %838 = vmatprep.mubr.f32.mxu0 0.0
  %839 = vmatmul.mubr.f32.gmra.mrb[0].mxu0 %v728
  %v840 = vpop.f32.mrb[0].mxu0
  %v841 = vadd.f32 0.0, %v840
  %v842 = vpop.f32.mrb[0].mxu0
  %843 = vmatprep.mubr.f32.mxu0 0.0
  %844 = vmatmul.mubr.f32.gmra.mrb[0].mxu0 %v729
  %v845 = vpop.f32.mrb[0].mxu0
  %v846 = vadd.f32 0.0, %v845
  %v847 = vpop.f32.mrb[0].mxu0
  %848 = vmatprep.mubr.f32.mxu0 0.0
  %849 = vmatmul.mubr.f32.gmra.mrb[0].mxu0 %v730
  %v850 = vpop.f32.mrb[0].mxu0
  %v851 = vadd.f32 0.0, %v850
  %v852 = vpop.f32.mrb[0].mxu0
  %853 = vmatprep.mubr.f32.mxu0 0.0
  %854 = vmatmul.mubr.f32.gmra.mrb[0].mxu0 %v731
  %v855 = vpop.f32.mrb[0].mxu0
  %v856 = vadd.f32 0.0, %v855
  %v857 = vpop.f32.mrb[0].mxu0
  %858 = vmatprep.mubr.f32.mxu0 0.0
  %859 = vmatmul.mubr.f32.gmra.mrb[0].mxu0 %v732
  %v860 = vpop.f32.mrb[0].mxu0
  %v861 = vadd.f32 0.0, %v860
  %v862 = vpop.f32.mrb[0].mxu0
  %863 = vmatprep.mubr.f32.mxu0 0.0
  %864 = vmatmul.mubr.f32.gmra.mrb[0].mxu0 %v733
  %v865 = vpop.f32.mrb[0].mxu0
  %v866 = vadd.f32 0.0, %v865
  %v867 = vpop.f32.mrb[0].mxu0
  %868 = vmatprep.mubr.f32.mxu0 0.0
  %869 = vmatmul.mubr.f32.gmra.mrb[0].mxu0 %v734
  %v870 = vpop.f32.mrb[0].mxu0
  %v871 = vadd.f32 0.0, %v870
  %v872 = vpop.f32.mrb[0].mxu0
  %873 = vmatprep.mubr.f32.mxu0 0.0
  %874 = vmatmul.mubr.f32.gmra.mrb[0].mxu0 %v735
  %v875 = vpop.f32.mrb[0].mxu0
  %v876 = vadd.f32 0.0, %v875
  %v877 = vpop.f32.mrb[0].mxu0
  %878 = vmatprep.mubr.f32.mxu0 0.0
  %879 = vmatmul.mubr.f32.gmra.mrb[0].mxu0 %v736
  %v880 = vpop.f32.mrb[0].mxu0
  %v881 = vadd.f32 0.0, %v880
  %v882 = vpop.f32.mrb[0].mxu0
  %883 = vmatprep.mubr.f32.mxu0 0.0
  %884 = vmatmul.mubr.f32.gmra.mrb[0].mxu0 %v737
  %v885 = vpop.f32.mrb[0].mxu0
  %v886 = vadd.f32 0.0, %v885
  %v887 = vpop.f32.mrb[0].mxu0
  %888 = vmatprep.mubr.f32.mxu0 0.0
  %889 = vmatmul.mubr.f32.gmra.mrb[0].mxu0 %v738
  %v890 = vpop.f32.mrb[0].mxu0
  %v891 = vadd.f32 0.0, %v890
  %v892 = vpop.f32.mrb[0].mxu0
  %893 = vmatprep.mubr.f32.mxu0 0.0
  %894 = vmatmul.mubr.f32.gmra.mrb[0].mxu0 %v739
  %v895 = vpop.f32.mrb[0].mxu0
  %v896 = vadd.f32 0.0, %v895
  %v897 = vpop.f32.mrb[0].mxu0
  %898 = vmatprep.mubr.f32.mxu0 0.0
  %899 = vmatmul.mubr.f32.gmra.mrb[0].mxu0 %v740
  %v900 = vpop.f32.mrb[0].mxu0
  %v901 = vadd.f32 0.0, %v900
  %v902 = vpop.f32.mrb[0].mxu0
  %903 = vmatprep.mubr.f32.mxu0 0.0
  %904 = vmatmul.mubr.f32.gmra.mrb[0].mxu0 %v741
  %v905 = vpop.f32.mrb[0].mxu0
  %v906 = vadd.f32 0.0, %v905
  %v907 = vpop.f32.mrb[0].mxu0
  %908 = vmatprep.mubr.f32.mxu0 0.0
  %909 = vmatmul.mubr.f32.gmra.mrb[0].mxu0 %v742
  %v910 = vpop.f32.mrb[0].mxu0
  %v911 = vadd.f32 0.0, %v910
  %v912 = vpop.f32.mrb[0].mxu0
  %913 = vmatprep.mubr.f32.mxu0 0.0
  %914 = vmatmul.mubr.f32.gmra.mrb[0].mxu0 %v743
  %v915 = vpop.f32.mrb[0].mxu0
  %v916 = vadd.f32 0.0, %v915
  %v917 = vpop.f32.mrb[0].mxu0
  %918 = vdwg.mxu0
  %v919 = vadd.f32 %v811, %v816
  %v920 = vadd.f32 %v919, %v821
  %v921 = vadd.f32 %v920, %v826
  %v922 = vadd.f32 %v921, %v831
  %v923 = vadd.f32 %v922, %v836
  %v924 = vadd.f32 %v923, %v841
  %v925 = vadd.f32 %v924, %v846
  %v926 = vadd.f32 %v925, %v851
  %v927 = vadd.f32 %v926, %v856
  %v928 = vadd.f32 %v927, %v861
  %v929 = vadd.f32 %v928, %v866
  %v930 = vadd.f32 %v929, %v871
  %v931 = vadd.f32 %v930, %v876
  %v932 = vadd.f32 %v931, %v881
  %v933 = vadd.f32 %v932, %v886
  %v934 = vadd.f32 %v933, %v891
  %v935 = vadd.f32 %v934, %v896
  %v936 = vadd.f32 %v935, %v901
  %v937 = vadd.f32 %v936, %v906
  %v938 = vadd.f32 %v937, %v911
  %v939 = vadd.f32 %v938, %v916
  %v940 = vrot.slane %v939, 4
  %v941 = vadd.f32 %v939, %v940
  %v942 = vrot.slane %v941, 2
  %v943 = vadd.f32 %v941, %v942
  %v944 = vrot.slane %v943, 1
  %v945 = vadd.f32 %v943, %v944
  %v946 = vmul.f32 %v945, 0.001953125
  %v947 = vadd.f32 %v946, 1e-05
  %v948 = vrsqrt.pop %v947
  %v949 = vmul.f32 %v678, %v948
  %v950 = vmul.f32 %v679, %v948
  %v951 = vmul.f32 %v680, %v948
  %v952 = vmul.f32 %v681, %v948
  %v953 = vmul.f32 %v682, %v948
  %v954 = vmul.f32 %v683, %v948
  %v955 = vmul.f32 %v684, %v948
  %v956 = vmul.f32 %v685, %v948
  %v957 = vmul.f32 %v686, %v948
  %v958 = vmul.f32 %v687, %v948
  %v959 = vmul.f32 %v688, %v948
  %v960 = vmul.f32 %v689, %v948
  %v961 = vmul.f32 %v690, %v948
  %v962 = vmul.f32 %v691, %v948
  %v963 = vmul.f32 %v692, %v948
  %v964 = vmul.f32 %v693, %v948
  %v965 = vmul.f32 %v694, %v948
  %v966 = vmul.f32 %v695, %v948
  %v967 = vmul.f32 %v696, %v948
  %v968 = vmul.f32 %v697, %v948
  %v969 = vmul.f32 %v698, %v948
  %v970 = vmul.f32 %v699, %v948
  %v971 = vld [vmem:[%s5] sm:$0x1]
  %v973 = vlaneseq
  %v974 = vshrl.u32 %v973, 7
  %v975 = vsub.s32 0, %v974
  %v976 = vrot.slane %v971, %v975
  %v978 = vmul.f32 %v949, %v976
  %v979 = vmul.f32 %v950, %v976
  %v980 = vmul.f32 %v951, %v976
  %v981 = vmul.f32 %v952, %v976
  %v982 = vmul.f32 %v953, %v976
  %v983 = vmul.f32 %v954, %v976
  %v984 = vmul.f32 %v955, %v976
  %v985 = vmul.f32 %v956, %v976
  %v986 = vmul.f32 %v957, %v976
  %v987 = vmul.f32 %v958, %v976
  %v988 = vmul.f32 %v959, %v976
  %v989 = vmul.f32 %v960, %v976
  %v990 = vmul.f32 %v961, %v976
  %v991 = vmul.f32 %v962, %v976
  %v992 = vmul.f32 %v963, %v976
  %v993 = vmul.f32 %v964, %v976
  %v994 = vmul.f32 %v965, %v976
  %v995 = vmul.f32 %v966, %v976
  %v996 = vmul.f32 %v967, %v976
  %v997 = vmul.f32 %v968, %v976
  %v998 = vmul.f32 %v969, %v976
  %v999 = vmul.f32 %v970, %v976
  %v1000 = vld [vmem:[%s6] sm:$0x1]
  %v1002 = vlaneseq
  %v1003 = vshrl.u32 %v1002, 7
  %v1004 = vsub.s32 0, %v1003
  %v1005 = vrot.slane %v1000, %v1004
  %v1007 = vadd.f32 %v978, %v1005
  %v1008 = vadd.f32 %v979, %v1005
  %v1009 = vadd.f32 %v980, %v1005
  %v1010 = vadd.f32 %v981, %v1005
  %v1011 = vadd.f32 %v982, %v1005
  %v1012 = vadd.f32 %v983, %v1005
  %v1013 = vadd.f32 %v984, %v1005
  %v1014 = vadd.f32 %v985, %v1005
  %v1015 = vadd.f32 %v986, %v1005
  %v1016 = vadd.f32 %v987, %v1005
  %v1017 = vadd.f32 %v988, %v1005
  %v1018 = vadd.f32 %v989, %v1005
  %v1019 = vadd.f32 %v990, %v1005
  %v1020 = vadd.f32 %v991, %v1005
  %v1021 = vadd.f32 %v992, %v1005
  %v1022 = vadd.f32 %v993, %v1005
  %v1023 = vadd.f32 %v994, %v1005
  %v1024 = vadd.f32 %v995, %v1005
  %v1025 = vadd.f32 %v996, %v1005
  %v1026 = vadd.f32 %v997, %v1005
  %v1027 = vadd.f32 %v998, %v1005
  %v1028 = vadd.f32 %v999, %v1005
  %vm1029 = vcmp.gt.f32.partialorder %v1007, 0.0
  %vm1030 = vcmp.gt.f32.partialorder %v1008, 0.0
  %vm1031 = vcmp.gt.f32.partialorder %v1009, 0.0
  %vm1032 = vcmp.gt.f32.partialorder %v1010, 0.0
  %vm1033 = vcmp.gt.f32.partialorder %v1011, 0.0
  %vm1034 = vcmp.gt.f32.partialorder %v1012, 0.0
  %vm1035 = vcmp.gt.f32.partialorder %v1013, 0.0
  %vm1036 = vcmp.gt.f32.partialorder %v1014, 0.0
  %vm1037 = vcmp.gt.f32.partialorder %v1015, 0.0
  %vm1038 = vcmp.gt.f32.partialorder %v1016, 0.0
  %vm1039 = vcmp.gt.f32.partialorder %v1017, 0.0
  %vm1040 = vcmp.gt.f32.partialorder %v1018, 0.0
  %vm1041 = vcmp.gt.f32.partialorder %v1019, 0.0
  %vm1042 = vcmp.gt.f32.partialorder %v1020, 0.0
  %vm1043 = vcmp.gt.f32.partialorder %v1021, 0.0
  %vm1044 = vcmp.gt.f32.partialorder %v1022, 0.0
  %vm1045 = vcmp.gt.f32.partialorder %v1023, 0.0
  %vm1046 = vcmp.gt.f32.partialorder %v1024, 0.0
  %vm1047 = vcmp.gt.f32.partialorder %v1025, 0.0
  %vm1048 = vcmp.gt.f32.partialorder %v1026, 0.0
  %vm1049 = vcmp.gt.f32.partialorder %v1027, 0.0
  %vm1050 = vcmp.gt.f32.partialorder %v1028, 0.0
  %v1051 = vmul.f32 %v1007, 0.2
  %v1052 = vmul.f32 %v1008, 0.2
  %v1053 = vmul.f32 %v1009, 0.2
  %v1054 = vmul.f32 %v1010, 0.2
  %v1055 = vmul.f32 %v1011, 0.2
  %v1056 = vmul.f32 %v1012, 0.2
  %v1057 = vmul.f32 %v1013, 0.2
  %v1058 = vmul.f32 %v1014, 0.2
  %v1059 = vmul.f32 %v1015, 0.2
  %v1060 = vmul.f32 %v1016, 0.2
  %v1061 = vmul.f32 %v1017, 0.2
  %v1062 = vmul.f32 %v1018, 0.2
  %v1063 = vmul.f32 %v1019, 0.2
  %v1064 = vmul.f32 %v1020, 0.2
  %v1065 = vmul.f32 %v1021, 0.2
  %v1066 = vmul.f32 %v1022, 0.2
  %v1067 = vmul.f32 %v1023, 0.2
  %v1068 = vmul.f32 %v1024, 0.2
  %v1069 = vmul.f32 %v1025, 0.2
  %v1070 = vmul.f32 %v1026, 0.2
  %v1071 = vmul.f32 %v1027, 0.2
  %v1072 = vmul.f32 %v1028, 0.2
  %v1073 = vsel %vm1029, %v1007, %v1051
  %v1074 = vsel %vm1030, %v1008, %v1052
  %v1075 = vsel %vm1031, %v1009, %v1053
  %v1076 = vsel %vm1032, %v1010, %v1054
  %v1077 = vsel %vm1033, %v1011, %v1055
  %v1078 = vsel %vm1034, %v1012, %v1056
  %v1079 = vsel %vm1035, %v1013, %v1057
  %v1080 = vsel %vm1036, %v1014, %v1058
  %v1081 = vsel %vm1037, %v1015, %v1059
  %v1082 = vsel %vm1038, %v1016, %v1060
  %v1083 = vsel %vm1039, %v1017, %v1061
  %v1084 = vsel %vm1040, %v1018, %v1062
  %v1085 = vsel %vm1041, %v1019, %v1063
  %v1086 = vsel %vm1042, %v1020, %v1064
  %v1087 = vsel %vm1043, %v1021, %v1065
  %v1088 = vsel %vm1044, %v1022, %v1066
  %v1089 = vsel %vm1045, %v1023, %v1067
  %v1090 = vsel %vm1046, %v1024, %v1068
  %v1091 = vsel %vm1047, %v1025, %v1069
  %v1092 = vsel %vm1048, %v1026, %v1070
  %v1093 = vsel %vm1049, %v1027, %v1071
  %v1094 = vsel %vm1050, %v1028, %v1072
  %v1095 = vpack.c.bf16 %v1074, %v1073
  %v1096 = vpack.c.bf16 %v1076, %v1075
  %v1097 = vpack.c.bf16 %v1078, %v1077
  %v1098 = vpack.c.bf16 %v1080, %v1079
  %v1099 = vpack.c.bf16 %v1082, %v1081
  %v1100 = vpack.c.bf16 %v1084, %v1083
  %v1101 = vpack.c.bf16 %v1086, %v1085
  %v1102 = vpack.c.bf16 %v1088, %v1087
  %v1103 = vpack.c.bf16 %v1090, %v1089
  %v1104 = vpack.c.bf16 %v1092, %v1091
  %v1105 = vpack.c.bf16 %v1094, %v1093
  %v1117 = vunpack.c.l.b16 %v1095
  %v1118 = vunpack.c.h.b16 %v1095
  %v1119 = vunpack.c.l.b16 %v1096
  %v1120 = vunpack.c.h.b16 %v1096
  %v1121 = vunpack.c.l.b16 %v1097
  %v1122 = vunpack.c.h.b16 %v1097
  %v1123 = vunpack.c.l.b16 %v1098
  %v1124 = vunpack.c.h.b16 %v1098
  %v1125 = vunpack.c.l.b16 %v1099
  %v1126 = vunpack.c.h.b16 %v1099
  %v1127 = vunpack.c.l.b16 %v1100
  %v1128 = vunpack.c.h.b16 %v1100
  %v1129 = vunpack.c.l.b16 %v1101
  %v1130 = vunpack.c.h.b16 %v1101
  %v1131 = vunpack.c.l.b16 %v1102
  %v1132 = vunpack.c.h.b16 %v1102
  %v1133 = vunpack.c.l.b16 %v1103
  %v1134 = vunpack.c.h.b16 %v1103
  %v1135 = vunpack.c.l.b16 %v1104
  %v1136 = vunpack.c.h.b16 %v1104
  %v1137 = vunpack.c.l.b16 %v1105
  %v1138 = vunpack.c.h.b16 %v1105
  %v1139 = vpack.c.b16 %v1117, %v1117
  %v1140 = vpack.c.b16 %v1118, %v1118
  %v1141 = vpack.c.b16 %v1119, %v1119
  %v1142 = vpack.c.b16 %v1120, %v1120
  %v1143 = vpack.c.b16 %v1121, %v1121
  %v1144 = vpack.c.b16 %v1122, %v1122
  %v1145 = vpack.c.b16 %v1123, %v1123
  %v1146 = vpack.c.b16 %v1124, %v1124
  %v1147 = vpack.c.b16 %v1125, %v1125
  %v1148 = vpack.c.b16 %v1126, %v1126
  %v1149 = vpack.c.b16 %v1127, %v1127
  %v1150 = vpack.c.b16 %v1128, %v1128
  %v1151 = vpack.c.b16 %v1129, %v1129
  %v1152 = vpack.c.b16 %v1130, %v1130
  %v1153 = vpack.c.b16 %v1131, %v1131
  %v1154 = vpack.c.b16 %v1132, %v1132
  %v1155 = vpack.c.b16 %v1133, %v1133
  %v1156 = vpack.c.b16 %v1134, %v1134
  %v1157 = vpack.c.b16 %v1135, %v1135
  %v1158 = vpack.c.b16 %v1136, %v1136
  %v1159 = vpack.c.b16 %v1137, %v1137
  %v1160 = vpack.c.b16 %v1138, %v1138
  %1183 = vst [vmem:[%s7] sm:$0xf] %v1139
  %1184 = vst [vmem:[%s7 + $0x4] sm:$0xf] %v1140
  %1185 = vst [vmem:[%s7 + $0x8] sm:$0xf] %v1141
  %1186 = vst [vmem:[%s7 + $0xc] sm:$0xf] %v1142
  %1187 = vst [vmem:[%s7 + $0x10] sm:$0xf] %v1143
  %1188 = vst [vmem:[%s7 + $0x14] sm:$0xf] %v1144
  %1189 = vst [vmem:[%s7 + $0x18] sm:$0xf] %v1145
  %1190 = vst [vmem:[%s7 + $0x1c] sm:$0xf] %v1146
  %1191 = vst [vmem:[%s7 + $0x20] sm:$0xf] %v1147
  %1192 = vst [vmem:[%s7 + $0x24] sm:$0xf] %v1148
  %1193 = vst [vmem:[%s7 + $0x28] sm:$0xf] %v1149
  %1194 = vst [vmem:[%s7 + $0x2c] sm:$0xf] %v1150
  %1195 = vst [vmem:[%s7 + $0x30] sm:$0xf] %v1151
  %1196 = vst [vmem:[%s7 + $0x34] sm:$0xf] %v1152
  %1197 = vst [vmem:[%s7 + $0x38] sm:$0xf] %v1153
  %1198 = vst [vmem:[%s7 + $0x3c] sm:$0xf] %v1154
  %1199 = vst [vmem:[%s7 + $0x40] sm:$0xf] %v1155
  %1200 = vst [vmem:[%s7 + $0x44] sm:$0xf] %v1156
  %1201 = vst [vmem:[%s7 + $0x48] sm:$0xf] %v1157
  %1202 = vst [vmem:[%s7 + $0x4c] sm:$0xf] %v1158
  %1203 = vst [vmem:[%s7 + $0x50] sm:$0xf] %v1159
  %1204 = vst [vmem:[%s7 + $0x54] sm:$0xf] %v1160
  // Predicated region
  $region30: #{generator_forward.8} parent=0 // pred_check
    _
  $region31: #{generator_forward.8} parent=0 // pred_check_branch
    %1206 = sbr.rel (0) target = $region33
  $region32: #{generator_forward.8} parent=0 // pred_region
    _
  $region33: #{generator_forward.8} parent=0 // pred_fallthru
    _
  // Predicated region
  $region34: #{generator_forward.8} parent=0 // pred_check
    _
  $region35: #{generator_forward.8} parent=0 // pred_check_branch
    %1208 = sbr.rel (0) target = $region37
  $region36: #{generator_forward.8} parent=0 // pred_region
    _
  $region37: #{generator_forward.8} parent=0 // pred_fallthru
    _

// kernel: generator_forward.9
$region0: #{generator_forward.9}
  #allocation0 [shape = 'u32[]', space=smem, size = 0x4, offset = 0x4, fixed_abs, tag = 'smem constant byte address 0x4 - core index']
  #allocation1 [shape = 'u32[144,128]{1,0:T(1,128)}', space=vmem, size = 0x12000, scoped, tag = 'internal scratch']
  %s0 = inlined_call_operand.vmem [shape: bf16[592,128], index: 0, kind: input, shape index: {}]
  %s1 = inlined_call_operand.vmem [shape: bf16[128,128], index: 1, kind: input, shape index: {}]
  %s2 = inlined_call_operand.vmem [shape: f32[1,128], index: 2, kind: input, shape index: {}]
  %s3 = inlined_call_operand.vmem [shape: f32[592,128], index: 3, kind: output, shape index: {}]
  %s4 = sld [smem:[#allocation0]]
  $region22: #{generator_forward.9} parent=0
    _
  %s6 = ssub.s32 1, %s4
  %s7 = scalar_select 0, %s6, %s4
  // Predicated region
  $region2: #{generator_forward.9} parent=0 // pred_check
    _
  $region3: #{generator_forward.9} parent=0 // pred_check_branch
    %9 = sbr.rel (0) target = $region5
  $region4: #{generator_forward.9} parent=0 // pred_region
    _
  $region5: #{generator_forward.9} parent=0 // pred_fallthru
    _
  // Predicated region
  $region6: #{generator_forward.9} parent=0 // pred_check
    _
  $region7: #{generator_forward.9} parent=0 // pred_check_branch
    %11 = sbr.rel (0) target = $region9
  $region8: #{generator_forward.9} parent=0 // pred_region
    _
  $region9: #{generator_forward.9} parent=0 // pred_fallthru
    _
  // Predicated region
  $region10: #{generator_forward.9} parent=0 // pred_check
    _
  $region11: #{generator_forward.9} parent=0 // pred_check_branch
    %13 = sbr.rel (0) target = $region13
  $region12: #{generator_forward.9} parent=0 // pred_region
    _
  $region13: #{generator_forward.9} parent=0 // pred_fallthru
    _
  %v15 = vld [vmem:[%s0] sm:$0xf]
  %v16 = vld [vmem:[%s0 + $0x4] sm:$0xf]
  %v17 = vld [vmem:[%s0 + $0x8] sm:$0xf]
  %v18 = vld [vmem:[%s0 + $0xc] sm:$0xf]
  %v19 = vld [vmem:[%s0 + $0x10] sm:$0xf]
  %v20 = vld [vmem:[%s0 + $0x14] sm:$0xf]
  %v21 = vld [vmem:[%s0 + $0x18] sm:$0xf]
  %v22 = vld [vmem:[%s0 + $0x1c] sm:$0xf]
  %v23 = vld [vmem:[%s0 + $0x20] sm:$0xf]
  %v24 = vld [vmem:[%s0 + $0x24] sm:$0xf]
  %v25 = vld [vmem:[%s0 + $0x28] sm:$0xf]
  %v26 = vld [vmem:[%s0 + $0x2c] sm:$0xf]
  %v27 = vld [vmem:[%s0 + $0x30] sm:$0xf]
  %v28 = vld [vmem:[%s0 + $0x34] sm:$0xf]
  %v29 = vld [vmem:[%s0 + $0x38] sm:$0xf]
  %v30 = vld [vmem:[%s0 + $0x3c] sm:$0xf]
  %v31 = vld [vmem:[%s0 + $0x40] sm:$0xf]
  %v32 = vld [vmem:[%s0 + $0x44] sm:$0xf]
  %v33 = vld [vmem:[%s0 + $0x48] sm:$0xf]
  %v34 = vld [vmem:[%s0 + $0x4c] sm:$0xf]
  %v35 = vld [vmem:[%s0 + $0x50] sm:$0xf]
  %v36 = vld [vmem:[%s0 + $0x54] sm:$0xf]
  %v37 = vld [vmem:[%s0 + $0x58] sm:$0xf]
  %v38 = vld [vmem:[%s0 + $0x5c] sm:$0xf]
  %v39 = vld [vmem:[%s0 + $0x60] sm:$0xf]
  %v40 = vld [vmem:[%s0 + $0x64] sm:$0xf]
  %v41 = vld [vmem:[%s0 + $0x68] sm:$0xf]
  %v42 = vld [vmem:[%s0 + $0x6c] sm:$0xf]
  %v43 = vld [vmem:[%s0 + $0x70] sm:$0xf]
  %v44 = vld [vmem:[%s0 + $0x74] sm:$0xf]
  %v45 = vld [vmem:[%s0 + $0x78] sm:$0xf]
  %v46 = vld [vmem:[%s0 + $0x7c] sm:$0xf]
  %v47 = vld [vmem:[%s0 + $0x80] sm:$0xf]
  %v48 = vld [vmem:[%s0 + $0x84] sm:$0xf]
  %v49 = vld [vmem:[%s0 + $0x88] sm:$0xf]
  %v50 = vld [vmem:[%s0 + $0x8c] sm:$0xf]
  %v51 = vld [vmem:[%s0 + $0x90] sm:$0xf]
  %v52 = vld [vmem:[%s0 + $0x94] sm:$0xf]
  %v53 = vld [vmem:[%s0 + $0x98] sm:$0xf]
  %v54 = vld [vmem:[%s0 + $0x9c] sm:$0xf]
  %v55 = vld [vmem:[%s0 + $0xa0] sm:$0xf]
  %v56 = vld [vmem:[%s0 + $0xa4] sm:$0xf]
  %v57 = vld [vmem:[%s0 + $0xa8] sm:$0xf]
  %v58 = vld [vmem:[%s0 + $0xac] sm:$0xf]
  %v59 = vld [vmem:[%s0 + $0xb0] sm:$0xf]
  %v60 = vld [vmem:[%s0 + $0xb4] sm:$0xf]
  %v61 = vld [vmem:[%s0 + $0xb8] sm:$0xf]
  %v62 = vld [vmem:[%s0 + $0xbc] sm:$0xf]
  %v63 = vld [vmem:[%s0 + $0xc0] sm:$0xf]
  %v64 = vld [vmem:[%s0 + $0xc4] sm:$0xf]
  %v65 = vld [vmem:[%s0 + $0xc8] sm:$0xf]
  %v66 = vld [vmem:[%s0 + $0xcc] sm:$0xf]
  %v67 = vld [vmem:[%s0 + $0xd0] sm:$0xf]
  %v68 = vld [vmem:[%s0 + $0xd4] sm:$0xf]
  %v69 = vld [vmem:[%s0 + $0xd8] sm:$0xf]
  %v70 = vld [vmem:[%s0 + $0xdc] sm:$0xf]
  %v71 = vld [vmem:[%s0 + $0xe0] sm:$0xf]
  %v72 = vld [vmem:[%s0 + $0xe4] sm:$0xf]
  %v73 = vld [vmem:[%s0 + $0xe8] sm:$0xf]
  %v74 = vld [vmem:[%s0 + $0xec] sm:$0xf]
  %v75 = vld [vmem:[%s0 + $0xf0] sm:$0xf]
  %v76 = vld [vmem:[%s0 + $0xf4] sm:$0xf]
  %v77 = vld [vmem:[%s0 + $0xf8] sm:$0xf]
  %v78 = vld [vmem:[%s0 + $0xfc] sm:$0xf]
  %v79 = vld [vmem:[%s0 + $0x100] sm:$0xf]
  %v80 = vld [vmem:[%s0 + $0x104] sm:$0xf]
  %v81 = vld [vmem:[%s0 + $0x108] sm:$0xf]
  %v82 = vld [vmem:[%s0 + $0x10c] sm:$0xf]
  %v83 = vld [vmem:[%s0 + $0x110] sm:$0xf]
  %v84 = vld [vmem:[%s0 + $0x114] sm:$0xf]
  %v85 = vld [vmem:[%s0 + $0x118] sm:$0xf]
  %v86 = vld [vmem:[%s0 + $0x11c] sm:$0xf]
  %v87 = vld [vmem:[%s0 + $0x120] sm:$0xf]
  %v88 = vld [vmem:[%s0 + $0x124] sm:$0xf]
  %v89 = vld [vmem:[%s1] sm:$0xf]
  %v90 = vld [vmem:[%s1 + $0x4] sm:$0xf]
  %v91 = vld [vmem:[%s1 + $0x8] sm:$0xf]
  %v92 = vld [vmem:[%s1 + $0xc] sm:$0xf]
  %v93 = vld [vmem:[%s1 + $0x10] sm:$0xf]
  %v94 = vld [vmem:[%s1 + $0x14] sm:$0xf]
  %v95 = vld [vmem:[%s1 + $0x18] sm:$0xf]
  %v96 = vld [vmem:[%s1 + $0x1c] sm:$0xf]
  %v97 = vld [vmem:[%s1 + $0x20] sm:$0xf]
  %v98 = vld [vmem:[%s1 + $0x24] sm:$0xf]
  %v99 = vld [vmem:[%s1 + $0x28] sm:$0xf]
  %v100 = vld [vmem:[%s1 + $0x2c] sm:$0xf]
  %v101 = vld [vmem:[%s1 + $0x30] sm:$0xf]
  %v102 = vld [vmem:[%s1 + $0x34] sm:$0xf]
  %v103 = vld [vmem:[%s1 + $0x38] sm:$0xf]
  %v104 = vld [vmem:[%s1 + $0x3c] sm:$0xf]
  %v105 = vld [vmem:[%s2] sm:$0x1]
  %v107 = vlaneseq
  %v108 = vshrl.u32 %v107, 7
  %v109 = vsub.s32 0, %v108
  %v110 = vrot.slane %v105, %v109
  %v186 = vunpack.c.l.b16 %v15
  %v187 = vunpack.c.l.b16 %v16
  %v188 = vunpack.c.l.b16 %v17
  %v189 = vunpack.c.l.b16 %v18
  %v190 = vunpack.c.l.b16 %v19
  %v191 = vunpack.c.l.b16 %v20
  %v192 = vunpack.c.l.b16 %v21
  %v193 = vunpack.c.l.b16 %v22
  %v194 = vunpack.c.l.b16 %v23
  %v195 = vunpack.c.l.b16 %v24
  %v196 = vunpack.c.l.b16 %v25
  %v197 = vunpack.c.l.b16 %v26
  %v198 = vunpack.c.l.b16 %v27
  %v199 = vunpack.c.l.b16 %v28
  %v200 = vunpack.c.l.b16 %v29
  %v201 = vunpack.c.l.b16 %v30
  %v202 = vunpack.c.l.b16 %v31
  %v203 = vunpack.c.l.b16 %v32
  %v204 = vunpack.c.l.b16 %v33
  %v205 = vunpack.c.l.b16 %v34
  %v206 = vunpack.c.l.b16 %v35
  %v207 = vunpack.c.l.b16 %v36
  %v208 = vunpack.c.l.b16 %v37
  %v209 = vunpack.c.l.b16 %v38
  %v210 = vunpack.c.l.b16 %v39
  %v211 = vunpack.c.l.b16 %v40
  %v212 = vunpack.c.l.b16 %v41
  %v213 = vunpack.c.l.b16 %v42
  %v214 = vunpack.c.l.b16 %v43
  %v215 = vunpack.c.l.b16 %v44
  %v216 = vunpack.c.l.b16 %v45
  %v217 = vunpack.c.l.b16 %v46
  %v218 = vunpack.c.l.b16 %v47
  %v219 = vunpack.c.l.b16 %v48
  %v220 = vunpack.c.l.b16 %v49
  %v221 = vunpack.c.l.b16 %v50
  %v222 = vunpack.c.l.b16 %v51
  %v223 = vunpack.c.l.b16 %v52
  %v224 = vunpack.c.l.b16 %v53
  %v225 = vunpack.c.l.b16 %v54
  %v226 = vunpack.c.l.b16 %v55
  %v227 = vunpack.c.l.b16 %v56
  %v228 = vunpack.c.l.b16 %v57
  %v229 = vunpack.c.l.b16 %v58
  %v230 = vunpack.c.l.b16 %v59
  %v231 = vunpack.c.l.b16 %v60
  %v232 = vunpack.c.l.b16 %v61
  %v233 = vunpack.c.l.b16 %v62
  %v234 = vunpack.c.l.b16 %v63
  %v235 = vunpack.c.l.b16 %v64
  %v236 = vunpack.c.l.b16 %v65
  %v237 = vunpack.c.l.b16 %v66
  %v238 = vunpack.c.l.b16 %v67
  %v239 = vunpack.c.l.b16 %v68
  %v240 = vunpack.c.l.b16 %v69
  %v241 = vunpack.c.l.b16 %v70
  %v242 = vunpack.c.l.b16 %v71
  %v243 = vunpack.c.l.b16 %v72
  %v244 = vunpack.c.l.b16 %v73
  %v245 = vunpack.c.l.b16 %v74
  %v246 = vunpack.c.l.b16 %v75
  %v247 = vunpack.c.l.b16 %v76
  %v248 = vunpack.c.l.b16 %v77
  %v249 = vunpack.c.l.b16 %v78
  %v250 = vunpack.c.l.b16 %v79
  %v251 = vunpack.c.l.b16 %v80
  %v252 = vunpack.c.l.b16 %v81
  %v253 = vunpack.c.l.b16 %v82
  %v254 = vunpack.c.l.b16 %v83
  %v255 = vunpack.c.l.b16 %v84
  %v256 = vunpack.c.l.b16 %v85
  %v257 = vunpack.c.l.b16 %v86
  %v258 = vunpack.c.l.b16 %v87
  %v259 = vunpack.c.l.b16 %v88
  %v260 = vpack.c.b16 %v187, %v186
  %v261 = vpack.c.b16 %v189, %v188
  %v262 = vpack.c.b16 %v191, %v190
  %v263 = vpack.c.b16 %v193, %v192
  %v264 = vpack.c.b16 %v195, %v194
  %v265 = vpack.c.b16 %v197, %v196
  %v266 = vpack.c.b16 %v199, %v198
  %v267 = vpack.c.b16 %v201, %v200
  %v268 = vpack.c.b16 %v203, %v202
  %v269 = vpack.c.b16 %v205, %v204
  %v270 = vpack.c.b16 %v207, %v206
  %v271 = vpack.c.b16 %v209, %v208
  %v272 = vpack.c.b16 %v211, %v210
  %v273 = vpack.c.b16 %v213, %v212
  %v274 = vpack.c.b16 %v215, %v214
  %v275 = vpack.c.b16 %v217, %v216
  %v276 = vpack.c.b16 %v219, %v218
  %v277 = vpack.c.b16 %v221, %v220
  %v278 = vpack.c.b16 %v223, %v222
  %v279 = vpack.c.b16 %v225, %v224
  %v280 = vpack.c.b16 %v227, %v226
  %v281 = vpack.c.b16 %v229, %v228
  %v282 = vpack.c.b16 %v231, %v230
  %v283 = vpack.c.b16 %v233, %v232
  %v284 = vpack.c.b16 %v235, %v234
  %v285 = vpack.c.b16 %v237, %v236
  %v286 = vpack.c.b16 %v239, %v238
  %v287 = vpack.c.b16 %v241, %v240
  %v288 = vpack.c.b16 %v243, %v242
  %v289 = vpack.c.b16 %v245, %v244
  %v290 = vpack.c.b16 %v247, %v246
  %v291 = vpack.c.b16 %v249, %v248
  %v292 = vpack.c.b16 %v251, %v250
  %v293 = vpack.c.b16 %v253, %v252
  %v294 = vpack.c.b16 %v255, %v254
  %v295 = vpack.c.b16 %v257, %v256
  %v296 = vpack.c.b16 %v259, %v258
  %v350 = vunpack.c.l.b16 %v89
  %v351 = vunpack.c.l.b16 %v90
  %v352 = vunpack.c.l.b16 %v91
  %v353 = vunpack.c.l.b16 %v92
  %v354 = vunpack.c.l.b16 %v93
  %v355 = vunpack.c.l.b16 %v94
  %v356 = vunpack.c.l.b16 %v95
  %v357 = vunpack.c.l.b16 %v96
  %v358 = vunpack.c.l.b16 %v97
  %v359 = vunpack.c.l.b16 %v98
  %v360 = vunpack.c.l.b16 %v99
  %v361 = vunpack.c.l.b16 %v100
  %v362 = vunpack.c.l.b16 %v101
  %v363 = vunpack.c.l.b16 %v102
  %v364 = vunpack.c.l.b16 %v103
  %v365 = vunpack.c.l.b16 %v104
  %v366 = vpack.c.b16 %v351, %v350
  %v367 = vpack.c.b16 %v353, %v352
  %v368 = vpack.c.b16 %v355, %v354
  %v369 = vpack.c.b16 %v357, %v356
  %v370 = vpack.c.b16 %v359, %v358
  %v371 = vpack.c.b16 %v361, %v360
  %v372 = vpack.c.b16 %v363, %v362
  %v373 = vpack.c.b16 %v365, %v364
  %382 = vmatprep.subr.bf16.mxu0 0
  %383 = vmatpush1.bf16.msra.mxu0 %v366
  %384 = vmatprep.subr.bf16.mxu0 0
  %385 = vmatpush1.bf16.msra.mxu0 %v367
  %386 = vmatprep.subr.bf16.mxu0 0
  %387 = vmatpush1.bf16.msra.mxu0 %v368
  %388 = vmatprep.subr.bf16.mxu0 0
  %389 = vmatpush1.bf16.msra.mxu0 %v369
  %390 = vmatprep.subr.bf16.mxu0 0
  %391 = vmatpush1.bf16.msra.mxu0 %v370
  %392 = vmatprep.subr.bf16.mxu0 0
  %393 = vmatpush1.bf16.msra.mxu0 %v371
  %394 = vmatprep.subr.bf16.mxu0 0
  %395 = vmatpush1.bf16.msra.mxu0 %v372
  %396 = vmatprep.subr.bf16.mxu0 0
  %397 = vmatpush1.bf16.msra.mxu0 %v373
  %398 = vmatprep.subr.bf16.mxu0 0
  %399 = vmatpush1.bf16.msra.mxu0 0
  %400 = vmatprep.subr.bf16.mxu0 0
  %401 = vmatpush1.bf16.msra.mxu0 0
  %402 = vmatprep.subr.bf16.mxu0 0
  %403 = vmatpush1.bf16.msra.mxu0 0
  %404 = vmatprep.subr.bf16.mxu0 0
  %405 = vmatpush1.bf16.msra.mxu0 0
  %406 = vmatprep.subr.bf16.mxu0 0
  %407 = vmatpush1.bf16.msra.mxu0 0
  %408 = vmatprep.subr.bf16.mxu0 0
  %409 = vmatpush1.bf16.msra.mxu0 0
  %410 = vmatprep.subr.bf16.mxu0 0
  %411 = vmatpush1.bf16.msra.mxu0 0
  %412 = vmatprep.subr.bf16.mxu0 0
  %413 = vmatpush1.bf16.msra.mxu0 0
  %414 = vmatprep.mubr.bf16.mxu0 0
  %415 = vmatmul.mubr.bf16.gmra.mrb[0].mxu0 %v260
  %v416 = vpop.f32.mrb[0].mxu0
  %v417 = vadd.f32 %v110, %v416
  %v418 = vpop.f32.mrb[0].mxu0
  %v419 = vpop.f32.mrb[0].mxu0
  %v420 = vadd.f32 %v110, %v419
  %v421 = vpop.f32.mrb[0].mxu0
  %422 = vmatprep.mubr.bf16.mxu0 0
  %423 = vmatmul.mubr.bf16.gmra.mrb[0].mxu0 %v261
  %v424 = vpop.f32.mrb[0].mxu0
  %v425 = vadd.f32 %v110, %v424
  %v426 = vpop.f32.mrb[0].mxu0
  %v427 = vpop.f32.mrb[0].mxu0
  %v428 = vadd.f32 %v110, %v427
  %v429 = vpop.f32.mrb[0].mxu0
  %430 = vmatprep.mubr.bf16.mxu0 0
  %431 = vmatmul.mubr.bf16.gmra.mrb[0].mxu0 %v262
  %v432 = vpop.f32.mrb[0].mxu0
  %v433 = vadd.f32 %v110, %v432
  %v434 = vpop.f32.mrb[0].mxu0
  %v435 = vpop.f32.mrb[0].mxu0
  %v436 = vadd.f32 %v110, %v435
  %v437 = vpop.f32.mrb[0].mxu0
  %438 = vmatprep.mubr.bf16.mxu0 0
  %439 = vmatmul.mubr.bf16.gmra.mrb[0].mxu0 %v263
  %v440 = vpop.f32.mrb[0].mxu0
  %v441 = vadd.f32 %v110, %v440
  %v442 = vpop.f32.mrb[0].mxu0
  %v443 = vpop.f32.mrb[0].mxu0
  %v444 = vadd.f32 %v110, %v443
  %v445 = vpop.f32.mrb[0].mxu0
  %446 = vmatprep.mubr.bf16.mxu0 0
  %447 = vmatmul.mubr.bf16.gmra.mrb[0].mxu0 %v264
  %v448 = vpop.f32.mrb[0].mxu0
  %v449 = vadd.f32 %v110, %v448
  %v450 = vpop.f32.mrb[0].mxu0
  %v451 = vpop.f32.mrb[0].mxu0
  %v452 = vadd.f32 %v110, %v451
  %v453 = vpop.f32.mrb[0].mxu0
  %454 = vmatprep.mubr.bf16.mxu0 0
  %455 = vmatmul.mubr.bf16.gmra.mrb[0].mxu0 %v265
  %v456 = vpop.f32.mrb[0].mxu0
  %v457 = vadd.f32 %v110, %v456
  %v458 = vpop.f32.mrb[0].mxu0
  %v459 = vpop.f32.mrb[0].mxu0
  %v460 = vadd.f32 %v110, %v459
  %v461 = vpop.f32.mrb[0].mxu0
  %462 = vmatprep.mubr.bf16.mxu0 0
  %463 = vmatmul.mubr.bf16.gmra.mrb[0].mxu0 %v266
  %v464 = vpop.f32.mrb[0].mxu0
  %v465 = vadd.f32 %v110, %v464
  %v466 = vpop.f32.mrb[0].mxu0
  %v467 = vpop.f32.mrb[0].mxu0
  %v468 = vadd.f32 %v110, %v467
  %v469 = vpop.f32.mrb[0].mxu0
  %470 = vmatprep.mubr.bf16.mxu0 0
  %471 = vmatmul.mubr.bf16.gmra.mrb[0].mxu0 %v267
  %v472 = vpop.f32.mrb[0].mxu0
  %v473 = vadd.f32 %v110, %v472
  %v474 = vpop.f32.mrb[0].mxu0
  %v475 = vpop.f32.mrb[0].mxu0
  %v476 = vadd.f32 %v110, %v475
  %v477 = vpop.f32.mrb[0].mxu0
  %478 = vmatprep.mubr.bf16.mxu0 0
  %479 = vmatmul.mubr.bf16.gmra.mrb[0].mxu0 %v268
  %v480 = vpop.f32.mrb[0].mxu0
  %v481 = vadd.f32 %v110, %v480
  %v482 = vpop.f32.mrb[0].mxu0
  %v483 = vpop.f32.mrb[0].mxu0
  %v484 = vadd.f32 %v110, %v483
  %v485 = vpop.f32.mrb[0].mxu0
  %486 = vmatprep.mubr.bf16.mxu0 0
  %487 = vmatmul.mubr.bf16.gmra.mrb[0].mxu0 %v269
  %v488 = vpop.f32.mrb[0].mxu0
  %v489 = vadd.f32 %v110, %v488
  %v490 = vpop.f32.mrb[0].mxu0
  %v491 = vpop.f32.mrb[0].mxu0
  %v492 = vadd.f32 %v110, %v491
  %v493 = vpop.f32.mrb[0].mxu0
  %494 = vmatprep.mubr.bf16.mxu0 0
  %495 = vmatmul.mubr.bf16.gmra.mrb[0].mxu0 %v270
  %v496 = vpop.f32.mrb[0].mxu0
  %v497 = vadd.f32 %v110, %v496
  %v498 = vpop.f32.mrb[0].mxu0
  %v499 = vpop.f32.mrb[0].mxu0
  %v500 = vadd.f32 %v110, %v499
  %v501 = vpop.f32.mrb[0].mxu0
  %502 = vmatprep.mubr.bf16.mxu0 0
  %503 = vmatmul.mubr.bf16.gmra.mrb[0].mxu0 %v271
  %v504 = vpop.f32.mrb[0].mxu0
  %v505 = vadd.f32 %v110, %v504
  %v506 = vpop.f32.mrb[0].mxu0
  %v507 = vpop.f32.mrb[0].mxu0
  %v508 = vadd.f32 %v110, %v507
  %v509 = vpop.f32.mrb[0].mxu0
  %510 = vmatprep.mubr.bf16.mxu0 0
  %511 = vmatmul.mubr.bf16.gmra.mrb[0].mxu0 %v272
  %v512 = vpop.f32.mrb[0].mxu0
  %v513 = vadd.f32 %v110, %v512
  %v514 = vpop.f32.mrb[0].mxu0
  %v515 = vpop.f32.mrb[0].mxu0
  %v516 = vadd.f32 %v110, %v515
  %v517 = vpop.f32.mrb[0].mxu0
  %518 = vmatprep.mubr.bf16.mxu0 0
  %519 = vmatmul.mubr.bf16.gmra.mrb[0].mxu0 %v273
  %v520 = vpop.f32.mrb[0].mxu0
  %v521 = vadd.f32 %v110, %v520
  %v522 = vpop.f32.mrb[0].mxu0
  %v523 = vpop.f32.mrb[0].mxu0
  %v524 = vadd.f32 %v110, %v523
  %v525 = vpop.f32.mrb[0].mxu0
  %526 = vmatprep.mubr.bf16.mxu0 0
  %527 = vmatmul.mubr.bf16.gmra.mrb[0].mxu0 %v274
  %v528 = vpop.f32.mrb[0].mxu0
  %v529 = vadd.f32 %v110, %v528
  %v530 = vpop.f32.mrb[0].mxu0
  %v531 = vpop.f32.mrb[0].mxu0
  %v532 = vadd.f32 %v110, %v531
  %v533 = vpop.f32.mrb[0].mxu0
  %534 = vmatprep.mubr.bf16.mxu0 0
  %535 = vmatmul.mubr.bf16.gmra.mrb[0].mxu0 %v275
  %v536 = vpop.f32.mrb[0].mxu0
  %v537 = vadd.f32 %v110, %v536
  %v538 = vpop.f32.mrb[0].mxu0
  %v539 = vpop.f32.mrb[0].mxu0
  %v540 = vadd.f32 %v110, %v539
  %v541 = vpop.f32.mrb[0].mxu0
  %542 = vmatprep.mubr.bf16.mxu0 0
  %543 = vmatmul.mubr.bf16.gmra.mrb[0].mxu0 %v276
  %v544 = vpop.f32.mrb[0].mxu0
  %v545 = vadd.f32 %v110, %v544
  %v546 = vpop.f32.mrb[0].mxu0
  %v547 = vpop.f32.mrb[0].mxu0
  %v548 = vadd.f32 %v110, %v547
  %v549 = vpop.f32.mrb[0].mxu0
  %550 = vmatprep.mubr.bf16.mxu0 0
  %551 = vmatmul.mubr.bf16.gmra.mrb[0].mxu0 %v277
  %v552 = vpop.f32.mrb[0].mxu0
  %v553 = vadd.f32 %v110, %v552
  %v554 = vpop.f32.mrb[0].mxu0
  %v555 = vpop.f32.mrb[0].mxu0
  %v556 = vadd.f32 %v110, %v555
  %v557 = vpop.f32.mrb[0].mxu0
  %558 = vmatprep.mubr.bf16.mxu0 0
  %559 = vmatmul.mubr.bf16.gmra.mrb[0].mxu0 %v278
  %v560 = vpop.f32.mrb[0].mxu0
  %v561 = vadd.f32 %v110, %v560
  %v562 = vpop.f32.mrb[0].mxu0
  %v563 = vpop.f32.mrb[0].mxu0
  %v564 = vadd.f32 %v110, %v563
  %v565 = vpop.f32.mrb[0].mxu0
  %566 = vmatprep.mubr.bf16.mxu0 0
  %567 = vmatmul.mubr.bf16.gmra.mrb[0].mxu0 %v279
  %v568 = vpop.f32.mrb[0].mxu0
  %v569 = vadd.f32 %v110, %v568
  %v570 = vpop.f32.mrb[0].mxu0
  %v571 = vpop.f32.mrb[0].mxu0
  %v572 = vadd.f32 %v110, %v571
  %v573 = vpop.f32.mrb[0].mxu0
  %574 = vmatprep.mubr.bf16.mxu0 0
  %575 = vmatmul.mubr.bf16.gmra.mrb[0].mxu0 %v280
  %v576 = vpop.f32.mrb[0].mxu0
  %v577 = vadd.f32 %v110, %v576
  %v578 = vpop.f32.mrb[0].mxu0
  %v579 = vpop.f32.mrb[0].mxu0
  %v580 = vadd.f32 %v110, %v579
  %v581 = vpop.f32.mrb[0].mxu0
  %582 = vmatprep.mubr.bf16.mxu0 0
  %583 = vmatmul.mubr.bf16.gmra.mrb[0].mxu0 %v281
  %v584 = vpop.f32.mrb[0].mxu0
  %v585 = vadd.f32 %v110, %v584
  %v586 = vpop.f32.mrb[0].mxu0
  %v587 = vpop.f32.mrb[0].mxu0
  %v588 = vadd.f32 %v110, %v587
  %v589 = vpop.f32.mrb[0].mxu0
  %590 = vmatprep.mubr.bf16.mxu0 0
  %591 = vmatmul.mubr.bf16.gmra.mrb[0].mxu0 %v282
  %v592 = vpop.f32.mrb[0].mxu0
  %v593 = vadd.f32 %v110, %v592
  %v594 = vpop.f32.mrb[0].mxu0
  %v595 = vpop.f32.mrb[0].mxu0
  %v596 = vadd.f32 %v110, %v595
  %v597 = vpop.f32.mrb[0].mxu0
  %598 = vmatprep.mubr.bf16.mxu0 0
  %599 = vmatmul.mubr.bf16.gmra.mrb[0].mxu0 %v283
  %v600 = vpop.f32.mrb[0].mxu0
  %v601 = vadd.f32 %v110, %v600
  %v602 = vpop.f32.mrb[0].mxu0
  %v603 = vpop.f32.mrb[0].mxu0
  %v604 = vadd.f32 %v110, %v603
  %v605 = vpop.f32.mrb[0].mxu0
  %606 = vmatprep.mubr.bf16.mxu0 0
  %607 = vmatmul.mubr.bf16.gmra.mrb[0].mxu0 %v284
  %v608 = vpop.f32.mrb[0].mxu0
  %v609 = vadd.f32 %v110, %v608
  %v610 = vpop.f32.mrb[0].mxu0
  %v611 = vpop.f32.mrb[0].mxu0
  %v612 = vadd.f32 %v110, %v611
  %v613 = vpop.f32.mrb[0].mxu0
  %614 = vmatprep.mubr.bf16.mxu0 0
  %615 = vmatmul.mubr.bf16.gmra.mrb[0].mxu0 %v285
  %v616 = vpop.f32.mrb[0].mxu0
  %v617 = vadd.f32 %v110, %v616
  %v618 = vpop.f32.mrb[0].mxu0
  %v619 = vpop.f32.mrb[0].mxu0
  %v620 = vadd.f32 %v110, %v619
  %v621 = vpop.f32.mrb[0].mxu0
  %622 = vmatprep.mubr.bf16.mxu0 0
  %623 = vmatmul.mubr.bf16.gmra.mrb[0].mxu0 %v286
  %v624 = vpop.f32.mrb[0].mxu0
  %v625 = vadd.f32 %v110, %v624
  %v626 = vpop.f32.mrb[0].mxu0
  %v627 = vpop.f32.mrb[0].mxu0
  %v628 = vadd.f32 %v110, %v627
  %v629 = vpop.f32.mrb[0].mxu0
  %630 = vmatprep.mubr.bf16.mxu0 0
  %631 = vmatmul.mubr.bf16.gmra.mrb[0].mxu0 %v287
  %v632 = vpop.f32.mrb[0].mxu0
  %v633 = vadd.f32 %v110, %v632
  %v634 = vpop.f32.mrb[0].mxu0
  %v635 = vpop.f32.mrb[0].mxu0
  %v636 = vadd.f32 %v110, %v635
  %v637 = vpop.f32.mrb[0].mxu0
  %638 = vmatprep.mubr.bf16.mxu0 0
  %639 = vmatmul.mubr.bf16.gmra.mrb[0].mxu0 %v288
  %v640 = vpop.f32.mrb[0].mxu0
  %v641 = vadd.f32 %v110, %v640
  %v642 = vpop.f32.mrb[0].mxu0
  %v643 = vpop.f32.mrb[0].mxu0
  %v644 = vadd.f32 %v110, %v643
  %v645 = vpop.f32.mrb[0].mxu0
  %646 = vmatprep.mubr.bf16.mxu0 0
  %647 = vmatmul.mubr.bf16.gmra.mrb[0].mxu0 %v289
  %v648 = vpop.f32.mrb[0].mxu0
  %v649 = vadd.f32 %v110, %v648
  %v650 = vpop.f32.mrb[0].mxu0
  %v651 = vpop.f32.mrb[0].mxu0
  %v652 = vadd.f32 %v110, %v651
  %v653 = vpop.f32.mrb[0].mxu0
  %654 = vmatprep.mubr.bf16.mxu0 0
  %655 = vmatmul.mubr.bf16.gmra.mrb[0].mxu0 %v290
  %v656 = vpop.f32.mrb[0].mxu0
  %v657 = vadd.f32 %v110, %v656
  %v658 = vpop.f32.mrb[0].mxu0
  %v659 = vpop.f32.mrb[0].mxu0
  %v660 = vadd.f32 %v110, %v659
  %v661 = vpop.f32.mrb[0].mxu0
  %662 = vmatprep.mubr.bf16.mxu0 0
  %663 = vmatmul.mubr.bf16.gmra.mrb[0].mxu0 %v291
  %v664 = vpop.f32.mrb[0].mxu0
  %v665 = vadd.f32 %v110, %v664
  %v666 = vpop.f32.mrb[0].mxu0
  %v667 = vpop.f32.mrb[0].mxu0
  %v668 = vadd.f32 %v110, %v667
  %v669 = vpop.f32.mrb[0].mxu0
  %670 = vmatprep.mubr.bf16.mxu0 0
  %671 = vmatmul.mubr.bf16.gmra.mrb[0].mxu0 %v292
  %v672 = vpop.f32.mrb[0].mxu0
  %v673 = vadd.f32 %v110, %v672
  %v674 = vpop.f32.mrb[0].mxu0
  %v675 = vpop.f32.mrb[0].mxu0
  %v676 = vadd.f32 %v110, %v675
  %v677 = vpop.f32.mrb[0].mxu0
  %678 = vmatprep.mubr.bf16.mxu0 0
  %679 = vmatmul.mubr.bf16.gmra.mrb[0].mxu0 %v293
  %v680 = vpop.f32.mrb[0].mxu0
  %v681 = vadd.f32 %v110, %v680
  %v682 = vpop.f32.mrb[0].mxu0
  %v683 = vpop.f32.mrb[0].mxu0
  %v684 = vadd.f32 %v110, %v683
  %v685 = vpop.f32.mrb[0].mxu0
  %686 = vmatprep.mubr.bf16.mxu0 0
  %687 = vmatmul.mubr.bf16.gmra.mrb[0].mxu0 %v294
  %v688 = vpop.f32.mrb[0].mxu0
  %v689 = vadd.f32 %v110, %v688
  %v690 = vpop.f32.mrb[0].mxu0
  %v691 = vpop.f32.mrb[0].mxu0
  %v692 = vadd.f32 %v110, %v691
  %v693 = vpop.f32.mrb[0].mxu0
  %694 = vmatprep.mubr.bf16.mxu0 0
  %695 = vmatmul.mubr.bf16.gmra.mrb[0].mxu0 %v295
  %v696 = vpop.f32.mrb[0].mxu0
  %v697 = vadd.f32 %v110, %v696
  %v698 = vpop.f32.mrb[0].mxu0
  %v699 = vpop.f32.mrb[0].mxu0
  %v700 = vadd.f32 %v110, %v699
  %v701 = vpop.f32.mrb[0].mxu0
  %702 = vmatprep.mubr.bf16.mxu0 0
  %703 = vmatmul.mubr.bf16.gmra.mrb[0].mxu0 %v296
  %v704 = vpop.f32.mrb[0].mxu0
  %v705 = vadd.f32 %v110, %v704
  %v706 = vpop.f32.mrb[0].mxu0
  %v707 = vpop.f32.mrb[0].mxu0
  %v708 = vadd.f32 %v110, %v707
  %v709 = vpop.f32.mrb[0].mxu0
  %710 = vdwg.mxu0
  %v711 = vtanh.pop %v417
  %v712 = vtanh.pop %v420
  %v713 = vtanh.pop %v425
  %v714 = vtanh.pop %v428
  %v715 = vtanh.pop %v433
  %v716 = vtanh.pop %v436
  %v717 = vtanh.pop %v441
  %v718 = vtanh.pop %v444
  %v719 = vtanh.pop %v449
  %v720 = vtanh.pop %v452
  %v721 = vtanh.pop %v457
  %v722 = vtanh.pop %v460
  %v723 = vtanh.pop %v465
  %v724 = vtanh.pop %v468
  %v725 = vtanh.pop %v473
  %v726 = vtanh.pop %v476
  %v727 = vtanh.pop %v481
  %v728 = vtanh.pop %v484
  %v729 = vtanh.pop %v489
  %v730 = vtanh.pop %v492
  %v731 = vtanh.pop %v497
  %v732 = vtanh.pop %v500
  %v733 = vtanh.pop %v505
  %v734 = vtanh.pop %v508
  %v735 = vtanh.pop %v513
  %v736 = vtanh.pop %v516
  %v737 = vtanh.pop %v521
  %v738 = vtanh.pop %v524
  %v739 = vtanh.pop %v529
  %v740 = vtanh.pop %v532
  %v741 = vtanh.pop %v537
  %v742 = vtanh.pop %v540
  %v743 = vtanh.pop %v545
  %v744 = vtanh.pop %v548
  %v745 = vtanh.pop %v553
  %v746 = vtanh.pop %v556
  %v747 = vtanh.pop %v561
  %v748 = vtanh.pop %v564
  %v749 = vtanh.pop %v569
  %v750 = vtanh.pop %v572
  %v751 = vtanh.pop %v577
  %v752 = vtanh.pop %v580
  %v753 = vtanh.pop %v585
  %v754 = vtanh.pop %v588
  %v755 = vtanh.pop %v593
  %v756 = vtanh.pop %v596
  %v757 = vtanh.pop %v601
  %v758 = vtanh.pop %v604
  %v759 = vtanh.pop %v609
  %v760 = vtanh.pop %v612
  %v761 = vtanh.pop %v617
  %v762 = vtanh.pop %v620
  %v763 = vtanh.pop %v625
  %v764 = vtanh.pop %v628
  %v765 = vtanh.pop %v633
  %v766 = vtanh.pop %v636
  %v767 = vtanh.pop %v641
  %v768 = vtanh.pop %v644
  %v769 = vtanh.pop %v649
  %v770 = vtanh.pop %v652
  %v771 = vtanh.pop %v657
  %v772 = vtanh.pop %v660
  %v773 = vtanh.pop %v665
  %v774 = vtanh.pop %v668
  %v775 = vtanh.pop %v673
  %v776 = vtanh.pop %v676
  %v777 = vtanh.pop %v681
  %v778 = vtanh.pop %v684
  %v779 = vtanh.pop %v689
  %v780 = vtanh.pop %v692
  %v781 = vtanh.pop %v697
  %v782 = vtanh.pop %v700
  %v783 = vtanh.pop %v705
  %v784 = vtanh.pop %v708
  %785 = vst [vmem:[%s3] sm:$0xff] %v711
  %786 = vst [vmem:[%s3 + $0x8] sm:$0xff] %v712
  %787 = vst [vmem:[%s3 + $0x10] sm:$0xff] %v713
  %788 = vst [vmem:[%s3 + $0x18] sm:$0xff] %v714
  %789 = vst [vmem:[%s3 + $0x20] sm:$0xff] %v715
  %790 = vst [vmem:[%s3 + $0x28] sm:$0xff] %v716
  %791 = vst [vmem:[%s3 + $0x30] sm:$0xff] %v717
  %792 = vst [vmem:[%s3 + $0x38] sm:$0xff] %v718
  %793 = vst [vmem:[%s3 + $0x40] sm:$0xff] %v719
  %794 = vst [vmem:[%s3 + $0x48] sm:$0xff] %v720
  %795 = vst [vmem:[%s3 + $0x50] sm:$0xff] %v721
  %796 = vst [vmem:[%s3 + $0x58] sm:$0xff] %v722
  %797 = vst [vmem:[%s3 + $0x60] sm:$0xff] %v723
  %798 = vst [vmem:[%s3 + $0x68] sm:$0xff] %v724
  %799 = vst [vmem:[%s3 + $0x70] sm:$0xff] %v725
  %800 = vst [vmem:[%s3 + $0x78] sm:$0xff] %v726
  %801 = vst [vmem:[%s3 + $0x80] sm:$0xff] %v727
  %802 = vst [vmem:[%s3 + $0x88] sm:$0xff] %v728
  %803 = vst [vmem:[%s3 + $0x90] sm:$0xff] %v729
  %804 = vst [vmem:[%s3 + $0x98] sm:$0xff] %v730
  %805 = vst [vmem:[%s3 + $0xa0] sm:$0xff] %v731
  %806 = vst [vmem:[%s3 + $0xa8] sm:$0xff] %v732
  %807 = vst [vmem:[%s3 + $0xb0] sm:$0xff] %v733
  %808 = vst [vmem:[%s3 + $0xb8] sm:$0xff] %v734
  %809 = vst [vmem:[%s3 + $0xc0] sm:$0xff] %v735
  %810 = vst [vmem:[%s3 + $0xc8] sm:$0xff] %v736
  %811 = vst [vmem:[%s3 + $0xd0] sm:$0xff] %v737
  %812 = vst [vmem:[%s3 + $0xd8] sm:$0xff] %v738
  %813 = vst [vmem:[%s3 + $0xe0] sm:$0xff] %v739
  %814 = vst [vmem:[%s3 + $0xe8] sm:$0xff] %v740
  %815 = vst [vmem:[%s3 + $0xf0] sm:$0xff] %v741
  %816 = vst [vmem:[%s3 + $0xf8] sm:$0xff] %v742
  %817 = vst [vmem:[%s3 + $0x100] sm:$0xff] %v743
  %818 = vst [vmem:[%s3 + $0x108] sm:$0xff] %v744
  %819 = vst [vmem:[%s3 + $0x110] sm:$0xff] %v745
  %820 = vst [vmem:[%s3 + $0x118] sm:$0xff] %v746
  %821 = vst [vmem:[%s3 + $0x120] sm:$0xff] %v747
  %822 = vst [vmem:[%s3 + $0x128] sm:$0xff] %v748
  %823 = vst [vmem:[%s3 + $0x130] sm:$0xff] %v749
  %824 = vst [vmem:[%s3 + $0x138] sm:$0xff] %v750
  %825 = vst [vmem:[%s3 + $0x140] sm:$0xff] %v751
  %826 = vst [vmem:[%s3 + $0x148] sm:$0xff] %v752
  %827 = vst [vmem:[%s3 + $0x150] sm:$0xff] %v753
  %828 = vst [vmem:[%s3 + $0x158] sm:$0xff] %v754
  %829 = vst [vmem:[%s3 + $0x160] sm:$0xff] %v755
  %830 = vst [vmem:[%s3 + $0x168] sm:$0xff] %v756
  %831 = vst [vmem:[%s3 + $0x170] sm:$0xff] %v757
  %832 = vst [vmem:[%s3 + $0x178] sm:$0xff] %v758
  %833 = vst [vmem:[%s3 + $0x180] sm:$0xff] %v759
  %834 = vst [vmem:[%s3 + $0x188] sm:$0xff] %v760
  %835 = vst [vmem:[%s3 + $0x190] sm:$0xff] %v761
  %836 = vst [vmem:[%s3 + $0x198] sm:$0xff] %v762
  %837 = vst [vmem:[%s3 + $0x1a0] sm:$0xff] %v763
  %838 = vst [vmem:[%s3 + $0x1a8] sm:$0xff] %v764
  %839 = vst [vmem:[%s3 + $0x1b0] sm:$0xff] %v765
  %840 = vst [vmem:[%s3 + $0x1b8] sm:$0xff] %v766
  %841 = vst [vmem:[%s3 + $0x1c0] sm:$0xff] %v767
  %842 = vst [vmem:[%s3 + $0x1c8] sm:$0xff] %v768
  %843 = vst [vmem:[%s3 + $0x1d0] sm:$0xff] %v769
  %844 = vst [vmem:[%s3 + $0x1d8] sm:$0xff] %v770
  %845 = vst [vmem:[%s3 + $0x1e0] sm:$0xff] %v771
  %846 = vst [vmem:[%s3 + $0x1e8] sm:$0xff] %v772
  %847 = vst [vmem:[%s3 + $0x1f0] sm:$0xff] %v773
  %848 = vst [vmem:[%s3 + $0x1f8] sm:$0xff] %v774
  %849 = vst [vmem:[%s3 + $0x200] sm:$0xff] %v775
  %850 = vst [vmem:[%s3 + $0x208] sm:$0xff] %v776
  %851 = vst [vmem:[%s3 + $0x210] sm:$0xff] %v777
  %852 = vst [vmem:[%s3 + $0x218] sm:$0xff] %v778
  %853 = vst [vmem:[%s3 + $0x220] sm:$0xff] %v779
  %854 = vst [vmem:[%s3 + $0x228] sm:$0xff] %v780
  %855 = vst [vmem:[%s3 + $0x230] sm:$0xff] %v781
  %856 = vst [vmem:[%s3 + $0x238] sm:$0xff] %v782
  %857 = vst [vmem:[%s3 + $0x240] sm:$0xff] %v783
  %858 = vst [vmem:[%s3 + $0x248] sm:$0xff] %v784
  // Predicated region
  $region14: #{generator_forward.9} parent=0 // pred_check
    _
  $region15: #{generator_forward.9} parent=0 // pred_check_branch
    %860 = sbr.rel (0) target = $region17
  $region16: #{generator_forward.9} parent=0 // pred_region
    _
  $region17: #{generator_forward.9} parent=0 // pred_fallthru
    _
  // Predicated region
  $region18: #{generator_forward.9} parent=0 // pred_check
    _
  $region19: #{generator_forward.9} parent=0 // pred_check_branch
    %862 = sbr.rel (0) target = $region21
  $region20: #{generator_forward.9} parent=0 // pred_region
    _
  $region21: #{generator_forward.9} parent=0 // pred_fallthru
    _

</llo_original>
